<compile_context>
chip_gen: v7x
topology: tpu7x:2x2x1
jax: 0.10.0
libtpu: 0.0.40
codegen_flags: <defaults>
</compile_context>

<pallas_src>
import math
from functools import partial

import numpy as np
import jax
import jax.numpy as jnp
from jax import lax
from jax.experimental import pallas as pl
from jax.experimental.pallas import tpu as pltpu


# ----------------------------------------------------------------------------
# Kernel: one batch element per grid step, all decoder iterations inside.
# ----------------------------------------------------------------------------
def _decoder_kernel(
    ut_ref,
    # Wd_start: transposed and split by input block [hidden | start_state | end_state]
    wd_h_ref, wd_s_ref, wd_e_ref, wd_b_ref,
    # start chain maxouts (cols [0:D] = pool piece 0, [D:2D] = pool piece 1)
    ws0u_ref, ws0r_ref, bs0_ref,          # Maxout(3D -> D), rows split ut / r
    ws1_ref, bs1_ref,                     # Maxout(D  -> D)
    ws2m1_ref, ws2m2_ref, bs2_ref,        # Maxout(2D -> 1), rows split m1 / m2
    # end chain maxouts
    we0u_ref, we0r_ref, be0_ref,
    we1_ref, be1_ref,
    we2m1_ref, we2m2_ref, be2_ref,
    # LSTMCell: W_ih^T split by input block [start_state | end_state], W_hh^T, fused bias
    wls_ref, wle_ref, wlh_ref, bl_ref,
    # mlp
    wm_ref, bm_ref,
    # outputs
    alpha_ref, beta_ref, start_ref, end_ref,
):
    f32 = jnp.float32
    dot = partial(jnp.dot, preferred_element_type=f32)

    ut = ut_ref[0]                       # (Lc, 2D)
    Lc = ut.shape[0]
    D = wm_ref.shape[0]
    iters = alpha_ref.shape[1]

    # Load weights once.
    wd_h, wd_s, wd_e, wd_b = wd_h_ref[...], wd_s_ref[...], wd_e_ref[...], wd_b_ref[...]
    ws0u, ws0r, bs0 = ws0u_ref[...], ws0r_ref[...], bs0_ref[...]
    ws1, bs1 = ws1_ref[...], bs1_ref[...]
    ws2m1, ws2m2, bs2 = ws2m1_ref[...], ws2m2_ref[...], bs2_ref[...]
    we0u, we0r, be0 = we0u_ref[...], we0r_ref[...], be0_ref[...]
    we1, be1 = we1_ref[...], be1_ref[...]
    we2m1, we2m2, be2 = we2m1_ref[...], we2m2_ref[...], be2_ref[...]
    wls, wle, wlh, bl = wls_ref[...], wle_ref[...], wlh_ref[...], bl_ref[...]
    wm, bm = wm_ref[...], bm_ref[...]

    # Iteration-invariant ut projections of the first maxout of each chain,
    # hoisted out of the sequential iteration loop: one (Lc,2D)x(2D,2D) matmul each.
    U0s = dot(ut, ws0u) + bs0            # (Lc, 2D)   [piece0 | piece1]
    U0e = dot(ut, we0u) + be0            # (Lc, 2D)

    ids = lax.broadcasted_iota(jnp.int32, (Lc, 1), 0)

    def maxout_chain(U0, r_proj, w1, b1, w2m1, w2m2, b2):
        p0 = U0 + r_proj                                     # (Lc, 2D)
        m1 = jnp.maximum(p0[:, :D], p0[:, D:])               # (Lc, D)
        p1 = dot(m1, w1) + b1                                # (Lc, 2D)
        m2 = jnp.maximum(p1[:, :D], p1[:, D:])               # (Lc, D)
        sc = dot(m1, w2m1) + dot(m2, w2m2) + b2              # (Lc, 2) = two pool pieces
        return jnp.max(sc, axis=1, keepdims=True)            # (Lc, 1)

    def argmax_and_gather(col):
        mx = jnp.max(col, axis=0, keepdims=True)                               # (1, 1)
        idx = jnp.min(jnp.where(col == mx, ids, Lc), axis=0, keepdims=True)    # (1, 1) i32
        state = jnp.sum(jnp.where(ids == idx, ut, 0.0), axis=0, keepdims=True)  # (1, 2D)
        return idx, state

    hidden = jnp.zeros((1, D), f32)
    cell = jnp.zeros((1, D), f32)
    ss = ut[0:1, :]
    es = ut[0:1, :]
    s_i = jnp.zeros((1, 1), jnp.int32)
    e_i = jnp.zeros((1, 1), jnp.int32)

    # `iters` is a small static constant -> unroll in Python (static store indices,
    # full scheduler visibility).
    for it in range(iters):
        r = jnp.tanh(dot(hidden, wd_h) + dot(ss, wd_s) + dot(es, wd_e) + wd_b)   # (1, D)

        alpha_col = maxout_chain(U0s, dot(r, ws0r), ws1, bs1, ws2m1, ws2m2, bs2)
        beta_col = maxout_chain(U0e, dot(r, we0r), we1, be1, we2m1, we2m2, be2)

        alpha_ref[0, it] = alpha_col
        beta_ref[0, it] = beta_col

        s_i, ss = argmax_and_gather(alpha_col)
        e_i, es = argmax_and_gather(beta_col)

        # LSTMCell on [start_state | end_state]; PyTorch gate order i, f, g, o.
        g = dot(ss, wls) + dot(es, wle) + dot(hidden, wlh) + bl                  # (1, 4D)
        gi = jax.nn.sigmoid(g[:, 0:D])
        gf = jax.nn.sigmoid(g[:, D:2 * D])
        gg = jnp.tanh(g[:, 2 * D:3 * D])
        go = jax.nn.sigmoid(g[:, 3 * D:4 * D])
        cell = gf * cell + gi * gg
        hidden = dot(go * jnp.tanh(cell), wm) + bm                               # mlp(hidden)

    start_ref[0] = s_i
    end_ref[0] = e_i


# ----------------------------------------------------------------------------
# One-time host-side weight preprocessing (transpose / de-interleave / split)
# ----------------------------------------------------------------------------
def _maxout_pieces(w, b, pool=2):
    """PyTorch Maxout lin weight (d_out*pool, d_in) -> (d_in, pool*d_out), with
    columns [0:d_out] = pool piece 0, [d_out:2*d_out] = pool piece 1."""
    wt = jnp.transpose(w)
    w_r = jnp.concatenate([wt[:, p::pool] for p in range(pool)], axis=1)
    b_r = jnp.concatenate([b[p::pool] for p in range(pool)]).reshape(1, -1)
    return w_r, b_r


def prepare_decoder_params(p, d_model):
    D = d_model

    wdt = jnp.transpose(p["wd_start_w"])                   # (5D, D)
    wd_h, wd_s, wd_e = wdt[:D], wdt[D:3 * D], wdt[3 * D:]
    wd_b = p["wd_start_b"].reshape(1, D)

    def chain(prefix):
        w0, b0 = _maxout_pieces(p[f"{prefix}0_w"], p[f"{prefix}0_b"])   # (3D, 2D), (1, 2D)
        w0u, w0r = w0[:2 * D], w0[2 * D:]
        w1, b1 = _maxout_pieces(p[f"{prefix}1_w"], p[f"{prefix}1_b"])   # (D, 2D), (1, 2D)
        w2, b2 = _maxout_pieces(p[f"{prefix}2_w"], p[f"{prefix}2_b"])   # (2D, 2), (1, 2)
        w2m1, w2m2 = w2[:D], w2[D:]
        return (w0u, w0r, b0, w1, b1, w2m1, w2m2, b2)

    start_chain = chain("ws")
    end_chain = chain("we")

    wih_t = jnp.transpose(p["lstm_wih"])                   # (4D_in, 4D_gates)
    wls, wle = wih_t[:2 * D], wih_t[2 * D:]
    wlh = jnp.transpose(p["lstm_whh"])                     # (D, 4D)
    bl = (p["lstm_bih"] + p["lstm_bhh"]).reshape(1, 4 * D)

    wm = jnp.transpose(p["mlp_w"])
    bm = p["mlp_b"].reshape(1, D)

    return (wd_h, wd_s, wd_e, wd_b) + start_chain + end_chain + (wls, wle, wlh, bl, wm, bm)


# ----------------------------------------------------------------------------
# Wrapper
# ----------------------------------------------------------------------------
def decoder_forward(ut, prepared, iters):
    B, Lc, dim = ut.shape
    D = dim // 2

    weight_specs = [pl.BlockSpec(w.shape, lambda b, n=w.ndim: (0,) * n) for w in prepared]

    flops = int(2 * B * (2 * Lc * dim * dim
                         + iters * (2 * Lc * D * dim + 8 * Lc * D + 12 * dim * dim)))
    bytes_accessed = int(4 * (ut.size + sum(int(w.size) for w in prepared)
                              + 2 * B * iters * Lc + 2 * B))
    transcendentals = int(B * iters * 6 * D)

    alphas, betas, start, end = pl.pallas_call(
        _decoder_kernel,
        out_shape=(
            jax.ShapeDtypeStruct((B, iters, Lc, 1), jnp.float32),
            jax.ShapeDtypeStruct((B, iters, Lc, 1), jnp.float32),
            jax.ShapeDtypeStruct((B, 1, 1), jnp.int32),
            jax.ShapeDtypeStruct((B, 1, 1), jnp.int32),
        ),
        grid_spec=pltpu.PrefetchScalarGridSpec(
            num_scalar_prefetch=0,
            grid=(B,),
            in_specs=[pl.BlockSpec((1, Lc, dim), lambda b: (b, 0, 0))] + weight_specs,
            out_specs=[
                pl.BlockSpec((1, iters, Lc, 1), lambda b: (b, 0, 0, 0)),
                pl.BlockSpec((1, iters, Lc, 1), lambda b: (b, 0, 0, 0)),
                pl.BlockSpec((1, 1, 1), lambda b: (b, 0, 0)),
                pl.BlockSpec((1, 1, 1), lambda b: (b, 0, 0)),
            ],
        ),
        compiler_params=pltpu.CompilerParams(dimension_semantics=("parallel",)),
        cost_estimate=pl.CostEstimate(flops=flops, transcendentals=transcendentals,
                                      bytes_accessed=bytes_accessed),
    )(ut, *prepared)

    alphas = alphas[..., 0]   # (B, iters, Lc)
    betas = betas[..., 0]
    entropies = [[alphas[:, i, :], betas[:, i, :]] for i in range(iters)]
    return start.reshape(B), end.reshape(B), entropies


# ----------------------------------------------------------------------------
# Deterministic PyTorch-layout parameter init
# ----------------------------------------------------------------------------
def init_raw_params(key, d_model):
    D = d_model
    ks = jax.random.split(key, 16)

    def lin(k, d_out, d_in):
        lim = 1.0 / math.sqrt(d_in)
        kw, kb = jax.random.split(k)
        return (jax.random.uniform(kw, (d_out, d_in), jnp.float32, -lim, lim),
                jax.random.uniform(kb, (d_out,), jnp.float32, -lim, lim))

    p = {}
    p["wd_start_w"], p["wd_start_b"] = lin(ks[0], D, 5 * D)
    p["wd_end_w"], p["wd_end_b"] = lin(ks[1], D, 5 * D)   # defined in the module, unused in forward
    p["ws0_w"], p["ws0_b"] = lin(ks[2], 2 * D, 3 * D)
    p["ws1_w"], p["ws1_b"] = lin(ks[3], 2 * D, D)
    p["ws2_w"], p["ws2_b"] = lin(ks[4], 2, 2 * D)
    p["we0_w"], p["we0_b"] = lin(ks[5], 2 * D, 3 * D)
    p["we1_w"], p["we1_b"] = lin(ks[6], 2 * D, D)
    p["we2_w"], p["we2_b"] = lin(ks[7], 2, 2 * D)
    lim = 1.0 / math.sqrt(D)
    p["lstm_wih"] = jax.random.uniform(ks[8], (4 * D, 4 * D), jnp.float32, -lim, lim)
    p["lstm_whh"] = jax.random.uniform(ks[9], (4 * D, D), jnp.float32, -lim, lim)
    p["lstm_bih"] = jax.random.uniform(ks[10], (4 * D,), jnp.float32, -lim, lim)
    p["lstm_bhh"] = jax.random.uniform(ks[11], (4 * D,), jnp.float32, -lim, lim)
    p["mlp_w"], p["mlp_b"] = lin(ks[12], D, D)
    return p


# ----------------------------------------------------------------------------
# Pure-JAX reference (mirrors the PyTorch forward exactly) for verification
# ----------------------------------------------------------------------------
def _maxout_ref(x, w, b, d_out, pool=2):
    out = x @ jnp.transpose(w) + b
    out = out.reshape(x.shape[:-1] + (d_out, pool))
    return jnp.max(out, axis=-1)


def reference_decoder(ut, p, iters):
    B, Lc, dim = ut.shape
    D = dim // 2
    hidden = jnp.zeros((B, D), jnp.float32)
    cell = jnp.zeros((B, D), jnp.float32)
    ss = ut[:, 0, :]
    es = ut[:, 0, :]
    start = jnp.zeros((B,), jnp.int32)
    end = jnp.zeros((B,), jnp.int32)
    entropies = []
    for _ in range(iters):
        h_s_e = jnp.concatenate([hidden, ss, es], axis=-1)
        r = jnp.tanh(h_s_e @ jnp.transpose(p["wd_start_w"]) + p["wd_start_b"])   # (B, D)
        e_r = jnp.concatenate([ut, jnp.broadcast_to(r[:, None, :], (B, Lc, D))], axis=-1)

        m1 = _maxout_ref(e_r, p["ws0_w"], p["ws0_b"], D)
        m2 = _maxout_ref(m1, p["ws1_w"], p["ws1_b"], D)
        alpha = _maxout_ref(jnp.concatenate([m1, m2], -1), p["ws2_w"], p["ws2_b"], 1)[..., 0]
        start = jnp.argmax(alpha, axis=-1).astype(jnp.int32)
        ss = jnp.einsum("bl,bld->bd", jax.nn.one_hot(start, Lc, dtype=ut.dtype), ut)

        # (torch recomputes h_s_e here but never uses it; beta reuses the same r)
        m1e = _maxout_ref(e_r, p["we0_w"], p["we0_b"], D)
        m2e = _maxout_ref(m1e, p["we1_w"], p["we1_b"], D)
        beta = _maxout_ref(jnp.concatenate([m1e, m2e], -1), p["we2_w"], p["we2_b"], 1)[..., 0]
        end = jnp.argmax(beta, axis=-1).astype(jnp.int32)
        es = jnp.einsum("bl,bld->bd", jax.nn.one_hot(end, Lc, dtype=ut.dtype), ut)

        g = (jnp.concatenate([ss, es], -1) @ jnp.transpose(p["lstm_wih"]) + p["lstm_bih"]
             + hidden @ jnp.transpose(p["lstm_whh"]) + p["lstm_bhh"])
        gi = jax.nn.sigmoid(g[:, :D])
        gf = jax.nn.sigmoid(g[:, D:2 * D])
        gg = jnp.tanh(g[:, 2 * D:3 * D])
        go = jax.nn.sigmoid(g[:, 3 * D:])
        cell = gf * cell + gi * gg
        hidden = (go * jnp.tanh(cell)) @ jnp.transpose(p["mlp_w"]) + p["mlp_b"]

        entropies.append([alpha, beta])
    return start, end, entropies


if __name__ == "__main__":
    B, Lc, d_model, iters = 2, 16, 32, 4     # ut dim = 2 * d_model = 64
    dim = 2 * d_model
    key = jax.random.PRNGKey(0)
    k_ut, k_p = jax.random.split(key)

    ut = jax.random.normal(k_ut, (B, Lc, dim), jnp.float32)
    raw = init_raw_params(k_p, d_model)
    prepared = prepare_decoder_params(raw, d_model)

    start, end, entropies = decoder_forward(ut, prepared, iters)
    start = jax.block_until_ready(start)
    end = jax.block_until_ready(end)
    assert start.shape == (B,) and end.shape == (B,)
    assert len(entropies) == iters and entropies[0][0].shape == (B, Lc)

    start_r, end_r, ent_r = reference_decoder(ut, raw, iters)
    np.testing.assert_array_equal(np.asarray(start), np.asarray(start_r))
    np.testing.assert_array_equal(np.asarray(end), np.asarray(end_r))
    for i in range(iters):
        np.testing.assert_allclose(np.asarray(entropies[i][0]), np.asarray(ent_r[i][0]),
                                   rtol=1e-3, atol=1e-3)
        np.testing.assert_allclose(np.asarray(entropies[i][1]), np.asarray(ent_r[i][1]),
                                   rtol=1e-3, atol=1e-3)

    print("KERNEL_OK")
</pallas_src>

<mosaic_0001>
module attributes {stable_mosaic.version = 11 : i64} {
  func.func @_decoder_kernel(%arg0: i32, %arg1: memref<1x16x64xf32, #tpu.memory_space<vmem>>, %arg2: memref<32x32xf32, #tpu.memory_space<vmem>>, %arg3: memref<64x32xf32, #tpu.memory_space<vmem>>, %arg4: memref<64x32xf32, #tpu.memory_space<vmem>>, %arg5: memref<1x32xf32, #tpu.memory_space<vmem>>, %arg6: memref<64x64xf32, #tpu.memory_space<vmem>>, %arg7: memref<32x64xf32, #tpu.memory_space<vmem>>, %arg8: memref<1x64xf32, #tpu.memory_space<vmem>>, %arg9: memref<32x64xf32, #tpu.memory_space<vmem>>, %arg10: memref<1x64xf32, #tpu.memory_space<vmem>>, %arg11: memref<32x2xf32, #tpu.memory_space<vmem>>, %arg12: memref<32x2xf32, #tpu.memory_space<vmem>>, %arg13: memref<1x2xf32, #tpu.memory_space<vmem>>, %arg14: memref<64x64xf32, #tpu.memory_space<vmem>>, %arg15: memref<32x64xf32, #tpu.memory_space<vmem>>, %arg16: memref<1x64xf32, #tpu.memory_space<vmem>>, %arg17: memref<32x64xf32, #tpu.memory_space<vmem>>, %arg18: memref<1x64xf32, #tpu.memory_space<vmem>>, %arg19: memref<32x2xf32, #tpu.memory_space<vmem>>, %arg20: memref<32x2xf32, #tpu.memory_space<vmem>>, %arg21: memref<1x2xf32, #tpu.memory_space<vmem>>, %arg22: memref<64x128xf32, #tpu.memory_space<vmem>>, %arg23: memref<64x128xf32, #tpu.memory_space<vmem>>, %arg24: memref<32x128xf32, #tpu.memory_space<vmem>>, %arg25: memref<1x128xf32, #tpu.memory_space<vmem>>, %arg26: memref<32x32xf32, #tpu.memory_space<vmem>>, %arg27: memref<1x32xf32, #tpu.memory_space<vmem>>, %arg28: memref<1x4x16x1xf32, #tpu.memory_space<vmem>>, %arg29: memref<1x4x16x1xf32, #tpu.memory_space<vmem>>, %arg30: memref<1x1x1xi32, #tpu.memory_space<vmem>>, %arg31: memref<1x1x1xi32, #tpu.memory_space<vmem>>) attributes {dimension_semantics = [#tpu.dimension_semantics<parallel>], iteration_bounds = array<i64: 2>, scalar_prefetch = 0 : i64, scratch_operands = 0 : i64, tpu.core_type = #tpu.core_type<tc>, window_params = [{transform_indices = @transform_0, window_bounds = array<i64: 1, 16, 64>}, {pipeline_mode = #tpu.pipeline_mode<synchronous>, transform_indices = @transform_1, window_bounds = array<i64: 32, 32>}, {pipeline_mode = #tpu.pipeline_mode<synchronous>, transform_indices = @transform_2, window_bounds = array<i64: 64, 32>}, {pipeline_mode = #tpu.pipeline_mode<synchronous>, transform_indices = @transform_3, window_bounds = array<i64: 64, 32>}, {pipeline_mode = #tpu.pipeline_mode<synchronous>, transform_indices = @transform_4, window_bounds = array<i64: 1, 32>}, {pipeline_mode = #tpu.pipeline_mode<synchronous>, transform_indices = @transform_5, window_bounds = array<i64: 64, 64>}, {pipeline_mode = #tpu.pipeline_mode<synchronous>, transform_indices = @transform_6, window_bounds = array<i64: 32, 64>}, {pipeline_mode = #tpu.pipeline_mode<synchronous>, transform_indices = @transform_7, window_bounds = array<i64: 1, 64>}, {pipeline_mode = #tpu.pipeline_mode<synchronous>, transform_indices = @transform_8, window_bounds = array<i64: 32, 64>}, {pipeline_mode = #tpu.pipeline_mode<synchronous>, transform_indices = @transform_9, window_bounds = array<i64: 1, 64>}, {pipeline_mode = #tpu.pipeline_mode<synchronous>, transform_indices = @transform_10, window_bounds = array<i64: 32, 2>}, {pipeline_mode = #tpu.pipeline_mode<synchronous>, transform_indices = @transform_11, window_bounds = array<i64: 32, 2>}, {pipeline_mode = #tpu.pipeline_mode<synchronous>, transform_indices = @transform_12, window_bounds = array<i64: 1, 2>}, {pipeline_mode = #tpu.pipeline_mode<synchronous>, transform_indices = @transform_13, window_bounds = array<i64: 64, 64>}, {pipeline_mode = #tpu.pipeline_mode<synchronous>, transform_indices = @transform_14, window_bounds = array<i64: 32, 64>}, {pipeline_mode = #tpu.pipeline_mode<synchronous>, transform_indices = @transform_15, window_bounds = array<i64: 1, 64>}, {pipeline_mode = #tpu.pipeline_mode<synchronous>, transform_indices = @transform_16, window_bounds = array<i64: 32, 64>}, {pipeline_mode = #tpu.pipeline_mode<synchronous>, transform_indices = @transform_17, window_bounds = array<i64: 1, 64>}, {pipeline_mode = #tpu.pipeline_mode<synchronous>, transform_indices = @transform_18, window_bounds = array<i64: 32, 2>}, {pipeline_mode = #tpu.pipeline_mode<synchronous>, transform_indices = @transform_19, window_bounds = array<i64: 32, 2>}, {pipeline_mode = #tpu.pipeline_mode<synchronous>, transform_indices = @transform_20, window_bounds = array<i64: 1, 2>}, {pipeline_mode = #tpu.pipeline_mode<synchronous>, transform_indices = @transform_21, window_bounds = array<i64: 64, 128>}, {pipeline_mode = #tpu.pipeline_mode<synchronous>, transform_indices = @transform_22, window_bounds = array<i64: 64, 128>}, {pipeline_mode = #tpu.pipeline_mode<synchronous>, transform_indices = @transform_23, window_bounds = array<i64: 32, 128>}, {pipeline_mode = #tpu.pipeline_mode<synchronous>, transform_indices = @transform_24, window_bounds = array<i64: 1, 128>}, {pipeline_mode = #tpu.pipeline_mode<synchronous>, transform_indices = @transform_25, window_bounds = array<i64: 32, 32>}, {pipeline_mode = #tpu.pipeline_mode<synchronous>, transform_indices = @transform_26, window_bounds = array<i64: 1, 32>}, {transform_indices = @transform_27, window_bounds = array<i64: 1, 4, 16, 1>}, {transform_indices = @transform_28, window_bounds = array<i64: 1, 4, 16, 1>}, {transform_indices = @transform_29, window_bounds = array<i64: 1, 1, 1>}, {transform_indices = @transform_30, window_bounds = array<i64: 1, 1, 1>}]} {
    %c0 = arith.constant 0 : index
    %c0_0 = arith.constant 0 : index
    %c0_1 = arith.constant 0 : index
    %0 = vector.load %arg1[%c0, %c0_0, %c0_1] : memref<1x16x64xf32, #tpu.memory_space<vmem>>, vector<1x16x64xf32>
    %1 = vector.shape_cast %0 : vector<1x16x64xf32> to vector<16x64xf32>
    %c0_2 = arith.constant 0 : index
    %c0_3 = arith.constant 0 : index
    %2 = vector.load %arg2[%c0_2, %c0_3] : memref<32x32xf32, #tpu.memory_space<vmem>>, vector<32x32xf32>
    %c0_4 = arith.constant 0 : index
    %c0_5 = arith.constant 0 : index
    %3 = vector.load %arg3[%c0_4, %c0_5] : memref<64x32xf32, #tpu.memory_space<vmem>>, vector<64x32xf32>
    %c0_6 = arith.constant 0 : index
    %c0_7 = arith.constant 0 : index
    %4 = vector.load %arg4[%c0_6, %c0_7] : memref<64x32xf32, #tpu.memory_space<vmem>>, vector<64x32xf32>
    %c0_8 = arith.constant 0 : index
    %c0_9 = arith.constant 0 : index
    %5 = vector.load %arg5[%c0_8, %c0_9] : memref<1x32xf32, #tpu.memory_space<vmem>>, vector<1x32xf32>
    %c0_10 = arith.constant 0 : index
    %c0_11 = arith.constant 0 : index
    %6 = vector.load %arg6[%c0_10, %c0_11] : memref<64x64xf32, #tpu.memory_space<vmem>>, vector<64x64xf32>
    %c0_12 = arith.constant 0 : index
    %c0_13 = arith.constant 0 : index
    %7 = vector.load %arg7[%c0_12, %c0_13] : memref<32x64xf32, #tpu.memory_space<vmem>>, vector<32x64xf32>
    %c0_14 = arith.constant 0 : index
    %c0_15 = arith.constant 0 : index
    %8 = vector.load %arg8[%c0_14, %c0_15] : memref<1x64xf32, #tpu.memory_space<vmem>>, vector<1x64xf32>
    %c0_16 = arith.constant 0 : index
    %c0_17 = arith.constant 0 : index
    %9 = vector.load %arg9[%c0_16, %c0_17] : memref<32x64xf32, #tpu.memory_space<vmem>>, vector<32x64xf32>
    %c0_18 = arith.constant 0 : index
    %c0_19 = arith.constant 0 : index
    %10 = vector.load %arg10[%c0_18, %c0_19] : memref<1x64xf32, #tpu.memory_space<vmem>>, vector<1x64xf32>
    %c0_20 = arith.constant 0 : index
    %c0_21 = arith.constant 0 : index
    %11 = vector.load %arg11[%c0_20, %c0_21] : memref<32x2xf32, #tpu.memory_space<vmem>>, vector<32x2xf32>
    %c0_22 = arith.constant 0 : index
    %c0_23 = arith.constant 0 : index
    %12 = vector.load %arg12[%c0_22, %c0_23] : memref<32x2xf32, #tpu.memory_space<vmem>>, vector<32x2xf32>
    %c0_24 = arith.constant 0 : index
    %c0_25 = arith.constant 0 : index
    %13 = vector.load %arg13[%c0_24, %c0_25] : memref<1x2xf32, #tpu.memory_space<vmem>>, vector<1x2xf32>
    %c0_26 = arith.constant 0 : index
    %c0_27 = arith.constant 0 : index
    %14 = vector.load %arg14[%c0_26, %c0_27] : memref<64x64xf32, #tpu.memory_space<vmem>>, vector<64x64xf32>
    %c0_28 = arith.constant 0 : index
    %c0_29 = arith.constant 0 : index
    %15 = vector.load %arg15[%c0_28, %c0_29] : memref<32x64xf32, #tpu.memory_space<vmem>>, vector<32x64xf32>
    %c0_30 = arith.constant 0 : index
    %c0_31 = arith.constant 0 : index
    %16 = vector.load %arg16[%c0_30, %c0_31] : memref<1x64xf32, #tpu.memory_space<vmem>>, vector<1x64xf32>
    %c0_32 = arith.constant 0 : index
    %c0_33 = arith.constant 0 : index
    %17 = vector.load %arg17[%c0_32, %c0_33] : memref<32x64xf32, #tpu.memory_space<vmem>>, vector<32x64xf32>
    %c0_34 = arith.constant 0 : index
    %c0_35 = arith.constant 0 : index
    %18 = vector.load %arg18[%c0_34, %c0_35] : memref<1x64xf32, #tpu.memory_space<vmem>>, vector<1x64xf32>
    %c0_36 = arith.constant 0 : index
    %c0_37 = arith.constant 0 : index
    %19 = vector.load %arg19[%c0_36, %c0_37] : memref<32x2xf32, #tpu.memory_space<vmem>>, vector<32x2xf32>
    %c0_38 = arith.constant 0 : index
    %c0_39 = arith.constant 0 : index
    %20 = vector.load %arg20[%c0_38, %c0_39] : memref<32x2xf32, #tpu.memory_space<vmem>>, vector<32x2xf32>
    %c0_40 = arith.constant 0 : index
    %c0_41 = arith.constant 0 : index
    %21 = vector.load %arg21[%c0_40, %c0_41] : memref<1x2xf32, #tpu.memory_space<vmem>>, vector<1x2xf32>
    %c0_42 = arith.constant 0 : index
    %c0_43 = arith.constant 0 : index
    %22 = vector.load %arg22[%c0_42, %c0_43] : memref<64x128xf32, #tpu.memory_space<vmem>>, vector<64x128xf32>
    %c0_44 = arith.constant 0 : index
    %c0_45 = arith.constant 0 : index
    %23 = vector.load %arg23[%c0_44, %c0_45] : memref<64x128xf32, #tpu.memory_space<vmem>>, vector<64x128xf32>
    %c0_46 = arith.constant 0 : index
    %c0_47 = arith.constant 0 : index
    %24 = vector.load %arg24[%c0_46, %c0_47] : memref<32x128xf32, #tpu.memory_space<vmem>>, vector<32x128xf32>
    %c0_48 = arith.constant 0 : index
    %c0_49 = arith.constant 0 : index
    %25 = vector.load %arg25[%c0_48, %c0_49] : memref<1x128xf32, #tpu.memory_space<vmem>>, vector<1x128xf32>
    %c0_50 = arith.constant 0 : index
    %c0_51 = arith.constant 0 : index
    %26 = vector.load %arg26[%c0_50, %c0_51] : memref<32x32xf32, #tpu.memory_space<vmem>>, vector<32x32xf32>
    %c0_52 = arith.constant 0 : index
    %c0_53 = arith.constant 0 : index
    %27 = vector.load %arg27[%c0_52, %c0_53] : memref<1x32xf32, #tpu.memory_space<vmem>>, vector<1x32xf32>
    %cst = arith.constant dense<0.000000e+00> : vector<16x64xf32>
    %28 = tpu.matmul %1, %6, %cst {dimension_numbers = #tpu.dot_dimension_numbers<[1], [0], [0], [1], [0, 0, 1, 1], [], []>} : vector<16x64xf32>, vector<64x64xf32>, vector<16x64xf32> -> vector<16x64xf32>
    %29 = vector.broadcast %8 : vector<1x64xf32> to vector<16x64xf32>
    %30 = arith.addf %28, %29 : vector<16x64xf32>
    %cst_54 = arith.constant dense<0.000000e+00> : vector<16x64xf32>
    %31 = tpu.matmul %1, %14, %cst_54 {dimension_numbers = #tpu.dot_dimension_numbers<[1], [0], [0], [1], [0, 0, 1, 1], [], []>} : vector<16x64xf32>, vector<64x64xf32>, vector<16x64xf32> -> vector<16x64xf32>
    %32 = vector.broadcast %16 : vector<1x64xf32> to vector<16x64xf32>
    %33 = arith.addf %31, %32 : vector<16x64xf32>
    %34 = tpu.iota {dimensions = array<i32: 0>} : vector<16x1xi32>
    %cst_55 = arith.constant 0.000000e+00 : f32
    %35 = vector.broadcast %cst_55 : f32 to vector<1x32xf32>
    %cst_56 = arith.constant 0.000000e+00 : f32
    %36 = vector.broadcast %cst_56 : f32 to vector<1x32xf32>
    %37 = vector.extract_strided_slice %1 {offsets = [0, 0], sizes = [1, 64], strides = [1, 1]} : vector<16x64xf32> to vector<1x64xf32>
    %38 = vector.extract_strided_slice %1 {offsets = [0, 0], sizes = [1, 64], strides = [1, 1]} : vector<16x64xf32> to vector<1x64xf32>
    %cst_57 = arith.constant dense<0.000000e+00> : vector<1x32xf32>
    %39 = tpu.matmul %35, %2, %cst_57 {dimension_numbers = #tpu.dot_dimension_numbers<[1], [0], [0], [1], [0, 0, 1, 1], [], []>} : vector<1x32xf32>, vector<32x32xf32>, vector<1x32xf32> -> vector<1x32xf32>
    %cst_58 = arith.constant dense<0.000000e+00> : vector<1x32xf32>
    %40 = tpu.matmul %37, %3, %cst_58 {dimension_numbers = #tpu.dot_dimension_numbers<[1], [0], [0], [1], [0, 0, 1, 1], [], []>} : vector<1x64xf32>, vector<64x32xf32>, vector<1x32xf32> -> vector<1x32xf32>
    %41 = arith.addf %39, %40 : vector<1x32xf32>
    %cst_59 = arith.constant dense<0.000000e+00> : vector<1x32xf32>
    %42 = tpu.matmul %38, %4, %cst_59 {dimension_numbers = #tpu.dot_dimension_numbers<[1], [0], [0], [1], [0, 0, 1, 1], [], []>} : vector<1x64xf32>, vector<64x32xf32>, vector<1x32xf32> -> vector<1x32xf32>
    %43 = arith.addf %41, %42 : vector<1x32xf32>
    %44 = arith.addf %43, %5 : vector<1x32xf32>
    %45 = math.tanh %44 : vector<1x32xf32>
    %cst_60 = arith.constant dense<0.000000e+00> : vector<1x64xf32>
    %46 = tpu.matmul %45, %7, %cst_60 {dimension_numbers = #tpu.dot_dimension_numbers<[1], [0], [0], [1], [0, 0, 1, 1], [], []>} : vector<1x32xf32>, vector<32x64xf32>, vector<1x64xf32> -> vector<1x64xf32>
    %47 = vector.broadcast %46 : vector<1x64xf32> to vector<16x64xf32>
    %48 = arith.addf %30, %47 : vector<16x64xf32>
    %49 = vector.extract_strided_slice %48 {offsets = [0, 0], sizes = [16, 32], strides = [1, 1]} : vector<16x64xf32> to vector<16x32xf32>
    %50 = vector.extract_strided_slice %48 {offsets = [0, 32], sizes = [16, 32], strides = [1, 1]} : vector<16x64xf32> to vector<16x32xf32>
    %51 = arith.maximumf %49, %50 : vector<16x32xf32>
    %cst_61 = arith.constant dense<0.000000e+00> : vector<16x64xf32>
    %52 = tpu.matmul %51, %9, %cst_61 {dimension_numbers = #tpu.dot_dimension_numbers<[1], [0], [0], [1], [0, 0, 1, 1], [], []>} : vector<16x32xf32>, vector<32x64xf32>, vector<16x64xf32> -> vector<16x64xf32>
    %53 = vector.broadcast %10 : vector<1x64xf32> to vector<16x64xf32>
    %54 = arith.addf %52, %53 : vector<16x64xf32>
    %55 = vector.extract_strided_slice %54 {offsets = [0, 0], sizes = [16, 32], strides = [1, 1]} : vector<16x64xf32> to vector<16x32xf32>
    %56 = vector.extract_strided_slice %54 {offsets = [0, 32], sizes = [16, 32], strides = [1, 1]} : vector<16x64xf32> to vector<16x32xf32>
    %57 = arith.maximumf %55, %56 : vector<16x32xf32>
    %cst_62 = arith.constant dense<0.000000e+00> : vector<16x2xf32>
    %58 = tpu.matmul %51, %11, %cst_62 {dimension_numbers = #tpu.dot_dimension_numbers<[1], [0], [0], [1], [0, 0, 1, 1], [], []>} : vector<16x32xf32>, vector<32x2xf32>, vector<16x2xf32> -> vector<16x2xf32>
    %cst_63 = arith.constant dense<0.000000e+00> : vector<16x2xf32>
    %59 = tpu.matmul %57, %12, %cst_63 {dimension_numbers = #tpu.dot_dimension_numbers<[1], [0], [0], [1], [0, 0, 1, 1], [], []>} : vector<16x32xf32>, vector<32x2xf32>, vector<16x2xf32> -> vector<16x2xf32>
    %60 = arith.addf %58, %59 : vector<16x2xf32>
    %61 = vector.broadcast %13 : vector<1x2xf32> to vector<16x2xf32>
    %62 = arith.addf %60, %61 : vector<16x2xf32>
    %cst_64 = arith.constant dense<0xFF800000> : vector<16xf32>
    %63 = vector.multi_reduction <maximumf>, %62, %cst_64 [1] : vector<16x2xf32> to vector<16xf32>
    %64 = vector.shape_cast %63 : vector<16xf32> to vector<16x1xf32>
    %cst_65 = arith.constant dense<0.000000e+00> : vector<1x64xf32>
    %65 = tpu.matmul %45, %15, %cst_65 {dimension_numbers = #tpu.dot_dimension_numbers<[1], [0], [0], [1], [0, 0, 1, 1], [], []>} : vector<1x32xf32>, vector<32x64xf32>, vector<1x64xf32> -> vector<1x64xf32>
    %66 = vector.broadcast %65 : vector<1x64xf32> to vector<16x64xf32>
    %67 = arith.addf %33, %66 : vector<16x64xf32>
    %68 = vector.extract_strided_slice %67 {offsets = [0, 0], sizes = [16, 32], strides = [1, 1]} : vector<16x64xf32> to vector<16x32xf32>
    %69 = vector.extract_strided_slice %67 {offsets = [0, 32], sizes = [16, 32], strides = [1, 1]} : vector<16x64xf32> to vector<16x32xf32>
    %70 = arith.maximumf %68, %69 : vector<16x32xf32>
    %cst_66 = arith.constant dense<0.000000e+00> : vector<16x64xf32>
    %71 = tpu.matmul %70, %17, %cst_66 {dimension_numbers = #tpu.dot_dimension_numbers<[1], [0], [0], [1], [0, 0, 1, 1], [], []>} : vector<16x32xf32>, vector<32x64xf32>, vector<16x64xf32> -> vector<16x64xf32>
    %72 = vector.broadcast %18 : vector<1x64xf32> to vector<16x64xf32>
    %73 = arith.addf %71, %72 : vector<16x64xf32>
    %74 = vector.extract_strided_slice %73 {offsets = [0, 0], sizes = [16, 32], strides = [1, 1]} : vector<16x64xf32> to vector<16x32xf32>
    %75 = vector.extract_strided_slice %73 {offsets = [0, 32], sizes = [16, 32], strides = [1, 1]} : vector<16x64xf32> to vector<16x32xf32>
    %76 = arith.maximumf %74, %75 : vector<16x32xf32>
    %cst_67 = arith.constant dense<0.000000e+00> : vector<16x2xf32>
    %77 = tpu.matmul %70, %19, %cst_67 {dimension_numbers = #tpu.dot_dimension_numbers<[1], [0], [0], [1], [0, 0, 1, 1], [], []>} : vector<16x32xf32>, vector<32x2xf32>, vector<16x2xf32> -> vector<16x2xf32>
    %cst_68 = arith.constant dense<0.000000e+00> : vector<16x2xf32>
    %78 = tpu.matmul %76, %20, %cst_68 {dimension_numbers = #tpu.dot_dimension_numbers<[1], [0], [0], [1], [0, 0, 1, 1], [], []>} : vector<16x32xf32>, vector<32x2xf32>, vector<16x2xf32> -> vector<16x2xf32>
    %79 = arith.addf %77, %78 : vector<16x2xf32>
    %80 = vector.broadcast %21 : vector<1x2xf32> to vector<16x2xf32>
    %81 = arith.addf %79, %80 : vector<16x2xf32>
    %cst_69 = arith.constant dense<0xFF800000> : vector<16xf32>
    %82 = vector.multi_reduction <maximumf>, %81, %cst_69 [1] : vector<16x2xf32> to vector<16xf32>
    %83 = vector.shape_cast %82 : vector<16xf32> to vector<16x1xf32>
    %c0_70 = arith.constant 0 : index
    %c0_71 = arith.constant 0 : index
    %c0_72 = arith.constant 0 : index
    %c0_73 = arith.constant 0 : index
    %84 = vector.load %arg28[%c0_70, %c0_71, %c0_72, %c0_73] : memref<1x4x16x1xf32, #tpu.memory_space<vmem>>, vector<1x1x16x1xf32>
    %85 = vector.shape_cast %84 : vector<1x1x16x1xf32> to vector<16x1xf32>
    %86 = vector.shape_cast %64 : vector<16x1xf32> to vector<1x1x16x1xf32>
    tpu.vector_store %arg28[%c0_70, %c0_71, %c0_72, %c0_73], %86 {strides = array<i32>} : memref<1x4x16x1xf32, #tpu.memory_space<vmem>>, vector<1x1x16x1xf32>,
    %c0_74 = arith.constant 0 : index
    %c0_75 = arith.constant 0 : index
    %c0_76 = arith.constant 0 : index
    %c0_77 = arith.constant 0 : index
    %87 = vector.load %arg29[%c0_74, %c0_75, %c0_76, %c0_77] : memref<1x4x16x1xf32, #tpu.memory_space<vmem>>, vector<1x1x16x1xf32>
    %88 = vector.shape_cast %87 : vector<1x1x16x1xf32> to vector<16x1xf32>
    %89 = vector.shape_cast %83 : vector<16x1xf32> to vector<1x1x16x1xf32>
    tpu.vector_store %arg29[%c0_74, %c0_75, %c0_76, %c0_77], %89 {strides = array<i32>} : memref<1x4x16x1xf32, #tpu.memory_space<vmem>>, vector<1x1x16x1xf32>,
    %cst_78 = arith.constant dense<0xFF800000> : vector<1xf32>
    %90 = vector.multi_reduction <maximumf>, %64, %cst_78 [0] : vector<16x1xf32> to vector<1xf32>
    %91 = vector.shape_cast %90 : vector<1xf32> to vector<1x1xf32>
    %92 = vector.broadcast %91 : vector<1x1xf32> to vector<16x1xf32>
    %93 = arith.cmpf oeq, %64, %92 : vector<16x1xf32>
    %c16_i32 = arith.constant 16 : i32
    %94 = vector.broadcast %c16_i32 : i32 to vector<16x1xi32>
    %95 = arith.select %93, %34, %94 : vector<16x1xi1>, vector<16x1xi32>
    %cst_79 = arith.constant dense<2147483647> : vector<1xi32>
    %96 = vector.multi_reduction <minsi>, %95, %cst_79 [0] : vector<16x1xi32> to vector<1xi32>
    %97 = vector.shape_cast %96 : vector<1xi32> to vector<1x1xi32>
    %98 = vector.broadcast %97 : vector<1x1xi32> to vector<16x1xi32>
    %99 = arith.cmpi eq, %34, %98 : vector<16x1xi32>
    %cst_80 = arith.constant 0.000000e+00 : f32
    %100 = vector.shape_cast %99 : vector<16x1xi1> to vector<16x1xi1>
    %101 = vector.broadcast %100 : vector<16x1xi1> to vector<16x64xi1>
    %102 = vector.broadcast %cst_80 : f32 to vector<16x64xf32>
    %103 = arith.select %101, %1, %102 : vector<16x64xi1>, vector<16x64xf32>
    %cst_81 = arith.constant dense<0.000000e+00> : vector<64xf32>
    %104 = vector.multi_reduction <add>, %103, %cst_81 [0] : vector<16x64xf32> to vector<64xf32>
    %105 = vector.shape_cast %104 : vector<64xf32> to vector<1x64xf32>
    %cst_82 = arith.constant dense<0xFF800000> : vector<1xf32>
    %106 = vector.multi_reduction <maximumf>, %83, %cst_82 [0] : vector<16x1xf32> to vector<1xf32>
    %107 = vector.shape_cast %106 : vector<1xf32> to vector<1x1xf32>
    %108 = vector.broadcast %107 : vector<1x1xf32> to vector<16x1xf32>
    %109 = arith.cmpf oeq, %83, %108 : vector<16x1xf32>
    %c16_i32_83 = arith.constant 16 : i32
    %110 = vector.broadcast %c16_i32_83 : i32 to vector<16x1xi32>
    %111 = arith.select %109, %34, %110 : vector<16x1xi1>, vector<16x1xi32>
    %cst_84 = arith.constant dense<2147483647> : vector<1xi32>
    %112 = vector.multi_reduction <minsi>, %111, %cst_84 [0] : vector<16x1xi32> to vector<1xi32>
    %113 = vector.shape_cast %112 : vector<1xi32> to vector<1x1xi32>
    %114 = vector.broadcast %113 : vector<1x1xi32> to vector<16x1xi32>
    %115 = arith.cmpi eq, %34, %114 : vector<16x1xi32>
    %cst_85 = arith.constant 0.000000e+00 : f32
    %116 = vector.shape_cast %115 : vector<16x1xi1> to vector<16x1xi1>
    %117 = vector.broadcast %116 : vector<16x1xi1> to vector<16x64xi1>
    %118 = vector.broadcast %cst_85 : f32 to vector<16x64xf32>
    %119 = arith.select %117, %1, %118 : vector<16x64xi1>, vector<16x64xf32>
    %cst_86 = arith.constant dense<0.000000e+00> : vector<64xf32>
    %120 = vector.multi_reduction <add>, %119, %cst_86 [0] : vector<16x64xf32> to vector<64xf32>
    %121 = vector.shape_cast %120 : vector<64xf32> to vector<1x64xf32>
    %cst_87 = arith.constant dense<0.000000e+00> : vector<1x128xf32>
    %122 = tpu.matmul %105, %22, %cst_87 {dimension_numbers = #tpu.dot_dimension_numbers<[1], [0], [0], [1], [0, 0, 1, 1], [], []>} : vector<1x64xf32>, vector<64x128xf32>, vector<1x128xf32> -> vector<1x128xf32>
    %cst_88 = arith.constant dense<0.000000e+00> : vector<1x128xf32>
    %123 = tpu.matmul %121, %23, %cst_88 {dimension_numbers = #tpu.dot_dimension_numbers<[1], [0], [0], [1], [0, 0, 1, 1], [], []>} : vector<1x64xf32>, vector<64x128xf32>, vector<1x128xf32> -> vector<1x128xf32>
    %124 = arith.addf %122, %123 : vector<1x128xf32>
    %cst_89 = arith.constant dense<0.000000e+00> : vector<1x128xf32>
    %125 = tpu.matmul %35, %24, %cst_89 {dimension_numbers = #tpu.dot_dimension_numbers<[1], [0], [0], [1], [0, 0, 1, 1], [], []>} : vector<1x32xf32>, vector<32x128xf32>, vector<1x128xf32> -> vector<1x128xf32>
    %126 = arith.addf %124, %125 : vector<1x128xf32>
    %127 = arith.addf %126, %25 : vector<1x128xf32>
    %128 = vector.extract_strided_slice %127 {offsets = [0, 0], sizes = [1, 32], strides = [1, 1]} : vector<1x128xf32> to vector<1x32xf32>
    %129 = arith.negf %128 : vector<1x32xf32>
    %130 = math.exp %129 : vector<1x32xf32>
    %cst_90 = arith.constant 1.000000e+00 : f32
    %131 = vector.broadcast %cst_90 : f32 to vector<1x32xf32>
    %132 = arith.addf %131, %130 : vector<1x32xf32>
    %133 = arith.divf %131, %132 : vector<1x32xf32>
    %134 = vector.extract_strided_slice %127 {offsets = [0, 32], sizes = [1, 32], strides = [1, 1]} : vector<1x128xf32> to vector<1x32xf32>
    %135 = arith.negf %134 : vector<1x32xf32>
    %136 = math.exp %135 : vector<1x32xf32>
    %cst_91 = arith.constant 1.000000e+00 : f32
    %137 = vector.broadcast %cst_91 : f32 to vector<1x32xf32>
    %138 = arith.addf %137, %136 : vector<1x32xf32>
    %139 = arith.divf %137, %138 : vector<1x32xf32>
    %140 = vector.extract_strided_slice %127 {offsets = [0, 64], sizes = [1, 32], strides = [1, 1]} : vector<1x128xf32> to vector<1x32xf32>
    %141 = math.tanh %140 : vector<1x32xf32>
    %142 = vector.extract_strided_slice %127 {offsets = [0, 96], sizes = [1, 32], strides = [1, 1]} : vector<1x128xf32> to vector<1x32xf32>
    %143 = arith.negf %142 : vector<1x32xf32>
    %144 = math.exp %143 : vector<1x32xf32>
    %cst_92 = arith.constant 1.000000e+00 : f32
    %145 = vector.broadcast %cst_92 : f32 to vector<1x32xf32>
    %146 = arith.addf %145, %144 : vector<1x32xf32>
    %147 = arith.divf %145, %146 : vector<1x32xf32>
    %148 = arith.mulf %139, %36 : vector<1x32xf32>
    %149 = arith.mulf %133, %141 : vector<1x32xf32>
    %150 = arith.addf %148, %149 : vector<1x32xf32>
    %151 = math.tanh %150 : vector<1x32xf32>
    %152 = arith.mulf %147, %151 : vector<1x32xf32>
    %cst_93 = arith.constant dense<0.000000e+00> : vector<1x32xf32>
    %153 = tpu.matmul %152, %26, %cst_93 {dimension_numbers = #tpu.dot_dimension_numbers<[1], [0], [0], [1], [0, 0, 1, 1], [], []>} : vector<1x32xf32>, vector<32x32xf32>, vector<1x32xf32> -> vector<1x32xf32>
    %154 = arith.addf %153, %27 : vector<1x32xf32>
    %cst_94 = arith.constant dense<0.000000e+00> : vector<1x32xf32>
    %155 = tpu.matmul %154, %2, %cst_94 {dimension_numbers = #tpu.dot_dimension_numbers<[1], [0], [0], [1], [0, 0, 1, 1], [], []>} : vector<1x32xf32>, vector<32x32xf32>, vector<1x32xf32> -> vector<1x32xf32>
    %cst_95 = arith.constant dense<0.000000e+00> : vector<1x32xf32>
    %156 = tpu.matmul %105, %3, %cst_95 {dimension_numbers = #tpu.dot_dimension_numbers<[1], [0], [0], [1], [0, 0, 1, 1], [], []>} : vector<1x64xf32>, vector<64x32xf32>, vector<1x32xf32> -> vector<1x32xf32>
    %157 = arith.addf %155, %156 : vector<1x32xf32>
    %cst_96 = arith.constant dense<0.000000e+00> : vector<1x32xf32>
    %158 = tpu.matmul %121, %4, %cst_96 {dimension_numbers = #tpu.dot_dimension_numbers<[1], [0], [0], [1], [0, 0, 1, 1], [], []>} : vector<1x64xf32>, vector<64x32xf32>, vector<1x32xf32> -> vector<1x32xf32>
    %159 = arith.addf %157, %158 : vector<1x32xf32>
    %160 = arith.addf %159, %5 : vector<1x32xf32>
    %161 = math.tanh %160 : vector<1x32xf32>
    %cst_97 = arith.constant dense<0.000000e+00> : vector<1x64xf32>
    %162 = tpu.matmul %161, %7, %cst_97 {dimension_numbers = #tpu.dot_dimension_numbers<[1], [0], [0], [1], [0, 0, 1, 1], [], []>} : vector<1x32xf32>, vector<32x64xf32>, vector<1x64xf32> -> vector<1x64xf32>
    %163 = vector.broadcast %162 : vector<1x64xf32> to vector<16x64xf32>
    %164 = arith.addf %30, %163 : vector<16x64xf32>
    %165 = vector.extract_strided_slice %164 {offsets = [0, 0], sizes = [16, 32], strides = [1, 1]} : vector<16x64xf32> to vector<16x32xf32>
    %166 = vector.extract_strided_slice %164 {offsets = [0, 32], sizes = [16, 32], strides = [1, 1]} : vector<16x64xf32> to vector<16x32xf32>
    %167 = arith.maximumf %165, %166 : vector<16x32xf32>
    %cst_98 = arith.constant dense<0.000000e+00> : vector<16x64xf32>
    %168 = tpu.matmul %167, %9, %cst_98 {dimension_numbers = #tpu.dot_dimension_numbers<[1], [0], [0], [1], [0, 0, 1, 1], [], []>} : vector<16x32xf32>, vector<32x64xf32>, vector<16x64xf32> -> vector<16x64xf32>
    %169 = vector.broadcast %10 : vector<1x64xf32> to vector<16x64xf32>
    %170 = arith.addf %168, %169 : vector<16x64xf32>
    %171 = vector.extract_strided_slice %170 {offsets = [0, 0], sizes = [16, 32], strides = [1, 1]} : vector<16x64xf32> to vector<16x32xf32>
    %172 = vector.extract_strided_slice %170 {offsets = [0, 32], sizes = [16, 32], strides = [1, 1]} : vector<16x64xf32> to vector<16x32xf32>
    %173 = arith.maximumf %171, %172 : vector<16x32xf32>
    %cst_99 = arith.constant dense<0.000000e+00> : vector<16x2xf32>
    %174 = tpu.matmul %167, %11, %cst_99 {dimension_numbers = #tpu.dot_dimension_numbers<[1], [0], [0], [1], [0, 0, 1, 1], [], []>} : vector<16x32xf32>, vector<32x2xf32>, vector<16x2xf32> -> vector<16x2xf32>
    %cst_100 = arith.constant dense<0.000000e+00> : vector<16x2xf32>
    %175 = tpu.matmul %173, %12, %cst_100 {dimension_numbers = #tpu.dot_dimension_numbers<[1], [0], [0], [1], [0, 0, 1, 1], [], []>} : vector<16x32xf32>, vector<32x2xf32>, vector<16x2xf32> -> vector<16x2xf32>
    %176 = arith.addf %174, %175 : vector<16x2xf32>
    %177 = vector.broadcast %13 : vector<1x2xf32> to vector<16x2xf32>
    %178 = arith.addf %176, %177 : vector<16x2xf32>
    %cst_101 = arith.constant dense<0xFF800000> : vector<16xf32>
    %179 = vector.multi_reduction <maximumf>, %178, %cst_101 [1] : vector<16x2xf32> to vector<16xf32>
    %180 = vector.shape_cast %179 : vector<16xf32> to vector<16x1xf32>
    %cst_102 = arith.constant dense<0.000000e+00> : vector<1x64xf32>
    %181 = tpu.matmul %161, %15, %cst_102 {dimension_numbers = #tpu.dot_dimension_numbers<[1], [0], [0], [1], [0, 0, 1, 1], [], []>} : vector<1x32xf32>, vector<32x64xf32>, vector<1x64xf32> -> vector<1x64xf32>
    %182 = vector.broadcast %181 : vector<1x64xf32> to vector<16x64xf32>
    %183 = arith.addf %33, %182 : vector<16x64xf32>
    %184 = vector.extract_strided_slice %183 {offsets = [0, 0], sizes = [16, 32], strides = [1, 1]} : vector<16x64xf32> to vector<16x32xf32>
    %185 = vector.extract_strided_slice %183 {offsets = [0, 32], sizes = [16, 32], strides = [1, 1]} : vector<16x64xf32> to vector<16x32xf32>
    %186 = arith.maximumf %184, %185 : vector<16x32xf32>
    %cst_103 = arith.constant dense<0.000000e+00> : vector<16x64xf32>
    %187 = tpu.matmul %186, %17, %cst_103 {dimension_numbers = #tpu.dot_dimension_numbers<[1], [0], [0], [1], [0, 0, 1, 1], [], []>} : vector<16x32xf32>, vector<32x64xf32>, vector<16x64xf32> -> vector<16x64xf32>
    %188 = vector.broadcast %18 : vector<1x64xf32> to vector<16x64xf32>
    %189 = arith.addf %187, %188 : vector<16x64xf32>
    %190 = vector.extract_strided_slice %189 {offsets = [0, 0], sizes = [16, 32], strides = [1, 1]} : vector<16x64xf32> to vector<16x32xf32>
    %191 = vector.extract_strided_slice %189 {offsets = [0, 32], sizes = [16, 32], strides = [1, 1]} : vector<16x64xf32> to vector<16x32xf32>
    %192 = arith.maximumf %190, %191 : vector<16x32xf32>
    %cst_104 = arith.constant dense<0.000000e+00> : vector<16x2xf32>
    %193 = tpu.matmul %186, %19, %cst_104 {dimension_numbers = #tpu.dot_dimension_numbers<[1], [0], [0], [1], [0, 0, 1, 1], [], []>} : vector<16x32xf32>, vector<32x2xf32>, vector<16x2xf32> -> vector<16x2xf32>
    %cst_105 = arith.constant dense<0.000000e+00> : vector<16x2xf32>
    %194 = tpu.matmul %192, %20, %cst_105 {dimension_numbers = #tpu.dot_dimension_numbers<[1], [0], [0], [1], [0, 0, 1, 1], [], []>} : vector<16x32xf32>, vector<32x2xf32>, vector<16x2xf32> -> vector<16x2xf32>
    %195 = arith.addf %193, %194 : vector<16x2xf32>
    %196 = vector.broadcast %21 : vector<1x2xf32> to vector<16x2xf32>
    %197 = arith.addf %195, %196 : vector<16x2xf32>
    %cst_106 = arith.constant dense<0xFF800000> : vector<16xf32>
    %198 = vector.multi_reduction <maximumf>, %197, %cst_106 [1] : vector<16x2xf32> to vector<16xf32>
    %199 = vector.shape_cast %198 : vector<16xf32> to vector<16x1xf32>
    %c0_107 = arith.constant 0 : index
    %c1 = arith.constant 1 : index
    %c0_108 = arith.constant 0 : index
    %c0_109 = arith.constant 0 : index
    %200 = vector.load %arg28[%c0_107, %c1, %c0_108, %c0_109] : memref<1x4x16x1xf32, #tpu.memory_space<vmem>>, vector<1x1x16x1xf32>
    %201 = vector.shape_cast %200 : vector<1x1x16x1xf32> to vector<16x1xf32>
    %202 = vector.shape_cast %180 : vector<16x1xf32> to vector<1x1x16x1xf32>
    tpu.vector_store %arg28[%c0_107, %c1, %c0_108, %c0_109], %202 {strides = array<i32>} : memref<1x4x16x1xf32, #tpu.memory_space<vmem>>, vector<1x1x16x1xf32>,
    %c0_110 = arith.constant 0 : index
    %c1_111 = arith.constant 1 : index
    %c0_112 = arith.constant 0 : index
    %c0_113 = arith.constant 0 : index
    %203 = vector.load %arg29[%c0_110, %c1_111, %c0_112, %c0_113] : memref<1x4x16x1xf32, #tpu.memory_space<vmem>>, vector<1x1x16x1xf32>
    %204 = vector.shape_cast %203 : vector<1x1x16x1xf32> to vector<16x1xf32>
    %205 = vector.shape_cast %199 : vector<16x1xf32> to vector<1x1x16x1xf32>
    tpu.vector_store %arg29[%c0_110, %c1_111, %c0_112, %c0_113], %205 {strides = array<i32>} : memref<1x4x16x1xf32, #tpu.memory_space<vmem>>, vector<1x1x16x1xf32>,
    %cst_114 = arith.constant dense<0xFF800000> : vector<1xf32>
    %206 = vector.multi_reduction <maximumf>, %180, %cst_114 [0] : vector<16x1xf32> to vector<1xf32>
    %207 = vector.shape_cast %206 : vector<1xf32> to vector<1x1xf32>
    %208 = vector.broadcast %207 : vector<1x1xf32> to vector<16x1xf32>
    %209 = arith.cmpf oeq, %180, %208 : vector<16x1xf32>
    %c16_i32_115 = arith.constant 16 : i32
    %210 = vector.broadcast %c16_i32_115 : i32 to vector<16x1xi32>
    %211 = arith.select %209, %34, %210 : vector<16x1xi1>, vector<16x1xi32>
    %cst_116 = arith.constant dense<2147483647> : vector<1xi32>
    %212 = vector.multi_reduction <minsi>, %211, %cst_116 [0] : vector<16x1xi32> to vector<1xi32>
    %213 = vector.shape_cast %212 : vector<1xi32> to vector<1x1xi32>
    %214 = vector.broadcast %213 : vector<1x1xi32> to vector<16x1xi32>
    %215 = arith.cmpi eq, %34, %214 : vector<16x1xi32>
    %cst_117 = arith.constant 0.000000e+00 : f32
    %216 = vector.shape_cast %215 : vector<16x1xi1> to vector<16x1xi1>
    %217 = vector.broadcast %216 : vector<16x1xi1> to vector<16x64xi1>
    %218 = vector.broadcast %cst_117 : f32 to vector<16x64xf32>
    %219 = arith.select %217, %1, %218 : vector<16x64xi1>, vector<16x64xf32>
    %cst_118 = arith.constant dense<0.000000e+00> : vector<64xf32>
    %220 = vector.multi_reduction <add>, %219, %cst_118 [0] : vector<16x64xf32> to vector<64xf32>
    %221 = vector.shape_cast %220 : vector<64xf32> to vector<1x64xf32>
    %cst_119 = arith.constant dense<0xFF800000> : vector<1xf32>
    %222 = vector.multi_reduction <maximumf>, %199, %cst_119 [0] : vector<16x1xf32> to vector<1xf32>
    %223 = vector.shape_cast %222 : vector<1xf32> to vector<1x1xf32>
    %224 = vector.broadcast %223 : vector<1x1xf32> to vector<16x1xf32>
    %225 = arith.cmpf oeq, %199, %224 : vector<16x1xf32>
    %c16_i32_120 = arith.constant 16 : i32
    %226 = vector.broadcast %c16_i32_120 : i32 to vector<16x1xi32>
    %227 = arith.select %225, %34, %226 : vector<16x1xi1>, vector<16x1xi32>
    %cst_121 = arith.constant dense<2147483647> : vector<1xi32>
    %228 = vector.multi_reduction <minsi>, %227, %cst_121 [0] : vector<16x1xi32> to vector<1xi32>
    %229 = vector.shape_cast %228 : vector<1xi32> to vector<1x1xi32>
    %230 = vector.broadcast %229 : vector<1x1xi32> to vector<16x1xi32>
    %231 = arith.cmpi eq, %34, %230 : vector<16x1xi32>
    %cst_122 = arith.constant 0.000000e+00 : f32
    %232 = vector.shape_cast %231 : vector<16x1xi1> to vector<16x1xi1>
    %233 = vector.broadcast %232 : vector<16x1xi1> to vector<16x64xi1>
    %234 = vector.broadcast %cst_122 : f32 to vector<16x64xf32>
    %235 = arith.select %233, %1, %234 : vector<16x64xi1>, vector<16x64xf32>
    %cst_123 = arith.constant dense<0.000000e+00> : vector<64xf32>
    %236 = vector.multi_reduction <add>, %235, %cst_123 [0] : vector<16x64xf32> to vector<64xf32>
    %237 = vector.shape_cast %236 : vector<64xf32> to vector<1x64xf32>
    %cst_124 = arith.constant dense<0.000000e+00> : vector<1x128xf32>
    %238 = tpu.matmul %221, %22, %cst_124 {dimension_numbers = #tpu.dot_dimension_numbers<[1], [0], [0], [1], [0, 0, 1, 1], [], []>} : vector<1x64xf32>, vector<64x128xf32>, vector<1x128xf32> -> vector<1x128xf32>
    %cst_125 = arith.constant dense<0.000000e+00> : vector<1x128xf32>
    %239 = tpu.matmul %237, %23, %cst_125 {dimension_numbers = #tpu.dot_dimension_numbers<[1], [0], [0], [1], [0, 0, 1, 1], [], []>} : vector<1x64xf32>, vector<64x128xf32>, vector<1x128xf32> -> vector<1x128xf32>
    %240 = arith.addf %238, %239 : vector<1x128xf32>
    %cst_126 = arith.constant dense<0.000000e+00> : vector<1x128xf32>
    %241 = tpu.matmul %154, %24, %cst_126 {dimension_numbers = #tpu.dot_dimension_numbers<[1], [0], [0], [1], [0, 0, 1, 1], [], []>} : vector<1x32xf32>, vector<32x128xf32>, vector<1x128xf32> -> vector<1x128xf32>
    %242 = arith.addf %240, %241 : vector<1x128xf32>
    %243 = arith.addf %242, %25 : vector<1x128xf32>
    %244 = vector.extract_strided_slice %243 {offsets = [0, 0], sizes = [1, 32], strides = [1, 1]} : vector<1x128xf32> to vector<1x32xf32>
    %245 = arith.negf %244 : vector<1x32xf32>
    %246 = math.exp %245 : vector<1x32xf32>
    %cst_127 = arith.constant 1.000000e+00 : f32
    %247 = vector.broadcast %cst_127 : f32 to vector<1x32xf32>
    %248 = arith.addf %247, %246 : vector<1x32xf32>
    %249 = arith.divf %247, %248 : vector<1x32xf32>
    %250 = vector.extract_strided_slice %243 {offsets = [0, 32], sizes = [1, 32], strides = [1, 1]} : vector<1x128xf32> to vector<1x32xf32>
    %251 = arith.negf %250 : vector<1x32xf32>
    %252 = math.exp %251 : vector<1x32xf32>
    %cst_128 = arith.constant 1.000000e+00 : f32
    %253 = vector.broadcast %cst_128 : f32 to vector<1x32xf32>
    %254 = arith.addf %253, %252 : vector<1x32xf32>
    %255 = arith.divf %253, %254 : vector<1x32xf32>
    %256 = vector.extract_strided_slice %243 {offsets = [0, 64], sizes = [1, 32], strides = [1, 1]} : vector<1x128xf32> to vector<1x32xf32>
    %257 = math.tanh %256 : vector<1x32xf32>
    %258 = vector.extract_strided_slice %243 {offsets = [0, 96], sizes = [1, 32], strides = [1, 1]} : vector<1x128xf32> to vector<1x32xf32>
    %259 = arith.negf %258 : vector<1x32xf32>
    %260 = math.exp %259 : vector<1x32xf32>
    %cst_129 = arith.constant 1.000000e+00 : f32
    %261 = vector.broadcast %cst_129 : f32 to vector<1x32xf32>
    %262 = arith.addf %261, %260 : vector<1x32xf32>
    %263 = arith.divf %261, %262 : vector<1x32xf32>
    %264 = arith.mulf %255, %150 : vector<1x32xf32>
    %265 = arith.mulf %249, %257 : vector<1x32xf32>
    %266 = arith.addf %264, %265 : vector<1x32xf32>
    %267 = math.tanh %266 : vector<1x32xf32>
    %268 = arith.mulf %263, %267 : vector<1x32xf32>
    %cst_130 = arith.constant dense<0.000000e+00> : vector<1x32xf32>
    %269 = tpu.matmul %268, %26, %cst_130 {dimension_numbers = #tpu.dot_dimension_numbers<[1], [0], [0], [1], [0, 0, 1, 1], [], []>} : vector<1x32xf32>, vector<32x32xf32>, vector<1x32xf32> -> vector<1x32xf32>
    %270 = arith.addf %269, %27 : vector<1x32xf32>
    %cst_131 = arith.constant dense<0.000000e+00> : vector<1x32xf32>
    %271 = tpu.matmul %270, %2, %cst_131 {dimension_numbers = #tpu.dot_dimension_numbers<[1], [0], [0], [1], [0, 0, 1, 1], [], []>} : vector<1x32xf32>, vector<32x32xf32>, vector<1x32xf32> -> vector<1x32xf32>
    %cst_132 = arith.constant dense<0.000000e+00> : vector<1x32xf32>
    %272 = tpu.matmul %221, %3, %cst_132 {dimension_numbers = #tpu.dot_dimension_numbers<[1], [0], [0], [1], [0, 0, 1, 1], [], []>} : vector<1x64xf32>, vector<64x32xf32>, vector<1x32xf32> -> vector<1x32xf32>
    %273 = arith.addf %271, %272 : vector<1x32xf32>
    %cst_133 = arith.constant dense<0.000000e+00> : vector<1x32xf32>
    %274 = tpu.matmul %237, %4, %cst_133 {dimension_numbers = #tpu.dot_dimension_numbers<[1], [0], [0], [1], [0, 0, 1, 1], [], []>} : vector<1x64xf32>, vector<64x32xf32>, vector<1x32xf32> -> vector<1x32xf32>
    %275 = arith.addf %273, %274 : vector<1x32xf32>
    %276 = arith.addf %275, %5 : vector<1x32xf32>
    %277 = math.tanh %276 : vector<1x32xf32>
    %cst_134 = arith.constant dense<0.000000e+00> : vector<1x64xf32>
    %278 = tpu.matmul %277, %7, %cst_134 {dimension_numbers = #tpu.dot_dimension_numbers<[1], [0], [0], [1], [0, 0, 1, 1], [], []>} : vector<1x32xf32>, vector<32x64xf32>, vector<1x64xf32> -> vector<1x64xf32>
    %279 = vector.broadcast %278 : vector<1x64xf32> to vector<16x64xf32>
    %280 = arith.addf %30, %279 : vector<16x64xf32>
    %281 = vector.extract_strided_slice %280 {offsets = [0, 0], sizes = [16, 32], strides = [1, 1]} : vector<16x64xf32> to vector<16x32xf32>
    %282 = vector.extract_strided_slice %280 {offsets = [0, 32], sizes = [16, 32], strides = [1, 1]} : vector<16x64xf32> to vector<16x32xf32>
    %283 = arith.maximumf %281, %282 : vector<16x32xf32>
    %cst_135 = arith.constant dense<0.000000e+00> : vector<16x64xf32>
    %284 = tpu.matmul %283, %9, %cst_135 {dimension_numbers = #tpu.dot_dimension_numbers<[1], [0], [0], [1], [0, 0, 1, 1], [], []>} : vector<16x32xf32>, vector<32x64xf32>, vector<16x64xf32> -> vector<16x64xf32>
    %285 = vector.broadcast %10 : vector<1x64xf32> to vector<16x64xf32>
    %286 = arith.addf %284, %285 : vector<16x64xf32>
    %287 = vector.extract_strided_slice %286 {offsets = [0, 0], sizes = [16, 32], strides = [1, 1]} : vector<16x64xf32> to vector<16x32xf32>
    %288 = vector.extract_strided_slice %286 {offsets = [0, 32], sizes = [16, 32], strides = [1, 1]} : vector<16x64xf32> to vector<16x32xf32>
    %289 = arith.maximumf %287, %288 : vector<16x32xf32>
    %cst_136 = arith.constant dense<0.000000e+00> : vector<16x2xf32>
    %290 = tpu.matmul %283, %11, %cst_136 {dimension_numbers = #tpu.dot_dimension_numbers<[1], [0], [0], [1], [0, 0, 1, 1], [], []>} : vector<16x32xf32>, vector<32x2xf32>, vector<16x2xf32> -> vector<16x2xf32>
    %cst_137 = arith.constant dense<0.000000e+00> : vector<16x2xf32>
    %291 = tpu.matmul %289, %12, %cst_137 {dimension_numbers = #tpu.dot_dimension_numbers<[1], [0], [0], [1], [0, 0, 1, 1], [], []>} : vector<16x32xf32>, vector<32x2xf32>, vector<16x2xf32> -> vector<16x2xf32>
    %292 = arith.addf %290, %291 : vector<16x2xf32>
    %293 = vector.broadcast %13 : vector<1x2xf32> to vector<16x2xf32>
    %294 = arith.addf %292, %293 : vector<16x2xf32>
    %cst_138 = arith.constant dense<0xFF800000> : vector<16xf32>
    %295 = vector.multi_reduction <maximumf>, %294, %cst_138 [1] : vector<16x2xf32> to vector<16xf32>
    %296 = vector.shape_cast %295 : vector<16xf32> to vector<16x1xf32>
    %cst_139 = arith.constant dense<0.000000e+00> : vector<1x64xf32>
    %297 = tpu.matmul %277, %15, %cst_139 {dimension_numbers = #tpu.dot_dimension_numbers<[1], [0], [0], [1], [0, 0, 1, 1], [], []>} : vector<1x32xf32>, vector<32x64xf32>, vector<1x64xf32> -> vector<1x64xf32>
    %298 = vector.broadcast %297 : vector<1x64xf32> to vector<16x64xf32>
    %299 = arith.addf %33, %298 : vector<16x64xf32>
    %300 = vector.extract_strided_slice %299 {offsets = [0, 0], sizes = [16, 32], strides = [1, 1]} : vector<16x64xf32> to vector<16x32xf32>
    %301 = vector.extract_strided_slice %299 {offsets = [0, 32], sizes = [16, 32], strides = [1, 1]} : vector<16x64xf32> to vector<16x32xf32>
    %302 = arith.maximumf %300, %301 : vector<16x32xf32>
    %cst_140 = arith.constant dense<0.000000e+00> : vector<16x64xf32>
    %303 = tpu.matmul %302, %17, %cst_140 {dimension_numbers = #tpu.dot_dimension_numbers<[1], [0], [0], [1], [0, 0, 1, 1], [], []>} : vector<16x32xf32>, vector<32x64xf32>, vector<16x64xf32> -> vector<16x64xf32>
    %304 = vector.broadcast %18 : vector<1x64xf32> to vector<16x64xf32>
    %305 = arith.addf %303, %304 : vector<16x64xf32>
    %306 = vector.extract_strided_slice %305 {offsets = [0, 0], sizes = [16, 32], strides = [1, 1]} : vector<16x64xf32> to vector<16x32xf32>
    %307 = vector.extract_strided_slice %305 {offsets = [0, 32], sizes = [16, 32], strides = [1, 1]} : vector<16x64xf32> to vector<16x32xf32>
    %308 = arith.maximumf %306, %307 : vector<16x32xf32>
    %cst_141 = arith.constant dense<0.000000e+00> : vector<16x2xf32>
    %309 = tpu.matmul %302, %19, %cst_141 {dimension_numbers = #tpu.dot_dimension_numbers<[1], [0], [0], [1], [0, 0, 1, 1], [], []>} : vector<16x32xf32>, vector<32x2xf32>, vector<16x2xf32> -> vector<16x2xf32>
    %cst_142 = arith.constant dense<0.000000e+00> : vector<16x2xf32>
    %310 = tpu.matmul %308, %20, %cst_142 {dimension_numbers = #tpu.dot_dimension_numbers<[1], [0], [0], [1], [0, 0, 1, 1], [], []>} : vector<16x32xf32>, vector<32x2xf32>, vector<16x2xf32> -> vector<16x2xf32>
    %311 = arith.addf %309, %310 : vector<16x2xf32>
    %312 = vector.broadcast %21 : vector<1x2xf32> to vector<16x2xf32>
    %313 = arith.addf %311, %312 : vector<16x2xf32>
    %cst_143 = arith.constant dense<0xFF800000> : vector<16xf32>
    %314 = vector.multi_reduction <maximumf>, %313, %cst_143 [1] : vector<16x2xf32> to vector<16xf32>
    %315 = vector.shape_cast %314 : vector<16xf32> to vector<16x1xf32>
    %c0_144 = arith.constant 0 : index
    %c2 = arith.constant 2 : index
    %c0_145 = arith.constant 0 : index
    %c0_146 = arith.constant 0 : index
    %316 = vector.load %arg28[%c0_144, %c2, %c0_145, %c0_146] : memref<1x4x16x1xf32, #tpu.memory_space<vmem>>, vector<1x1x16x1xf32>
    %317 = vector.shape_cast %316 : vector<1x1x16x1xf32> to vector<16x1xf32>
    %318 = vector.shape_cast %296 : vector<16x1xf32> to vector<1x1x16x1xf32>
    tpu.vector_store %arg28[%c0_144, %c2, %c0_145, %c0_146], %318 {strides = array<i32>} : memref<1x4x16x1xf32, #tpu.memory_space<vmem>>, vector<1x1x16x1xf32>,
    %c0_147 = arith.constant 0 : index
    %c2_148 = arith.constant 2 : index
    %c0_149 = arith.constant 0 : index
    %c0_150 = arith.constant 0 : index
    %319 = vector.load %arg29[%c0_147, %c2_148, %c0_149, %c0_150] : memref<1x4x16x1xf32, #tpu.memory_space<vmem>>, vector<1x1x16x1xf32>
    %320 = vector.shape_cast %319 : vector<1x1x16x1xf32> to vector<16x1xf32>
    %321 = vector.shape_cast %315 : vector<16x1xf32> to vector<1x1x16x1xf32>
    tpu.vector_store %arg29[%c0_147, %c2_148, %c0_149, %c0_150], %321 {strides = array<i32>} : memref<1x4x16x1xf32, #tpu.memory_space<vmem>>, vector<1x1x16x1xf32>,
    %cst_151 = arith.constant dense<0xFF800000> : vector<1xf32>
    %322 = vector.multi_reduction <maximumf>, %296, %cst_151 [0] : vector<16x1xf32> to vector<1xf32>
    %323 = vector.shape_cast %322 : vector<1xf32> to vector<1x1xf32>
    %324 = vector.broadcast %323 : vector<1x1xf32> to vector<16x1xf32>
    %325 = arith.cmpf oeq, %296, %324 : vector<16x1xf32>
    %c16_i32_152 = arith.constant 16 : i32
    %326 = vector.broadcast %c16_i32_152 : i32 to vector<16x1xi32>
    %327 = arith.select %325, %34, %326 : vector<16x1xi1>, vector<16x1xi32>
    %cst_153 = arith.constant dense<2147483647> : vector<1xi32>
    %328 = vector.multi_reduction <minsi>, %327, %cst_153 [0] : vector<16x1xi32> to vector<1xi32>
    %329 = vector.shape_cast %328 : vector<1xi32> to vector<1x1xi32>
    %330 = vector.broadcast %329 : vector<1x1xi32> to vector<16x1xi32>
    %331 = arith.cmpi eq, %34, %330 : vector<16x1xi32>
    %cst_154 = arith.constant 0.000000e+00 : f32
    %332 = vector.shape_cast %331 : vector<16x1xi1> to vector<16x1xi1>
    %333 = vector.broadcast %332 : vector<16x1xi1> to vector<16x64xi1>
    %334 = vector.broadcast %cst_154 : f32 to vector<16x64xf32>
    %335 = arith.select %333, %1, %334 : vector<16x64xi1>, vector<16x64xf32>
    %cst_155 = arith.constant dense<0.000000e+00> : vector<64xf32>
    %336 = vector.multi_reduction <add>, %335, %cst_155 [0] : vector<16x64xf32> to vector<64xf32>
    %337 = vector.shape_cast %336 : vector<64xf32> to vector<1x64xf32>
    %cst_156 = arith.constant dense<0xFF800000> : vector<1xf32>
    %338 = vector.multi_reduction <maximumf>, %315, %cst_156 [0] : vector<16x1xf32> to vector<1xf32>
    %339 = vector.shape_cast %338 : vector<1xf32> to vector<1x1xf32>
    %340 = vector.broadcast %339 : vector<1x1xf32> to vector<16x1xf32>
    %341 = arith.cmpf oeq, %315, %340 : vector<16x1xf32>
    %c16_i32_157 = arith.constant 16 : i32
    %342 = vector.broadcast %c16_i32_157 : i32 to vector<16x1xi32>
    %343 = arith.select %341, %34, %342 : vector<16x1xi1>, vector<16x1xi32>
    %cst_158 = arith.constant dense<2147483647> : vector<1xi32>
    %344 = vector.multi_reduction <minsi>, %343, %cst_158 [0] : vector<16x1xi32> to vector<1xi32>
    %345 = vector.shape_cast %344 : vector<1xi32> to vector<1x1xi32>
    %346 = vector.broadcast %345 : vector<1x1xi32> to vector<16x1xi32>
    %347 = arith.cmpi eq, %34, %346 : vector<16x1xi32>
    %cst_159 = arith.constant 0.000000e+00 : f32
    %348 = vector.shape_cast %347 : vector<16x1xi1> to vector<16x1xi1>
    %349 = vector.broadcast %348 : vector<16x1xi1> to vector<16x64xi1>
    %350 = vector.broadcast %cst_159 : f32 to vector<16x64xf32>
    %351 = arith.select %349, %1, %350 : vector<16x64xi1>, vector<16x64xf32>
    %cst_160 = arith.constant dense<0.000000e+00> : vector<64xf32>
    %352 = vector.multi_reduction <add>, %351, %cst_160 [0] : vector<16x64xf32> to vector<64xf32>
    %353 = vector.shape_cast %352 : vector<64xf32> to vector<1x64xf32>
    %cst_161 = arith.constant dense<0.000000e+00> : vector<1x128xf32>
    %354 = tpu.matmul %337, %22, %cst_161 {dimension_numbers = #tpu.dot_dimension_numbers<[1], [0], [0], [1], [0, 0, 1, 1], [], []>} : vector<1x64xf32>, vector<64x128xf32>, vector<1x128xf32> -> vector<1x128xf32>
    %cst_162 = arith.constant dense<0.000000e+00> : vector<1x128xf32>
    %355 = tpu.matmul %353, %23, %cst_162 {dimension_numbers = #tpu.dot_dimension_numbers<[1], [0], [0], [1], [0, 0, 1, 1], [], []>} : vector<1x64xf32>, vector<64x128xf32>, vector<1x128xf32> -> vector<1x128xf32>
    %356 = arith.addf %354, %355 : vector<1x128xf32>
    %cst_163 = arith.constant dense<0.000000e+00> : vector<1x128xf32>
    %357 = tpu.matmul %270, %24, %cst_163 {dimension_numbers = #tpu.dot_dimension_numbers<[1], [0], [0], [1], [0, 0, 1, 1], [], []>} : vector<1x32xf32>, vector<32x128xf32>, vector<1x128xf32> -> vector<1x128xf32>
    %358 = arith.addf %356, %357 : vector<1x128xf32>
    %359 = arith.addf %358, %25 : vector<1x128xf32>
    %360 = vector.extract_strided_slice %359 {offsets = [0, 0], sizes = [1, 32], strides = [1, 1]} : vector<1x128xf32> to vector<1x32xf32>
    %361 = arith.negf %360 : vector<1x32xf32>
    %362 = math.exp %361 : vector<1x32xf32>
    %cst_164 = arith.constant 1.000000e+00 : f32
    %363 = vector.broadcast %cst_164 : f32 to vector<1x32xf32>
    %364 = arith.addf %363, %362 : vector<1x32xf32>
    %365 = arith.divf %363, %364 : vector<1x32xf32>
    %366 = vector.extract_strided_slice %359 {offsets = [0, 32], sizes = [1, 32], strides = [1, 1]} : vector<1x128xf32> to vector<1x32xf32>
    %367 = arith.negf %366 : vector<1x32xf32>
    %368 = math.exp %367 : vector<1x32xf32>
    %cst_165 = arith.constant 1.000000e+00 : f32
    %369 = vector.broadcast %cst_165 : f32 to vector<1x32xf32>
    %370 = arith.addf %369, %368 : vector<1x32xf32>
    %371 = arith.divf %369, %370 : vector<1x32xf32>
    %372 = vector.extract_strided_slice %359 {offsets = [0, 64], sizes = [1, 32], strides = [1, 1]} : vector<1x128xf32> to vector<1x32xf32>
    %373 = math.tanh %372 : vector<1x32xf32>
    %374 = vector.extract_strided_slice %359 {offsets = [0, 96], sizes = [1, 32], strides = [1, 1]} : vector<1x128xf32> to vector<1x32xf32>
    %375 = arith.negf %374 : vector<1x32xf32>
    %376 = math.exp %375 : vector<1x32xf32>
    %cst_166 = arith.constant 1.000000e+00 : f32
    %377 = vector.broadcast %cst_166 : f32 to vector<1x32xf32>
    %378 = arith.addf %377, %376 : vector<1x32xf32>
    %379 = arith.divf %377, %378 : vector<1x32xf32>
    %380 = arith.mulf %371, %266 : vector<1x32xf32>
    %381 = arith.mulf %365, %373 : vector<1x32xf32>
    %382 = arith.addf %380, %381 : vector<1x32xf32>
    %383 = math.tanh %382 : vector<1x32xf32>
    %384 = arith.mulf %379, %383 : vector<1x32xf32>
    %cst_167 = arith.constant dense<0.000000e+00> : vector<1x32xf32>
    %385 = tpu.matmul %384, %26, %cst_167 {dimension_numbers = #tpu.dot_dimension_numbers<[1], [0], [0], [1], [0, 0, 1, 1], [], []>} : vector<1x32xf32>, vector<32x32xf32>, vector<1x32xf32> -> vector<1x32xf32>
    %386 = arith.addf %385, %27 : vector<1x32xf32>
    %cst_168 = arith.constant dense<0.000000e+00> : vector<1x32xf32>
    %387 = tpu.matmul %386, %2, %cst_168 {dimension_numbers = #tpu.dot_dimension_numbers<[1], [0], [0], [1], [0, 0, 1, 1], [], []>} : vector<1x32xf32>, vector<32x32xf32>, vector<1x32xf32> -> vector<1x32xf32>
    %cst_169 = arith.constant dense<0.000000e+00> : vector<1x32xf32>
    %388 = tpu.matmul %337, %3, %cst_169 {dimension_numbers = #tpu.dot_dimension_numbers<[1], [0], [0], [1], [0, 0, 1, 1], [], []>} : vector<1x64xf32>, vector<64x32xf32>, vector<1x32xf32> -> vector<1x32xf32>
    %389 = arith.addf %387, %388 : vector<1x32xf32>
    %cst_170 = arith.constant dense<0.000000e+00> : vector<1x32xf32>
    %390 = tpu.matmul %353, %4, %cst_170 {dimension_numbers = #tpu.dot_dimension_numbers<[1], [0], [0], [1], [0, 0, 1, 1], [], []>} : vector<1x64xf32>, vector<64x32xf32>, vector<1x32xf32> -> vector<1x32xf32>
    %391 = arith.addf %389, %390 : vector<1x32xf32>
    %392 = arith.addf %391, %5 : vector<1x32xf32>
    %393 = math.tanh %392 : vector<1x32xf32>
    %cst_171 = arith.constant dense<0.000000e+00> : vector<1x64xf32>
    %394 = tpu.matmul %393, %7, %cst_171 {dimension_numbers = #tpu.dot_dimension_numbers<[1], [0], [0], [1], [0, 0, 1, 1], [], []>} : vector<1x32xf32>, vector<32x64xf32>, vector<1x64xf32> -> vector<1x64xf32>
    %395 = vector.broadcast %394 : vector<1x64xf32> to vector<16x64xf32>
    %396 = arith.addf %30, %395 : vector<16x64xf32>
    %397 = vector.extract_strided_slice %396 {offsets = [0, 0], sizes = [16, 32], strides = [1, 1]} : vector<16x64xf32> to vector<16x32xf32>
    %398 = vector.extract_strided_slice %396 {offsets = [0, 32], sizes = [16, 32], strides = [1, 1]} : vector<16x64xf32> to vector<16x32xf32>
    %399 = arith.maximumf %397, %398 : vector<16x32xf32>
    %cst_172 = arith.constant dense<0.000000e+00> : vector<16x64xf32>
    %400 = tpu.matmul %399, %9, %cst_172 {dimension_numbers = #tpu.dot_dimension_numbers<[1], [0], [0], [1], [0, 0, 1, 1], [], []>} : vector<16x32xf32>, vector<32x64xf32>, vector<16x64xf32> -> vector<16x64xf32>
    %401 = vector.broadcast %10 : vector<1x64xf32> to vector<16x64xf32>
    %402 = arith.addf %400, %401 : vector<16x64xf32>
    %403 = vector.extract_strided_slice %402 {offsets = [0, 0], sizes = [16, 32], strides = [1, 1]} : vector<16x64xf32> to vector<16x32xf32>
    %404 = vector.extract_strided_slice %402 {offsets = [0, 32], sizes = [16, 32], strides = [1, 1]} : vector<16x64xf32> to vector<16x32xf32>
    %405 = arith.maximumf %403, %404 : vector<16x32xf32>
    %cst_173 = arith.constant dense<0.000000e+00> : vector<16x2xf32>
    %406 = tpu.matmul %399, %11, %cst_173 {dimension_numbers = #tpu.dot_dimension_numbers<[1], [0], [0], [1], [0, 0, 1, 1], [], []>} : vector<16x32xf32>, vector<32x2xf32>, vector<16x2xf32> -> vector<16x2xf32>
    %cst_174 = arith.constant dense<0.000000e+00> : vector<16x2xf32>
    %407 = tpu.matmul %405, %12, %cst_174 {dimension_numbers = #tpu.dot_dimension_numbers<[1], [0], [0], [1], [0, 0, 1, 1], [], []>} : vector<16x32xf32>, vector<32x2xf32>, vector<16x2xf32> -> vector<16x2xf32>
    %408 = arith.addf %406, %407 : vector<16x2xf32>
    %409 = vector.broadcast %13 : vector<1x2xf32> to vector<16x2xf32>
    %410 = arith.addf %408, %409 : vector<16x2xf32>
    %cst_175 = arith.constant dense<0xFF800000> : vector<16xf32>
    %411 = vector.multi_reduction <maximumf>, %410, %cst_175 [1] : vector<16x2xf32> to vector<16xf32>
    %412 = vector.shape_cast %411 : vector<16xf32> to vector<16x1xf32>
    %cst_176 = arith.constant dense<0.000000e+00> : vector<1x64xf32>
    %413 = tpu.matmul %393, %15, %cst_176 {dimension_numbers = #tpu.dot_dimension_numbers<[1], [0], [0], [1], [0, 0, 1, 1], [], []>} : vector<1x32xf32>, vector<32x64xf32>, vector<1x64xf32> -> vector<1x64xf32>
    %414 = vector.broadcast %413 : vector<1x64xf32> to vector<16x64xf32>
    %415 = arith.addf %33, %414 : vector<16x64xf32>
    %416 = vector.extract_strided_slice %415 {offsets = [0, 0], sizes = [16, 32], strides = [1, 1]} : vector<16x64xf32> to vector<16x32xf32>
    %417 = vector.extract_strided_slice %415 {offsets = [0, 32], sizes = [16, 32], strides = [1, 1]} : vector<16x64xf32> to vector<16x32xf32>
    %418 = arith.maximumf %416, %417 : vector<16x32xf32>
    %cst_177 = arith.constant dense<0.000000e+00> : vector<16x64xf32>
    %419 = tpu.matmul %418, %17, %cst_177 {dimension_numbers = #tpu.dot_dimension_numbers<[1], [0], [0], [1], [0, 0, 1, 1], [], []>} : vector<16x32xf32>, vector<32x64xf32>, vector<16x64xf32> -> vector<16x64xf32>
    %420 = vector.broadcast %18 : vector<1x64xf32> to vector<16x64xf32>
    %421 = arith.addf %419, %420 : vector<16x64xf32>
    %422 = vector.extract_strided_slice %421 {offsets = [0, 0], sizes = [16, 32], strides = [1, 1]} : vector<16x64xf32> to vector<16x32xf32>
    %423 = vector.extract_strided_slice %421 {offsets = [0, 32], sizes = [16, 32], strides = [1, 1]} : vector<16x64xf32> to vector<16x32xf32>
    %424 = arith.maximumf %422, %423 : vector<16x32xf32>
    %cst_178 = arith.constant dense<0.000000e+00> : vector<16x2xf32>
    %425 = tpu.matmul %418, %19, %cst_178 {dimension_numbers = #tpu.dot_dimension_numbers<[1], [0], [0], [1], [0, 0, 1, 1], [], []>} : vector<16x32xf32>, vector<32x2xf32>, vector<16x2xf32> -> vector<16x2xf32>
    %cst_179 = arith.constant dense<0.000000e+00> : vector<16x2xf32>
    %426 = tpu.matmul %424, %20, %cst_179 {dimension_numbers = #tpu.dot_dimension_numbers<[1], [0], [0], [1], [0, 0, 1, 1], [], []>} : vector<16x32xf32>, vector<32x2xf32>, vector<16x2xf32> -> vector<16x2xf32>
    %427 = arith.addf %425, %426 : vector<16x2xf32>
    %428 = vector.broadcast %21 : vector<1x2xf32> to vector<16x2xf32>
    %429 = arith.addf %427, %428 : vector<16x2xf32>
    %cst_180 = arith.constant dense<0xFF800000> : vector<16xf32>
    %430 = vector.multi_reduction <maximumf>, %429, %cst_180 [1] : vector<16x2xf32> to vector<16xf32>
    %431 = vector.shape_cast %430 : vector<16xf32> to vector<16x1xf32>
    %c0_181 = arith.constant 0 : index
    %c3 = arith.constant 3 : index
    %c0_182 = arith.constant 0 : index
    %c0_183 = arith.constant 0 : index
    %432 = vector.load %arg28[%c0_181, %c3, %c0_182, %c0_183] : memref<1x4x16x1xf32, #tpu.memory_space<vmem>>, vector<1x1x16x1xf32>
    %433 = vector.shape_cast %432 : vector<1x1x16x1xf32> to vector<16x1xf32>
    %434 = vector.shape_cast %412 : vector<16x1xf32> to vector<1x1x16x1xf32>
    tpu.vector_store %arg28[%c0_181, %c3, %c0_182, %c0_183], %434 {strides = array<i32>} : memref<1x4x16x1xf32, #tpu.memory_space<vmem>>, vector<1x1x16x1xf32>,
    %c0_184 = arith.constant 0 : index
    %c3_185 = arith.constant 3 : index
    %c0_186 = arith.constant 0 : index
    %c0_187 = arith.constant 0 : index
    %435 = vector.load %arg29[%c0_184, %c3_185, %c0_186, %c0_187] : memref<1x4x16x1xf32, #tpu.memory_space<vmem>>, vector<1x1x16x1xf32>
    %436 = vector.shape_cast %435 : vector<1x1x16x1xf32> to vector<16x1xf32>
    %437 = vector.shape_cast %431 : vector<16x1xf32> to vector<1x1x16x1xf32>
    tpu.vector_store %arg29[%c0_184, %c3_185, %c0_186, %c0_187], %437 {strides = array<i32>} : memref<1x4x16x1xf32, #tpu.memory_space<vmem>>, vector<1x1x16x1xf32>,
    %cst_188 = arith.constant dense<0xFF800000> : vector<1xf32>
    %438 = vector.multi_reduction <maximumf>, %412, %cst_188 [0] : vector<16x1xf32> to vector<1xf32>
    %439 = vector.shape_cast %438 : vector<1xf32> to vector<1x1xf32>
    %440 = vector.broadcast %439 : vector<1x1xf32> to vector<16x1xf32>
    %441 = arith.cmpf oeq, %412, %440 : vector<16x1xf32>
    %c16_i32_189 = arith.constant 16 : i32
    %442 = vector.broadcast %c16_i32_189 : i32 to vector<16x1xi32>
    %443 = arith.select %441, %34, %442 : vector<16x1xi1>, vector<16x1xi32>
    %cst_190 = arith.constant dense<2147483647> : vector<1xi32>
    %444 = vector.multi_reduction <minsi>, %443, %cst_190 [0] : vector<16x1xi32> to vector<1xi32>
    %445 = vector.shape_cast %444 : vector<1xi32> to vector<1x1xi32>
    %cst_191 = arith.constant dense<0xFF800000> : vector<1xf32>
    %446 = vector.multi_reduction <maximumf>, %431, %cst_191 [0] : vector<16x1xf32> to vector<1xf32>
    %447 = vector.shape_cast %446 : vector<1xf32> to vector<1x1xf32>
    %448 = vector.broadcast %447 : vector<1x1xf32> to vector<16x1xf32>
    %449 = arith.cmpf oeq, %431, %448 : vector<16x1xf32>
    %c16_i32_192 = arith.constant 16 : i32
    %450 = vector.broadcast %c16_i32_192 : i32 to vector<16x1xi32>
    %451 = arith.select %449, %34, %450 : vector<16x1xi1>, vector<16x1xi32>
    %cst_193 = arith.constant dense<2147483647> : vector<1xi32>
    %452 = vector.multi_reduction <minsi>, %451, %cst_193 [0] : vector<16x1xi32> to vector<1xi32>
    %453 = vector.shape_cast %452 : vector<1xi32> to vector<1x1xi32>
    %c0_194 = arith.constant 0 : index
    %c0_195 = arith.constant 0 : index
    %c0_196 = arith.constant 0 : index
    %454 = vector.load %arg30[%c0_194, %c0_195, %c0_196] : memref<1x1x1xi32, #tpu.memory_space<vmem>>, vector<1x1x1xi32>
    %455 = vector.shape_cast %454 : vector<1x1x1xi32> to vector<1x1xi32>
    %456 = vector.shape_cast %445 : vector<1x1xi32> to vector<1x1x1xi32>
    tpu.vector_store %arg30[%c0_194, %c0_195, %c0_196], %456 {strides = array<i32>} : memref<1x1x1xi32, #tpu.memory_space<vmem>>, vector<1x1x1xi32>,
    %c0_197 = arith.constant 0 : index
    %c0_198 = arith.constant 0 : index
    %c0_199 = arith.constant 0 : index
    %457 = vector.load %arg31[%c0_197, %c0_198, %c0_199] : memref<1x1x1xi32, #tpu.memory_space<vmem>>, vector<1x1x1xi32>
    %458 = vector.shape_cast %457 : vector<1x1x1xi32> to vector<1x1xi32>
    %459 = vector.shape_cast %453 : vector<1x1xi32> to vector<1x1x1xi32>
    tpu.vector_store %arg31[%c0_197, %c0_198, %c0_199], %459 {strides = array<i32>} : memref<1x1x1xi32, #tpu.memory_space<vmem>>, vector<1x1x1xi32>,
    return
  }
  func.func @transform_0(%arg0: i32) -> (i32, i32, i32) {
    %c0_i32 = arith.constant 0 : i32
    %c0_i32_0 = arith.constant 0 : i32
    %c0_i32_1 = arith.constant 0 : i32
    return %arg0, %c0_i32, %c0_i32_0 : i32, i32, i32
  }
  func.func @transform_1(%arg0: i32) -> (i32, i32) {
    %c0_i32 = arith.constant 0 : i32
    %c0_i32_0 = arith.constant 0 : i32
    %c0_i32_1 = arith.constant 0 : i32
    return %c0_i32, %c0_i32_0 : i32, i32
  }
  func.func @transform_2(%arg0: i32) -> (i32, i32) {
    %c0_i32 = arith.constant 0 : i32
    %c0_i32_0 = arith.constant 0 : i32
    %c0_i32_1 = arith.constant 0 : i32
    return %c0_i32, %c0_i32_0 : i32, i32
  }
  func.func @transform_3(%arg0: i32) -> (i32, i32) {
    %c0_i32 = arith.constant 0 : i32
    %c0_i32_0 = arith.constant 0 : i32
    %c0_i32_1 = arith.constant 0 : i32
    return %c0_i32, %c0_i32_0 : i32, i32
  }
  func.func @transform_4(%arg0: i32) -> (i32, i32) {
    %c0_i32 = arith.constant 0 : i32
    %c0_i32_0 = arith.constant 0 : i32
    %c0_i32_1 = arith.constant 0 : i32
    return %c0_i32, %c0_i32_0 : i32, i32
  }
  func.func @transform_5(%arg0: i32) -> (i32, i32) {
    %c0_i32 = arith.constant 0 : i32
    %c0_i32_0 = arith.constant 0 : i32
    %c0_i32_1 = arith.constant 0 : i32
    return %c0_i32, %c0_i32_0 : i32, i32
  }
  func.func @transform_6(%arg0: i32) -> (i32, i32) {
    %c0_i32 = arith.constant 0 : i32
    %c0_i32_0 = arith.constant 0 : i32
    %c0_i32_1 = arith.constant 0 : i32
    return %c0_i32, %c0_i32_0 : i32, i32
  }
  func.func @transform_7(%arg0: i32) -> (i32, i32) {
    %c0_i32 = arith.constant 0 : i32
    %c0_i32_0 = arith.constant 0 : i32
    %c0_i32_1 = arith.constant 0 : i32
    return %c0_i32, %c0_i32_0 : i32, i32
  }
  func.func @transform_8(%arg0: i32) -> (i32, i32) {
    %c0_i32 = arith.constant 0 : i32
    %c0_i32_0 = arith.constant 0 : i32
    %c0_i32_1 = arith.constant 0 : i32
    return %c0_i32, %c0_i32_0 : i32, i32
  }
  func.func @transform_9(%arg0: i32) -> (i32, i32) {
    %c0_i32 = arith.constant 0 : i32
    %c0_i32_0 = arith.constant 0 : i32
    %c0_i32_1 = arith.constant 0 : i32
    return %c0_i32, %c0_i32_0 : i32, i32
  }
  func.func @transform_10(%arg0: i32) -> (i32, i32) {
    %c0_i32 = arith.constant 0 : i32
    %c0_i32_0 = arith.constant 0 : i32
    %c0_i32_1 = arith.constant 0 : i32
    return %c0_i32, %c0_i32_0 : i32, i32
  }
  func.func @transform_11(%arg0: i32) -> (i32, i32) {
    %c0_i32 = arith.constant 0 : i32
    %c0_i32_0 = arith.constant 0 : i32
    %c0_i32_1 = arith.constant 0 : i32
    return %c0_i32, %c0_i32_0 : i32, i32
  }
  func.func @transform_12(%arg0: i32) -> (i32, i32) {
    %c0_i32 = arith.constant 0 : i32
    %c0_i32_0 = arith.constant 0 : i32
    %c0_i32_1 = arith.constant 0 : i32
    return %c0_i32, %c0_i32_0 : i32, i32
  }
  func.func @transform_13(%arg0: i32) -> (i32, i32) {
    %c0_i32 = arith.constant 0 : i32
    %c0_i32_0 = arith.constant 0 : i32
    %c0_i32_1 = arith.constant 0 : i32
    return %c0_i32, %c0_i32_0 : i32, i32
  }
  func.func @transform_14(%arg0: i32) -> (i32, i32) {
    %c0_i32 = arith.constant 0 : i32
    %c0_i32_0 = arith.constant 0 : i32
    %c0_i32_1 = arith.constant 0 : i32
    return %c0_i32, %c0_i32_0 : i32, i32
  }
  func.func @transform_15(%arg0: i32) -> (i32, i32) {
    %c0_i32 = arith.constant 0 : i32
    %c0_i32_0 = arith.constant 0 : i32
    %c0_i32_1 = arith.constant 0 : i32
    return %c0_i32, %c0_i32_0 : i32, i32
  }
  func.func @transform_16(%arg0: i32) -> (i32, i32) {
    %c0_i32 = arith.constant 0 : i32
    %c0_i32_0 = arith.constant 0 : i32
    %c0_i32_1 = arith.constant 0 : i32
    return %c0_i32, %c0_i32_0 : i32, i32
  }
  func.func @transform_17(%arg0: i32) -> (i32, i32) {
    %c0_i32 = arith.constant 0 : i32
    %c0_i32_0 = arith.constant 0 : i32
    %c0_i32_1 = arith.constant 0 : i32
    return %c0_i32, %c0_i32_0 : i32, i32
  }
  func.func @transform_18(%arg0: i32) -> (i32, i32) {
    %c0_i32 = arith.constant 0 : i32
    %c0_i32_0 = arith.constant 0 : i32
    %c0_i32_1 = arith.constant 0 : i32
    return %c0_i32, %c0_i32_0 : i32, i32
  }
  func.func @transform_19(%arg0: i32) -> (i32, i32) {
    %c0_i32 = arith.constant 0 : i32
    %c0_i32_0 = arith.constant 0 : i32
    %c0_i32_1 = arith.constant 0 : i32
    return %c0_i32, %c0_i32_0 : i32, i32
  }
  func.func @transform_20(%arg0: i32) -> (i32, i32) {
    %c0_i32 = arith.constant 0 : i32
    %c0_i32_0 = arith.constant 0 : i32
    %c0_i32_1 = arith.constant 0 : i32
    return %c0_i32, %c0_i32_0 : i32, i32
  }
  func.func @transform_21(%arg0: i32) -> (i32, i32) {
    %c0_i32 = arith.constant 0 : i32
    %c0_i32_0 = arith.constant 0 : i32
    %c0_i32_1 = arith.constant 0 : i32
    return %c0_i32, %c0_i32_0 : i32, i32
  }
  func.func @transform_22(%arg0: i32) -> (i32, i32) {
    %c0_i32 = arith.constant 0 : i32
    %c0_i32_0 = arith.constant 0 : i32
    %c0_i32_1 = arith.constant 0 : i32
    return %c0_i32, %c0_i32_0 : i32, i32
  }
  func.func @transform_23(%arg0: i32) -> (i32, i32) {
    %c0_i32 = arith.constant 0 : i32
    %c0_i32_0 = arith.constant 0 : i32
    %c0_i32_1 = arith.constant 0 : i32
    return %c0_i32, %c0_i32_0 : i32, i32
  }
  func.func @transform_24(%arg0: i32) -> (i32, i32) {
    %c0_i32 = arith.constant 0 : i32
    %c0_i32_0 = arith.constant 0 : i32
    %c0_i32_1 = arith.constant 0 : i32
    return %c0_i32, %c0_i32_0 : i32, i32
  }
  func.func @transform_25(%arg0: i32) -> (i32, i32) {
    %c0_i32 = arith.constant 0 : i32
    %c0_i32_0 = arith.constant 0 : i32
    %c0_i32_1 = arith.constant 0 : i32
    return %c0_i32, %c0_i32_0 : i32, i32
  }
  func.func @transform_26(%arg0: i32) -> (i32, i32) {
    %c0_i32 = arith.constant 0 : i32
    %c0_i32_0 = arith.constant 0 : i32
    %c0_i32_1 = arith.constant 0 : i32
    return %c0_i32, %c0_i32_0 : i32, i32
  }
  func.func @transform_27(%arg0: i32) -> (i32, i32, i32, i32) {
    %c0_i32 = arith.constant 0 : i32
    %c0_i32_0 = arith.constant 0 : i32
    %c0_i32_1 = arith.constant 0 : i32
    %c0_i32_2 = arith.constant 0 : i32
    return %arg0, %c0_i32, %c0_i32_0, %c0_i32_1 : i32, i32, i32, i32
  }
  func.func @transform_28(%arg0: i32) -> (i32, i32, i32, i32) {
    %c0_i32 = arith.constant 0 : i32
    %c0_i32_0 = arith.constant 0 : i32
    %c0_i32_1 = arith.constant 0 : i32
    %c0_i32_2 = arith.constant 0 : i32
    return %arg0, %c0_i32, %c0_i32_0, %c0_i32_1 : i32, i32, i32, i32
  }
  func.func @transform_29(%arg0: i32) -> (i32, i32, i32) {
    %c0_i32 = arith.constant 0 : i32
    %c0_i32_0 = arith.constant 0 : i32
    %c0_i32_1 = arith.constant 0 : i32
    return %arg0, %c0_i32, %c0_i32_0 : i32, i32, i32
  }
  func.func @transform_30(%arg0: i32) -> (i32, i32, i32) {
    %c0_i32 = arith.constant 0 : i32
    %c0_i32_0 = arith.constant 0 : i32
    %c0_i32_1 = arith.constant 0 : i32
    return %arg0, %c0_i32, %c0_i32_0 : i32, i32, i32
  }
}

</mosaic_0001>

<llo_original>
// kernel: tpu_custom_call.1
$region0: #{tpu_custom_call.1}
  #allocation0 [shape = 'u32[]', space=smem, size = 0x4, offset = 0x4, fixed_abs, tag = 'smem constant byte address 0x4 - core index']
  #allocation1 [shape = 'u32[144,128]{1,0:T(1,128)}', space=vmem, size = 0x12000, scoped, tag = 'internal scratch']
  %s0 = inlined_call_operand.smem [shape: u32[31], index: -1, kind: input, shape index: {}]
  %s1 = sld [smem:[%s0]]
  %s2 = scalar_lea.smem %s0, 1
  %s3 = sld [smem:[%s2]]
  %s4 = scalar_lea.smem %s0, 2
  %s5 = sld [smem:[%s4]]
  %s6 = scalar_lea.smem %s0, 3
  %s7 = sld [smem:[%s6]]
  %s8 = scalar_lea.smem %s0, 4
  %s9 = sld [smem:[%s8]]
  %s10 = scalar_lea.smem %s0, 5
  %s11 = sld [smem:[%s10]]
  %s12 = scalar_lea.smem %s0, 6
  %s13 = sld [smem:[%s12]]
  %s14 = scalar_lea.smem %s0, 7
  %s15 = sld [smem:[%s14]]
  %s16 = scalar_lea.smem %s0, 8
  %s17 = sld [smem:[%s16]]
  %s18 = scalar_lea.smem %s0, 9
  %s19 = sld [smem:[%s18]]
  %s20 = scalar_lea.smem %s0, 10
  %s21 = sld [smem:[%s20]]
  %s22 = scalar_lea.smem %s0, 11
  %s23 = sld [smem:[%s22]]
  %s24 = scalar_lea.smem %s0, 12
  %s25 = sld [smem:[%s24]]
  %s26 = scalar_lea.smem %s0, 13
  %s27 = sld [smem:[%s26]]
  %s28 = scalar_lea.smem %s0, 14
  %s29 = sld [smem:[%s28]]
  %s30 = scalar_lea.smem %s0, 15
  %s31 = sld [smem:[%s30]]
  %s32 = scalar_lea.smem %s0, 16
  %s33 = sld [smem:[%s32]]
  %s34 = scalar_lea.smem %s0, 17
  %s35 = sld [smem:[%s34]]
  %s36 = scalar_lea.smem %s0, 18
  %s37 = sld [smem:[%s36]]
  %s38 = scalar_lea.smem %s0, 19
  %s39 = sld [smem:[%s38]]
  %s40 = scalar_lea.smem %s0, 20
  %s41 = sld [smem:[%s40]]
  %s42 = scalar_lea.smem %s0, 21
  %s43 = sld [smem:[%s42]]
  %s44 = scalar_lea.smem %s0, 22
  %s45 = sld [smem:[%s44]]
  %s46 = scalar_lea.smem %s0, 23
  %s47 = sld [smem:[%s46]]
  %s48 = scalar_lea.smem %s0, 24
  %s49 = sld [smem:[%s48]]
  %s50 = scalar_lea.smem %s0, 25
  %s51 = sld [smem:[%s50]]
  %s52 = scalar_lea.smem %s0, 26
  %s53 = sld [smem:[%s52]]
  %s54 = scalar_lea.smem %s0, 27
  %s55 = sld [smem:[%s54]]
  %s56 = scalar_lea.smem %s0, 28
  %s57 = sld [smem:[%s56]]
  %s58 = scalar_lea.smem %s0, 29
  %s59 = sld [smem:[%s58]]
  %s60 = scalar_lea.smem %s0, 30
  %s61 = sld [smem:[%s60]]
  %62 = xla_tuple %s55, %s57, %s59, %s61
  %s63 = sld [smem:[#allocation0]]
  $region217: #{tpu_custom_call.1} parent=0
    _
  %s65 = ssub.s32 1, %s63
  %s66 = scalar_select 0, %s65, %s63
  $region1: #{tpu_custom_call.1} parent=0
    #allocation2 [shape = 'u8[16384]{0}', space=vmem, size = 0x4000, scoped, tag = 'input window, operand 0']
    #allocation3 [shape = 's32[2]{0}', space=sflag, size = 0x8, scoped, tag = 'scoped memory for tpu_custom_call.1']
    #allocation4 [shape = 'u8[16384]{0}', space=vmem, size = 0x4000, scoped, tag = 'input window, operand 1, single buffered']
    #allocation5 [shape = 's32[1]{0}', space=sflag, size = 0x4, scoped, tag = 'scoped memory for tpu_custom_call.1']
    #allocation6 [shape = 'u8[512]{0}', space=vmem, size = 0x400, scoped, tag = 'input window, operand 4, single buffered']
    #allocation7 [shape = 'u8[16384]{0}', space=vmem, size = 0x4000, scoped, tag = 'input window, operand 6, single buffered']
    #allocation8 [shape = 's32[1]{0}', space=sflag, size = 0x4, scoped, tag = 'scoped memory for tpu_custom_call.1']
    #allocation9 [shape = 'u8[512]{0}', space=vmem, size = 0x400, scoped, tag = 'input window, operand 7, single buffered']
    #allocation10 [shape = 'u8[512]{0}', space=vmem, size = 0x400, scoped, tag = 'input window, operand 9, single buffered']
    #allocation11 [shape = 's32[1]{0}', space=sflag, size = 0x4, scoped, tag = 'scoped memory for tpu_custom_call.1']
    #allocation12 [shape = 'u8[512]{0}', space=vmem, size = 0x400, scoped, tag = 'input window, operand 12, single buffered']
    #allocation13 [shape = 'u8[16384]{0}', space=vmem, size = 0x4000, scoped, tag = 'input window, operand 14, single buffered']
    #allocation14 [shape = 's32[1]{0}', space=sflag, size = 0x4, scoped, tag = 'scoped memory for tpu_custom_call.1']
    #allocation15 [shape = 'u8[512]{0}', space=vmem, size = 0x400, scoped, tag = 'input window, operand 15, single buffered']
    #allocation16 [shape = 'u8[512]{0}', space=vmem, size = 0x400, scoped, tag = 'input window, operand 17, single buffered']
    #allocation17 [shape = 's32[1]{0}', space=sflag, size = 0x4, scoped, tag = 'scoped memory for tpu_custom_call.1']
    #allocation18 [shape = 'u8[512]{0}', space=vmem, size = 0x400, scoped, tag = 'input window, operand 20, single buffered']
    #allocation19 [shape = 'u8[16384]{0}', space=vmem, size = 0x4000, scoped, tag = 'input window, operand 23, single buffered']
    #allocation20 [shape = 's32[1]{0}', space=sflag, size = 0x4, scoped, tag = 'scoped memory for tpu_custom_call.1']
    #allocation21 [shape = 'u8[512]{0}', space=vmem, size = 0x400, scoped, tag = 'input window, operand 24, single buffered']
    %67 = vsyncpa [#allocation3], 0
    %s68 = scalar_lea.sflag [#allocation3], 1
    %69 = vsyncpa %s68, 0
    %70 = vsyncpa [#allocation5], 0
    %71 = vsyncpa [#allocation8], 0
    %72 = vsyncpa [#allocation11], 0
    %73 = vsyncpa [#allocation14], 0
    %74 = vsyncpa [#allocation17], 0
    %75 = vsyncpa [#allocation20], 0
    loop: start=0, step=1, limit=4
    $region2: #{tpu_custom_call.1} parent=1 // loop_pre_header
      _
    $region3: #{tpu_custom_call.1} parent=1 // loop_header
      %s77 = sphi 0, %s81
      %p78 = scmp.ge.s32.totalorder %s77, 4
      %s87 = sphi 0, %s89
      %s90 = sphi 0, %s87
      %s91 = sphi 0, %s90
      %s107 = sphi 0, %s91
      %s111 = sphi 0, %s111
      %s113 = sphi 0, %s111
      %s114 = sphi 0, %s113
      %s128 = sphi 0, %s114
      %s132 = sphi 0, %s132
      %s134 = sphi 0, %s132
      %s135 = sphi 0, %s134
      %s149 = sphi 0, %s135
      %s153 = sphi 0, %s153
      %s155 = sphi 0, %s153
      %s156 = sphi 0, %s155
      %s170 = sphi 0, %s156
      %s174 = sphi 0, %s174
      %s176 = sphi 0, %s174
      %s177 = sphi 0, %s176
      %s191 = sphi 0, %s177
      %s195 = sphi 0, %s195
      %s197 = sphi 0, %s195
      %s198 = sphi 0, %s197
      %s212 = sphi 0, %s198
      %s216 = sphi 0, %s216
      %s218 = sphi 0, %s216
      %s219 = sphi 0, %s218
      %s233 = sphi 0, %s219
      %s237 = sphi 0, %s237
      %s239 = sphi 0, %s237
      %s240 = sphi 0, %s239
      %s254 = sphi 0, %s240
      %s258 = sphi 0, %s258
      %s260 = sphi 0, %s258
      %s261 = sphi 0, %s260
      %s275 = sphi 0, %s261
      %s279 = sphi 0, %s279
      %s281 = sphi 0, %s279
      %s282 = sphi 0, %s281
      %s296 = sphi 0, %s282
      %s300 = sphi 0, %s300
      %s302 = sphi 0, %s300
      %s303 = sphi 0, %s302
      %s317 = sphi 0, %s303
      %s321 = sphi 0, %s321
      %s323 = sphi 0, %s321
      %s324 = sphi 0, %s323
      %s338 = sphi 0, %s324
      %s342 = sphi 0, %s342
      %s344 = sphi 0, %s342
      %s345 = sphi 0, %s344
      %s359 = sphi 0, %s345
      %s363 = sphi 0, %s363
      %s365 = sphi 0, %s363
      %s366 = sphi 0, %s365
      %s380 = sphi 0, %s366
      %s384 = sphi 0, %s384
      %s386 = sphi 0, %s384
      %s387 = sphi 0, %s386
      %s401 = sphi 0, %s387
      %s405 = sphi 0, %s405
      %s407 = sphi 0, %s405
      %s408 = sphi 0, %s407
      %s422 = sphi 0, %s408
      %s426 = sphi 0, %s426
      %s428 = sphi 0, %s426
      %s429 = sphi 0, %s428
      %s443 = sphi 0, %s429
      %s447 = sphi 0, %s447
      %s449 = sphi 0, %s447
      %s450 = sphi 0, %s449
      %s464 = sphi 0, %s450
      %s468 = sphi 0, %s468
      %s470 = sphi 0, %s468
      %s471 = sphi 0, %s470
      %s485 = sphi 0, %s471
      %s489 = sphi 0, %s489
      %s491 = sphi 0, %s489
      %s492 = sphi 0, %s491
      %s506 = sphi 0, %s492
      %s510 = sphi 0, %s510
      %s512 = sphi 0, %s510
      %s513 = sphi 0, %s512
      %s527 = sphi 0, %s513
      %s531 = sphi 0, %s531
      %s533 = sphi 0, %s531
      %s534 = sphi 0, %s533
      %s548 = sphi 0, %s534
      %s552 = sphi 0, %s552
      %s554 = sphi 0, %s552
      %s555 = sphi 0, %s554
      %s569 = sphi 0, %s555
      %s573 = sphi 0, %s573
      %s575 = sphi 0, %s573
      %s576 = sphi 0, %s575
      %s590 = sphi 0, %s576
      %s594 = sphi 0, %s594
      %s596 = sphi 0, %s594
      %s597 = sphi 0, %s596
      %s611 = sphi 0, %s597
      %s615 = sphi 0, %s615
      %s617 = sphi 0, %s615
      %s618 = sphi 0, %s617
      %s632 = sphi 0, %s618
      %s636 = sphi 0, %s636
      %s638 = sphi 0, %s636
      %s639 = sphi 0, %s638
      %s653 = sphi 0, %s639
      %s659 = sphi 0, %s661
      %s662 = sphi 0, %s659
      %s663 = sphi 0, %s662
      %s679 = sphi 0, %s663
      %s685 = sphi 0, %s687
      %s688 = sphi 0, %s685
      %s689 = sphi 0, %s688
      %s705 = sphi 0, %s689
      %s711 = sphi 0, %s713
      %s714 = sphi 0, %s711
      %s715 = sphi 0, %s714
      %s731 = sphi 0, %s715
      %s737 = sphi 0, %s739
      %s740 = sphi 0, %s737
      %s741 = sphi 0, %s740
      %s757 = sphi 0, %s741
    $region4: #{tpu_custom_call.1} parent=1 // loop_header_branch
      %80 = sbr.rel (%p78) target = $region8
    $region5: #{tpu_custom_call.1} parent=1 // loop_body
      %s82 = ssub.s32 %s77, 1
      %s83 = ssub.s32 %s77, 2
      %s84 = sadd.s32 %s77, 1
      %s85 = ssub.s32 %s77, %s84
      %p86 = scmp.eq.s32.totalorder %s85, 0
      %s88 = sadd.s32 %s87, 1
      %s89 = scalar_select %p86, %s87, %s88
      %p92 = pneg %p86
      %p93 = scmp.eq.s32.totalorder %s77, 1
      %p94 = por %p92, %p93
      %p95 = scmp.ne.s32.totalorder %s87, %s90
      %p96 = scmp.eq.s32.totalorder %s77, 0
      %p97 = por %p95, %p96
      %p98 = scmp.ne.s32.totalorder %s87, %s90
      %p99 = scmp.eq.s32.totalorder %s82, 1
      %p100 = por %p98, %p99
      %p101 = scmp.ne.s32.totalorder %s90, %s91
      %p102 = scmp.eq.s32.totalorder %s82, 0
      %p103 = por %p101, %p102
      %p104 = scmp.ne.s32.totalorder %s90, %s91
      %p105 = scmp.eq.s32.totalorder %s83, 1
      %p106 = por %p104, %p105
      %p108 = scmp.ne.s32.totalorder %s91, %s107
      %p109 = scmp.eq.s32.totalorder %s83, 0
      %p110 = por %p108, %p109
      %s112 = sadd.s32 %s111, 1
      %p115 = scmp.eq.s32.totalorder %s77, 1
      %p116 = scmp.ne.s32.totalorder %s111, %s113
      %p117 = scmp.eq.s32.totalorder %s77, 0
      %p118 = por %p116, %p117
      %p119 = scmp.ne.s32.totalorder %s111, %s113
      %p120 = scmp.eq.s32.totalorder %s82, 1
      %p121 = por %p119, %p120
      %p122 = scmp.ne.s32.totalorder %s113, %s114
      %p123 = scmp.eq.s32.totalorder %s82, 0
      %p124 = por %p122, %p123
      %p125 = scmp.ne.s32.totalorder %s113, %s114
      %p126 = scmp.eq.s32.totalorder %s83, 1
      %p127 = por %p125, %p126
      %p129 = scmp.ne.s32.totalorder %s114, %s128
      %p130 = scmp.eq.s32.totalorder %s83, 0
      %p131 = por %p129, %p130
      %s133 = sadd.s32 %s132, 1
      %p136 = scmp.eq.s32.totalorder %s77, 1
      %p137 = scmp.ne.s32.totalorder %s132, %s134
      %p138 = scmp.eq.s32.totalorder %s77, 0
      %p139 = por %p137, %p138
      %p140 = scmp.ne.s32.totalorder %s132, %s134
      %p141 = scmp.eq.s32.totalorder %s82, 1
      %p142 = por %p140, %p141
      %p143 = scmp.ne.s32.totalorder %s134, %s135
      %p144 = scmp.eq.s32.totalorder %s82, 0
      %p145 = por %p143, %p144
      %p146 = scmp.ne.s32.totalorder %s134, %s135
      %p147 = scmp.eq.s32.totalorder %s83, 1
      %p148 = por %p146, %p147
      %p150 = scmp.ne.s32.totalorder %s135, %s149
      %p151 = scmp.eq.s32.totalorder %s83, 0
      %p152 = por %p150, %p151
      %s154 = sadd.s32 %s153, 1
      %p157 = scmp.eq.s32.totalorder %s77, 1
      %p158 = scmp.ne.s32.totalorder %s153, %s155
      %p159 = scmp.eq.s32.totalorder %s77, 0
      %p160 = por %p158, %p159
      %p161 = scmp.ne.s32.totalorder %s153, %s155
      %p162 = scmp.eq.s32.totalorder %s82, 1
      %p163 = por %p161, %p162
      %p164 = scmp.ne.s32.totalorder %s155, %s156
      %p165 = scmp.eq.s32.totalorder %s82, 0
      %p166 = por %p164, %p165
      %p167 = scmp.ne.s32.totalorder %s155, %s156
      %p168 = scmp.eq.s32.totalorder %s83, 1
      %p169 = por %p167, %p168
      %p171 = scmp.ne.s32.totalorder %s156, %s170
      %p172 = scmp.eq.s32.totalorder %s83, 0
      %p173 = por %p171, %p172
      %s175 = sadd.s32 %s174, 1
      %p178 = scmp.eq.s32.totalorder %s77, 1
      %p179 = scmp.ne.s32.totalorder %s174, %s176
      %p180 = scmp.eq.s32.totalorder %s77, 0
      %p181 = por %p179, %p180
      %p182 = scmp.ne.s32.totalorder %s174, %s176
      %p183 = scmp.eq.s32.totalorder %s82, 1
      %p184 = por %p182, %p183
      %p185 = scmp.ne.s32.totalorder %s176, %s177
      %p186 = scmp.eq.s32.totalorder %s82, 0
      %p187 = por %p185, %p186
      %p188 = scmp.ne.s32.totalorder %s176, %s177
      %p189 = scmp.eq.s32.totalorder %s83, 1
      %p190 = por %p188, %p189
      %p192 = scmp.ne.s32.totalorder %s177, %s191
      %p193 = scmp.eq.s32.totalorder %s83, 0
      %p194 = por %p192, %p193
      %s196 = sadd.s32 %s195, 1
      %p199 = scmp.eq.s32.totalorder %s77, 1
      %p200 = scmp.ne.s32.totalorder %s195, %s197
      %p201 = scmp.eq.s32.totalorder %s77, 0
      %p202 = por %p200, %p201
      %p203 = scmp.ne.s32.totalorder %s195, %s197
      %p204 = scmp.eq.s32.totalorder %s82, 1
      %p205 = por %p203, %p204
      %p206 = scmp.ne.s32.totalorder %s197, %s198
      %p207 = scmp.eq.s32.totalorder %s82, 0
      %p208 = por %p206, %p207
      %p209 = scmp.ne.s32.totalorder %s197, %s198
      %p210 = scmp.eq.s32.totalorder %s83, 1
      %p211 = por %p209, %p210
      %p213 = scmp.ne.s32.totalorder %s198, %s212
      %p214 = scmp.eq.s32.totalorder %s83, 0
      %p215 = por %p213, %p214
      %s217 = sadd.s32 %s216, 1
      %p220 = scmp.eq.s32.totalorder %s77, 1
      %p221 = scmp.ne.s32.totalorder %s216, %s218
      %p222 = scmp.eq.s32.totalorder %s77, 0
      %p223 = por %p221, %p222
      %p224 = scmp.ne.s32.totalorder %s216, %s218
      %p225 = scmp.eq.s32.totalorder %s82, 1
      %p226 = por %p224, %p225
      %p227 = scmp.ne.s32.totalorder %s218, %s219
      %p228 = scmp.eq.s32.totalorder %s82, 0
      %p229 = por %p227, %p228
      %p230 = scmp.ne.s32.totalorder %s218, %s219
      %p231 = scmp.eq.s32.totalorder %s83, 1
      %p232 = por %p230, %p231
      %p234 = scmp.ne.s32.totalorder %s219, %s233
      %p235 = scmp.eq.s32.totalorder %s83, 0
      %p236 = por %p234, %p235
      %s238 = sadd.s32 %s237, 1
      %p241 = scmp.eq.s32.totalorder %s77, 1
      %p242 = scmp.ne.s32.totalorder %s237, %s239
      %p243 = scmp.eq.s32.totalorder %s77, 0
      %p244 = por %p242, %p243
      %p245 = scmp.ne.s32.totalorder %s237, %s239
      %p246 = scmp.eq.s32.totalorder %s82, 1
      %p247 = por %p245, %p246
      %p248 = scmp.ne.s32.totalorder %s239, %s240
      %p249 = scmp.eq.s32.totalorder %s82, 0
      %p250 = por %p248, %p249
      %p251 = scmp.ne.s32.totalorder %s239, %s240
      %p252 = scmp.eq.s32.totalorder %s83, 1
      %p253 = por %p251, %p252
      %p255 = scmp.ne.s32.totalorder %s240, %s254
      %p256 = scmp.eq.s32.totalorder %s83, 0
      %p257 = por %p255, %p256
      %s259 = sadd.s32 %s258, 1
      %p262 = scmp.eq.s32.totalorder %s77, 1
      %p263 = scmp.ne.s32.totalorder %s258, %s260
      %p264 = scmp.eq.s32.totalorder %s77, 0
      %p265 = por %p263, %p264
      %p266 = scmp.ne.s32.totalorder %s258, %s260
      %p267 = scmp.eq.s32.totalorder %s82, 1
      %p268 = por %p266, %p267
      %p269 = scmp.ne.s32.totalorder %s260, %s261
      %p270 = scmp.eq.s32.totalorder %s82, 0
      %p271 = por %p269, %p270
      %p272 = scmp.ne.s32.totalorder %s260, %s261
      %p273 = scmp.eq.s32.totalorder %s83, 1
      %p274 = por %p272, %p273
      %p276 = scmp.ne.s32.totalorder %s261, %s275
      %p277 = scmp.eq.s32.totalorder %s83, 0
      %p278 = por %p276, %p277
      %s280 = sadd.s32 %s279, 1
      %p283 = scmp.eq.s32.totalorder %s77, 1
      %p284 = scmp.ne.s32.totalorder %s279, %s281
      %p285 = scmp.eq.s32.totalorder %s77, 0
      %p286 = por %p284, %p285
      %p287 = scmp.ne.s32.totalorder %s279, %s281
      %p288 = scmp.eq.s32.totalorder %s82, 1
      %p289 = por %p287, %p288
      %p290 = scmp.ne.s32.totalorder %s281, %s282
      %p291 = scmp.eq.s32.totalorder %s82, 0
      %p292 = por %p290, %p291
      %p293 = scmp.ne.s32.totalorder %s281, %s282
      %p294 = scmp.eq.s32.totalorder %s83, 1
      %p295 = por %p293, %p294
      %p297 = scmp.ne.s32.totalorder %s282, %s296
      %p298 = scmp.eq.s32.totalorder %s83, 0
      %p299 = por %p297, %p298
      %s301 = sadd.s32 %s300, 1
      %p304 = scmp.eq.s32.totalorder %s77, 1
      %p305 = scmp.ne.s32.totalorder %s300, %s302
      %p306 = scmp.eq.s32.totalorder %s77, 0
      %p307 = por %p305, %p306
      %p308 = scmp.ne.s32.totalorder %s300, %s302
      %p309 = scmp.eq.s32.totalorder %s82, 1
      %p310 = por %p308, %p309
      %p311 = scmp.ne.s32.totalorder %s302, %s303
      %p312 = scmp.eq.s32.totalorder %s82, 0
      %p313 = por %p311, %p312
      %p314 = scmp.ne.s32.totalorder %s302, %s303
      %p315 = scmp.eq.s32.totalorder %s83, 1
      %p316 = por %p314, %p315
      %p318 = scmp.ne.s32.totalorder %s303, %s317
      %p319 = scmp.eq.s32.totalorder %s83, 0
      %p320 = por %p318, %p319
      %s322 = sadd.s32 %s321, 1
      %p325 = scmp.eq.s32.totalorder %s77, 1
      %p326 = scmp.ne.s32.totalorder %s321, %s323
      %p327 = scmp.eq.s32.totalorder %s77, 0
      %p328 = por %p326, %p327
      %p329 = scmp.ne.s32.totalorder %s321, %s323
      %p330 = scmp.eq.s32.totalorder %s82, 1
      %p331 = por %p329, %p330
      %p332 = scmp.ne.s32.totalorder %s323, %s324
      %p333 = scmp.eq.s32.totalorder %s82, 0
      %p334 = por %p332, %p333
      %p335 = scmp.ne.s32.totalorder %s323, %s324
      %p336 = scmp.eq.s32.totalorder %s83, 1
      %p337 = por %p335, %p336
      %p339 = scmp.ne.s32.totalorder %s324, %s338
      %p340 = scmp.eq.s32.totalorder %s83, 0
      %p341 = por %p339, %p340
      %s343 = sadd.s32 %s342, 1
      %p346 = scmp.eq.s32.totalorder %s77, 1
      %p347 = scmp.ne.s32.totalorder %s342, %s344
      %p348 = scmp.eq.s32.totalorder %s77, 0
      %p349 = por %p347, %p348
      %p350 = scmp.ne.s32.totalorder %s342, %s344
      %p351 = scmp.eq.s32.totalorder %s82, 1
      %p352 = por %p350, %p351
      %p353 = scmp.ne.s32.totalorder %s344, %s345
      %p354 = scmp.eq.s32.totalorder %s82, 0
      %p355 = por %p353, %p354
      %p356 = scmp.ne.s32.totalorder %s344, %s345
      %p357 = scmp.eq.s32.totalorder %s83, 1
      %p358 = por %p356, %p357
      %p360 = scmp.ne.s32.totalorder %s345, %s359
      %p361 = scmp.eq.s32.totalorder %s83, 0
      %p362 = por %p360, %p361
      %s364 = sadd.s32 %s363, 1
      %p367 = scmp.eq.s32.totalorder %s77, 1
      %p368 = scmp.ne.s32.totalorder %s363, %s365
      %p369 = scmp.eq.s32.totalorder %s77, 0
      %p370 = por %p368, %p369
      %p371 = scmp.ne.s32.totalorder %s363, %s365
      %p372 = scmp.eq.s32.totalorder %s82, 1
      %p373 = por %p371, %p372
      %p374 = scmp.ne.s32.totalorder %s365, %s366
      %p375 = scmp.eq.s32.totalorder %s82, 0
      %p376 = por %p374, %p375
      %p377 = scmp.ne.s32.totalorder %s365, %s366
      %p378 = scmp.eq.s32.totalorder %s83, 1
      %p379 = por %p377, %p378
      %p381 = scmp.ne.s32.totalorder %s366, %s380
      %p382 = scmp.eq.s32.totalorder %s83, 0
      %p383 = por %p381, %p382
      %s385 = sadd.s32 %s384, 1
      %p388 = scmp.eq.s32.totalorder %s77, 1
      %p389 = scmp.ne.s32.totalorder %s384, %s386
      %p390 = scmp.eq.s32.totalorder %s77, 0
      %p391 = por %p389, %p390
      %p392 = scmp.ne.s32.totalorder %s384, %s386
      %p393 = scmp.eq.s32.totalorder %s82, 1
      %p394 = por %p392, %p393
      %p395 = scmp.ne.s32.totalorder %s386, %s387
      %p396 = scmp.eq.s32.totalorder %s82, 0
      %p397 = por %p395, %p396
      %p398 = scmp.ne.s32.totalorder %s386, %s387
      %p399 = scmp.eq.s32.totalorder %s83, 1
      %p400 = por %p398, %p399
      %p402 = scmp.ne.s32.totalorder %s387, %s401
      %p403 = scmp.eq.s32.totalorder %s83, 0
      %p404 = por %p402, %p403
      %s406 = sadd.s32 %s405, 1
      %p409 = scmp.eq.s32.totalorder %s77, 1
      %p410 = scmp.ne.s32.totalorder %s405, %s407
      %p411 = scmp.eq.s32.totalorder %s77, 0
      %p412 = por %p410, %p411
      %p413 = scmp.ne.s32.totalorder %s405, %s407
      %p414 = scmp.eq.s32.totalorder %s82, 1
      %p415 = por %p413, %p414
      %p416 = scmp.ne.s32.totalorder %s407, %s408
      %p417 = scmp.eq.s32.totalorder %s82, 0
      %p418 = por %p416, %p417
      %p419 = scmp.ne.s32.totalorder %s407, %s408
      %p420 = scmp.eq.s32.totalorder %s83, 1
      %p421 = por %p419, %p420
      %p423 = scmp.ne.s32.totalorder %s408, %s422
      %p424 = scmp.eq.s32.totalorder %s83, 0
      %p425 = por %p423, %p424
      %s427 = sadd.s32 %s426, 1
      %p430 = scmp.eq.s32.totalorder %s77, 1
      %p431 = scmp.ne.s32.totalorder %s426, %s428
      %p432 = scmp.eq.s32.totalorder %s77, 0
      %p433 = por %p431, %p432
      %p434 = scmp.ne.s32.totalorder %s426, %s428
      %p435 = scmp.eq.s32.totalorder %s82, 1
      %p436 = por %p434, %p435
      %p437 = scmp.ne.s32.totalorder %s428, %s429
      %p438 = scmp.eq.s32.totalorder %s82, 0
      %p439 = por %p437, %p438
      %p440 = scmp.ne.s32.totalorder %s428, %s429
      %p441 = scmp.eq.s32.totalorder %s83, 1
      %p442 = por %p440, %p441
      %p444 = scmp.ne.s32.totalorder %s429, %s443
      %p445 = scmp.eq.s32.totalorder %s83, 0
      %p446 = por %p444, %p445
      %s448 = sadd.s32 %s447, 1
      %p451 = scmp.eq.s32.totalorder %s77, 1
      %p452 = scmp.ne.s32.totalorder %s447, %s449
      %p453 = scmp.eq.s32.totalorder %s77, 0
      %p454 = por %p452, %p453
      %p455 = scmp.ne.s32.totalorder %s447, %s449
      %p456 = scmp.eq.s32.totalorder %s82, 1
      %p457 = por %p455, %p456
      %p458 = scmp.ne.s32.totalorder %s449, %s450
      %p459 = scmp.eq.s32.totalorder %s82, 0
      %p460 = por %p458, %p459
      %p461 = scmp.ne.s32.totalorder %s449, %s450
      %p462 = scmp.eq.s32.totalorder %s83, 1
      %p463 = por %p461, %p462
      %p465 = scmp.ne.s32.totalorder %s450, %s464
      %p466 = scmp.eq.s32.totalorder %s83, 0
      %p467 = por %p465, %p466
      %s469 = sadd.s32 %s468, 1
      %p472 = scmp.eq.s32.totalorder %s77, 1
      %p473 = scmp.ne.s32.totalorder %s468, %s470
      %p474 = scmp.eq.s32.totalorder %s77, 0
      %p475 = por %p473, %p474
      %p476 = scmp.ne.s32.totalorder %s468, %s470
      %p477 = scmp.eq.s32.totalorder %s82, 1
      %p478 = por %p476, %p477
      %p479 = scmp.ne.s32.totalorder %s470, %s471
      %p480 = scmp.eq.s32.totalorder %s82, 0
      %p481 = por %p479, %p480
      %p482 = scmp.ne.s32.totalorder %s470, %s471
      %p483 = scmp.eq.s32.totalorder %s83, 1
      %p484 = por %p482, %p483
      %p486 = scmp.ne.s32.totalorder %s471, %s485
      %p487 = scmp.eq.s32.totalorder %s83, 0
      %p488 = por %p486, %p487
      %s490 = sadd.s32 %s489, 1
      %p493 = scmp.eq.s32.totalorder %s77, 1
      %p494 = scmp.ne.s32.totalorder %s489, %s491
      %p495 = scmp.eq.s32.totalorder %s77, 0
      %p496 = por %p494, %p495
      %p497 = scmp.ne.s32.totalorder %s489, %s491
      %p498 = scmp.eq.s32.totalorder %s82, 1
      %p499 = por %p497, %p498
      %p500 = scmp.ne.s32.totalorder %s491, %s492
      %p501 = scmp.eq.s32.totalorder %s82, 0
      %p502 = por %p500, %p501
      %p503 = scmp.ne.s32.totalorder %s491, %s492
      %p504 = scmp.eq.s32.totalorder %s83, 1
      %p505 = por %p503, %p504
      %p507 = scmp.ne.s32.totalorder %s492, %s506
      %p508 = scmp.eq.s32.totalorder %s83, 0
      %p509 = por %p507, %p508
      %s511 = sadd.s32 %s510, 1
      %p514 = scmp.eq.s32.totalorder %s77, 1
      %p515 = scmp.ne.s32.totalorder %s510, %s512
      %p516 = scmp.eq.s32.totalorder %s77, 0
      %p517 = por %p515, %p516
      %p518 = scmp.ne.s32.totalorder %s510, %s512
      %p519 = scmp.eq.s32.totalorder %s82, 1
      %p520 = por %p518, %p519
      %p521 = scmp.ne.s32.totalorder %s512, %s513
      %p522 = scmp.eq.s32.totalorder %s82, 0
      %p523 = por %p521, %p522
      %p524 = scmp.ne.s32.totalorder %s512, %s513
      %p525 = scmp.eq.s32.totalorder %s83, 1
      %p526 = por %p524, %p525
      %p528 = scmp.ne.s32.totalorder %s513, %s527
      %p529 = scmp.eq.s32.totalorder %s83, 0
      %p530 = por %p528, %p529
      %s532 = sadd.s32 %s531, 1
      %p535 = scmp.eq.s32.totalorder %s77, 1
      %p536 = scmp.ne.s32.totalorder %s531, %s533
      %p537 = scmp.eq.s32.totalorder %s77, 0
      %p538 = por %p536, %p537
      %p539 = scmp.ne.s32.totalorder %s531, %s533
      %p540 = scmp.eq.s32.totalorder %s82, 1
      %p541 = por %p539, %p540
      %p542 = scmp.ne.s32.totalorder %s533, %s534
      %p543 = scmp.eq.s32.totalorder %s82, 0
      %p544 = por %p542, %p543
      %p545 = scmp.ne.s32.totalorder %s533, %s534
      %p546 = scmp.eq.s32.totalorder %s83, 1
      %p547 = por %p545, %p546
      %p549 = scmp.ne.s32.totalorder %s534, %s548
      %p550 = scmp.eq.s32.totalorder %s83, 0
      %p551 = por %p549, %p550
      %s553 = sadd.s32 %s552, 1
      %p556 = scmp.eq.s32.totalorder %s77, 1
      %p557 = scmp.ne.s32.totalorder %s552, %s554
      %p558 = scmp.eq.s32.totalorder %s77, 0
      %p559 = por %p557, %p558
      %p560 = scmp.ne.s32.totalorder %s552, %s554
      %p561 = scmp.eq.s32.totalorder %s82, 1
      %p562 = por %p560, %p561
      %p563 = scmp.ne.s32.totalorder %s554, %s555
      %p564 = scmp.eq.s32.totalorder %s82, 0
      %p565 = por %p563, %p564
      %p566 = scmp.ne.s32.totalorder %s554, %s555
      %p567 = scmp.eq.s32.totalorder %s83, 1
      %p568 = por %p566, %p567
      %p570 = scmp.ne.s32.totalorder %s555, %s569
      %p571 = scmp.eq.s32.totalorder %s83, 0
      %p572 = por %p570, %p571
      %s574 = sadd.s32 %s573, 1
      %p577 = scmp.eq.s32.totalorder %s77, 1
      %p578 = scmp.ne.s32.totalorder %s573, %s575
      %p579 = scmp.eq.s32.totalorder %s77, 0
      %p580 = por %p578, %p579
      %p581 = scmp.ne.s32.totalorder %s573, %s575
      %p582 = scmp.eq.s32.totalorder %s82, 1
      %p583 = por %p581, %p582
      %p584 = scmp.ne.s32.totalorder %s575, %s576
      %p585 = scmp.eq.s32.totalorder %s82, 0
      %p586 = por %p584, %p585
      %p587 = scmp.ne.s32.totalorder %s575, %s576
      %p588 = scmp.eq.s32.totalorder %s83, 1
      %p589 = por %p587, %p588
      %p591 = scmp.ne.s32.totalorder %s576, %s590
      %p592 = scmp.eq.s32.totalorder %s83, 0
      %p593 = por %p591, %p592
      %s595 = sadd.s32 %s594, 1
      %p598 = scmp.eq.s32.totalorder %s77, 1
      %p599 = scmp.ne.s32.totalorder %s594, %s596
      %p600 = scmp.eq.s32.totalorder %s77, 0
      %p601 = por %p599, %p600
      %p602 = scmp.ne.s32.totalorder %s594, %s596
      %p603 = scmp.eq.s32.totalorder %s82, 1
      %p604 = por %p602, %p603
      %p605 = scmp.ne.s32.totalorder %s596, %s597
      %p606 = scmp.eq.s32.totalorder %s82, 0
      %p607 = por %p605, %p606
      %p608 = scmp.ne.s32.totalorder %s596, %s597
      %p609 = scmp.eq.s32.totalorder %s83, 1
      %p610 = por %p608, %p609
      %p612 = scmp.ne.s32.totalorder %s597, %s611
      %p613 = scmp.eq.s32.totalorder %s83, 0
      %p614 = por %p612, %p613
      %s616 = sadd.s32 %s615, 1
      %p619 = scmp.eq.s32.totalorder %s77, 1
      %p620 = scmp.ne.s32.totalorder %s615, %s617
      %p621 = scmp.eq.s32.totalorder %s77, 0
      %p622 = por %p620, %p621
      %p623 = scmp.ne.s32.totalorder %s615, %s617
      %p624 = scmp.eq.s32.totalorder %s82, 1
      %p625 = por %p623, %p624
      %p626 = scmp.ne.s32.totalorder %s617, %s618
      %p627 = scmp.eq.s32.totalorder %s82, 0
      %p628 = por %p626, %p627
      %p629 = scmp.ne.s32.totalorder %s617, %s618
      %p630 = scmp.eq.s32.totalorder %s83, 1
      %p631 = por %p629, %p630
      %p633 = scmp.ne.s32.totalorder %s618, %s632
      %p634 = scmp.eq.s32.totalorder %s83, 0
      %p635 = por %p633, %p634
      %s637 = sadd.s32 %s636, 1
      %p640 = scmp.eq.s32.totalorder %s77, 1
      %p641 = scmp.ne.s32.totalorder %s636, %s638
      %p642 = scmp.eq.s32.totalorder %s77, 0
      %p643 = por %p641, %p642
      %p644 = scmp.ne.s32.totalorder %s636, %s638
      %p645 = scmp.eq.s32.totalorder %s82, 1
      %p646 = por %p644, %p645
      %p647 = scmp.ne.s32.totalorder %s638, %s639
      %p648 = scmp.eq.s32.totalorder %s82, 0
      %p649 = por %p647, %p648
      %p650 = scmp.ne.s32.totalorder %s638, %s639
      %p651 = scmp.eq.s32.totalorder %s83, 1
      %p652 = por %p650, %p651
      %p654 = scmp.ne.s32.totalorder %s639, %s653
      %p655 = scmp.eq.s32.totalorder %s83, 0
      %p656 = por %p654, %p655
      %s657 = ssub.s32 %s77, %s84
      %p658 = scmp.eq.s32.totalorder %s657, 0
      %s660 = sadd.s32 %s659, 1
      %s661 = scalar_select %p658, %s659, %s660
      %p664 = pneg %p658
      %p665 = scmp.eq.s32.totalorder %s77, 1
      %p666 = por %p664, %p665
      %p667 = scmp.ne.s32.totalorder %s659, %s662
      %p668 = scmp.eq.s32.totalorder %s77, 0
      %p669 = por %p667, %p668
      %p670 = scmp.ne.s32.totalorder %s659, %s662
      %p671 = scmp.eq.s32.totalorder %s82, 1
      %p672 = por %p670, %p671
      %p673 = scmp.ne.s32.totalorder %s662, %s663
      %p674 = scmp.eq.s32.totalorder %s82, 0
      %p675 = por %p673, %p674
      %p676 = scmp.ne.s32.totalorder %s662, %s663
      %p677 = scmp.eq.s32.totalorder %s83, 1
      %p678 = por %p676, %p677
      %p680 = scmp.ne.s32.totalorder %s663, %s679
      %p681 = scmp.eq.s32.totalorder %s83, 0
      %p682 = por %p680, %p681
      %s683 = ssub.s32 %s77, %s84
      %p684 = scmp.eq.s32.totalorder %s683, 0
      %s686 = sadd.s32 %s685, 1
      %s687 = scalar_select %p684, %s685, %s686
      %p690 = pneg %p684
      %p691 = scmp.eq.s32.totalorder %s77, 1
      %p692 = por %p690, %p691
      %p693 = scmp.ne.s32.totalorder %s685, %s688
      %p694 = scmp.eq.s32.totalorder %s77, 0
      %p695 = por %p693, %p694
      %p696 = scmp.ne.s32.totalorder %s685, %s688
      %p697 = scmp.eq.s32.totalorder %s82, 1
      %p698 = por %p696, %p697
      %p699 = scmp.ne.s32.totalorder %s688, %s689
      %p700 = scmp.eq.s32.totalorder %s82, 0
      %p701 = por %p699, %p700
      %p702 = scmp.ne.s32.totalorder %s688, %s689
      %p703 = scmp.eq.s32.totalorder %s83, 1
      %p704 = por %p702, %p703
      %p706 = scmp.ne.s32.totalorder %s689, %s705
      %p707 = scmp.eq.s32.totalorder %s83, 0
      %p708 = por %p706, %p707
      %s709 = ssub.s32 %s77, %s84
      %p710 = scmp.eq.s32.totalorder %s709, 0
      %s712 = sadd.s32 %s711, 1
      %s713 = scalar_select %p710, %s711, %s712
      %p716 = pneg %p710
      %p717 = scmp.eq.s32.totalorder %s77, 1
      %p718 = por %p716, %p717
      %p719 = scmp.ne.s32.totalorder %s711, %s714
      %p720 = scmp.eq.s32.totalorder %s77, 0
      %p721 = por %p719, %p720
      %p722 = scmp.ne.s32.totalorder %s711, %s714
      %p723 = scmp.eq.s32.totalorder %s82, 1
      %p724 = por %p722, %p723
      %p725 = scmp.ne.s32.totalorder %s714, %s715
      %p726 = scmp.eq.s32.totalorder %s82, 0
      %p727 = por %p725, %p726
      %p728 = scmp.ne.s32.totalorder %s714, %s715
      %p729 = scmp.eq.s32.totalorder %s83, 1
      %p730 = por %p728, %p729
      %p732 = scmp.ne.s32.totalorder %s715, %s731
      %p733 = scmp.eq.s32.totalorder %s83, 0
      %p734 = por %p732, %p733
      %s735 = ssub.s32 %s77, %s84
      %p736 = scmp.eq.s32.totalorder %s735, 0
      %s738 = sadd.s32 %s737, 1
      %s739 = scalar_select %p736, %s737, %s738
      %p742 = pneg %p736
      %p743 = scmp.eq.s32.totalorder %s77, 1
      %p744 = por %p742, %p743
      %p745 = scmp.ne.s32.totalorder %s737, %s740
      %p746 = scmp.eq.s32.totalorder %s77, 0
      %p747 = por %p745, %p746
      %p748 = scmp.ne.s32.totalorder %s737, %s740
      %p749 = scmp.eq.s32.totalorder %s82, 1
      %p750 = por %p748, %p749
      %p751 = scmp.ne.s32.totalorder %s740, %s741
      %p752 = scmp.eq.s32.totalorder %s82, 0
      %p753 = por %p751, %p752
      %p754 = scmp.ne.s32.totalorder %s740, %s741
      %p755 = scmp.eq.s32.totalorder %s83, 1
      %p756 = por %p754, %p755
      %p758 = scmp.ne.s32.totalorder %s741, %s757
      %p759 = scmp.eq.s32.totalorder %s83, 0
      %p760 = por %p758, %p759
      %p761 = scmp.le.s32.totalorder 1, %s77
      %p762 = scmp.lt.s32.totalorder %s77, 3
      %p763 = pnand %p761, %p762
      %p764 = pneg %p763
      // Predicated region
      $region9: #{tpu_custom_call.1} parent=5 // pred_check
        _
      $region10: #{tpu_custom_call.1} parent=5 // pred_check_branch
        %766 = sbr.rel (%p763) target = $region12
      $region11: #{tpu_custom_call.1} parent=5 // pred_region
        %s767 = ssub.s32 %s77, 1
        // Predicated region
        $region13: #{tpu_custom_call.1} parent=11 // pred_check
          %p768 = pneg %p124
        $region14: #{tpu_custom_call.1} parent=11 // pred_check_branch
          %770 = sbr.rel (%p768) target = $region16
        $region15: #{tpu_custom_call.1} parent=11 // pred_region
          %s772 = ssub.s32 512, 512
          %773 = vsyncadd [#allocation5], %s772
          %s774 = sshll.u32 [#allocation4], 4
          %s775 = int_to_ptr.vmem [resolvable:$true] %s774
          %780 = dma.hbm_to_vmem [thread:$0]  %s3, 512, %s775, [#allocation5], 128, 128, 8
        $region16: #{tpu_custom_call.1} parent=11 // pred_fallthru
          _
        // Predicated region
        $region17: #{tpu_custom_call.1} parent=11 // pred_check
          %p781 = pneg %p145
        $region18: #{tpu_custom_call.1} parent=11 // pred_check_branch
          %783 = sbr.rel (%p781) target = $region20
        $region19: #{tpu_custom_call.1} parent=11 // pred_region
          _
        $region20: #{tpu_custom_call.1} parent=11 // pred_fallthru
          _
        // Predicated region
        $region21: #{tpu_custom_call.1} parent=11 // pred_check
          %p784 = pneg %p166
        $region22: #{tpu_custom_call.1} parent=11 // pred_check_branch
          %786 = sbr.rel (%p784) target = $region24
        $region23: #{tpu_custom_call.1} parent=11 // pred_region
          _
        $region24: #{tpu_custom_call.1} parent=11 // pred_fallthru
          _
        // Predicated region
        $region25: #{tpu_custom_call.1} parent=11 // pred_check
          %p787 = pneg %p187
        $region26: #{tpu_custom_call.1} parent=11 // pred_check_branch
          %789 = sbr.rel (%p787) target = $region28
        $region27: #{tpu_custom_call.1} parent=11 // pred_region
          %s791 = ssub.s32 16, 16
          %792 = vsyncadd [#allocation5], %s791
          %s794 = sshll.u32 [#allocation6], 4
          %s795 = int_to_ptr.vmem [resolvable:$true] %s794
          %797 = dma.hbm_to_vmem [thread:$0]  %s9, 16, %s795, [#allocation5]
        $region28: #{tpu_custom_call.1} parent=11 // pred_fallthru
          _
        // Predicated region
        $region29: #{tpu_custom_call.1} parent=11 // pred_check
          %p798 = pneg %p208
        $region30: #{tpu_custom_call.1} parent=11 // pred_check_branch
          %800 = sbr.rel (%p798) target = $region32
        $region31: #{tpu_custom_call.1} parent=11 // pred_region
          _
        $region32: #{tpu_custom_call.1} parent=11 // pred_fallthru
          _
        // Predicated region
        $region33: #{tpu_custom_call.1} parent=11 // pred_check
          %p801 = pneg %p229
        $region34: #{tpu_custom_call.1} parent=11 // pred_check_branch
          %803 = sbr.rel (%p801) target = $region36
        $region35: #{tpu_custom_call.1} parent=11 // pred_region
          %s805 = ssub.s32 512, 512
          %806 = vsyncadd [#allocation8], %s805
          %s807 = sshll.u32 [#allocation7], 4
          %s808 = int_to_ptr.vmem [resolvable:$true] %s807
          %813 = dma.hbm_to_vmem [thread:$0]  %s13, 512, %s808, [#allocation8], 128, 128, 8
        $region36: #{tpu_custom_call.1} parent=11 // pred_fallthru
          _
        // Predicated region
        $region37: #{tpu_custom_call.1} parent=11 // pred_check
          %p814 = pneg %p250
        $region38: #{tpu_custom_call.1} parent=11 // pred_check_branch
          %816 = sbr.rel (%p814) target = $region40
        $region39: #{tpu_custom_call.1} parent=11 // pred_region
          %s818 = ssub.s32 16, 16
          %819 = vsyncadd [#allocation8], %s818
          %s821 = sshll.u32 [#allocation9], 4
          %s822 = int_to_ptr.vmem [resolvable:$true] %s821
          %824 = dma.hbm_to_vmem [thread:$0]  %s15, 16, %s822, [#allocation8]
        $region40: #{tpu_custom_call.1} parent=11 // pred_fallthru
          _
        // Predicated region
        $region41: #{tpu_custom_call.1} parent=11 // pred_check
          %p825 = pneg %p271
        $region42: #{tpu_custom_call.1} parent=11 // pred_check_branch
          %827 = sbr.rel (%p825) target = $region44
        $region43: #{tpu_custom_call.1} parent=11 // pred_region
          _
        $region44: #{tpu_custom_call.1} parent=11 // pred_fallthru
          _
        // Predicated region
        $region45: #{tpu_custom_call.1} parent=11 // pred_check
          %p828 = pneg %p292
        $region46: #{tpu_custom_call.1} parent=11 // pred_check_branch
          %830 = sbr.rel (%p828) target = $region48
        $region47: #{tpu_custom_call.1} parent=11 // pred_region
          %s832 = ssub.s32 16, 16
          %833 = vsyncadd [#allocation11], %s832
          %s835 = sshll.u32 [#allocation10], 4
          %s836 = int_to_ptr.vmem [resolvable:$true] %s835
          %838 = dma.hbm_to_vmem [thread:$0]  %s19, 16, %s836, [#allocation11]
        $region48: #{tpu_custom_call.1} parent=11 // pred_fallthru
          _
        // Predicated region
        $region49: #{tpu_custom_call.1} parent=11 // pred_check
          %p839 = pneg %p313
        $region50: #{tpu_custom_call.1} parent=11 // pred_check_branch
          %841 = sbr.rel (%p839) target = $region52
        $region51: #{tpu_custom_call.1} parent=11 // pred_region
          _
        $region52: #{tpu_custom_call.1} parent=11 // pred_fallthru
          _
        // Predicated region
        $region53: #{tpu_custom_call.1} parent=11 // pred_check
          %p842 = pneg %p334
        $region54: #{tpu_custom_call.1} parent=11 // pred_check_branch
          %844 = sbr.rel (%p842) target = $region56
        $region55: #{tpu_custom_call.1} parent=11 // pred_region
          _
        $region56: #{tpu_custom_call.1} parent=11 // pred_fallthru
          _
        // Predicated region
        $region57: #{tpu_custom_call.1} parent=11 // pred_check
          %p845 = pneg %p355
        $region58: #{tpu_custom_call.1} parent=11 // pred_check_branch
          %847 = sbr.rel (%p845) target = $region60
        $region59: #{tpu_custom_call.1} parent=11 // pred_region
          %s849 = ssub.s32 16, 16
          %850 = vsyncadd [#allocation11], %s849
          %s852 = sshll.u32 [#allocation12], 4
          %s853 = int_to_ptr.vmem [resolvable:$true] %s852
          %855 = dma.hbm_to_vmem [thread:$0]  %s25, 16, %s853, [#allocation11]
        $region60: #{tpu_custom_call.1} parent=11 // pred_fallthru
          _
        // Predicated region
        $region61: #{tpu_custom_call.1} parent=11 // pred_check
          %p856 = pneg %p376
        $region62: #{tpu_custom_call.1} parent=11 // pred_check_branch
          %858 = sbr.rel (%p856) target = $region64
        $region63: #{tpu_custom_call.1} parent=11 // pred_region
          _
        $region64: #{tpu_custom_call.1} parent=11 // pred_fallthru
          _
        // Predicated region
        $region65: #{tpu_custom_call.1} parent=11 // pred_check
          %p859 = pneg %p397
        $region66: #{tpu_custom_call.1} parent=11 // pred_check_branch
          %861 = sbr.rel (%p859) target = $region68
        $region67: #{tpu_custom_call.1} parent=11 // pred_region
          %s863 = ssub.s32 512, 512
          %864 = vsyncadd [#allocation14], %s863
          %s865 = sshll.u32 [#allocation13], 4
          %s866 = int_to_ptr.vmem [resolvable:$true] %s865
          %871 = dma.hbm_to_vmem [thread:$0]  %s29, 512, %s866, [#allocation14], 128, 128, 8
        $region68: #{tpu_custom_call.1} parent=11 // pred_fallthru
          _
        // Predicated region
        $region69: #{tpu_custom_call.1} parent=11 // pred_check
          %p872 = pneg %p418
        $region70: #{tpu_custom_call.1} parent=11 // pred_check_branch
          %874 = sbr.rel (%p872) target = $region72
        $region71: #{tpu_custom_call.1} parent=11 // pred_region
          %s876 = ssub.s32 16, 16
          %877 = vsyncadd [#allocation14], %s876
          %s879 = sshll.u32 [#allocation15], 4
          %s880 = int_to_ptr.vmem [resolvable:$true] %s879
          %882 = dma.hbm_to_vmem [thread:$0]  %s31, 16, %s880, [#allocation14]
        $region72: #{tpu_custom_call.1} parent=11 // pred_fallthru
          _
        // Predicated region
        $region73: #{tpu_custom_call.1} parent=11 // pred_check
          %p883 = pneg %p439
        $region74: #{tpu_custom_call.1} parent=11 // pred_check_branch
          %885 = sbr.rel (%p883) target = $region76
        $region75: #{tpu_custom_call.1} parent=11 // pred_region
          _
        $region76: #{tpu_custom_call.1} parent=11 // pred_fallthru
          _
        // Predicated region
        $region77: #{tpu_custom_call.1} parent=11 // pred_check
          %p886 = pneg %p460
        $region78: #{tpu_custom_call.1} parent=11 // pred_check_branch
          %888 = sbr.rel (%p886) target = $region80
        $region79: #{tpu_custom_call.1} parent=11 // pred_region
          %s890 = ssub.s32 16, 16
          %891 = vsyncadd [#allocation17], %s890
          %s893 = sshll.u32 [#allocation16], 4
          %s894 = int_to_ptr.vmem [resolvable:$true] %s893
          %896 = dma.hbm_to_vmem [thread:$0]  %s35, 16, %s894, [#allocation17]
        $region80: #{tpu_custom_call.1} parent=11 // pred_fallthru
          _
        // Predicated region
        $region81: #{tpu_custom_call.1} parent=11 // pred_check
          %p897 = pneg %p481
        $region82: #{tpu_custom_call.1} parent=11 // pred_check_branch
          %899 = sbr.rel (%p897) target = $region84
        $region83: #{tpu_custom_call.1} parent=11 // pred_region
          _
        $region84: #{tpu_custom_call.1} parent=11 // pred_fallthru
          _
        // Predicated region
        $region85: #{tpu_custom_call.1} parent=11 // pred_check
          %p900 = pneg %p502
        $region86: #{tpu_custom_call.1} parent=11 // pred_check_branch
          %902 = sbr.rel (%p900) target = $region88
        $region87: #{tpu_custom_call.1} parent=11 // pred_region
          _
        $region88: #{tpu_custom_call.1} parent=11 // pred_fallthru
          _
        // Predicated region
        $region89: #{tpu_custom_call.1} parent=11 // pred_check
          %p903 = pneg %p523
        $region90: #{tpu_custom_call.1} parent=11 // pred_check_branch
          %905 = sbr.rel (%p903) target = $region92
        $region91: #{tpu_custom_call.1} parent=11 // pred_region
          %s907 = ssub.s32 16, 16
          %908 = vsyncadd [#allocation17], %s907
          %s910 = sshll.u32 [#allocation18], 4
          %s911 = int_to_ptr.vmem [resolvable:$true] %s910
          %913 = dma.hbm_to_vmem [thread:$0]  %s41, 16, %s911, [#allocation17]
        $region92: #{tpu_custom_call.1} parent=11 // pred_fallthru
          _
        // Predicated region
        $region93: #{tpu_custom_call.1} parent=11 // pred_check
          %p914 = pneg %p544
        $region94: #{tpu_custom_call.1} parent=11 // pred_check_branch
          %916 = sbr.rel (%p914) target = $region96
        $region95: #{tpu_custom_call.1} parent=11 // pred_region
          _
        $region96: #{tpu_custom_call.1} parent=11 // pred_fallthru
          _
        // Predicated region
        $region97: #{tpu_custom_call.1} parent=11 // pred_check
          %p917 = pneg %p565
        $region98: #{tpu_custom_call.1} parent=11 // pred_check_branch
          %919 = sbr.rel (%p917) target = $region100
        $region99: #{tpu_custom_call.1} parent=11 // pred_region
          _
        $region100: #{tpu_custom_call.1} parent=11 // pred_fallthru
          _
        // Predicated region
        $region101: #{tpu_custom_call.1} parent=11 // pred_check
          %p920 = pneg %p586
        $region102: #{tpu_custom_call.1} parent=11 // pred_check_branch
          %922 = sbr.rel (%p920) target = $region104
        $region103: #{tpu_custom_call.1} parent=11 // pred_region
          %s924 = ssub.s32 512, 512
          %925 = vsyncadd [#allocation20], %s924
          %s926 = sshll.u32 [#allocation19], 4
          %s927 = int_to_ptr.vmem [resolvable:$true] %s926
          %932 = dma.hbm_to_vmem [thread:$0]  %s47, 512, %s927, [#allocation20], 128, 128, 8
        $region104: #{tpu_custom_call.1} parent=11 // pred_fallthru
          _
        // Predicated region
        $region105: #{tpu_custom_call.1} parent=11 // pred_check
          %p933 = pneg %p607
        $region106: #{tpu_custom_call.1} parent=11 // pred_check_branch
          %935 = sbr.rel (%p933) target = $region108
        $region107: #{tpu_custom_call.1} parent=11 // pred_region
          %s937 = ssub.s32 16, 16
          %938 = vsyncadd [#allocation20], %s937
          %s940 = sshll.u32 [#allocation21], 4
          %s941 = int_to_ptr.vmem [resolvable:$true] %s940
          %943 = dma.hbm_to_vmem [thread:$0]  %s49, 16, %s941, [#allocation20]
        $region108: #{tpu_custom_call.1} parent=11 // pred_fallthru
          _
        // Predicated region
        $region109: #{tpu_custom_call.1} parent=11 // pred_check
          %p944 = pneg %p628
        $region110: #{tpu_custom_call.1} parent=11 // pred_check_branch
          %946 = sbr.rel (%p944) target = $region112
        $region111: #{tpu_custom_call.1} parent=11 // pred_region
          _
        $region112: #{tpu_custom_call.1} parent=11 // pred_fallthru
          _
        // Predicated region
        $region113: #{tpu_custom_call.1} parent=11 // pred_check
          %p947 = pneg %p649
        $region114: #{tpu_custom_call.1} parent=11 // pred_check_branch
          %949 = sbr.rel (%p947) target = $region116
        $region115: #{tpu_custom_call.1} parent=11 // pred_region
          _
        $region116: #{tpu_custom_call.1} parent=11 // pred_fallthru
          _
      $region12: #{tpu_custom_call.1} parent=5 // pred_fallthru
        _
      %p950 = scmp.lt.s32.totalorder %s77, 2
      // Predicated region
      $region117: #{tpu_custom_call.1} parent=5 // pred_check
        %p951 = pneg %p950
      $region118: #{tpu_custom_call.1} parent=5 // pred_check_branch
        %953 = sbr.rel (%p951) target = $region120
      $region119: #{tpu_custom_call.1} parent=5 // pred_region
        // Predicated region
        $region121: #{tpu_custom_call.1} parent=119 // pred_check
          %p954 = pneg %p97
        $region122: #{tpu_custom_call.1} parent=119 // pred_check_branch
          %956 = sbr.rel (%p954) target = $region124
        $region123: #{tpu_custom_call.1} parent=119 // pred_region
          %s957 = sand.u32 %s87, 1
          %s958 = scalar_lea.sflag [#allocation3], %s957
          %s959 = sand.u32 %s87, 1
          %s960 = smul.addr %s959, 16
          %s961 = scalar_lea.vmem [#allocation2], %s960
          %s963 = ssub.s32 256, 256
          %964 = vsyncadd %s958, %s963
          %s965 = smul.addr %s77, 2
          %s966 = smul.addr %s965, 128
          %s967 = scalar_lea.hbm %s1, %s966
          %s968 = sshll.u32 %s961, 4
          %s969 = int_to_ptr.vmem [resolvable:$true] %s968
          %974 = dma.hbm_to_vmem [thread:$0]  %s967, 256, %s969, %s958, 128, 128, 8
        $region124: #{tpu_custom_call.1} parent=119 // pred_fallthru
          _
      $region120: #{tpu_custom_call.1} parent=5 // pred_fallthru
        _
      %p975 = scmp.le.s32.totalorder 1, %s77
      %p976 = scmp.lt.s32.totalorder %s77, 3
      %p977 = pnand %p975, %p976
      %p978 = pneg %p977
      // Predicated region
      $region125: #{tpu_custom_call.1} parent=5 // pred_check
        _
      $region126: #{tpu_custom_call.1} parent=5 // pred_check_branch
        %980 = sbr.rel (%p977) target = $region128
      $region127: #{tpu_custom_call.1} parent=5 // pred_region
        %s981 = ssub.s32 %s77, 1
        %s982 = sand.u32 %s90, 1
        %s983 = scalar_lea.sflag [#allocation3], %s982
        %s984 = sand.u32 %s90, 1
        %s985 = smul.addr %s984, 16
        %s986 = scalar_lea.vmem [#allocation2], %s985
        // Predicated region
        $region129: #{tpu_custom_call.1} parent=127 // pred_check
          %p987 = pneg %p103
        $region130: #{tpu_custom_call.1} parent=127 // pred_check_branch
          %989 = sbr.rel (%p987) target = $region132
        $region131: #{tpu_custom_call.1} parent=127 // pred_region
          %990 = dma.done %s983, 256
        $region132: #{tpu_custom_call.1} parent=127 // pred_fallthru
          _
        // Predicated region
        $region133: #{tpu_custom_call.1} parent=127 // pred_check
          %p991 = pneg %p124
        $region134: #{tpu_custom_call.1} parent=127 // pred_check_branch
          %993 = sbr.rel (%p991) target = $region136
        $region135: #{tpu_custom_call.1} parent=127 // pred_region
          %994 = dma.done [#allocation5], 512
        $region136: #{tpu_custom_call.1} parent=127 // pred_fallthru
          _
        // Predicated region
        $region137: #{tpu_custom_call.1} parent=127 // pred_check
          %p995 = pneg %p187
        $region138: #{tpu_custom_call.1} parent=127 // pred_check_branch
          %997 = sbr.rel (%p995) target = $region140
        $region139: #{tpu_custom_call.1} parent=127 // pred_region
          %998 = dma.done [#allocation5], 16
        $region140: #{tpu_custom_call.1} parent=127 // pred_fallthru
          _
        // Predicated region
        $region141: #{tpu_custom_call.1} parent=127 // pred_check
          %p999 = pneg %p229
        $region142: #{tpu_custom_call.1} parent=127 // pred_check_branch
          %1001 = sbr.rel (%p999) target = $region144
        $region143: #{tpu_custom_call.1} parent=127 // pred_region
          %1002 = dma.done [#allocation8], 512
        $region144: #{tpu_custom_call.1} parent=127 // pred_fallthru
          _
        // Predicated region
        $region145: #{tpu_custom_call.1} parent=127 // pred_check
          %p1003 = pneg %p250
        $region146: #{tpu_custom_call.1} parent=127 // pred_check_branch
          %1005 = sbr.rel (%p1003) target = $region148
        $region147: #{tpu_custom_call.1} parent=127 // pred_region
          %1006 = dma.done [#allocation8], 16
        $region148: #{tpu_custom_call.1} parent=127 // pred_fallthru
          _
        // Predicated region
        $region149: #{tpu_custom_call.1} parent=127 // pred_check
          %p1007 = pneg %p292
        $region150: #{tpu_custom_call.1} parent=127 // pred_check_branch
          %1009 = sbr.rel (%p1007) target = $region152
        $region151: #{tpu_custom_call.1} parent=127 // pred_region
          %1010 = dma.done [#allocation11], 16
        $region152: #{tpu_custom_call.1} parent=127 // pred_fallthru
          _
        // Predicated region
        $region153: #{tpu_custom_call.1} parent=127 // pred_check
          %p1011 = pneg %p355
        $region154: #{tpu_custom_call.1} parent=127 // pred_check_branch
          %1013 = sbr.rel (%p1011) target = $region156
        $region155: #{tpu_custom_call.1} parent=127 // pred_region
          %1014 = dma.done [#allocation11], 16
        $region156: #{tpu_custom_call.1} parent=127 // pred_fallthru
          _
        // Predicated region
        $region157: #{tpu_custom_call.1} parent=127 // pred_check
          %p1015 = pneg %p397
        $region158: #{tpu_custom_call.1} parent=127 // pred_check_branch
          %1017 = sbr.rel (%p1015) target = $region160
        $region159: #{tpu_custom_call.1} parent=127 // pred_region
          %1018 = dma.done [#allocation14], 512
        $region160: #{tpu_custom_call.1} parent=127 // pred_fallthru
          _
        // Predicated region
        $region161: #{tpu_custom_call.1} parent=127 // pred_check
          %p1019 = pneg %p418
        $region162: #{tpu_custom_call.1} parent=127 // pred_check_branch
          %1021 = sbr.rel (%p1019) target = $region164
        $region163: #{tpu_custom_call.1} parent=127 // pred_region
          %1022 = dma.done [#allocation14], 16
        $region164: #{tpu_custom_call.1} parent=127 // pred_fallthru
          _
        // Predicated region
        $region165: #{tpu_custom_call.1} parent=127 // pred_check
          %p1023 = pneg %p460
        $region166: #{tpu_custom_call.1} parent=127 // pred_check_branch
          %1025 = sbr.rel (%p1023) target = $region168
        $region167: #{tpu_custom_call.1} parent=127 // pred_region
          %1026 = dma.done [#allocation17], 16
        $region168: #{tpu_custom_call.1} parent=127 // pred_fallthru
          _
        // Predicated region
        $region169: #{tpu_custom_call.1} parent=127 // pred_check
          %p1027 = pneg %p523
        $region170: #{tpu_custom_call.1} parent=127 // pred_check_branch
          %1029 = sbr.rel (%p1027) target = $region172
        $region171: #{tpu_custom_call.1} parent=127 // pred_region
          %1030 = dma.done [#allocation17], 16
        $region172: #{tpu_custom_call.1} parent=127 // pred_fallthru
          _
        // Predicated region
        $region173: #{tpu_custom_call.1} parent=127 // pred_check
          %p1031 = pneg %p586
        $region174: #{tpu_custom_call.1} parent=127 // pred_check_branch
          %1033 = sbr.rel (%p1031) target = $region176
        $region175: #{tpu_custom_call.1} parent=127 // pred_region
          %1034 = dma.done [#allocation20], 512
        $region176: #{tpu_custom_call.1} parent=127 // pred_fallthru
          _
        // Predicated region
        $region177: #{tpu_custom_call.1} parent=127 // pred_check
          %p1035 = pneg %p607
        $region178: #{tpu_custom_call.1} parent=127 // pred_check_branch
          %1037 = sbr.rel (%p1035) target = $region180
        $region179: #{tpu_custom_call.1} parent=127 // pred_region
          %1038 = dma.done [#allocation20], 16
        $region180: #{tpu_custom_call.1} parent=127 // pred_fallthru
          _
        %s1039 = sand.u32 %s90, 1
        %s1040 = scalar_lea.sflag [#allocation3], %s1039
        %s1041 = sand.u32 %s90, 1
        %s1042 = smul.addr %s1041, 16
        %s1043 = scalar_lea.vmem [#allocation2], %s1042
        %p1044 = pneg %p103
        %p1045 = pneg %p100
        %p1046 = pneg %p124
        %p1047 = pneg %p121
        %p1048 = pneg %p145
        %p1049 = pneg %p142
        %p1050 = pneg %p166
        %p1051 = pneg %p163
        %p1052 = pneg %p187
        %p1053 = pneg %p184
        %p1054 = pneg %p208
        %p1055 = pneg %p205
        %p1056 = pneg %p229
        %p1057 = pneg %p226
        %p1058 = pneg %p250
        %p1059 = pneg %p247
        %p1060 = pneg %p271
        %p1061 = pneg %p268
        %p1062 = pneg %p292
        %p1063 = pneg %p289
        %p1064 = pneg %p313
        %p1065 = pneg %p310
        %p1066 = pneg %p334
        %p1067 = pneg %p331
        %p1068 = pneg %p355
        %p1069 = pneg %p352
        %p1070 = pneg %p376
        %p1071 = pneg %p373
        %p1072 = pneg %p397
        %p1073 = pneg %p394
        %p1074 = pneg %p418
        %p1075 = pneg %p415
        %p1076 = pneg %p439
        %p1077 = pneg %p436
        %p1078 = pneg %p460
        %p1079 = pneg %p457
        %p1080 = pneg %p481
        %p1081 = pneg %p478
        %p1082 = pneg %p502
        %p1083 = pneg %p499
        %p1084 = pneg %p523
        %p1085 = pneg %p520
        %p1086 = pneg %p544
        %p1087 = pneg %p541
        %p1088 = pneg %p565
        %p1089 = pneg %p562
        %p1090 = pneg %p586
        %p1091 = pneg %p583
        %p1092 = pneg %p607
        %p1093 = pneg %p604
        %p1094 = pneg %p628
        %p1095 = pneg %p625
        %p1096 = pneg %p649
        %p1097 = pneg %p646
        %p1098 = pneg %p675
        %p1099 = pneg %p672
        %p1100 = scmp.lt.s32.totalorder %s82, 1
        %s1101 = scalar_select %p1100, %s82, 1
        %s1102 = smul.addr %s1101, 8
        %s1103 = smul.addr %s1102, 8
        %s1104 = scalar_lea.vmem %s55, %s1103
        %p1105 = pneg %p701
        %p1106 = pneg %p698
        %p1107 = scmp.lt.s32.totalorder %s82, 1
        %s1108 = scalar_select %p1107, %s82, 1
        %s1109 = smul.addr %s1108, 8
        %s1110 = smul.addr %s1109, 8
        %s1111 = scalar_lea.vmem %s57, %s1110
        %p1112 = pneg %p727
        %p1113 = pneg %p724
        %p1114 = scmp.lt.s32.totalorder %s82, 1
        %s1115 = scalar_select %p1114, %s82, 1
        %s1116 = scalar_lea.vmem %s59, %s1115
        %p1117 = pneg %p753
        %p1118 = pneg %p750
        %p1119 = scmp.lt.s32.totalorder %s82, 1
        %s1120 = scalar_select %p1119, %s82, 1
        %s1121 = scalar_lea.vmem %s61, %s1120
        %p1122 = scmp.lt.s32.totalorder %s82, 1
        %s1123 = scalar_select %p1122, %s82, 1
        %s1124 = smul.addr %s1123, 8
        %s1125 = smul.addr %s1124, 8
        %s1126 = scalar_lea.vmem %s55, %s1125
        %p1127 = scmp.lt.s32.totalorder %s82, 1
        %s1128 = scalar_select %p1127, %s82, 1
        %s1129 = smul.addr %s1128, 8
        %s1130 = smul.addr %s1129, 8
        %s1131 = scalar_lea.vmem %s57, %s1130
        %p1132 = scmp.lt.s32.totalorder %s82, 1
        %s1133 = scalar_select %p1132, %s82, 1
        %s1134 = scalar_lea.vmem %s59, %s1133
        %p1135 = scmp.lt.s32.totalorder %s82, 1
        %s1136 = scalar_select %p1135, %s82, 1
        %s1137 = scalar_lea.vmem %s61, %s1136
        %v1138 = vld [vmem:[%s986] sm:$0xff]
        %v1139 = vld [vmem:[%s986 + $0x8] sm:$0xff]
        %v1140 = vld [vmem:[#allocation4] sm:$0xff]
        %v1141 = vld [vmem:[#allocation4 + $0x8] sm:$0xff]
        %v1142 = vld [vmem:[#allocation4 + $0x10] sm:$0xff]
        %v1143 = vld [vmem:[#allocation4 + $0x18] sm:$0xff]
        %v1144 = vld [vmem:[%s5] sm:$0xff]
        %v1145 = vld [vmem:[%s5 + $0x8] sm:$0xff]
        %v1146 = vld [vmem:[%s5 + $0x10] sm:$0xff]
        %v1147 = vld [vmem:[%s5 + $0x18] sm:$0xff]
        %v1148 = vld [vmem:[%s5 + $0x20] sm:$0xff]
        %v1149 = vld [vmem:[%s5 + $0x28] sm:$0xff]
        %v1150 = vld [vmem:[%s5 + $0x30] sm:$0xff]
        %v1151 = vld [vmem:[%s5 + $0x38] sm:$0xff]
        %v1152 = vld [vmem:[%s7] sm:$0xff]
        %v1153 = vld [vmem:[%s7 + $0x8] sm:$0xff]
        %v1154 = vld [vmem:[%s7 + $0x10] sm:$0xff]
        %v1155 = vld [vmem:[%s7 + $0x18] sm:$0xff]
        %v1156 = vld [vmem:[%s7 + $0x20] sm:$0xff]
        %v1157 = vld [vmem:[%s7 + $0x28] sm:$0xff]
        %v1158 = vld [vmem:[%s7 + $0x30] sm:$0xff]
        %v1159 = vld [vmem:[%s7 + $0x38] sm:$0xff]
        %v1160 = vld [vmem:[#allocation6] sm:$0x1]
        %v1161 = vld [vmem:[%s11] sm:$0xff]
        %v1162 = vld [vmem:[%s11 + $0x8] sm:$0xff]
        %v1163 = vld [vmem:[%s11 + $0x10] sm:$0xff]
        %v1164 = vld [vmem:[%s11 + $0x18] sm:$0xff]
        %v1165 = vld [vmem:[%s11 + $0x20] sm:$0xff]
        %v1166 = vld [vmem:[%s11 + $0x28] sm:$0xff]
        %v1167 = vld [vmem:[%s11 + $0x30] sm:$0xff]
        %v1168 = vld [vmem:[%s11 + $0x38] sm:$0xff]
        %v1169 = vld [vmem:[#allocation7] sm:$0xff]
        %v1170 = vld [vmem:[#allocation7 + $0x8] sm:$0xff]
        %v1171 = vld [vmem:[#allocation7 + $0x10] sm:$0xff]
        %v1172 = vld [vmem:[#allocation7 + $0x18] sm:$0xff]
        %v1173 = vld [vmem:[#allocation9] sm:$0x1]
        %v1174 = vld [vmem:[%s17] sm:$0xff]
        %v1175 = vld [vmem:[%s17 + $0x8] sm:$0xff]
        %v1176 = vld [vmem:[%s17 + $0x10] sm:$0xff]
        %v1177 = vld [vmem:[%s17 + $0x18] sm:$0xff]
        %v1178 = vld [vmem:[#allocation10] sm:$0x1]
        %v1179 = vld [vmem:[%s21] sm:$0xff]
        %v1180 = vld [vmem:[%s21 + $0x8] sm:$0xff]
        %v1181 = vld [vmem:[%s21 + $0x10] sm:$0xff]
        %v1182 = vld [vmem:[%s21 + $0x18] sm:$0xff]
        %v1183 = vld [vmem:[%s23] sm:$0xff]
        %v1184 = vld [vmem:[%s23 + $0x8] sm:$0xff]
        %v1185 = vld [vmem:[%s23 + $0x10] sm:$0xff]
        %v1186 = vld [vmem:[%s23 + $0x18] sm:$0xff]
        %v1187 = vld [vmem:[#allocation12] sm:$0x1]
        %v1188 = vld [vmem:[%s27] sm:$0xff]
        %v1189 = vld [vmem:[%s27 + $0x8] sm:$0xff]
        %v1190 = vld [vmem:[%s27 + $0x10] sm:$0xff]
        %v1191 = vld [vmem:[%s27 + $0x18] sm:$0xff]
        %v1192 = vld [vmem:[%s27 + $0x20] sm:$0xff]
        %v1193 = vld [vmem:[%s27 + $0x28] sm:$0xff]
        %v1194 = vld [vmem:[%s27 + $0x30] sm:$0xff]
        %v1195 = vld [vmem:[%s27 + $0x38] sm:$0xff]
        %v1196 = vld [vmem:[#allocation13] sm:$0xff]
        %v1197 = vld [vmem:[#allocation13 + $0x8] sm:$0xff]
        %v1198 = vld [vmem:[#allocation13 + $0x10] sm:$0xff]
        %v1199 = vld [vmem:[#allocation13 + $0x18] sm:$0xff]
        %v1200 = vld [vmem:[#allocation15] sm:$0x1]
        %v1201 = vld [vmem:[%s33] sm:$0xff]
        %v1202 = vld [vmem:[%s33 + $0x8] sm:$0xff]
        %v1203 = vld [vmem:[%s33 + $0x10] sm:$0xff]
        %v1204 = vld [vmem:[%s33 + $0x18] sm:$0xff]
        %v1205 = vld [vmem:[#allocation16] sm:$0x1]
        %v1206 = vld [vmem:[%s37] sm:$0xff]
        %v1207 = vld [vmem:[%s37 + $0x8] sm:$0xff]
        %v1208 = vld [vmem:[%s37 + $0x10] sm:$0xff]
        %v1209 = vld [vmem:[%s37 + $0x18] sm:$0xff]
        %v1210 = vld [vmem:[%s39] sm:$0xff]
        %v1211 = vld [vmem:[%s39 + $0x8] sm:$0xff]
        %v1212 = vld [vmem:[%s39 + $0x10] sm:$0xff]
        %v1213 = vld [vmem:[%s39 + $0x18] sm:$0xff]
        %v1214 = vld [vmem:[#allocation18] sm:$0x1]
        %v1215 = vld [vmem:[%s43] sm:$0xff]
        %v1216 = vld [vmem:[%s43 + $0x8] sm:$0xff]
        %v1217 = vld [vmem:[%s43 + $0x10] sm:$0xff]
        %v1218 = vld [vmem:[%s43 + $0x18] sm:$0xff]
        %v1219 = vld [vmem:[%s43 + $0x20] sm:$0xff]
        %v1220 = vld [vmem:[%s43 + $0x28] sm:$0xff]
        %v1221 = vld [vmem:[%s43 + $0x30] sm:$0xff]
        %v1222 = vld [vmem:[%s43 + $0x38] sm:$0xff]
        %v1223 = vld [vmem:[%s45] sm:$0xff]
        %v1224 = vld [vmem:[%s45 + $0x8] sm:$0xff]
        %v1225 = vld [vmem:[%s45 + $0x10] sm:$0xff]
        %v1226 = vld [vmem:[%s45 + $0x18] sm:$0xff]
        %v1227 = vld [vmem:[%s45 + $0x20] sm:$0xff]
        %v1228 = vld [vmem:[%s45 + $0x28] sm:$0xff]
        %v1229 = vld [vmem:[%s45 + $0x30] sm:$0xff]
        %v1230 = vld [vmem:[%s45 + $0x38] sm:$0xff]
        %v1231 = vld [vmem:[#allocation19] sm:$0xff]
        %v1232 = vld [vmem:[#allocation19 + $0x8] sm:$0xff]
        %v1233 = vld [vmem:[#allocation19 + $0x10] sm:$0xff]
        %v1234 = vld [vmem:[#allocation19 + $0x18] sm:$0xff]
        %v1235 = vld [vmem:[#allocation21] sm:$0x1]
        %v1236 = vld [vmem:[%s51] sm:$0xff]
        %v1237 = vld [vmem:[%s51 + $0x8] sm:$0xff]
        %v1238 = vld [vmem:[%s51 + $0x10] sm:$0xff]
        %v1239 = vld [vmem:[%s51 + $0x18] sm:$0xff]
        %v1240 = vld [vmem:[%s53] sm:$0x1]
        %v1242 = vlaneseq
        %v1243 = vshrl.u32 %v1242, 7
        %v1244 = vsub.s32 0, %v1243
        %v1245 = vrot.slane %v1173, %v1244
        %vm1247 = vcmask 523264
        %v1249 = vsel %vm1247, %v1138, 0
        %v1252 = vsel %vm1247, %v1139, 0
        %1254 = vmatprep.subr.mxu0 0.0
        %1255 = vmatpush1.msra.mxu0 %v1161
        %1256 = vmatprep.subr.mxu0 0.0
        %1257 = vmatpush1.msra.mxu0 %v1162
        %1258 = vmatprep.subr.mxu0 0.0
        %1259 = vmatpush1.msra.mxu0 %v1163
        %1260 = vmatprep.subr.mxu0 0.0
        %1261 = vmatpush1.msra.mxu0 %v1164
        %1262 = vmatprep.subr.mxu0 0.0
        %1263 = vmatpush1.msra.mxu0 %v1165
        %1264 = vmatprep.subr.mxu0 0.0
        %1265 = vmatpush1.msra.mxu0 %v1166
        %1266 = vmatprep.subr.mxu0 0.0
        %1267 = vmatpush1.msra.mxu0 %v1167
        %1268 = vmatprep.subr.mxu0 0.0
        %1269 = vmatpush1.msra.mxu0 %v1168
        %1270 = vmatprep.subr.mxu0 0.0
        %1271 = vmatpush1.msra.mxu0 0.0
        %1272 = vmatprep.subr.mxu0 0.0
        %1273 = vmatpush1.msra.mxu0 0.0
        %1274 = vmatprep.subr.mxu0 0.0
        %1275 = vmatpush1.msra.mxu0 0.0
        %1276 = vmatprep.subr.mxu0 0.0
        %1277 = vmatpush1.msra.mxu0 0.0
        %1278 = vmatprep.subr.mxu0 0.0
        %1279 = vmatpush1.msra.mxu0 0.0
        %1280 = vmatprep.subr.mxu0 0.0
        %1281 = vmatpush1.msra.mxu0 0.0
        %1282 = vmatprep.subr.mxu0 0.0
        %1283 = vmatpush1.msra.mxu0 0.0
        %1284 = vmatprep.subr.mxu0 0.0
        %1285 = vmatpush1.msra.mxu0 0.0
        %1286 = vmatprep.subr.mxu0 0.0
        %1287 = vmatpush1.msra.mxu0 0.0
        %1288 = vmatprep.subr.mxu0 0.0
        %1289 = vmatpush1.msra.mxu0 0.0
        %1290 = vmatprep.subr.mxu0 0.0
        %1291 = vmatpush1.msra.mxu0 0.0
        %1292 = vmatprep.subr.mxu0 0.0
        %1293 = vmatpush1.msra.mxu0 0.0
        %1294 = vmatprep.subr.mxu0 0.0
        %1295 = vmatpush1.msra.mxu0 0.0
        %1296 = vmatprep.subr.mxu0 0.0
        %1297 = vmatpush1.msra.mxu0 0.0
        %1298 = vmatprep.subr.mxu0 0.0
        %1299 = vmatpush1.msra.mxu0 0.0
        %1300 = vmatprep.subr.mxu0 0.0
        %1301 = vmatpush1.msra.mxu0 0.0
        %1302 = vmatprep.subr.mxu0 0.0
        %1303 = vmatpush1.msra.mxu0 0.0
        %1304 = vmatprep.subr.mxu0 0.0
        %1305 = vmatpush1.msra.mxu0 0.0
        %1306 = vmatprep.subr.mxu0 0.0
        %1307 = vmatpush1.msra.mxu0 0.0
        %1308 = vmatprep.subr.mxu0 0.0
        %1309 = vmatpush1.msra.mxu0 0.0
        %1310 = vmatprep.subr.mxu0 0.0
        %1311 = vmatpush1.msra.mxu0 0.0
        %1312 = vmatprep.subr.mxu0 0.0
        %1313 = vmatpush1.msra.mxu0 0.0
        %1314 = vmatprep.subr.mxu0 0.0
        %1315 = vmatpush1.msra.mxu0 0.0
        %1316 = vmatprep.subr.mxu0 0.0
        %1317 = vmatpush1.msra.mxu0 0.0
        %1318 = vmatprep.mubr.f32.mxu0 0.0
        %1319 = vmatmul.mubr.f32.gmra.mrb[0].mxu0 %v1249
        %v1320 = vpop.f32.mrb[0].mxu0
        %v1321 = vadd.f32 %v1245, %v1320
        %v1322 = vpop.f32.mrb[0].mxu0
        %1323 = vmatprep.mubr.f32.mxu0 0.0
        %1324 = vmatmul.mubr.f32.gmra.mrb[0].mxu0 %v1252
        %v1325 = vpop.f32.mrb[0].mxu0
        %v1326 = vadd.f32 %v1245, %v1325
        %v1327 = vpop.f32.mrb[0].mxu0
        %1328 = vdwg.mxu0
        %v1330 = vlaneseq
        %v1331 = vshrl.u32 %v1330, 7
        %v1332 = vsub.s32 0, %v1331
        %v1333 = vrot.slane %v1200, %v1332
        %1335 = vmatprep.subr.mxu0 0.0
        %1336 = vmatpush1.msra.mxu0 %v1188
        %1337 = vmatprep.subr.mxu0 0.0
        %1338 = vmatpush1.msra.mxu0 %v1189
        %1339 = vmatprep.subr.mxu0 0.0
        %1340 = vmatpush1.msra.mxu0 %v1190
        %1341 = vmatprep.subr.mxu0 0.0
        %1342 = vmatpush1.msra.mxu0 %v1191
        %1343 = vmatprep.subr.mxu0 0.0
        %1344 = vmatpush1.msra.mxu0 %v1192
        %1345 = vmatprep.subr.mxu0 0.0
        %1346 = vmatpush1.msra.mxu0 %v1193
        %1347 = vmatprep.subr.mxu0 0.0
        %1348 = vmatpush1.msra.mxu0 %v1194
        %1349 = vmatprep.subr.mxu0 0.0
        %1350 = vmatpush1.msra.mxu0 %v1195
        %1351 = vmatprep.subr.mxu0 0.0
        %1352 = vmatpush1.msra.mxu0 0.0
        %1353 = vmatprep.subr.mxu0 0.0
        %1354 = vmatpush1.msra.mxu0 0.0
        %1355 = vmatprep.subr.mxu0 0.0
        %1356 = vmatpush1.msra.mxu0 0.0
        %1357 = vmatprep.subr.mxu0 0.0
        %1358 = vmatpush1.msra.mxu0 0.0
        %1359 = vmatprep.subr.mxu0 0.0
        %1360 = vmatpush1.msra.mxu0 0.0
        %1361 = vmatprep.subr.mxu0 0.0
        %1362 = vmatpush1.msra.mxu0 0.0
        %1363 = vmatprep.subr.mxu0 0.0
        %1364 = vmatpush1.msra.mxu0 0.0
        %1365 = vmatprep.subr.mxu0 0.0
        %1366 = vmatpush1.msra.mxu0 0.0
        %1367 = vmatprep.subr.mxu0 0.0
        %1368 = vmatpush1.msra.mxu0 0.0
        %1369 = vmatprep.subr.mxu0 0.0
        %1370 = vmatpush1.msra.mxu0 0.0
        %1371 = vmatprep.subr.mxu0 0.0
        %1372 = vmatpush1.msra.mxu0 0.0
        %1373 = vmatprep.subr.mxu0 0.0
        %1374 = vmatpush1.msra.mxu0 0.0
        %1375 = vmatprep.subr.mxu0 0.0
        %1376 = vmatpush1.msra.mxu0 0.0
        %1377 = vmatprep.subr.mxu0 0.0
        %1378 = vmatpush1.msra.mxu0 0.0
        %1379 = vmatprep.subr.mxu0 0.0
        %1380 = vmatpush1.msra.mxu0 0.0
        %1381 = vmatprep.subr.mxu0 0.0
        %1382 = vmatpush1.msra.mxu0 0.0
        %1383 = vmatprep.subr.mxu0 0.0
        %1384 = vmatpush1.msra.mxu0 0.0
        %1385 = vmatprep.subr.mxu0 0.0
        %1386 = vmatpush1.msra.mxu0 0.0
        %1387 = vmatprep.subr.mxu0 0.0
        %1388 = vmatpush1.msra.mxu0 0.0
        %1389 = vmatprep.subr.mxu0 0.0
        %1390 = vmatpush1.msra.mxu0 0.0
        %1391 = vmatprep.subr.mxu0 0.0
        %1392 = vmatpush1.msra.mxu0 0.0
        %1393 = vmatprep.subr.mxu0 0.0
        %1394 = vmatpush1.msra.mxu0 0.0
        %1395 = vmatprep.subr.mxu0 0.0
        %1396 = vmatpush1.msra.mxu0 0.0
        %1397 = vmatprep.subr.mxu0 0.0
        %1398 = vmatpush1.msra.mxu0 0.0
        %1399 = vmatprep.mubr.f32.mxu0 0.0
        %1400 = vmatmul.mubr.f32.gmra.mrb[0].mxu0 %v1249
        %v1401 = vpop.f32.mrb[0].mxu0
        %v1402 = vadd.f32 %v1333, %v1401
        %v1403 = vpop.f32.mrb[0].mxu0
        %1404 = vmatprep.mubr.f32.mxu0 0.0
        %1405 = vmatmul.mubr.f32.gmra.mrb[0].mxu0 %v1252
        %v1406 = vpop.f32.mrb[0].mxu0
        %v1407 = vadd.f32 %v1333, %v1406
        %v1408 = vpop.f32.mrb[0].mxu0
        %1409 = vdwg.mxu0
        %v1410 = vlaneseq
        %v1411 = vshrl.u32 %v1410, 7
        %v1412 = vadd.s32 %v1411, 8
        %1413 = vmatprep.subr.mxu0 0.0
        %1414 = vmatpush1.msra.mxu0 %v1144
        %1415 = vmatprep.subr.mxu0 0.0
        %1416 = vmatpush1.msra.mxu0 %v1145
        %1417 = vmatprep.subr.mxu0 0.0
        %1418 = vmatpush1.msra.mxu0 %v1146
        %1419 = vmatprep.subr.mxu0 0.0
        %1420 = vmatpush1.msra.mxu0 %v1147
        %1421 = vmatprep.subr.mxu0 0.0
        %1422 = vmatpush1.msra.mxu0 %v1148
        %1423 = vmatprep.subr.mxu0 0.0
        %1424 = vmatpush1.msra.mxu0 %v1149
        %1425 = vmatprep.subr.mxu0 0.0
        %1426 = vmatpush1.msra.mxu0 %v1150
        %1427 = vmatprep.subr.mxu0 0.0
        %1428 = vmatpush1.msra.mxu0 %v1151
        %1429 = vmatprep.subr.mxu0 0.0
        %1430 = vmatpush1.msra.mxu0 0.0
        %1431 = vmatprep.subr.mxu0 0.0
        %1432 = vmatpush1.msra.mxu0 0.0
        %1433 = vmatprep.subr.mxu0 0.0
        %1434 = vmatpush1.msra.mxu0 0.0
        %1435 = vmatprep.subr.mxu0 0.0
        %1436 = vmatpush1.msra.mxu0 0.0
        %1437 = vmatprep.subr.mxu0 0.0
        %1438 = vmatpush1.msra.mxu0 0.0
        %1439 = vmatprep.subr.mxu0 0.0
        %1440 = vmatpush1.msra.mxu0 0.0
        %1441 = vmatprep.subr.mxu0 0.0
        %1442 = vmatpush1.msra.mxu0 0.0
        %1443 = vmatprep.subr.mxu0 0.0
        %1444 = vmatpush1.msra.mxu0 0.0
        %1445 = vmatprep.subr.mxu0 0.0
        %1446 = vmatpush1.msra.mxu0 0.0
        %1447 = vmatprep.subr.mxu0 0.0
        %1448 = vmatpush1.msra.mxu0 0.0
        %1449 = vmatprep.subr.mxu0 0.0
        %1450 = vmatpush1.msra.mxu0 0.0
        %1451 = vmatprep.subr.mxu0 0.0
        %1452 = vmatpush1.msra.mxu0 0.0
        %1453 = vmatprep.subr.mxu0 0.0
        %1454 = vmatpush1.msra.mxu0 0.0
        %1455 = vmatprep.subr.mxu0 0.0
        %1456 = vmatpush1.msra.mxu0 0.0
        %1457 = vmatprep.subr.mxu0 0.0
        %1458 = vmatpush1.msra.mxu0 0.0
        %1459 = vmatprep.subr.mxu0 0.0
        %1460 = vmatpush1.msra.mxu0 0.0
        %1461 = vmatprep.subr.mxu0 0.0
        %1462 = vmatpush1.msra.mxu0 0.0
        %1463 = vmatprep.subr.mxu0 0.0
        %1464 = vmatpush1.msra.mxu0 0.0
        %1465 = vmatprep.subr.mxu0 0.0
        %1466 = vmatpush1.msra.mxu0 0.0
        %1467 = vmatprep.subr.mxu0 0.0
        %1468 = vmatpush1.msra.mxu0 0.0
        %1469 = vmatprep.subr.mxu0 0.0
        %1470 = vmatpush1.msra.mxu0 0.0
        %1471 = vmatprep.subr.mxu0 0.0
        %1472 = vmatpush1.msra.mxu0 0.0
        %1473 = vmatprep.subr.mxu0 0.0
        %1474 = vmatpush1.msra.mxu0 0.0
        %1475 = vmatprep.subr.mxu0 0.0
        %1476 = vmatpush1.msra.mxu0 0.0
        %1477 = vmatprep.mubr.f32.mxu0 0.0
        %1478 = vmatmul.mubr.f32.gmra.mrb[0].mxu0 %v1249
        %v1479 = vpop.f32.mrb[0].mxu0
        %v1480 = vadd.f32 0.0, %v1479
        %v1481 = vpop.f32.mrb[0].mxu0
        %1482 = vdwg.mxu0
        %vm1483 = vcmask 261120
        %v1485 = vsel %vm1483, 0.0, 0
        %1487 = vmatprep.subr.mxu0 0.0
        %1488 = vmatpush1.msra.mxu0 %v1140
        %1489 = vmatprep.subr.mxu0 0.0
        %1490 = vmatpush1.msra.mxu0 %v1141
        %1491 = vmatprep.subr.mxu0 0.0
        %1492 = vmatpush1.msra.mxu0 %v1142
        %1493 = vmatprep.subr.mxu0 0.0
        %1494 = vmatpush1.msra.mxu0 %v1143
        %1495 = vmatprep.subr.mxu0 0.0
        %1496 = vmatpush1.msra.mxu0 0.0
        %1497 = vmatprep.subr.mxu0 0.0
        %1498 = vmatpush1.msra.mxu0 0.0
        %1499 = vmatprep.subr.mxu0 0.0
        %1500 = vmatpush1.msra.mxu0 0.0
        %1501 = vmatprep.subr.mxu0 0.0
        %1502 = vmatpush1.msra.mxu0 0.0
        %1503 = vmatprep.subr.mxu0 0.0
        %1504 = vmatpush1.msra.mxu0 0.0
        %1505 = vmatprep.subr.mxu0 0.0
        %1506 = vmatpush1.msra.mxu0 0.0
        %1507 = vmatprep.subr.mxu0 0.0
        %1508 = vmatpush1.msra.mxu0 0.0
        %1509 = vmatprep.subr.mxu0 0.0
        %1510 = vmatpush1.msra.mxu0 0.0
        %1511 = vmatprep.subr.mxu0 0.0
        %1512 = vmatpush1.msra.mxu0 0.0
        %1513 = vmatprep.subr.mxu0 0.0
        %1514 = vmatpush1.msra.mxu0 0.0
        %1515 = vmatprep.subr.mxu0 0.0
        %1516 = vmatpush1.msra.mxu0 0.0
        %1517 = vmatprep.subr.mxu0 0.0
        %1518 = vmatpush1.msra.mxu0 0.0
        %1519 = vmatprep.subr.mxu0 0.0
        %1520 = vmatpush1.msra.mxu0 0.0
        %1521 = vmatprep.subr.mxu0 0.0
        %1522 = vmatpush1.msra.mxu0 0.0
        %1523 = vmatprep.subr.mxu0 0.0
        %1524 = vmatpush1.msra.mxu0 0.0
        %1525 = vmatprep.subr.mxu0 0.0
        %1526 = vmatpush1.msra.mxu0 0.0
        %1527 = vmatprep.subr.mxu0 0.0
        %1528 = vmatpush1.msra.mxu0 0.0
        %1529 = vmatprep.subr.mxu0 0.0
        %1530 = vmatpush1.msra.mxu0 0.0
        %1531 = vmatprep.subr.mxu0 0.0
        %1532 = vmatpush1.msra.mxu0 0.0
        %1533 = vmatprep.subr.mxu0 0.0
        %1534 = vmatpush1.msra.mxu0 0.0
        %1535 = vmatprep.subr.mxu0 0.0
        %1536 = vmatpush1.msra.mxu0 0.0
        %1537 = vmatprep.subr.mxu0 0.0
        %1538 = vmatpush1.msra.mxu0 0.0
        %1539 = vmatprep.subr.mxu0 0.0
        %1540 = vmatpush1.msra.mxu0 0.0
        %1541 = vmatprep.subr.mxu0 0.0
        %1542 = vmatpush1.msra.mxu0 0.0
        %1543 = vmatprep.subr.mxu0 0.0
        %1544 = vmatpush1.msra.mxu0 0.0
        %1545 = vmatprep.subr.mxu0 0.0
        %1546 = vmatpush1.msra.mxu0 0.0
        %1547 = vmatprep.subr.mxu0 0.0
        %1548 = vmatpush1.msra.mxu0 0.0
        %1549 = vmatprep.subr.mxu0 0.0
        %1550 = vmatpush1.msra.mxu0 0.0
        %1551 = vmatprep.mubr.f32.mxu0 0.0
        %1552 = vmatmul.mubr.f32.gmra.mrb[0].mxu0 %v1485
        %v1553 = vpop.f32.mrb[0].mxu0
        %v1554 = vadd.f32 %v1480, %v1553
        %v1555 = vpop.f32.mrb[0].mxu0
        %1556 = vdwg.mxu0
        %1557 = vmatprep.subr.mxu0 0.0
        %1558 = vmatpush1.msra.mxu0 %v1152
        %1559 = vmatprep.subr.mxu0 0.0
        %1560 = vmatpush1.msra.mxu0 %v1153
        %1561 = vmatprep.subr.mxu0 0.0
        %1562 = vmatpush1.msra.mxu0 %v1154
        %1563 = vmatprep.subr.mxu0 0.0
        %1564 = vmatpush1.msra.mxu0 %v1155
        %1565 = vmatprep.subr.mxu0 0.0
        %1566 = vmatpush1.msra.mxu0 %v1156
        %1567 = vmatprep.subr.mxu0 0.0
        %1568 = vmatpush1.msra.mxu0 %v1157
        %1569 = vmatprep.subr.mxu0 0.0
        %1570 = vmatpush1.msra.mxu0 %v1158
        %1571 = vmatprep.subr.mxu0 0.0
        %1572 = vmatpush1.msra.mxu0 %v1159
        %1573 = vmatprep.subr.mxu0 0.0
        %1574 = vmatpush1.msra.mxu0 0.0
        %1575 = vmatprep.subr.mxu0 0.0
        %1576 = vmatpush1.msra.mxu0 0.0
        %1577 = vmatprep.subr.mxu0 0.0
        %1578 = vmatpush1.msra.mxu0 0.0
        %1579 = vmatprep.subr.mxu0 0.0
        %1580 = vmatpush1.msra.mxu0 0.0
        %1581 = vmatprep.subr.mxu0 0.0
        %1582 = vmatpush1.msra.mxu0 0.0
        %1583 = vmatprep.subr.mxu0 0.0
        %1584 = vmatpush1.msra.mxu0 0.0
        %1585 = vmatprep.subr.mxu0 0.0
        %1586 = vmatpush1.msra.mxu0 0.0
        %1587 = vmatprep.subr.mxu0 0.0
        %1588 = vmatpush1.msra.mxu0 0.0
        %1589 = vmatprep.subr.mxu0 0.0
        %1590 = vmatpush1.msra.mxu0 0.0
        %1591 = vmatprep.subr.mxu0 0.0
        %1592 = vmatpush1.msra.mxu0 0.0
        %1593 = vmatprep.subr.mxu0 0.0
        %1594 = vmatpush1.msra.mxu0 0.0
        %1595 = vmatprep.subr.mxu0 0.0
        %1596 = vmatpush1.msra.mxu0 0.0
        %1597 = vmatprep.subr.mxu0 0.0
        %1598 = vmatpush1.msra.mxu0 0.0
        %1599 = vmatprep.subr.mxu0 0.0
        %1600 = vmatpush1.msra.mxu0 0.0
        %1601 = vmatprep.subr.mxu0 0.0
        %1602 = vmatpush1.msra.mxu0 0.0
        %1603 = vmatprep.subr.mxu0 0.0
        %1604 = vmatpush1.msra.mxu0 0.0
        %1605 = vmatprep.subr.mxu0 0.0
        %1606 = vmatpush1.msra.mxu0 0.0
        %1607 = vmatprep.subr.mxu0 0.0
        %1608 = vmatpush1.msra.mxu0 0.0
        %1609 = vmatprep.subr.mxu0 0.0
        %1610 = vmatpush1.msra.mxu0 0.0
        %1611 = vmatprep.subr.mxu0 0.0
        %1612 = vmatpush1.msra.mxu0 0.0
        %1613 = vmatprep.subr.mxu0 0.0
        %1614 = vmatpush1.msra.mxu0 0.0
        %1615 = vmatprep.subr.mxu0 0.0
        %1616 = vmatpush1.msra.mxu0 0.0
        %1617 = vmatprep.subr.mxu0 0.0
        %1618 = vmatpush1.msra.mxu0 0.0
        %1619 = vmatprep.subr.mxu0 0.0
        %1620 = vmatpush1.msra.mxu0 0.0
        %1621 = vmatprep.mubr.f32.mxu0 0.0
        %1622 = vmatmul.mubr.f32.gmra.mrb[0].mxu0 %v1249
        %v1623 = vpop.f32.mrb[0].mxu0
        %v1624 = vadd.f32 0.0, %v1623
        %v1625 = vpop.f32.mrb[0].mxu0
        %1626 = vdwg.mxu0
        %v1627 = vadd.f32 %v1554, %v1624
        %v1628 = vadd.f32 %v1627, %v1160
        %v1629 = vtanh.pop %v1628
        %v1631 = vsel %vm1483, %v1629, 0
        %1633 = vmatprep.subr.mxu0 0.0
        %1634 = vmatpush1.msra.mxu0 %v1169
        %1635 = vmatprep.subr.mxu0 0.0
        %1636 = vmatpush1.msra.mxu0 %v1170
        %1637 = vmatprep.subr.mxu0 0.0
        %1638 = vmatpush1.msra.mxu0 %v1171
        %1639 = vmatprep.subr.mxu0 0.0
        %1640 = vmatpush1.msra.mxu0 %v1172
        %1641 = vmatprep.subr.mxu0 0.0
        %1642 = vmatpush1.msra.mxu0 0.0
        %1643 = vmatprep.subr.mxu0 0.0
        %1644 = vmatpush1.msra.mxu0 0.0
        %1645 = vmatprep.subr.mxu0 0.0
        %1646 = vmatpush1.msra.mxu0 0.0
        %1647 = vmatprep.subr.mxu0 0.0
        %1648 = vmatpush1.msra.mxu0 0.0
        %1649 = vmatprep.subr.mxu0 0.0
        %1650 = vmatpush1.msra.mxu0 0.0
        %1651 = vmatprep.subr.mxu0 0.0
        %1652 = vmatpush1.msra.mxu0 0.0
        %1653 = vmatprep.subr.mxu0 0.0
        %1654 = vmatpush1.msra.mxu0 0.0
        %1655 = vmatprep.subr.mxu0 0.0
        %1656 = vmatpush1.msra.mxu0 0.0
        %1657 = vmatprep.subr.mxu0 0.0
        %1658 = vmatpush1.msra.mxu0 0.0
        %1659 = vmatprep.subr.mxu0 0.0
        %1660 = vmatpush1.msra.mxu0 0.0
        %1661 = vmatprep.subr.mxu0 0.0
        %1662 = vmatpush1.msra.mxu0 0.0
        %1663 = vmatprep.subr.mxu0 0.0
        %1664 = vmatpush1.msra.mxu0 0.0
        %1665 = vmatprep.subr.mxu0 0.0
        %1666 = vmatpush1.msra.mxu0 0.0
        %1667 = vmatprep.subr.mxu0 0.0
        %1668 = vmatpush1.msra.mxu0 0.0
        %1669 = vmatprep.subr.mxu0 0.0
        %1670 = vmatpush1.msra.mxu0 0.0
        %1671 = vmatprep.subr.mxu0 0.0
        %1672 = vmatpush1.msra.mxu0 0.0
        %1673 = vmatprep.subr.mxu0 0.0
        %1674 = vmatpush1.msra.mxu0 0.0
        %1675 = vmatprep.subr.mxu0 0.0
        %1676 = vmatpush1.msra.mxu0 0.0
        %1677 = vmatprep.subr.mxu0 0.0
        %1678 = vmatpush1.msra.mxu0 0.0
        %1679 = vmatprep.subr.mxu0 0.0
        %1680 = vmatpush1.msra.mxu0 0.0
        %1681 = vmatprep.subr.mxu0 0.0
        %1682 = vmatpush1.msra.mxu0 0.0
        %1683 = vmatprep.subr.mxu0 0.0
        %1684 = vmatpush1.msra.mxu0 0.0
        %1685 = vmatprep.subr.mxu0 0.0
        %1686 = vmatpush1.msra.mxu0 0.0
        %1687 = vmatprep.subr.mxu0 0.0
        %1688 = vmatpush1.msra.mxu0 0.0
        %1689 = vmatprep.subr.mxu0 0.0
        %1690 = vmatpush1.msra.mxu0 0.0
        %1691 = vmatprep.subr.mxu0 0.0
        %1692 = vmatpush1.msra.mxu0 0.0
        %1693 = vmatprep.subr.mxu0 0.0
        %1694 = vmatpush1.msra.mxu0 0.0
        %1695 = vmatprep.subr.mxu0 0.0
        %1696 = vmatpush1.msra.mxu0 0.0
        %1697 = vmatprep.mubr.f32.mxu0 0.0
        %1698 = vmatmul.mubr.f32.gmra.mrb[0].mxu0 %v1631
        %v1699 = vpop.f32.mrb[0].mxu0
        %v1700 = vadd.f32 0.0, %v1699
        %v1701 = vpop.f32.mrb[0].mxu0
        %1702 = vdwg.mxu0
        %v1703 = vlaneseq
        %v1704 = vshrl.u32 %v1703, 7
        %v1705 = vsub.s32 0, %v1704
        %v1706 = vrot.slane %v1700, %v1705
        %v1707 = vadd.f32 %v1321, %v1706
        %v1708 = vadd.f32 %v1326, %v1706
        %1711 = vrot.lane.b32.xlu0 %v1707, 96
        %v1712 = vpop.permute.xlu0 %1711
        %1713 = vrot.lane.b32.xlu0 %v1708, 96
        %v1714 = vpop.permute.xlu0 %1713
        %v1717 = vmax.f32 %v1707, %v1712
        %v1718 = vmax.f32 %v1708, %v1714
        %v1720 = vlaneseq
        %v1721 = vshrl.u32 %v1720, 7
        %v1722 = vsub.s32 0, %v1721
        %v1723 = vrot.slane %v1178, %v1722
        %v1726 = vsel %vm1483, %v1717, 0
        %v1729 = vsel %vm1483, %v1718, 0
        %1731 = vmatprep.subr.mxu0 0.0
        %1732 = vmatpush1.msra.mxu0 %v1174
        %1733 = vmatprep.subr.mxu0 0.0
        %1734 = vmatpush1.msra.mxu0 %v1175
        %1735 = vmatprep.subr.mxu0 0.0
        %1736 = vmatpush1.msra.mxu0 %v1176
        %1737 = vmatprep.subr.mxu0 0.0
        %1738 = vmatpush1.msra.mxu0 %v1177
        %1739 = vmatprep.subr.mxu0 0.0
        %1740 = vmatpush1.msra.mxu0 0.0
        %1741 = vmatprep.subr.mxu0 0.0
        %1742 = vmatpush1.msra.mxu0 0.0
        %1743 = vmatprep.subr.mxu0 0.0
        %1744 = vmatpush1.msra.mxu0 0.0
        %1745 = vmatprep.subr.mxu0 0.0
        %1746 = vmatpush1.msra.mxu0 0.0
        %1747 = vmatprep.subr.mxu0 0.0
        %1748 = vmatpush1.msra.mxu0 0.0
        %1749 = vmatprep.subr.mxu0 0.0
        %1750 = vmatpush1.msra.mxu0 0.0
        %1751 = vmatprep.subr.mxu0 0.0
        %1752 = vmatpush1.msra.mxu0 0.0
        %1753 = vmatprep.subr.mxu0 0.0
        %1754 = vmatpush1.msra.mxu0 0.0
        %1755 = vmatprep.subr.mxu0 0.0
        %1756 = vmatpush1.msra.mxu0 0.0
        %1757 = vmatprep.subr.mxu0 0.0
        %1758 = vmatpush1.msra.mxu0 0.0
        %1759 = vmatprep.subr.mxu0 0.0
        %1760 = vmatpush1.msra.mxu0 0.0
        %1761 = vmatprep.subr.mxu0 0.0
        %1762 = vmatpush1.msra.mxu0 0.0
        %1763 = vmatprep.subr.mxu0 0.0
        %1764 = vmatpush1.msra.mxu0 0.0
        %1765 = vmatprep.subr.mxu0 0.0
        %1766 = vmatpush1.msra.mxu0 0.0
        %1767 = vmatprep.subr.mxu0 0.0
        %1768 = vmatpush1.msra.mxu0 0.0
        %1769 = vmatprep.subr.mxu0 0.0
        %1770 = vmatpush1.msra.mxu0 0.0
        %1771 = vmatprep.subr.mxu0 0.0
        %1772 = vmatpush1.msra.mxu0 0.0
        %1773 = vmatprep.subr.mxu0 0.0
        %1774 = vmatpush1.msra.mxu0 0.0
        %1775 = vmatprep.subr.mxu0 0.0
        %1776 = vmatpush1.msra.mxu0 0.0
        %1777 = vmatprep.subr.mxu0 0.0
        %1778 = vmatpush1.msra.mxu0 0.0
        %1779 = vmatprep.subr.mxu0 0.0
        %1780 = vmatpush1.msra.mxu0 0.0
        %1781 = vmatprep.subr.mxu0 0.0
        %1782 = vmatpush1.msra.mxu0 0.0
        %1783 = vmatprep.subr.mxu0 0.0
        %1784 = vmatpush1.msra.mxu0 0.0
        %1785 = vmatprep.subr.mxu0 0.0
        %1786 = vmatpush1.msra.mxu0 0.0
        %1787 = vmatprep.subr.mxu0 0.0
        %1788 = vmatpush1.msra.mxu0 0.0
        %1789 = vmatprep.subr.mxu0 0.0
        %1790 = vmatpush1.msra.mxu0 0.0
        %1791 = vmatprep.subr.mxu0 0.0
        %1792 = vmatpush1.msra.mxu0 0.0
        %1793 = vmatprep.subr.mxu0 0.0
        %1794 = vmatpush1.msra.mxu0 0.0
        %1795 = vmatprep.mubr.f32.mxu0 0.0
        %1796 = vmatmul.mubr.f32.gmra.mrb[0].mxu0 %v1726
        %v1797 = vpop.f32.mrb[0].mxu0
        %v1798 = vadd.f32 %v1723, %v1797
        %v1799 = vpop.f32.mrb[0].mxu0
        %1800 = vmatprep.mubr.f32.mxu0 0.0
        %1801 = vmatmul.mubr.f32.gmra.mrb[0].mxu0 %v1729
        %v1802 = vpop.f32.mrb[0].mxu0
        %v1803 = vadd.f32 %v1723, %v1802
        %v1804 = vpop.f32.mrb[0].mxu0
        %1805 = vdwg.mxu0
        %1808 = vrot.lane.b32.xlu0 %v1798, 96
        %v1809 = vpop.permute.xlu0 %1808
        %1810 = vrot.lane.b32.xlu0 %v1803, 96
        %v1811 = vpop.permute.xlu0 %1810
        %v1814 = vmax.f32 %v1798, %v1809
        %v1815 = vmax.f32 %v1803, %v1811
        %v1817 = vsel %vm1483, %v1814, 0
        %v1820 = vsel %vm1483, %v1815, 0
        %1822 = vmatprep.subr.mxu0 0.0
        %1823 = vmatpush1.msra.mxu0 %v1183
        %1824 = vmatprep.subr.mxu0 0.0
        %1825 = vmatpush1.msra.mxu0 %v1184
        %1826 = vmatprep.subr.mxu0 0.0
        %1827 = vmatpush1.msra.mxu0 %v1185
        %1828 = vmatprep.subr.mxu0 0.0
        %1829 = vmatpush1.msra.mxu0 %v1186
        %1830 = vmatprep.subr.mxu0 0.0
        %1831 = vmatpush1.msra.mxu0 0.0
        %1832 = vmatprep.subr.mxu0 0.0
        %1833 = vmatpush1.msra.mxu0 0.0
        %1834 = vmatprep.subr.mxu0 0.0
        %1835 = vmatpush1.msra.mxu0 0.0
        %1836 = vmatprep.subr.mxu0 0.0
        %1837 = vmatpush1.msra.mxu0 0.0
        %1838 = vmatprep.subr.mxu0 0.0
        %1839 = vmatpush1.msra.mxu0 0.0
        %1840 = vmatprep.subr.mxu0 0.0
        %1841 = vmatpush1.msra.mxu0 0.0
        %1842 = vmatprep.subr.mxu0 0.0
        %1843 = vmatpush1.msra.mxu0 0.0
        %1844 = vmatprep.subr.mxu0 0.0
        %1845 = vmatpush1.msra.mxu0 0.0
        %1846 = vmatprep.subr.mxu0 0.0
        %1847 = vmatpush1.msra.mxu0 0.0
        %1848 = vmatprep.subr.mxu0 0.0
        %1849 = vmatpush1.msra.mxu0 0.0
        %1850 = vmatprep.subr.mxu0 0.0
        %1851 = vmatpush1.msra.mxu0 0.0
        %1852 = vmatprep.subr.mxu0 0.0
        %1853 = vmatpush1.msra.mxu0 0.0
        %1854 = vmatprep.subr.mxu0 0.0
        %1855 = vmatpush1.msra.mxu0 0.0
        %1856 = vmatprep.subr.mxu0 0.0
        %1857 = vmatpush1.msra.mxu0 0.0
        %1858 = vmatprep.subr.mxu0 0.0
        %1859 = vmatpush1.msra.mxu0 0.0
        %1860 = vmatprep.subr.mxu0 0.0
        %1861 = vmatpush1.msra.mxu0 0.0
        %1862 = vmatprep.subr.mxu0 0.0
        %1863 = vmatpush1.msra.mxu0 0.0
        %1864 = vmatprep.subr.mxu0 0.0
        %1865 = vmatpush1.msra.mxu0 0.0
        %1866 = vmatprep.subr.mxu0 0.0
        %1867 = vmatpush1.msra.mxu0 0.0
        %1868 = vmatprep.subr.mxu0 0.0
        %1869 = vmatpush1.msra.mxu0 0.0
        %1870 = vmatprep.subr.mxu0 0.0
        %1871 = vmatpush1.msra.mxu0 0.0
        %1872 = vmatprep.subr.mxu0 0.0
        %1873 = vmatpush1.msra.mxu0 0.0
        %1874 = vmatprep.subr.mxu0 0.0
        %1875 = vmatpush1.msra.mxu0 0.0
        %1876 = vmatprep.subr.mxu0 0.0
        %1877 = vmatpush1.msra.mxu0 0.0
        %1878 = vmatprep.subr.mxu0 0.0
        %1879 = vmatpush1.msra.mxu0 0.0
        %1880 = vmatprep.subr.mxu0 0.0
        %1881 = vmatpush1.msra.mxu0 0.0
        %1882 = vmatprep.subr.mxu0 0.0
        %1883 = vmatpush1.msra.mxu0 0.0
        %1884 = vmatprep.subr.mxu0 0.0
        %1885 = vmatpush1.msra.mxu0 0.0
        %1886 = vmatprep.mubr.f32.mxu0 0.0
        %1887 = vmatmul.mubr.f32.gmra.mrb[0].mxu0 %v1817
        %v1888 = vpop.f32.mrb[0].mxu0
        %v1889 = vadd.f32 0.0, %v1888
        %v1890 = vpop.f32.mrb[0].mxu0
        %1891 = vmatprep.mubr.f32.mxu0 0.0
        %1892 = vmatmul.mubr.f32.gmra.mrb[0].mxu0 %v1820
        %v1893 = vpop.f32.mrb[0].mxu0
        %v1894 = vadd.f32 0.0, %v1893
        %v1895 = vpop.f32.mrb[0].mxu0
        %1896 = vdwg.mxu0
        %1897 = vmatprep.subr.mxu0 0.0
        %1898 = vmatpush1.msra.mxu0 %v1179
        %1899 = vmatprep.subr.mxu0 0.0
        %1900 = vmatpush1.msra.mxu0 %v1180
        %1901 = vmatprep.subr.mxu0 0.0
        %1902 = vmatpush1.msra.mxu0 %v1181
        %1903 = vmatprep.subr.mxu0 0.0
        %1904 = vmatpush1.msra.mxu0 %v1182
        %1905 = vmatprep.subr.mxu0 0.0
        %1906 = vmatpush1.msra.mxu0 0.0
        %1907 = vmatprep.subr.mxu0 0.0
        %1908 = vmatpush1.msra.mxu0 0.0
        %1909 = vmatprep.subr.mxu0 0.0
        %1910 = vmatpush1.msra.mxu0 0.0
        %1911 = vmatprep.subr.mxu0 0.0
        %1912 = vmatpush1.msra.mxu0 0.0
        %1913 = vmatprep.subr.mxu0 0.0
        %1914 = vmatpush1.msra.mxu0 0.0
        %1915 = vmatprep.subr.mxu0 0.0
        %1916 = vmatpush1.msra.mxu0 0.0
        %1917 = vmatprep.subr.mxu0 0.0
        %1918 = vmatpush1.msra.mxu0 0.0
        %1919 = vmatprep.subr.mxu0 0.0
        %1920 = vmatpush1.msra.mxu0 0.0
        %1921 = vmatprep.subr.mxu0 0.0
        %1922 = vmatpush1.msra.mxu0 0.0
        %1923 = vmatprep.subr.mxu0 0.0
        %1924 = vmatpush1.msra.mxu0 0.0
        %1925 = vmatprep.subr.mxu0 0.0
        %1926 = vmatpush1.msra.mxu0 0.0
        %1927 = vmatprep.subr.mxu0 0.0
        %1928 = vmatpush1.msra.mxu0 0.0
        %1929 = vmatprep.subr.mxu0 0.0
        %1930 = vmatpush1.msra.mxu0 0.0
        %1931 = vmatprep.subr.mxu0 0.0
        %1932 = vmatpush1.msra.mxu0 0.0
        %1933 = vmatprep.subr.mxu0 0.0
        %1934 = vmatpush1.msra.mxu0 0.0
        %1935 = vmatprep.subr.mxu0 0.0
        %1936 = vmatpush1.msra.mxu0 0.0
        %1937 = vmatprep.subr.mxu0 0.0
        %1938 = vmatpush1.msra.mxu0 0.0
        %1939 = vmatprep.subr.mxu0 0.0
        %1940 = vmatpush1.msra.mxu0 0.0
        %1941 = vmatprep.subr.mxu0 0.0
        %1942 = vmatpush1.msra.mxu0 0.0
        %1943 = vmatprep.subr.mxu0 0.0
        %1944 = vmatpush1.msra.mxu0 0.0
        %1945 = vmatprep.subr.mxu0 0.0
        %1946 = vmatpush1.msra.mxu0 0.0
        %1947 = vmatprep.subr.mxu0 0.0
        %1948 = vmatpush1.msra.mxu0 0.0
        %1949 = vmatprep.subr.mxu0 0.0
        %1950 = vmatpush1.msra.mxu0 0.0
        %1951 = vmatprep.subr.mxu0 0.0
        %1952 = vmatpush1.msra.mxu0 0.0
        %1953 = vmatprep.subr.mxu0 0.0
        %1954 = vmatpush1.msra.mxu0 0.0
        %1955 = vmatprep.subr.mxu0 0.0
        %1956 = vmatpush1.msra.mxu0 0.0
        %1957 = vmatprep.subr.mxu0 0.0
        %1958 = vmatpush1.msra.mxu0 0.0
        %1959 = vmatprep.subr.mxu0 0.0
        %1960 = vmatpush1.msra.mxu0 0.0
        %1961 = vmatprep.mubr.f32.mxu0 0.0
        %1962 = vmatmul.mubr.f32.gmra.mrb[0].mxu0 %v1726
        %v1963 = vpop.f32.mrb[0].mxu0
        %v1964 = vadd.f32 %v1889, %v1963
        %v1965 = vpop.f32.mrb[0].mxu0
        %1966 = vmatprep.mubr.f32.mxu0 0.0
        %1967 = vmatmul.mubr.f32.gmra.mrb[0].mxu0 %v1729
        %v1968 = vpop.f32.mrb[0].mxu0
        %v1969 = vadd.f32 %v1894, %v1968
        %v1970 = vpop.f32.mrb[0].mxu0
        %1971 = vdwg.mxu0
        %v1973 = vlaneseq
        %v1974 = vshrl.u32 %v1973, 7
        %v1975 = vsub.s32 0, %v1974
        %v1976 = vrot.slane %v1187, %v1975
        %v1978 = vadd.f32 %v1964, %v1976
        %v1979 = vadd.f32 %v1969, %v1976
        %vm1980 = vcmask 15360
        %v1981 = vsel %vm1980, %v1978, -inf
        %1982 = vmax.xlane.f32.xlu0 %v1981
        %v1983 = vpop.xlane.xlu0 %1982
        %v1984 = vsel %vm1980, %v1979, -inf
        %1985 = vmax.xlane.f32.xlu0 %v1984
        %v1986 = vpop.xlane.xlu0 %1985
        %1987 = vmatprep.subr.mxu0 0.0
        %1988 = vmatpush1.msra.mxu0 %v1196
        %1989 = vmatprep.subr.mxu0 0.0
        %1990 = vmatpush1.msra.mxu0 %v1197
        %1991 = vmatprep.subr.mxu0 0.0
        %1992 = vmatpush1.msra.mxu0 %v1198
        %1993 = vmatprep.subr.mxu0 0.0
        %1994 = vmatpush1.msra.mxu0 %v1199
        %1995 = vmatprep.subr.mxu0 0.0
        %1996 = vmatpush1.msra.mxu0 0.0
        %1997 = vmatprep.subr.mxu0 0.0
        %1998 = vmatpush1.msra.mxu0 0.0
        %1999 = vmatprep.subr.mxu0 0.0
        %2000 = vmatpush1.msra.mxu0 0.0
        %2001 = vmatprep.subr.mxu0 0.0
        %2002 = vmatpush1.msra.mxu0 0.0
        %2003 = vmatprep.subr.mxu0 0.0
        %2004 = vmatpush1.msra.mxu0 0.0
        %2005 = vmatprep.subr.mxu0 0.0
        %2006 = vmatpush1.msra.mxu0 0.0
        %2007 = vmatprep.subr.mxu0 0.0
        %2008 = vmatpush1.msra.mxu0 0.0
        %2009 = vmatprep.subr.mxu0 0.0
        %2010 = vmatpush1.msra.mxu0 0.0
        %2011 = vmatprep.subr.mxu0 0.0
        %2012 = vmatpush1.msra.mxu0 0.0
        %2013 = vmatprep.subr.mxu0 0.0
        %2014 = vmatpush1.msra.mxu0 0.0
        %2015 = vmatprep.subr.mxu0 0.0
        %2016 = vmatpush1.msra.mxu0 0.0
        %2017 = vmatprep.subr.mxu0 0.0
        %2018 = vmatpush1.msra.mxu0 0.0
        %2019 = vmatprep.subr.mxu0 0.0
        %2020 = vmatpush1.msra.mxu0 0.0
        %2021 = vmatprep.subr.mxu0 0.0
        %2022 = vmatpush1.msra.mxu0 0.0
        %2023 = vmatprep.subr.mxu0 0.0
        %2024 = vmatpush1.msra.mxu0 0.0
        %2025 = vmatprep.subr.mxu0 0.0
        %2026 = vmatpush1.msra.mxu0 0.0
        %2027 = vmatprep.subr.mxu0 0.0
        %2028 = vmatpush1.msra.mxu0 0.0
        %2029 = vmatprep.subr.mxu0 0.0
        %2030 = vmatpush1.msra.mxu0 0.0
        %2031 = vmatprep.subr.mxu0 0.0
        %2032 = vmatpush1.msra.mxu0 0.0
        %2033 = vmatprep.subr.mxu0 0.0
        %2034 = vmatpush1.msra.mxu0 0.0
        %2035 = vmatprep.subr.mxu0 0.0
        %2036 = vmatpush1.msra.mxu0 0.0
        %2037 = vmatprep.subr.mxu0 0.0
        %2038 = vmatpush1.msra.mxu0 0.0
        %2039 = vmatprep.subr.mxu0 0.0
        %2040 = vmatpush1.msra.mxu0 0.0
        %2041 = vmatprep.subr.mxu0 0.0
        %2042 = vmatpush1.msra.mxu0 0.0
        %2043 = vmatprep.subr.mxu0 0.0
        %2044 = vmatpush1.msra.mxu0 0.0
        %2045 = vmatprep.subr.mxu0 0.0
        %2046 = vmatpush1.msra.mxu0 0.0
        %2047 = vmatprep.subr.mxu0 0.0
        %2048 = vmatpush1.msra.mxu0 0.0
        %2049 = vmatprep.subr.mxu0 0.0
        %2050 = vmatpush1.msra.mxu0 0.0
        %2051 = vmatprep.mubr.f32.mxu0 0.0
        %2052 = vmatmul.mubr.f32.gmra.mrb[0].mxu0 %v1631
        %v2053 = vpop.f32.mrb[0].mxu0
        %v2054 = vadd.f32 0.0, %v2053
        %v2055 = vpop.f32.mrb[0].mxu0
        %2056 = vdwg.mxu0
        %v2057 = vlaneseq
        %v2058 = vshrl.u32 %v2057, 7
        %v2059 = vsub.s32 0, %v2058
        %v2060 = vrot.slane %v2054, %v2059
        %v2061 = vadd.f32 %v1402, %v2060
        %v2062 = vadd.f32 %v1407, %v2060
        %2065 = vrot.lane.b32.xlu0 %v2061, 96
        %v2066 = vpop.permute.xlu0 %2065
        %2067 = vrot.lane.b32.xlu0 %v2062, 96
        %v2068 = vpop.permute.xlu0 %2067
        %v2071 = vmax.f32 %v2061, %v2066
        %v2072 = vmax.f32 %v2062, %v2068
        %v2074 = vlaneseq
        %v2075 = vshrl.u32 %v2074, 7
        %v2076 = vsub.s32 0, %v2075
        %v2077 = vrot.slane %v1205, %v2076
        %v2080 = vsel %vm1483, %v2071, 0
        %v2083 = vsel %vm1483, %v2072, 0
        %2085 = vmatprep.subr.mxu0 0.0
        %2086 = vmatpush1.msra.mxu0 %v1201
        %2087 = vmatprep.subr.mxu0 0.0
        %2088 = vmatpush1.msra.mxu0 %v1202
        %2089 = vmatprep.subr.mxu0 0.0
        %2090 = vmatpush1.msra.mxu0 %v1203
        %2091 = vmatprep.subr.mxu0 0.0
        %2092 = vmatpush1.msra.mxu0 %v1204
        %2093 = vmatprep.subr.mxu0 0.0
        %2094 = vmatpush1.msra.mxu0 0.0
        %2095 = vmatprep.subr.mxu0 0.0
        %2096 = vmatpush1.msra.mxu0 0.0
        %2097 = vmatprep.subr.mxu0 0.0
        %2098 = vmatpush1.msra.mxu0 0.0
        %2099 = vmatprep.subr.mxu0 0.0
        %2100 = vmatpush1.msra.mxu0 0.0
        %2101 = vmatprep.subr.mxu0 0.0
        %2102 = vmatpush1.msra.mxu0 0.0
        %2103 = vmatprep.subr.mxu0 0.0
        %2104 = vmatpush1.msra.mxu0 0.0
        %2105 = vmatprep.subr.mxu0 0.0
        %2106 = vmatpush1.msra.mxu0 0.0
        %2107 = vmatprep.subr.mxu0 0.0
        %2108 = vmatpush1.msra.mxu0 0.0
        %2109 = vmatprep.subr.mxu0 0.0
        %2110 = vmatpush1.msra.mxu0 0.0
        %2111 = vmatprep.subr.mxu0 0.0
        %2112 = vmatpush1.msra.mxu0 0.0
        %2113 = vmatprep.subr.mxu0 0.0
        %2114 = vmatpush1.msra.mxu0 0.0
        %2115 = vmatprep.subr.mxu0 0.0
        %2116 = vmatpush1.msra.mxu0 0.0
        %2117 = vmatprep.subr.mxu0 0.0
        %2118 = vmatpush1.msra.mxu0 0.0
        %2119 = vmatprep.subr.mxu0 0.0
        %2120 = vmatpush1.msra.mxu0 0.0
        %2121 = vmatprep.subr.mxu0 0.0
        %2122 = vmatpush1.msra.mxu0 0.0
        %2123 = vmatprep.subr.mxu0 0.0
        %2124 = vmatpush1.msra.mxu0 0.0
        %2125 = vmatprep.subr.mxu0 0.0
        %2126 = vmatpush1.msra.mxu0 0.0
        %2127 = vmatprep.subr.mxu0 0.0
        %2128 = vmatpush1.msra.mxu0 0.0
        %2129 = vmatprep.subr.mxu0 0.0
        %2130 = vmatpush1.msra.mxu0 0.0
        %2131 = vmatprep.subr.mxu0 0.0
        %2132 = vmatpush1.msra.mxu0 0.0
        %2133 = vmatprep.subr.mxu0 0.0
        %2134 = vmatpush1.msra.mxu0 0.0
        %2135 = vmatprep.subr.mxu0 0.0
        %2136 = vmatpush1.msra.mxu0 0.0
        %2137 = vmatprep.subr.mxu0 0.0
        %2138 = vmatpush1.msra.mxu0 0.0
        %2139 = vmatprep.subr.mxu0 0.0
        %2140 = vmatpush1.msra.mxu0 0.0
        %2141 = vmatprep.subr.mxu0 0.0
        %2142 = vmatpush1.msra.mxu0 0.0
        %2143 = vmatprep.subr.mxu0 0.0
        %2144 = vmatpush1.msra.mxu0 0.0
        %2145 = vmatprep.subr.mxu0 0.0
        %2146 = vmatpush1.msra.mxu0 0.0
        %2147 = vmatprep.subr.mxu0 0.0
        %2148 = vmatpush1.msra.mxu0 0.0
        %2149 = vmatprep.mubr.f32.mxu0 0.0
        %2150 = vmatmul.mubr.f32.gmra.mrb[0].mxu0 %v2080
        %v2151 = vpop.f32.mrb[0].mxu0
        %v2152 = vadd.f32 %v2077, %v2151
        %v2153 = vpop.f32.mrb[0].mxu0
        %2154 = vmatprep.mubr.f32.mxu0 0.0
        %2155 = vmatmul.mubr.f32.gmra.mrb[0].mxu0 %v2083
        %v2156 = vpop.f32.mrb[0].mxu0
        %v2157 = vadd.f32 %v2077, %v2156
        %v2158 = vpop.f32.mrb[0].mxu0
        %2159 = vdwg.mxu0
        %2162 = vrot.lane.b32.xlu0 %v2152, 96
        %v2163 = vpop.permute.xlu0 %2162
        %2164 = vrot.lane.b32.xlu0 %v2157, 96
        %v2165 = vpop.permute.xlu0 %2164
        %v2168 = vmax.f32 %v2152, %v2163
        %v2169 = vmax.f32 %v2157, %v2165
        %v2171 = vsel %vm1483, %v2168, 0
        %v2174 = vsel %vm1483, %v2169, 0
        %2176 = vmatprep.subr.mxu0 0.0
        %2177 = vmatpush1.msra.mxu0 %v1210
        %2178 = vmatprep.subr.mxu0 0.0
        %2179 = vmatpush1.msra.mxu0 %v1211
        %2180 = vmatprep.subr.mxu0 0.0
        %2181 = vmatpush1.msra.mxu0 %v1212
        %2182 = vmatprep.subr.mxu0 0.0
        %2183 = vmatpush1.msra.mxu0 %v1213
        %2184 = vmatprep.subr.mxu0 0.0
        %2185 = vmatpush1.msra.mxu0 0.0
        %2186 = vmatprep.subr.mxu0 0.0
        %2187 = vmatpush1.msra.mxu0 0.0
        %2188 = vmatprep.subr.mxu0 0.0
        %2189 = vmatpush1.msra.mxu0 0.0
        %2190 = vmatprep.subr.mxu0 0.0
        %2191 = vmatpush1.msra.mxu0 0.0
        %2192 = vmatprep.subr.mxu0 0.0
        %2193 = vmatpush1.msra.mxu0 0.0
        %2194 = vmatprep.subr.mxu0 0.0
        %2195 = vmatpush1.msra.mxu0 0.0
        %2196 = vmatprep.subr.mxu0 0.0
        %2197 = vmatpush1.msra.mxu0 0.0
        %2198 = vmatprep.subr.mxu0 0.0
        %2199 = vmatpush1.msra.mxu0 0.0
        %2200 = vmatprep.subr.mxu0 0.0
        %2201 = vmatpush1.msra.mxu0 0.0
        %2202 = vmatprep.subr.mxu0 0.0
        %2203 = vmatpush1.msra.mxu0 0.0
        %2204 = vmatprep.subr.mxu0 0.0
        %2205 = vmatpush1.msra.mxu0 0.0
        %2206 = vmatprep.subr.mxu0 0.0
        %2207 = vmatpush1.msra.mxu0 0.0
        %2208 = vmatprep.subr.mxu0 0.0
        %2209 = vmatpush1.msra.mxu0 0.0
        %2210 = vmatprep.subr.mxu0 0.0
        %2211 = vmatpush1.msra.mxu0 0.0
        %2212 = vmatprep.subr.mxu0 0.0
        %2213 = vmatpush1.msra.mxu0 0.0
        %2214 = vmatprep.subr.mxu0 0.0
        %2215 = vmatpush1.msra.mxu0 0.0
        %2216 = vmatprep.subr.mxu0 0.0
        %2217 = vmatpush1.msra.mxu0 0.0
        %2218 = vmatprep.subr.mxu0 0.0
        %2219 = vmatpush1.msra.mxu0 0.0
        %2220 = vmatprep.subr.mxu0 0.0
        %2221 = vmatpush1.msra.mxu0 0.0
        %2222 = vmatprep.subr.mxu0 0.0
        %2223 = vmatpush1.msra.mxu0 0.0
        %2224 = vmatprep.subr.mxu0 0.0
        %2225 = vmatpush1.msra.mxu0 0.0
        %2226 = vmatprep.subr.mxu0 0.0
        %2227 = vmatpush1.msra.mxu0 0.0
        %2228 = vmatprep.subr.mxu0 0.0
        %2229 = vmatpush1.msra.mxu0 0.0
        %2230 = vmatprep.subr.mxu0 0.0
        %2231 = vmatpush1.msra.mxu0 0.0
        %2232 = vmatprep.subr.mxu0 0.0
        %2233 = vmatpush1.msra.mxu0 0.0
        %2234 = vmatprep.subr.mxu0 0.0
        %2235 = vmatpush1.msra.mxu0 0.0
        %2236 = vmatprep.subr.mxu0 0.0
        %2237 = vmatpush1.msra.mxu0 0.0
        %2238 = vmatprep.subr.mxu0 0.0
        %2239 = vmatpush1.msra.mxu0 0.0
        %2240 = vmatprep.mubr.f32.mxu0 0.0
        %2241 = vmatmul.mubr.f32.gmra.mrb[0].mxu0 %v2171
        %v2242 = vpop.f32.mrb[0].mxu0
        %v2243 = vadd.f32 0.0, %v2242
        %v2244 = vpop.f32.mrb[0].mxu0
        %2245 = vmatprep.mubr.f32.mxu0 0.0
        %2246 = vmatmul.mubr.f32.gmra.mrb[0].mxu0 %v2174
        %v2247 = vpop.f32.mrb[0].mxu0
        %v2248 = vadd.f32 0.0, %v2247
        %v2249 = vpop.f32.mrb[0].mxu0
        %2250 = vdwg.mxu0
        %2251 = vmatprep.subr.mxu0 0.0
        %2252 = vmatpush1.msra.mxu0 %v1206
        %2253 = vmatprep.subr.mxu0 0.0
        %2254 = vmatpush1.msra.mxu0 %v1207
        %2255 = vmatprep.subr.mxu0 0.0
        %2256 = vmatpush1.msra.mxu0 %v1208
        %2257 = vmatprep.subr.mxu0 0.0
        %2258 = vmatpush1.msra.mxu0 %v1209
        %2259 = vmatprep.subr.mxu0 0.0
        %2260 = vmatpush1.msra.mxu0 0.0
        %2261 = vmatprep.subr.mxu0 0.0
        %2262 = vmatpush1.msra.mxu0 0.0
        %2263 = vmatprep.subr.mxu0 0.0
        %2264 = vmatpush1.msra.mxu0 0.0
        %2265 = vmatprep.subr.mxu0 0.0
        %2266 = vmatpush1.msra.mxu0 0.0
        %2267 = vmatprep.subr.mxu0 0.0
        %2268 = vmatpush1.msra.mxu0 0.0
        %2269 = vmatprep.subr.mxu0 0.0
        %2270 = vmatpush1.msra.mxu0 0.0
        %2271 = vmatprep.subr.mxu0 0.0
        %2272 = vmatpush1.msra.mxu0 0.0
        %2273 = vmatprep.subr.mxu0 0.0
        %2274 = vmatpush1.msra.mxu0 0.0
        %2275 = vmatprep.subr.mxu0 0.0
        %2276 = vmatpush1.msra.mxu0 0.0
        %2277 = vmatprep.subr.mxu0 0.0
        %2278 = vmatpush1.msra.mxu0 0.0
        %2279 = vmatprep.subr.mxu0 0.0
        %2280 = vmatpush1.msra.mxu0 0.0
        %2281 = vmatprep.subr.mxu0 0.0
        %2282 = vmatpush1.msra.mxu0 0.0
        %2283 = vmatprep.subr.mxu0 0.0
        %2284 = vmatpush1.msra.mxu0 0.0
        %2285 = vmatprep.subr.mxu0 0.0
        %2286 = vmatpush1.msra.mxu0 0.0
        %2287 = vmatprep.subr.mxu0 0.0
        %2288 = vmatpush1.msra.mxu0 0.0
        %2289 = vmatprep.subr.mxu0 0.0
        %2290 = vmatpush1.msra.mxu0 0.0
        %2291 = vmatprep.subr.mxu0 0.0
        %2292 = vmatpush1.msra.mxu0 0.0
        %2293 = vmatprep.subr.mxu0 0.0
        %2294 = vmatpush1.msra.mxu0 0.0
        %2295 = vmatprep.subr.mxu0 0.0
        %2296 = vmatpush1.msra.mxu0 0.0
        %2297 = vmatprep.subr.mxu0 0.0
        %2298 = vmatpush1.msra.mxu0 0.0
        %2299 = vmatprep.subr.mxu0 0.0
        %2300 = vmatpush1.msra.mxu0 0.0
        %2301 = vmatprep.subr.mxu0 0.0
        %2302 = vmatpush1.msra.mxu0 0.0
        %2303 = vmatprep.subr.mxu0 0.0
        %2304 = vmatpush1.msra.mxu0 0.0
        %2305 = vmatprep.subr.mxu0 0.0
        %2306 = vmatpush1.msra.mxu0 0.0
        %2307 = vmatprep.subr.mxu0 0.0
        %2308 = vmatpush1.msra.mxu0 0.0
        %2309 = vmatprep.subr.mxu0 0.0
        %2310 = vmatpush1.msra.mxu0 0.0
        %2311 = vmatprep.subr.mxu0 0.0
        %2312 = vmatpush1.msra.mxu0 0.0
        %2313 = vmatprep.subr.mxu0 0.0
        %2314 = vmatpush1.msra.mxu0 0.0
        %2315 = vmatprep.mubr.f32.mxu0 0.0
        %2316 = vmatmul.mubr.f32.gmra.mrb[0].mxu0 %v2080
        %v2317 = vpop.f32.mrb[0].mxu0
        %v2318 = vadd.f32 %v2243, %v2317
        %v2319 = vpop.f32.mrb[0].mxu0
        %2320 = vmatprep.mubr.f32.mxu0 0.0
        %2321 = vmatmul.mubr.f32.gmra.mrb[0].mxu0 %v2083
        %v2322 = vpop.f32.mrb[0].mxu0
        %v2323 = vadd.f32 %v2248, %v2322
        %v2324 = vpop.f32.mrb[0].mxu0
        %2325 = vdwg.mxu0
        %v2327 = vlaneseq
        %v2328 = vshrl.u32 %v2327, 7
        %v2329 = vsub.s32 0, %v2328
        %v2330 = vrot.slane %v1214, %v2329
        %v2332 = vadd.f32 %v2318, %v2330
        %v2333 = vadd.f32 %v2323, %v2330
        %v2334 = vsel %vm1980, %v2332, -inf
        %2335 = vmax.xlane.f32.xlu0 %v2334
        %v2336 = vpop.xlane.xlu0 %2335
        %v2337 = vsel %vm1980, %v2333, -inf
        %2338 = vmax.xlane.f32.xlu0 %v2337
        %v2339 = vpop.xlane.xlu0 %2338
        %vm2340 = vcmask 7168
        %2341 = vst.msk [vmem:[%s1126] sm:$0xff] %vm2340, %v1983
        %2342 = vst.msk [vmem:[%s1126 + $0x8] sm:$0xff] %vm2340, %v1986
        %2343 = vst.msk [vmem:[%s1131] sm:$0xff] %vm2340, %v2336
        %2344 = vst.msk [vmem:[%s1131 + $0x8] sm:$0xff] %vm2340, %v2339
        %v2345 = vmax.f32 %v1983, %v1986
        %v2346 = vrot.slane %v2345, 4
        %v2347 = vmax.f32 %v2345, %v2346
        %v2348 = vrot.slane %v2347, 2
        %v2349 = vmax.f32 %v2347, %v2348
        %v2350 = vrot.slane %v2349, 1
        %v2351 = vmax.f32 %v2349, %v2350
        %vm2352 = vcmp.eq.f32.partialorder %v1983, %v2351
        %vm2353 = vcmp.eq.f32.partialorder %v1986, %v2351
        %v2354 = vsel %vm2352, %v1411, 16
        %v2355 = vsel %vm2353, %v1412, 16
        %vm2356 = vcmp.lt.s32.totalorder %v2354, %v2355
        %v2357 = vsel %vm2356, %v2354, %v2355
        %v2358 = vrot.slane %v2357, 4
        %vm2359 = vcmp.lt.s32.totalorder %v2357, %v2358
        %v2360 = vsel %vm2359, %v2357, %v2358
        %v2361 = vrot.slane %v2360, 2
        %vm2362 = vcmp.lt.s32.totalorder %v2360, %v2361
        %v2363 = vsel %vm2362, %v2360, %v2361
        %v2364 = vrot.slane %v2363, 1
        %vm2365 = vcmp.lt.s32.totalorder %v2363, %v2364
        %v2366 = vsel %vm2365, %v2363, %v2364
        %vm2367 = vcmp.eq.s32.totalorder %v1411, %v2366
        %vm2368 = vcmp.eq.s32.totalorder %v1412, %v2366
        %v2369 = vsel %vm2367, 1, 0
        %v2370 = vsel %vm2368, 1, 0
        %vm2371 = vcmp.eq.s32.totalorder %v2369, 1
        %vm2372 = vcmp.eq.s32.totalorder %v2370, 1
        %v2373 = vsel %vm2371, %v1138, 0.0
        %v2374 = vsel %vm2372, %v1139, 0.0
        %v2375 = vsel %vm1247, %v2373, 0.0
        %v2376 = vsel %vm1247, %v2374, 0.0
        %v2377 = vadd.f32 %v2375, %v2376
        %v2378 = vrot.slane %v2377, 4
        %v2379 = vadd.f32 %v2377, %v2378
        %v2380 = vrot.slane %v2379, 2
        %v2381 = vadd.f32 %v2379, %v2380
        %v2382 = vrot.slane %v2381, 1
        %v2383 = vadd.f32 %v2381, %v2382
        %v2384 = vmax.f32 %v2336, %v2339
        %v2385 = vrot.slane %v2384, 4
        %v2386 = vmax.f32 %v2384, %v2385
        %v2387 = vrot.slane %v2386, 2
        %v2388 = vmax.f32 %v2386, %v2387
        %v2389 = vrot.slane %v2388, 1
        %v2390 = vmax.f32 %v2388, %v2389
        %vm2391 = vcmp.eq.f32.partialorder %v2336, %v2390
        %vm2392 = vcmp.eq.f32.partialorder %v2339, %v2390
        %v2393 = vsel %vm2391, %v1411, 16
        %v2394 = vsel %vm2392, %v1412, 16
        %vm2395 = vcmp.lt.s32.totalorder %v2393, %v2394
        %v2396 = vsel %vm2395, %v2393, %v2394
        %v2397 = vrot.slane %v2396, 4
        %vm2398 = vcmp.lt.s32.totalorder %v2396, %v2397
        %v2399 = vsel %vm2398, %v2396, %v2397
        %v2400 = vrot.slane %v2399, 2
        %vm2401 = vcmp.lt.s32.totalorder %v2399, %v2400
        %v2402 = vsel %vm2401, %v2399, %v2400
        %v2403 = vrot.slane %v2402, 1
        %vm2404 = vcmp.lt.s32.totalorder %v2402, %v2403
        %v2405 = vsel %vm2404, %v2402, %v2403
        %vm2406 = vcmp.eq.s32.totalorder %v1411, %v2405
        %vm2407 = vcmp.eq.s32.totalorder %v1412, %v2405
        %v2408 = vsel %vm2406, 1, 0
        %v2409 = vsel %vm2407, 1, 0
        %vm2410 = vcmp.eq.s32.totalorder %v2408, 1
        %vm2411 = vcmp.eq.s32.totalorder %v2409, 1
        %v2412 = vsel %vm2410, %v1138, 0.0
        %v2413 = vsel %vm2411, %v1139, 0.0
        %v2414 = vsel %vm1247, %v2412, 0.0
        %v2415 = vsel %vm1247, %v2413, 0.0
        %v2416 = vadd.f32 %v2414, %v2415
        %v2417 = vrot.slane %v2416, 4
        %v2418 = vadd.f32 %v2416, %v2417
        %v2419 = vrot.slane %v2418, 2
        %v2420 = vadd.f32 %v2418, %v2419
        %v2421 = vrot.slane %v2420, 1
        %v2422 = vadd.f32 %v2420, %v2421
        %v2424 = vsel %vm1247, %v2422, 0
        %2426 = vmatprep.subr.mxu0 0.0
        %2427 = vmatpush1.msra.mxu0 %v1223
        %2428 = vmatprep.subr.mxu0 0.0
        %2429 = vmatpush1.msra.mxu0 %v1224
        %2430 = vmatprep.subr.mxu0 0.0
        %2431 = vmatpush1.msra.mxu0 %v1225
        %2432 = vmatprep.subr.mxu0 0.0
        %2433 = vmatpush1.msra.mxu0 %v1226
        %2434 = vmatprep.subr.mxu0 0.0
        %2435 = vmatpush1.msra.mxu0 %v1227
        %2436 = vmatprep.subr.mxu0 0.0
        %2437 = vmatpush1.msra.mxu0 %v1228
        %2438 = vmatprep.subr.mxu0 0.0
        %2439 = vmatpush1.msra.mxu0 %v1229
        %2440 = vmatprep.subr.mxu0 0.0
        %2441 = vmatpush1.msra.mxu0 %v1230
        %2442 = vmatprep.subr.mxu0 0.0
        %2443 = vmatpush1.msra.mxu0 0.0
        %2444 = vmatprep.subr.mxu0 0.0
        %2445 = vmatpush1.msra.mxu0 0.0
        %2446 = vmatprep.subr.mxu0 0.0
        %2447 = vmatpush1.msra.mxu0 0.0
        %2448 = vmatprep.subr.mxu0 0.0
        %2449 = vmatpush1.msra.mxu0 0.0
        %2450 = vmatprep.subr.mxu0 0.0
        %2451 = vmatpush1.msra.mxu0 0.0
        %2452 = vmatprep.subr.mxu0 0.0
        %2453 = vmatpush1.msra.mxu0 0.0
        %2454 = vmatprep.subr.mxu0 0.0
        %2455 = vmatpush1.msra.mxu0 0.0
        %2456 = vmatprep.subr.mxu0 0.0
        %2457 = vmatpush1.msra.mxu0 0.0
        %2458 = vmatprep.subr.mxu0 0.0
        %2459 = vmatpush1.msra.mxu0 0.0
        %2460 = vmatprep.subr.mxu0 0.0
        %2461 = vmatpush1.msra.mxu0 0.0
        %2462 = vmatprep.subr.mxu0 0.0
        %2463 = vmatpush1.msra.mxu0 0.0
        %2464 = vmatprep.subr.mxu0 0.0
        %2465 = vmatpush1.msra.mxu0 0.0
        %2466 = vmatprep.subr.mxu0 0.0
        %2467 = vmatpush1.msra.mxu0 0.0
        %2468 = vmatprep.subr.mxu0 0.0
        %2469 = vmatpush1.msra.mxu0 0.0
        %2470 = vmatprep.subr.mxu0 0.0
        %2471 = vmatpush1.msra.mxu0 0.0
        %2472 = vmatprep.subr.mxu0 0.0
        %2473 = vmatpush1.msra.mxu0 0.0
        %2474 = vmatprep.subr.mxu0 0.0
        %2475 = vmatpush1.msra.mxu0 0.0
        %2476 = vmatprep.subr.mxu0 0.0
        %2477 = vmatpush1.msra.mxu0 0.0
        %2478 = vmatprep.subr.mxu0 0.0
        %2479 = vmatpush1.msra.mxu0 0.0
        %2480 = vmatprep.subr.mxu0 0.0
        %2481 = vmatpush1.msra.mxu0 0.0
        %2482 = vmatprep.subr.mxu0 0.0
        %2483 = vmatpush1.msra.mxu0 0.0
        %2484 = vmatprep.subr.mxu0 0.0
        %2485 = vmatpush1.msra.mxu0 0.0
        %2486 = vmatprep.subr.mxu0 0.0
        %2487 = vmatpush1.msra.mxu0 0.0
        %2488 = vmatprep.subr.mxu0 0.0
        %2489 = vmatpush1.msra.mxu0 0.0
        %2490 = vmatprep.mubr.f32.mxu0 0.0
        %2491 = vmatmul.mubr.f32.gmra.mrb[0].mxu0 %v2424
        %v2492 = vpop.f32.mrb[0].mxu0
        %v2493 = vadd.f32 0.0, %v2492
        %v2494 = vpop.f32.mrb[0].mxu0
        %2495 = vdwg.mxu0
        %v2497 = vsel %vm1247, %v2383, 0
        %2499 = vmatprep.subr.mxu0 0.0
        %2500 = vmatpush1.msra.mxu0 %v1215
        %2501 = vmatprep.subr.mxu0 0.0
        %2502 = vmatpush1.msra.mxu0 %v1216
        %2503 = vmatprep.subr.mxu0 0.0
        %2504 = vmatpush1.msra.mxu0 %v1217
        %2505 = vmatprep.subr.mxu0 0.0
        %2506 = vmatpush1.msra.mxu0 %v1218
        %2507 = vmatprep.subr.mxu0 0.0
        %2508 = vmatpush1.msra.mxu0 %v1219
        %2509 = vmatprep.subr.mxu0 0.0
        %2510 = vmatpush1.msra.mxu0 %v1220
        %2511 = vmatprep.subr.mxu0 0.0
        %2512 = vmatpush1.msra.mxu0 %v1221
        %2513 = vmatprep.subr.mxu0 0.0
        %2514 = vmatpush1.msra.mxu0 %v1222
        %2515 = vmatprep.subr.mxu0 0.0
        %2516 = vmatpush1.msra.mxu0 0.0
        %2517 = vmatprep.subr.mxu0 0.0
        %2518 = vmatpush1.msra.mxu0 0.0
        %2519 = vmatprep.subr.mxu0 0.0
        %2520 = vmatpush1.msra.mxu0 0.0
        %2521 = vmatprep.subr.mxu0 0.0
        %2522 = vmatpush1.msra.mxu0 0.0
        %2523 = vmatprep.subr.mxu0 0.0
        %2524 = vmatpush1.msra.mxu0 0.0
        %2525 = vmatprep.subr.mxu0 0.0
        %2526 = vmatpush1.msra.mxu0 0.0
        %2527 = vmatprep.subr.mxu0 0.0
        %2528 = vmatpush1.msra.mxu0 0.0
        %2529 = vmatprep.subr.mxu0 0.0
        %2530 = vmatpush1.msra.mxu0 0.0
        %2531 = vmatprep.subr.mxu0 0.0
        %2532 = vmatpush1.msra.mxu0 0.0
        %2533 = vmatprep.subr.mxu0 0.0
        %2534 = vmatpush1.msra.mxu0 0.0
        %2535 = vmatprep.subr.mxu0 0.0
        %2536 = vmatpush1.msra.mxu0 0.0
        %2537 = vmatprep.subr.mxu0 0.0
        %2538 = vmatpush1.msra.mxu0 0.0
        %2539 = vmatprep.subr.mxu0 0.0
        %2540 = vmatpush1.msra.mxu0 0.0
        %2541 = vmatprep.subr.mxu0 0.0
        %2542 = vmatpush1.msra.mxu0 0.0
        %2543 = vmatprep.subr.mxu0 0.0
        %2544 = vmatpush1.msra.mxu0 0.0
        %2545 = vmatprep.subr.mxu0 0.0
        %2546 = vmatpush1.msra.mxu0 0.0
        %2547 = vmatprep.subr.mxu0 0.0
        %2548 = vmatpush1.msra.mxu0 0.0
        %2549 = vmatprep.subr.mxu0 0.0
        %2550 = vmatpush1.msra.mxu0 0.0
        %2551 = vmatprep.subr.mxu0 0.0
        %2552 = vmatpush1.msra.mxu0 0.0
        %2553 = vmatprep.subr.mxu0 0.0
        %2554 = vmatpush1.msra.mxu0 0.0
        %2555 = vmatprep.subr.mxu0 0.0
        %2556 = vmatpush1.msra.mxu0 0.0
        %2557 = vmatprep.subr.mxu0 0.0
        %2558 = vmatpush1.msra.mxu0 0.0
        %2559 = vmatprep.subr.mxu0 0.0
        %2560 = vmatpush1.msra.mxu0 0.0
        %2561 = vmatprep.subr.mxu0 0.0
        %2562 = vmatpush1.msra.mxu0 0.0
        %2563 = vmatprep.mubr.f32.mxu0 0.0
        %2564 = vmatmul.mubr.f32.gmra.mrb[0].mxu0 %v2497
        %v2565 = vpop.f32.mrb[0].mxu0
        %v2566 = vadd.f32 %v2493, %v2565
        %v2567 = vpop.f32.mrb[0].mxu0
        %2568 = vdwg.mxu0
        %2569 = vmatprep.subr.mxu0 0.0
        %2570 = vmatpush1.msra.mxu0 %v1231
        %2571 = vmatprep.subr.mxu0 0.0
        %2572 = vmatpush1.msra.mxu0 %v1232
        %2573 = vmatprep.subr.mxu0 0.0
        %2574 = vmatpush1.msra.mxu0 %v1233
        %2575 = vmatprep.subr.mxu0 0.0
        %2576 = vmatpush1.msra.mxu0 %v1234
        %2577 = vmatprep.subr.mxu0 0.0
        %2578 = vmatpush1.msra.mxu0 0.0
        %2579 = vmatprep.subr.mxu0 0.0
        %2580 = vmatpush1.msra.mxu0 0.0
        %2581 = vmatprep.subr.mxu0 0.0
        %2582 = vmatpush1.msra.mxu0 0.0
        %2583 = vmatprep.subr.mxu0 0.0
        %2584 = vmatpush1.msra.mxu0 0.0
        %2585 = vmatprep.subr.mxu0 0.0
        %2586 = vmatpush1.msra.mxu0 0.0
        %2587 = vmatprep.subr.mxu0 0.0
        %2588 = vmatpush1.msra.mxu0 0.0
        %2589 = vmatprep.subr.mxu0 0.0
        %2590 = vmatpush1.msra.mxu0 0.0
        %2591 = vmatprep.subr.mxu0 0.0
        %2592 = vmatpush1.msra.mxu0 0.0
        %2593 = vmatprep.subr.mxu0 0.0
        %2594 = vmatpush1.msra.mxu0 0.0
        %2595 = vmatprep.subr.mxu0 0.0
        %2596 = vmatpush1.msra.mxu0 0.0
        %2597 = vmatprep.subr.mxu0 0.0
        %2598 = vmatpush1.msra.mxu0 0.0
        %2599 = vmatprep.subr.mxu0 0.0
        %2600 = vmatpush1.msra.mxu0 0.0
        %2601 = vmatprep.subr.mxu0 0.0
        %2602 = vmatpush1.msra.mxu0 0.0
        %2603 = vmatprep.subr.mxu0 0.0
        %2604 = vmatpush1.msra.mxu0 0.0
        %2605 = vmatprep.subr.mxu0 0.0
        %2606 = vmatpush1.msra.mxu0 0.0
        %2607 = vmatprep.subr.mxu0 0.0
        %2608 = vmatpush1.msra.mxu0 0.0
        %2609 = vmatprep.subr.mxu0 0.0
        %2610 = vmatpush1.msra.mxu0 0.0
        %2611 = vmatprep.subr.mxu0 0.0
        %2612 = vmatpush1.msra.mxu0 0.0
        %2613 = vmatprep.subr.mxu0 0.0
        %2614 = vmatpush1.msra.mxu0 0.0
        %2615 = vmatprep.subr.mxu0 0.0
        %2616 = vmatpush1.msra.mxu0 0.0
        %2617 = vmatprep.subr.mxu0 0.0
        %2618 = vmatpush1.msra.mxu0 0.0
        %2619 = vmatprep.subr.mxu0 0.0
        %2620 = vmatpush1.msra.mxu0 0.0
        %2621 = vmatprep.subr.mxu0 0.0
        %2622 = vmatpush1.msra.mxu0 0.0
        %2623 = vmatprep.subr.mxu0 0.0
        %2624 = vmatpush1.msra.mxu0 0.0
        %2625 = vmatprep.subr.mxu0 0.0
        %2626 = vmatpush1.msra.mxu0 0.0
        %2627 = vmatprep.subr.mxu0 0.0
        %2628 = vmatpush1.msra.mxu0 0.0
        %2629 = vmatprep.subr.mxu0 0.0
        %2630 = vmatpush1.msra.mxu0 0.0
        %2631 = vmatprep.subr.mxu0 0.0
        %2632 = vmatpush1.msra.mxu0 0.0
        %2633 = vmatprep.mubr.f32.mxu0 0.0
        %2634 = vmatmul.mubr.f32.gmra.mrb[0].mxu0 %v1485
        %v2635 = vpop.f32.mrb[0].mxu0
        %v2636 = vadd.f32 0.0, %v2635
        %v2637 = vpop.f32.mrb[0].mxu0
        %2638 = vdwg.mxu0
        %v2639 = vadd.f32 %v2566, %v2636
        %v2640 = vadd.f32 %v2639, %v1235
        %v2641 = vxor.u32 %v2640, 2147483648
        %v2642 = vmul.f32 %v2641, 1.442695
        %v2643 = vpow.pop %v2642
        %v2644 = vadd.f32 %v2643, 1.0
        %v2645 = vrcp.pop %v2644
        %v2646 = vmul.f32 1.0, %v2645
        %v2647 = vtanh.pop %v2640
        %v2648 = vmul.f32 %v2646, 0.0
        %2650 = vrot.lane.b32.xlu0 %v2647, 64
        %v2651 = vpop.permute.xlu0 %2650
        %v2653 = vmul.f32 %v2646, %v2651
        %2655 = vrot.lane.b32.xlu0 %v2653, 32
        %v2656 = vpop.permute.xlu0 %2655
        %v2658 = vadd.f32 %v2648, %v2656
        %v2659 = vtanh.pop %v2658
        %2661 = vrot.lane.b32.xlu0 %v2659, 64
        %v2662 = vpop.permute.xlu0 %2661
        %v2664 = vmul.f32 %v2646, %v2662
        %2666 = vrot.lane.b32.xlu0 %v2664, 32
        %v2667 = vpop.permute.xlu0 %2666
        %v2668 = vsel %vm1483, %v2667, 0
        %2670 = vmatprep.subr.mxu0 0.0
        %2671 = vmatpush1.msra.mxu0 %v1236
        %2672 = vmatprep.subr.mxu0 0.0
        %2673 = vmatpush1.msra.mxu0 %v1237
        %2674 = vmatprep.subr.mxu0 0.0
        %2675 = vmatpush1.msra.mxu0 %v1238
        %2676 = vmatprep.subr.mxu0 0.0
        %2677 = vmatpush1.msra.mxu0 %v1239
        %2678 = vmatprep.subr.mxu0 0.0
        %2679 = vmatpush1.msra.mxu0 0.0
        %2680 = vmatprep.subr.mxu0 0.0
        %2681 = vmatpush1.msra.mxu0 0.0
        %2682 = vmatprep.subr.mxu0 0.0
        %2683 = vmatpush1.msra.mxu0 0.0
        %2684 = vmatprep.subr.mxu0 0.0
        %2685 = vmatpush1.msra.mxu0 0.0
        %2686 = vmatprep.subr.mxu0 0.0
        %2687 = vmatpush1.msra.mxu0 0.0
        %2688 = vmatprep.subr.mxu0 0.0
        %2689 = vmatpush1.msra.mxu0 0.0
        %2690 = vmatprep.subr.mxu0 0.0
        %2691 = vmatpush1.msra.mxu0 0.0
        %2692 = vmatprep.subr.mxu0 0.0
        %2693 = vmatpush1.msra.mxu0 0.0
        %2694 = vmatprep.subr.mxu0 0.0
        %2695 = vmatpush1.msra.mxu0 0.0
        %2696 = vmatprep.subr.mxu0 0.0
        %2697 = vmatpush1.msra.mxu0 0.0
        %2698 = vmatprep.subr.mxu0 0.0
        %2699 = vmatpush1.msra.mxu0 0.0
        %2700 = vmatprep.subr.mxu0 0.0
        %2701 = vmatpush1.msra.mxu0 0.0
        %2702 = vmatprep.subr.mxu0 0.0
        %2703 = vmatpush1.msra.mxu0 0.0
        %2704 = vmatprep.subr.mxu0 0.0
        %2705 = vmatpush1.msra.mxu0 0.0
        %2706 = vmatprep.subr.mxu0 0.0
        %2707 = vmatpush1.msra.mxu0 0.0
        %2708 = vmatprep.subr.mxu0 0.0
        %2709 = vmatpush1.msra.mxu0 0.0
        %2710 = vmatprep.subr.mxu0 0.0
        %2711 = vmatpush1.msra.mxu0 0.0
        %2712 = vmatprep.subr.mxu0 0.0
        %2713 = vmatpush1.msra.mxu0 0.0
        %2714 = vmatprep.subr.mxu0 0.0
        %2715 = vmatpush1.msra.mxu0 0.0
        %2716 = vmatprep.subr.mxu0 0.0
        %2717 = vmatpush1.msra.mxu0 0.0
        %2718 = vmatprep.subr.mxu0 0.0
        %2719 = vmatpush1.msra.mxu0 0.0
        %2720 = vmatprep.subr.mxu0 0.0
        %2721 = vmatpush1.msra.mxu0 0.0
        %2722 = vmatprep.subr.mxu0 0.0
        %2723 = vmatpush1.msra.mxu0 0.0
        %2724 = vmatprep.subr.mxu0 0.0
        %2725 = vmatpush1.msra.mxu0 0.0
        %2726 = vmatprep.subr.mxu0 0.0
        %2727 = vmatpush1.msra.mxu0 0.0
        %2728 = vmatprep.subr.mxu0 0.0
        %2729 = vmatpush1.msra.mxu0 0.0
        %2730 = vmatprep.subr.mxu0 0.0
        %2731 = vmatpush1.msra.mxu0 0.0
        %2732 = vmatprep.subr.mxu0 0.0
        %2733 = vmatpush1.msra.mxu0 0.0
        %2734 = vmatprep.mubr.f32.mxu0 0.0
        %2735 = vmatmul.mubr.f32.gmra.mrb[0].mxu0 %v2668
        %v2736 = vpop.f32.mrb[0].mxu0
        %v2737 = vadd.f32 %v1240, %v2736
        %v2738 = vpop.f32.mrb[0].mxu0
        %2739 = vdwg.mxu0
        %2740 = vmatprep.subr.mxu0 0.0
        %2741 = vmatpush1.msra.mxu0 %v1144
        %2742 = vmatprep.subr.mxu0 0.0
        %2743 = vmatpush1.msra.mxu0 %v1145
        %2744 = vmatprep.subr.mxu0 0.0
        %2745 = vmatpush1.msra.mxu0 %v1146
        %2746 = vmatprep.subr.mxu0 0.0
        %2747 = vmatpush1.msra.mxu0 %v1147
        %2748 = vmatprep.subr.mxu0 0.0
        %2749 = vmatpush1.msra.mxu0 %v1148
        %2750 = vmatprep.subr.mxu0 0.0
        %2751 = vmatpush1.msra.mxu0 %v1149
        %2752 = vmatprep.subr.mxu0 0.0
        %2753 = vmatpush1.msra.mxu0 %v1150
        %2754 = vmatprep.subr.mxu0 0.0
        %2755 = vmatpush1.msra.mxu0 %v1151
        %2756 = vmatprep.subr.mxu0 0.0
        %2757 = vmatpush1.msra.mxu0 0.0
        %2758 = vmatprep.subr.mxu0 0.0
        %2759 = vmatpush1.msra.mxu0 0.0
        %2760 = vmatprep.subr.mxu0 0.0
        %2761 = vmatpush1.msra.mxu0 0.0
        %2762 = vmatprep.subr.mxu0 0.0
        %2763 = vmatpush1.msra.mxu0 0.0
        %2764 = vmatprep.subr.mxu0 0.0
        %2765 = vmatpush1.msra.mxu0 0.0
        %2766 = vmatprep.subr.mxu0 0.0
        %2767 = vmatpush1.msra.mxu0 0.0
        %2768 = vmatprep.subr.mxu0 0.0
        %2769 = vmatpush1.msra.mxu0 0.0
        %2770 = vmatprep.subr.mxu0 0.0
        %2771 = vmatpush1.msra.mxu0 0.0
        %2772 = vmatprep.subr.mxu0 0.0
        %2773 = vmatpush1.msra.mxu0 0.0
        %2774 = vmatprep.subr.mxu0 0.0
        %2775 = vmatpush1.msra.mxu0 0.0
        %2776 = vmatprep.subr.mxu0 0.0
        %2777 = vmatpush1.msra.mxu0 0.0
        %2778 = vmatprep.subr.mxu0 0.0
        %2779 = vmatpush1.msra.mxu0 0.0
        %2780 = vmatprep.subr.mxu0 0.0
        %2781 = vmatpush1.msra.mxu0 0.0
        %2782 = vmatprep.subr.mxu0 0.0
        %2783 = vmatpush1.msra.mxu0 0.0
        %2784 = vmatprep.subr.mxu0 0.0
        %2785 = vmatpush1.msra.mxu0 0.0
        %2786 = vmatprep.subr.mxu0 0.0
        %2787 = vmatpush1.msra.mxu0 0.0
        %2788 = vmatprep.subr.mxu0 0.0
        %2789 = vmatpush1.msra.mxu0 0.0
        %2790 = vmatprep.subr.mxu0 0.0
        %2791 = vmatpush1.msra.mxu0 0.0
        %2792 = vmatprep.subr.mxu0 0.0
        %2793 = vmatpush1.msra.mxu0 0.0
        %2794 = vmatprep.subr.mxu0 0.0
        %2795 = vmatpush1.msra.mxu0 0.0
        %2796 = vmatprep.subr.mxu0 0.0
        %2797 = vmatpush1.msra.mxu0 0.0
        %2798 = vmatprep.subr.mxu0 0.0
        %2799 = vmatpush1.msra.mxu0 0.0
        %2800 = vmatprep.subr.mxu0 0.0
        %2801 = vmatpush1.msra.mxu0 0.0
        %2802 = vmatprep.subr.mxu0 0.0
        %2803 = vmatpush1.msra.mxu0 0.0
        %2804 = vmatprep.mubr.f32.mxu0 0.0
        %2805 = vmatmul.mubr.f32.gmra.mrb[0].mxu0 %v2497
        %v2806 = vpop.f32.mrb[0].mxu0
        %v2807 = vadd.f32 0.0, %v2806
        %v2808 = vpop.f32.mrb[0].mxu0
        %2809 = vdwg.mxu0
        %v2811 = vsel %vm1483, %v2737, 0
        %2813 = vmatprep.subr.mxu0 0.0
        %2814 = vmatpush1.msra.mxu0 %v1140
        %2815 = vmatprep.subr.mxu0 0.0
        %2816 = vmatpush1.msra.mxu0 %v1141
        %2817 = vmatprep.subr.mxu0 0.0
        %2818 = vmatpush1.msra.mxu0 %v1142
        %2819 = vmatprep.subr.mxu0 0.0
        %2820 = vmatpush1.msra.mxu0 %v1143
        %2821 = vmatprep.subr.mxu0 0.0
        %2822 = vmatpush1.msra.mxu0 0.0
        %2823 = vmatprep.subr.mxu0 0.0
        %2824 = vmatpush1.msra.mxu0 0.0
        %2825 = vmatprep.subr.mxu0 0.0
        %2826 = vmatpush1.msra.mxu0 0.0
        %2827 = vmatprep.subr.mxu0 0.0
        %2828 = vmatpush1.msra.mxu0 0.0
        %2829 = vmatprep.subr.mxu0 0.0
        %2830 = vmatpush1.msra.mxu0 0.0
        %2831 = vmatprep.subr.mxu0 0.0
        %2832 = vmatpush1.msra.mxu0 0.0
        %2833 = vmatprep.subr.mxu0 0.0
        %2834 = vmatpush1.msra.mxu0 0.0
        %2835 = vmatprep.subr.mxu0 0.0
        %2836 = vmatpush1.msra.mxu0 0.0
        %2837 = vmatprep.subr.mxu0 0.0
        %2838 = vmatpush1.msra.mxu0 0.0
        %2839 = vmatprep.subr.mxu0 0.0
        %2840 = vmatpush1.msra.mxu0 0.0
        %2841 = vmatprep.subr.mxu0 0.0
        %2842 = vmatpush1.msra.mxu0 0.0
        %2843 = vmatprep.subr.mxu0 0.0
        %2844 = vmatpush1.msra.mxu0 0.0
        %2845 = vmatprep.subr.mxu0 0.0
        %2846 = vmatpush1.msra.mxu0 0.0
        %2847 = vmatprep.subr.mxu0 0.0
        %2848 = vmatpush1.msra.mxu0 0.0
        %2849 = vmatprep.subr.mxu0 0.0
        %2850 = vmatpush1.msra.mxu0 0.0
        %2851 = vmatprep.subr.mxu0 0.0
        %2852 = vmatpush1.msra.mxu0 0.0
        %2853 = vmatprep.subr.mxu0 0.0
        %2854 = vmatpush1.msra.mxu0 0.0
        %2855 = vmatprep.subr.mxu0 0.0
        %2856 = vmatpush1.msra.mxu0 0.0
        %2857 = vmatprep.subr.mxu0 0.0
        %2858 = vmatpush1.msra.mxu0 0.0
        %2859 = vmatprep.subr.mxu0 0.0
        %2860 = vmatpush1.msra.mxu0 0.0
        %2861 = vmatprep.subr.mxu0 0.0
        %2862 = vmatpush1.msra.mxu0 0.0
        %2863 = vmatprep.subr.mxu0 0.0
        %2864 = vmatpush1.msra.mxu0 0.0
        %2865 = vmatprep.subr.mxu0 0.0
        %2866 = vmatpush1.msra.mxu0 0.0
        %2867 = vmatprep.subr.mxu0 0.0
        %2868 = vmatpush1.msra.mxu0 0.0
        %2869 = vmatprep.subr.mxu0 0.0
        %2870 = vmatpush1.msra.mxu0 0.0
        %2871 = vmatprep.subr.mxu0 0.0
        %2872 = vmatpush1.msra.mxu0 0.0
        %2873 = vmatprep.subr.mxu0 0.0
        %2874 = vmatpush1.msra.mxu0 0.0
        %2875 = vmatprep.subr.mxu0 0.0
        %2876 = vmatpush1.msra.mxu0 0.0
        %2877 = vmatprep.mubr.f32.mxu0 0.0
        %2878 = vmatmul.mubr.f32.gmra.mrb[0].mxu0 %v2811
        %v2879 = vpop.f32.mrb[0].mxu0
        %v2880 = vadd.f32 %v2807, %v2879
        %v2881 = vpop.f32.mrb[0].mxu0
        %2882 = vdwg.mxu0
        %2883 = vmatprep.subr.mxu0 0.0
        %2884 = vmatpush1.msra.mxu0 %v1152
        %2885 = vmatprep.subr.mxu0 0.0
        %2886 = vmatpush1.msra.mxu0 %v1153
        %2887 = vmatprep.subr.mxu0 0.0
        %2888 = vmatpush1.msra.mxu0 %v1154
        %2889 = vmatprep.subr.mxu0 0.0
        %2890 = vmatpush1.msra.mxu0 %v1155
        %2891 = vmatprep.subr.mxu0 0.0
        %2892 = vmatpush1.msra.mxu0 %v1156
        %2893 = vmatprep.subr.mxu0 0.0
        %2894 = vmatpush1.msra.mxu0 %v1157
        %2895 = vmatprep.subr.mxu0 0.0
        %2896 = vmatpush1.msra.mxu0 %v1158
        %2897 = vmatprep.subr.mxu0 0.0
        %2898 = vmatpush1.msra.mxu0 %v1159
        %2899 = vmatprep.subr.mxu0 0.0
        %2900 = vmatpush1.msra.mxu0 0.0
        %2901 = vmatprep.subr.mxu0 0.0
        %2902 = vmatpush1.msra.mxu0 0.0
        %2903 = vmatprep.subr.mxu0 0.0
        %2904 = vmatpush1.msra.mxu0 0.0
        %2905 = vmatprep.subr.mxu0 0.0
        %2906 = vmatpush1.msra.mxu0 0.0
        %2907 = vmatprep.subr.mxu0 0.0
        %2908 = vmatpush1.msra.mxu0 0.0
        %2909 = vmatprep.subr.mxu0 0.0
        %2910 = vmatpush1.msra.mxu0 0.0
        %2911 = vmatprep.subr.mxu0 0.0
        %2912 = vmatpush1.msra.mxu0 0.0
        %2913 = vmatprep.subr.mxu0 0.0
        %2914 = vmatpush1.msra.mxu0 0.0
        %2915 = vmatprep.subr.mxu0 0.0
        %2916 = vmatpush1.msra.mxu0 0.0
        %2917 = vmatprep.subr.mxu0 0.0
        %2918 = vmatpush1.msra.mxu0 0.0
        %2919 = vmatprep.subr.mxu0 0.0
        %2920 = vmatpush1.msra.mxu0 0.0
        %2921 = vmatprep.subr.mxu0 0.0
        %2922 = vmatpush1.msra.mxu0 0.0
        %2923 = vmatprep.subr.mxu0 0.0
        %2924 = vmatpush1.msra.mxu0 0.0
        %2925 = vmatprep.subr.mxu0 0.0
        %2926 = vmatpush1.msra.mxu0 0.0
        %2927 = vmatprep.subr.mxu0 0.0
        %2928 = vmatpush1.msra.mxu0 0.0
        %2929 = vmatprep.subr.mxu0 0.0
        %2930 = vmatpush1.msra.mxu0 0.0
        %2931 = vmatprep.subr.mxu0 0.0
        %2932 = vmatpush1.msra.mxu0 0.0
        %2933 = vmatprep.subr.mxu0 0.0
        %2934 = vmatpush1.msra.mxu0 0.0
        %2935 = vmatprep.subr.mxu0 0.0
        %2936 = vmatpush1.msra.mxu0 0.0
        %2937 = vmatprep.subr.mxu0 0.0
        %2938 = vmatpush1.msra.mxu0 0.0
        %2939 = vmatprep.subr.mxu0 0.0
        %2940 = vmatpush1.msra.mxu0 0.0
        %2941 = vmatprep.subr.mxu0 0.0
        %2942 = vmatpush1.msra.mxu0 0.0
        %2943 = vmatprep.subr.mxu0 0.0
        %2944 = vmatpush1.msra.mxu0 0.0
        %2945 = vmatprep.subr.mxu0 0.0
        %2946 = vmatpush1.msra.mxu0 0.0
        %2947 = vmatprep.mubr.f32.mxu0 0.0
        %2948 = vmatmul.mubr.f32.gmra.mrb[0].mxu0 %v2424
        %v2949 = vpop.f32.mrb[0].mxu0
        %v2950 = vadd.f32 0.0, %v2949
        %v2951 = vpop.f32.mrb[0].mxu0
        %2952 = vdwg.mxu0
        %v2953 = vadd.f32 %v2880, %v2950
        %v2954 = vadd.f32 %v2953, %v1160
        %v2955 = vtanh.pop %v2954
        %v2957 = vsel %vm1483, %v2955, 0
        %2959 = vmatprep.subr.mxu0 0.0
        %2960 = vmatpush1.msra.mxu0 %v1169
        %2961 = vmatprep.subr.mxu0 0.0
        %2962 = vmatpush1.msra.mxu0 %v1170
        %2963 = vmatprep.subr.mxu0 0.0
        %2964 = vmatpush1.msra.mxu0 %v1171
        %2965 = vmatprep.subr.mxu0 0.0
        %2966 = vmatpush1.msra.mxu0 %v1172
        %2967 = vmatprep.subr.mxu0 0.0
        %2968 = vmatpush1.msra.mxu0 0.0
        %2969 = vmatprep.subr.mxu0 0.0
        %2970 = vmatpush1.msra.mxu0 0.0
        %2971 = vmatprep.subr.mxu0 0.0
        %2972 = vmatpush1.msra.mxu0 0.0
        %2973 = vmatprep.subr.mxu0 0.0
        %2974 = vmatpush1.msra.mxu0 0.0
        %2975 = vmatprep.subr.mxu0 0.0
        %2976 = vmatpush1.msra.mxu0 0.0
        %2977 = vmatprep.subr.mxu0 0.0
        %2978 = vmatpush1.msra.mxu0 0.0
        %2979 = vmatprep.subr.mxu0 0.0
        %2980 = vmatpush1.msra.mxu0 0.0
        %2981 = vmatprep.subr.mxu0 0.0
        %2982 = vmatpush1.msra.mxu0 0.0
        %2983 = vmatprep.subr.mxu0 0.0
        %2984 = vmatpush1.msra.mxu0 0.0
        %2985 = vmatprep.subr.mxu0 0.0
        %2986 = vmatpush1.msra.mxu0 0.0
        %2987 = vmatprep.subr.mxu0 0.0
        %2988 = vmatpush1.msra.mxu0 0.0
        %2989 = vmatprep.subr.mxu0 0.0
        %2990 = vmatpush1.msra.mxu0 0.0
        %2991 = vmatprep.subr.mxu0 0.0
        %2992 = vmatpush1.msra.mxu0 0.0
        %2993 = vmatprep.subr.mxu0 0.0
        %2994 = vmatpush1.msra.mxu0 0.0
        %2995 = vmatprep.subr.mxu0 0.0
        %2996 = vmatpush1.msra.mxu0 0.0
        %2997 = vmatprep.subr.mxu0 0.0
        %2998 = vmatpush1.msra.mxu0 0.0
        %2999 = vmatprep.subr.mxu0 0.0
        %3000 = vmatpush1.msra.mxu0 0.0
        %3001 = vmatprep.subr.mxu0 0.0
        %3002 = vmatpush1.msra.mxu0 0.0
        %3003 = vmatprep.subr.mxu0 0.0
        %3004 = vmatpush1.msra.mxu0 0.0
        %3005 = vmatprep.subr.mxu0 0.0
        %3006 = vmatpush1.msra.mxu0 0.0
        %3007 = vmatprep.subr.mxu0 0.0
        %3008 = vmatpush1.msra.mxu0 0.0
        %3009 = vmatprep.subr.mxu0 0.0
        %3010 = vmatpush1.msra.mxu0 0.0
        %3011 = vmatprep.subr.mxu0 0.0
        %3012 = vmatpush1.msra.mxu0 0.0
        %3013 = vmatprep.subr.mxu0 0.0
        %3014 = vmatpush1.msra.mxu0 0.0
        %3015 = vmatprep.subr.mxu0 0.0
        %3016 = vmatpush1.msra.mxu0 0.0
        %3017 = vmatprep.subr.mxu0 0.0
        %3018 = vmatpush1.msra.mxu0 0.0
        %3019 = vmatprep.subr.mxu0 0.0
        %3020 = vmatpush1.msra.mxu0 0.0
        %3021 = vmatprep.subr.mxu0 0.0
        %3022 = vmatpush1.msra.mxu0 0.0
        %3023 = vmatprep.mubr.f32.mxu0 0.0
        %3024 = vmatmul.mubr.f32.gmra.mrb[0].mxu0 %v2957
        %v3025 = vpop.f32.mrb[0].mxu0
        %v3026 = vadd.f32 0.0, %v3025
        %v3027 = vpop.f32.mrb[0].mxu0
        %3028 = vdwg.mxu0
        %v3029 = vlaneseq
        %v3030 = vshrl.u32 %v3029, 7
        %v3031 = vsub.s32 0, %v3030
        %v3032 = vrot.slane %v3026, %v3031
        %v3033 = vadd.f32 %v1321, %v3032
        %v3034 = vadd.f32 %v1326, %v3032
        %3037 = vrot.lane.b32.xlu0 %v3033, 96
        %v3038 = vpop.permute.xlu0 %3037
        %3039 = vrot.lane.b32.xlu0 %v3034, 96
        %v3040 = vpop.permute.xlu0 %3039
        %v3043 = vmax.f32 %v3033, %v3038
        %v3044 = vmax.f32 %v3034, %v3040
        %v3046 = vsel %vm1483, %v3043, 0
        %v3049 = vsel %vm1483, %v3044, 0
        %3051 = vmatprep.subr.mxu0 0.0
        %3052 = vmatpush1.msra.mxu0 %v1174
        %3053 = vmatprep.subr.mxu0 0.0
        %3054 = vmatpush1.msra.mxu0 %v1175
        %3055 = vmatprep.subr.mxu0 0.0
        %3056 = vmatpush1.msra.mxu0 %v1176
        %3057 = vmatprep.subr.mxu0 0.0
        %3058 = vmatpush1.msra.mxu0 %v1177
        %3059 = vmatprep.subr.mxu0 0.0
        %3060 = vmatpush1.msra.mxu0 0.0
        %3061 = vmatprep.subr.mxu0 0.0
        %3062 = vmatpush1.msra.mxu0 0.0
        %3063 = vmatprep.subr.mxu0 0.0
        %3064 = vmatpush1.msra.mxu0 0.0
        %3065 = vmatprep.subr.mxu0 0.0
        %3066 = vmatpush1.msra.mxu0 0.0
        %3067 = vmatprep.subr.mxu0 0.0
        %3068 = vmatpush1.msra.mxu0 0.0
        %3069 = vmatprep.subr.mxu0 0.0
        %3070 = vmatpush1.msra.mxu0 0.0
        %3071 = vmatprep.subr.mxu0 0.0
        %3072 = vmatpush1.msra.mxu0 0.0
        %3073 = vmatprep.subr.mxu0 0.0
        %3074 = vmatpush1.msra.mxu0 0.0
        %3075 = vmatprep.subr.mxu0 0.0
        %3076 = vmatpush1.msra.mxu0 0.0
        %3077 = vmatprep.subr.mxu0 0.0
        %3078 = vmatpush1.msra.mxu0 0.0
        %3079 = vmatprep.subr.mxu0 0.0
        %3080 = vmatpush1.msra.mxu0 0.0
        %3081 = vmatprep.subr.mxu0 0.0
        %3082 = vmatpush1.msra.mxu0 0.0
        %3083 = vmatprep.subr.mxu0 0.0
        %3084 = vmatpush1.msra.mxu0 0.0
        %3085 = vmatprep.subr.mxu0 0.0
        %3086 = vmatpush1.msra.mxu0 0.0
        %3087 = vmatprep.subr.mxu0 0.0
        %3088 = vmatpush1.msra.mxu0 0.0
        %3089 = vmatprep.subr.mxu0 0.0
        %3090 = vmatpush1.msra.mxu0 0.0
        %3091 = vmatprep.subr.mxu0 0.0
        %3092 = vmatpush1.msra.mxu0 0.0
        %3093 = vmatprep.subr.mxu0 0.0
        %3094 = vmatpush1.msra.mxu0 0.0
        %3095 = vmatprep.subr.mxu0 0.0
        %3096 = vmatpush1.msra.mxu0 0.0
        %3097 = vmatprep.subr.mxu0 0.0
        %3098 = vmatpush1.msra.mxu0 0.0
        %3099 = vmatprep.subr.mxu0 0.0
        %3100 = vmatpush1.msra.mxu0 0.0
        %3101 = vmatprep.subr.mxu0 0.0
        %3102 = vmatpush1.msra.mxu0 0.0
        %3103 = vmatprep.subr.mxu0 0.0
        %3104 = vmatpush1.msra.mxu0 0.0
        %3105 = vmatprep.subr.mxu0 0.0
        %3106 = vmatpush1.msra.mxu0 0.0
        %3107 = vmatprep.subr.mxu0 0.0
        %3108 = vmatpush1.msra.mxu0 0.0
        %3109 = vmatprep.subr.mxu0 0.0
        %3110 = vmatpush1.msra.mxu0 0.0
        %3111 = vmatprep.subr.mxu0 0.0
        %3112 = vmatpush1.msra.mxu0 0.0
        %3113 = vmatprep.subr.mxu0 0.0
        %3114 = vmatpush1.msra.mxu0 0.0
        %3115 = vmatprep.mubr.f32.mxu0 0.0
        %3116 = vmatmul.mubr.f32.gmra.mrb[0].mxu0 %v3046
        %v3117 = vpop.f32.mrb[0].mxu0
        %v3118 = vadd.f32 %v1723, %v3117
        %v3119 = vpop.f32.mrb[0].mxu0
        %3120 = vmatprep.mubr.f32.mxu0 0.0
        %3121 = vmatmul.mubr.f32.gmra.mrb[0].mxu0 %v3049
        %v3122 = vpop.f32.mrb[0].mxu0
        %v3123 = vadd.f32 %v1723, %v3122
        %v3124 = vpop.f32.mrb[0].mxu0
        %3125 = vdwg.mxu0
        %3128 = vrot.lane.b32.xlu0 %v3118, 96
        %v3129 = vpop.permute.xlu0 %3128
        %3130 = vrot.lane.b32.xlu0 %v3123, 96
        %v3131 = vpop.permute.xlu0 %3130
        %v3134 = vmax.f32 %v3118, %v3129
        %v3135 = vmax.f32 %v3123, %v3131
        %v3137 = vsel %vm1483, %v3134, 0
        %v3140 = vsel %vm1483, %v3135, 0
        %3142 = vmatprep.subr.mxu0 0.0
        %3143 = vmatpush1.msra.mxu0 %v1183
        %3144 = vmatprep.subr.mxu0 0.0
        %3145 = vmatpush1.msra.mxu0 %v1184
        %3146 = vmatprep.subr.mxu0 0.0
        %3147 = vmatpush1.msra.mxu0 %v1185
        %3148 = vmatprep.subr.mxu0 0.0
        %3149 = vmatpush1.msra.mxu0 %v1186
        %3150 = vmatprep.subr.mxu0 0.0
        %3151 = vmatpush1.msra.mxu0 0.0
        %3152 = vmatprep.subr.mxu0 0.0
        %3153 = vmatpush1.msra.mxu0 0.0
        %3154 = vmatprep.subr.mxu0 0.0
        %3155 = vmatpush1.msra.mxu0 0.0
        %3156 = vmatprep.subr.mxu0 0.0
        %3157 = vmatpush1.msra.mxu0 0.0
        %3158 = vmatprep.subr.mxu0 0.0
        %3159 = vmatpush1.msra.mxu0 0.0
        %3160 = vmatprep.subr.mxu0 0.0
        %3161 = vmatpush1.msra.mxu0 0.0
        %3162 = vmatprep.subr.mxu0 0.0
        %3163 = vmatpush1.msra.mxu0 0.0
        %3164 = vmatprep.subr.mxu0 0.0
        %3165 = vmatpush1.msra.mxu0 0.0
        %3166 = vmatprep.subr.mxu0 0.0
        %3167 = vmatpush1.msra.mxu0 0.0
        %3168 = vmatprep.subr.mxu0 0.0
        %3169 = vmatpush1.msra.mxu0 0.0
        %3170 = vmatprep.subr.mxu0 0.0
        %3171 = vmatpush1.msra.mxu0 0.0
        %3172 = vmatprep.subr.mxu0 0.0
        %3173 = vmatpush1.msra.mxu0 0.0
        %3174 = vmatprep.subr.mxu0 0.0
        %3175 = vmatpush1.msra.mxu0 0.0
        %3176 = vmatprep.subr.mxu0 0.0
        %3177 = vmatpush1.msra.mxu0 0.0
        %3178 = vmatprep.subr.mxu0 0.0
        %3179 = vmatpush1.msra.mxu0 0.0
        %3180 = vmatprep.subr.mxu0 0.0
        %3181 = vmatpush1.msra.mxu0 0.0
        %3182 = vmatprep.subr.mxu0 0.0
        %3183 = vmatpush1.msra.mxu0 0.0
        %3184 = vmatprep.subr.mxu0 0.0
        %3185 = vmatpush1.msra.mxu0 0.0
        %3186 = vmatprep.subr.mxu0 0.0
        %3187 = vmatpush1.msra.mxu0 0.0
        %3188 = vmatprep.subr.mxu0 0.0
        %3189 = vmatpush1.msra.mxu0 0.0
        %3190 = vmatprep.subr.mxu0 0.0
        %3191 = vmatpush1.msra.mxu0 0.0
        %3192 = vmatprep.subr.mxu0 0.0
        %3193 = vmatpush1.msra.mxu0 0.0
        %3194 = vmatprep.subr.mxu0 0.0
        %3195 = vmatpush1.msra.mxu0 0.0
        %3196 = vmatprep.subr.mxu0 0.0
        %3197 = vmatpush1.msra.mxu0 0.0
        %3198 = vmatprep.subr.mxu0 0.0
        %3199 = vmatpush1.msra.mxu0 0.0
        %3200 = vmatprep.subr.mxu0 0.0
        %3201 = vmatpush1.msra.mxu0 0.0
        %3202 = vmatprep.subr.mxu0 0.0
        %3203 = vmatpush1.msra.mxu0 0.0
        %3204 = vmatprep.subr.mxu0 0.0
        %3205 = vmatpush1.msra.mxu0 0.0
        %3206 = vmatprep.mubr.f32.mxu0 0.0
        %3207 = vmatmul.mubr.f32.gmra.mrb[0].mxu0 %v3137
        %v3208 = vpop.f32.mrb[0].mxu0
        %v3209 = vadd.f32 0.0, %v3208
        %v3210 = vpop.f32.mrb[0].mxu0
        %3211 = vmatprep.mubr.f32.mxu0 0.0
        %3212 = vmatmul.mubr.f32.gmra.mrb[0].mxu0 %v3140
        %v3213 = vpop.f32.mrb[0].mxu0
        %v3214 = vadd.f32 0.0, %v3213
        %v3215 = vpop.f32.mrb[0].mxu0
        %3216 = vdwg.mxu0
        %3217 = vmatprep.subr.mxu0 0.0
        %3218 = vmatpush1.msra.mxu0 %v1179
        %3219 = vmatprep.subr.mxu0 0.0
        %3220 = vmatpush1.msra.mxu0 %v1180
        %3221 = vmatprep.subr.mxu0 0.0
        %3222 = vmatpush1.msra.mxu0 %v1181
        %3223 = vmatprep.subr.mxu0 0.0
        %3224 = vmatpush1.msra.mxu0 %v1182
        %3225 = vmatprep.subr.mxu0 0.0
        %3226 = vmatpush1.msra.mxu0 0.0
        %3227 = vmatprep.subr.mxu0 0.0
        %3228 = vmatpush1.msra.mxu0 0.0
        %3229 = vmatprep.subr.mxu0 0.0
        %3230 = vmatpush1.msra.mxu0 0.0
        %3231 = vmatprep.subr.mxu0 0.0
        %3232 = vmatpush1.msra.mxu0 0.0
        %3233 = vmatprep.subr.mxu0 0.0
        %3234 = vmatpush1.msra.mxu0 0.0
        %3235 = vmatprep.subr.mxu0 0.0
        %3236 = vmatpush1.msra.mxu0 0.0
        %3237 = vmatprep.subr.mxu0 0.0
        %3238 = vmatpush1.msra.mxu0 0.0
        %3239 = vmatprep.subr.mxu0 0.0
        %3240 = vmatpush1.msra.mxu0 0.0
        %3241 = vmatprep.subr.mxu0 0.0
        %3242 = vmatpush1.msra.mxu0 0.0
        %3243 = vmatprep.subr.mxu0 0.0
        %3244 = vmatpush1.msra.mxu0 0.0
        %3245 = vmatprep.subr.mxu0 0.0
        %3246 = vmatpush1.msra.mxu0 0.0
        %3247 = vmatprep.subr.mxu0 0.0
        %3248 = vmatpush1.msra.mxu0 0.0
        %3249 = vmatprep.subr.mxu0 0.0
        %3250 = vmatpush1.msra.mxu0 0.0
        %3251 = vmatprep.subr.mxu0 0.0
        %3252 = vmatpush1.msra.mxu0 0.0
        %3253 = vmatprep.subr.mxu0 0.0
        %3254 = vmatpush1.msra.mxu0 0.0
        %3255 = vmatprep.subr.mxu0 0.0
        %3256 = vmatpush1.msra.mxu0 0.0
        %3257 = vmatprep.subr.mxu0 0.0
        %3258 = vmatpush1.msra.mxu0 0.0
        %3259 = vmatprep.subr.mxu0 0.0
        %3260 = vmatpush1.msra.mxu0 0.0
        %3261 = vmatprep.subr.mxu0 0.0
        %3262 = vmatpush1.msra.mxu0 0.0
        %3263 = vmatprep.subr.mxu0 0.0
        %3264 = vmatpush1.msra.mxu0 0.0
        %3265 = vmatprep.subr.mxu0 0.0
        %3266 = vmatpush1.msra.mxu0 0.0
        %3267 = vmatprep.subr.mxu0 0.0
        %3268 = vmatpush1.msra.mxu0 0.0
        %3269 = vmatprep.subr.mxu0 0.0
        %3270 = vmatpush1.msra.mxu0 0.0
        %3271 = vmatprep.subr.mxu0 0.0
        %3272 = vmatpush1.msra.mxu0 0.0
        %3273 = vmatprep.subr.mxu0 0.0
        %3274 = vmatpush1.msra.mxu0 0.0
        %3275 = vmatprep.subr.mxu0 0.0
        %3276 = vmatpush1.msra.mxu0 0.0
        %3277 = vmatprep.subr.mxu0 0.0
        %3278 = vmatpush1.msra.mxu0 0.0
        %3279 = vmatprep.subr.mxu0 0.0
        %3280 = vmatpush1.msra.mxu0 0.0
        %3281 = vmatprep.mubr.f32.mxu0 0.0
        %3282 = vmatmul.mubr.f32.gmra.mrb[0].mxu0 %v3046
        %v3283 = vpop.f32.mrb[0].mxu0
        %v3284 = vadd.f32 %v3209, %v3283
        %v3285 = vpop.f32.mrb[0].mxu0
        %3286 = vmatprep.mubr.f32.mxu0 0.0
        %3287 = vmatmul.mubr.f32.gmra.mrb[0].mxu0 %v3049
        %v3288 = vpop.f32.mrb[0].mxu0
        %v3289 = vadd.f32 %v3214, %v3288
        %v3290 = vpop.f32.mrb[0].mxu0
        %3291 = vdwg.mxu0
        %v3292 = vadd.f32 %v3284, %v1976
        %v3293 = vadd.f32 %v3289, %v1976
        %v3294 = vsel %vm1980, %v3292, -inf
        %3295 = vmax.xlane.f32.xlu0 %v3294
        %v3296 = vpop.xlane.xlu0 %3295
        %v3297 = vsel %vm1980, %v3293, -inf
        %3298 = vmax.xlane.f32.xlu0 %v3297
        %v3299 = vpop.xlane.xlu0 %3298
        %3300 = vmatprep.subr.mxu0 0.0
        %3301 = vmatpush1.msra.mxu0 %v1196
        %3302 = vmatprep.subr.mxu0 0.0
        %3303 = vmatpush1.msra.mxu0 %v1197
        %3304 = vmatprep.subr.mxu0 0.0
        %3305 = vmatpush1.msra.mxu0 %v1198
        %3306 = vmatprep.subr.mxu0 0.0
        %3307 = vmatpush1.msra.mxu0 %v1199
        %3308 = vmatprep.subr.mxu0 0.0
        %3309 = vmatpush1.msra.mxu0 0.0
        %3310 = vmatprep.subr.mxu0 0.0
        %3311 = vmatpush1.msra.mxu0 0.0
        %3312 = vmatprep.subr.mxu0 0.0
        %3313 = vmatpush1.msra.mxu0 0.0
        %3314 = vmatprep.subr.mxu0 0.0
        %3315 = vmatpush1.msra.mxu0 0.0
        %3316 = vmatprep.subr.mxu0 0.0
        %3317 = vmatpush1.msra.mxu0 0.0
        %3318 = vmatprep.subr.mxu0 0.0
        %3319 = vmatpush1.msra.mxu0 0.0
        %3320 = vmatprep.subr.mxu0 0.0
        %3321 = vmatpush1.msra.mxu0 0.0
        %3322 = vmatprep.subr.mxu0 0.0
        %3323 = vmatpush1.msra.mxu0 0.0
        %3324 = vmatprep.subr.mxu0 0.0
        %3325 = vmatpush1.msra.mxu0 0.0
        %3326 = vmatprep.subr.mxu0 0.0
        %3327 = vmatpush1.msra.mxu0 0.0
        %3328 = vmatprep.subr.mxu0 0.0
        %3329 = vmatpush1.msra.mxu0 0.0
        %3330 = vmatprep.subr.mxu0 0.0
        %3331 = vmatpush1.msra.mxu0 0.0
        %3332 = vmatprep.subr.mxu0 0.0
        %3333 = vmatpush1.msra.mxu0 0.0
        %3334 = vmatprep.subr.mxu0 0.0
        %3335 = vmatpush1.msra.mxu0 0.0
        %3336 = vmatprep.subr.mxu0 0.0
        %3337 = vmatpush1.msra.mxu0 0.0
        %3338 = vmatprep.subr.mxu0 0.0
        %3339 = vmatpush1.msra.mxu0 0.0
        %3340 = vmatprep.subr.mxu0 0.0
        %3341 = vmatpush1.msra.mxu0 0.0
        %3342 = vmatprep.subr.mxu0 0.0
        %3343 = vmatpush1.msra.mxu0 0.0
        %3344 = vmatprep.subr.mxu0 0.0
        %3345 = vmatpush1.msra.mxu0 0.0
        %3346 = vmatprep.subr.mxu0 0.0
        %3347 = vmatpush1.msra.mxu0 0.0
        %3348 = vmatprep.subr.mxu0 0.0
        %3349 = vmatpush1.msra.mxu0 0.0
        %3350 = vmatprep.subr.mxu0 0.0
        %3351 = vmatpush1.msra.mxu0 0.0
        %3352 = vmatprep.subr.mxu0 0.0
        %3353 = vmatpush1.msra.mxu0 0.0
        %3354 = vmatprep.subr.mxu0 0.0
        %3355 = vmatpush1.msra.mxu0 0.0
        %3356 = vmatprep.subr.mxu0 0.0
        %3357 = vmatpush1.msra.mxu0 0.0
        %3358 = vmatprep.subr.mxu0 0.0
        %3359 = vmatpush1.msra.mxu0 0.0
        %3360 = vmatprep.subr.mxu0 0.0
        %3361 = vmatpush1.msra.mxu0 0.0
        %3362 = vmatprep.subr.mxu0 0.0
        %3363 = vmatpush1.msra.mxu0 0.0
        %3364 = vmatprep.mubr.f32.mxu0 0.0
        %3365 = vmatmul.mubr.f32.gmra.mrb[0].mxu0 %v2957
        %v3366 = vpop.f32.mrb[0].mxu0
        %v3367 = vadd.f32 0.0, %v3366
        %v3368 = vpop.f32.mrb[0].mxu0
        %3369 = vdwg.mxu0
        %v3370 = vlaneseq
        %v3371 = vshrl.u32 %v3370, 7
        %v3372 = vsub.s32 0, %v3371
        %v3373 = vrot.slane %v3367, %v3372
        %v3374 = vadd.f32 %v1402, %v3373
        %v3375 = vadd.f32 %v1407, %v3373
        %3378 = vrot.lane.b32.xlu0 %v3374, 96
        %v3379 = vpop.permute.xlu0 %3378
        %3380 = vrot.lane.b32.xlu0 %v3375, 96
        %v3381 = vpop.permute.xlu0 %3380
        %v3384 = vmax.f32 %v3374, %v3379
        %v3385 = vmax.f32 %v3375, %v3381
        %v3387 = vsel %vm1483, %v3384, 0
        %v3390 = vsel %vm1483, %v3385, 0
        %3392 = vmatprep.subr.mxu0 0.0
        %3393 = vmatpush1.msra.mxu0 %v1201
        %3394 = vmatprep.subr.mxu0 0.0
        %3395 = vmatpush1.msra.mxu0 %v1202
        %3396 = vmatprep.subr.mxu0 0.0
        %3397 = vmatpush1.msra.mxu0 %v1203
        %3398 = vmatprep.subr.mxu0 0.0
        %3399 = vmatpush1.msra.mxu0 %v1204
        %3400 = vmatprep.subr.mxu0 0.0
        %3401 = vmatpush1.msra.mxu0 0.0
        %3402 = vmatprep.subr.mxu0 0.0
        %3403 = vmatpush1.msra.mxu0 0.0
        %3404 = vmatprep.subr.mxu0 0.0
        %3405 = vmatpush1.msra.mxu0 0.0
        %3406 = vmatprep.subr.mxu0 0.0
        %3407 = vmatpush1.msra.mxu0 0.0
        %3408 = vmatprep.subr.mxu0 0.0
        %3409 = vmatpush1.msra.mxu0 0.0
        %3410 = vmatprep.subr.mxu0 0.0
        %3411 = vmatpush1.msra.mxu0 0.0
        %3412 = vmatprep.subr.mxu0 0.0
        %3413 = vmatpush1.msra.mxu0 0.0
        %3414 = vmatprep.subr.mxu0 0.0
        %3415 = vmatpush1.msra.mxu0 0.0
        %3416 = vmatprep.subr.mxu0 0.0
        %3417 = vmatpush1.msra.mxu0 0.0
        %3418 = vmatprep.subr.mxu0 0.0
        %3419 = vmatpush1.msra.mxu0 0.0
        %3420 = vmatprep.subr.mxu0 0.0
        %3421 = vmatpush1.msra.mxu0 0.0
        %3422 = vmatprep.subr.mxu0 0.0
        %3423 = vmatpush1.msra.mxu0 0.0
        %3424 = vmatprep.subr.mxu0 0.0
        %3425 = vmatpush1.msra.mxu0 0.0
        %3426 = vmatprep.subr.mxu0 0.0
        %3427 = vmatpush1.msra.mxu0 0.0
        %3428 = vmatprep.subr.mxu0 0.0
        %3429 = vmatpush1.msra.mxu0 0.0
        %3430 = vmatprep.subr.mxu0 0.0
        %3431 = vmatpush1.msra.mxu0 0.0
        %3432 = vmatprep.subr.mxu0 0.0
        %3433 = vmatpush1.msra.mxu0 0.0
        %3434 = vmatprep.subr.mxu0 0.0
        %3435 = vmatpush1.msra.mxu0 0.0
        %3436 = vmatprep.subr.mxu0 0.0
        %3437 = vmatpush1.msra.mxu0 0.0
        %3438 = vmatprep.subr.mxu0 0.0
        %3439 = vmatpush1.msra.mxu0 0.0
        %3440 = vmatprep.subr.mxu0 0.0
        %3441 = vmatpush1.msra.mxu0 0.0
        %3442 = vmatprep.subr.mxu0 0.0
        %3443 = vmatpush1.msra.mxu0 0.0
        %3444 = vmatprep.subr.mxu0 0.0
        %3445 = vmatpush1.msra.mxu0 0.0
        %3446 = vmatprep.subr.mxu0 0.0
        %3447 = vmatpush1.msra.mxu0 0.0
        %3448 = vmatprep.subr.mxu0 0.0
        %3449 = vmatpush1.msra.mxu0 0.0
        %3450 = vmatprep.subr.mxu0 0.0
        %3451 = vmatpush1.msra.mxu0 0.0
        %3452 = vmatprep.subr.mxu0 0.0
        %3453 = vmatpush1.msra.mxu0 0.0
        %3454 = vmatprep.subr.mxu0 0.0
        %3455 = vmatpush1.msra.mxu0 0.0
        %3456 = vmatprep.mubr.f32.mxu0 0.0
        %3457 = vmatmul.mubr.f32.gmra.mrb[0].mxu0 %v3387
        %v3458 = vpop.f32.mrb[0].mxu0
        %v3459 = vadd.f32 %v2077, %v3458
        %v3460 = vpop.f32.mrb[0].mxu0
        %3461 = vmatprep.mubr.f32.mxu0 0.0
        %3462 = vmatmul.mubr.f32.gmra.mrb[0].mxu0 %v3390
        %v3463 = vpop.f32.mrb[0].mxu0
        %v3464 = vadd.f32 %v2077, %v3463
        %v3465 = vpop.f32.mrb[0].mxu0
        %3466 = vdwg.mxu0
        %3469 = vrot.lane.b32.xlu0 %v3459, 96
        %v3470 = vpop.permute.xlu0 %3469
        %3471 = vrot.lane.b32.xlu0 %v3464, 96
        %v3472 = vpop.permute.xlu0 %3471
        %v3475 = vmax.f32 %v3459, %v3470
        %v3476 = vmax.f32 %v3464, %v3472
        %v3478 = vsel %vm1483, %v3475, 0
        %v3481 = vsel %vm1483, %v3476, 0
        %3483 = vmatprep.subr.mxu0 0.0
        %3484 = vmatpush1.msra.mxu0 %v1210
        %3485 = vmatprep.subr.mxu0 0.0
        %3486 = vmatpush1.msra.mxu0 %v1211
        %3487 = vmatprep.subr.mxu0 0.0
        %3488 = vmatpush1.msra.mxu0 %v1212
        %3489 = vmatprep.subr.mxu0 0.0
        %3490 = vmatpush1.msra.mxu0 %v1213
        %3491 = vmatprep.subr.mxu0 0.0
        %3492 = vmatpush1.msra.mxu0 0.0
        %3493 = vmatprep.subr.mxu0 0.0
        %3494 = vmatpush1.msra.mxu0 0.0
        %3495 = vmatprep.subr.mxu0 0.0
        %3496 = vmatpush1.msra.mxu0 0.0
        %3497 = vmatprep.subr.mxu0 0.0
        %3498 = vmatpush1.msra.mxu0 0.0
        %3499 = vmatprep.subr.mxu0 0.0
        %3500 = vmatpush1.msra.mxu0 0.0
        %3501 = vmatprep.subr.mxu0 0.0
        %3502 = vmatpush1.msra.mxu0 0.0
        %3503 = vmatprep.subr.mxu0 0.0
        %3504 = vmatpush1.msra.mxu0 0.0
        %3505 = vmatprep.subr.mxu0 0.0
        %3506 = vmatpush1.msra.mxu0 0.0
        %3507 = vmatprep.subr.mxu0 0.0
        %3508 = vmatpush1.msra.mxu0 0.0
        %3509 = vmatprep.subr.mxu0 0.0
        %3510 = vmatpush1.msra.mxu0 0.0
        %3511 = vmatprep.subr.mxu0 0.0
        %3512 = vmatpush1.msra.mxu0 0.0
        %3513 = vmatprep.subr.mxu0 0.0
        %3514 = vmatpush1.msra.mxu0 0.0
        %3515 = vmatprep.subr.mxu0 0.0
        %3516 = vmatpush1.msra.mxu0 0.0
        %3517 = vmatprep.subr.mxu0 0.0
        %3518 = vmatpush1.msra.mxu0 0.0
        %3519 = vmatprep.subr.mxu0 0.0
        %3520 = vmatpush1.msra.mxu0 0.0
        %3521 = vmatprep.subr.mxu0 0.0
        %3522 = vmatpush1.msra.mxu0 0.0
        %3523 = vmatprep.subr.mxu0 0.0
        %3524 = vmatpush1.msra.mxu0 0.0
        %3525 = vmatprep.subr.mxu0 0.0
        %3526 = vmatpush1.msra.mxu0 0.0
        %3527 = vmatprep.subr.mxu0 0.0
        %3528 = vmatpush1.msra.mxu0 0.0
        %3529 = vmatprep.subr.mxu0 0.0
        %3530 = vmatpush1.msra.mxu0 0.0
        %3531 = vmatprep.subr.mxu0 0.0
        %3532 = vmatpush1.msra.mxu0 0.0
        %3533 = vmatprep.subr.mxu0 0.0
        %3534 = vmatpush1.msra.mxu0 0.0
        %3535 = vmatprep.subr.mxu0 0.0
        %3536 = vmatpush1.msra.mxu0 0.0
        %3537 = vmatprep.subr.mxu0 0.0
        %3538 = vmatpush1.msra.mxu0 0.0
        %3539 = vmatprep.subr.mxu0 0.0
        %3540 = vmatpush1.msra.mxu0 0.0
        %3541 = vmatprep.subr.mxu0 0.0
        %3542 = vmatpush1.msra.mxu0 0.0
        %3543 = vmatprep.subr.mxu0 0.0
        %3544 = vmatpush1.msra.mxu0 0.0
        %3545 = vmatprep.subr.mxu0 0.0
        %3546 = vmatpush1.msra.mxu0 0.0
        %3547 = vmatprep.mubr.f32.mxu0 0.0
        %3548 = vmatmul.mubr.f32.gmra.mrb[0].mxu0 %v3478
        %v3549 = vpop.f32.mrb[0].mxu0
        %v3550 = vadd.f32 0.0, %v3549
        %v3551 = vpop.f32.mrb[0].mxu0
        %3552 = vmatprep.mubr.f32.mxu0 0.0
        %3553 = vmatmul.mubr.f32.gmra.mrb[0].mxu0 %v3481
        %v3554 = vpop.f32.mrb[0].mxu0
        %v3555 = vadd.f32 0.0, %v3554
        %v3556 = vpop.f32.mrb[0].mxu0
        %3557 = vdwg.mxu0
        %3558 = vmatprep.subr.mxu0 0.0
        %3559 = vmatpush1.msra.mxu0 %v1206
        %3560 = vmatprep.subr.mxu0 0.0
        %3561 = vmatpush1.msra.mxu0 %v1207
        %3562 = vmatprep.subr.mxu0 0.0
        %3563 = vmatpush1.msra.mxu0 %v1208
        %3564 = vmatprep.subr.mxu0 0.0
        %3565 = vmatpush1.msra.mxu0 %v1209
        %3566 = vmatprep.subr.mxu0 0.0
        %3567 = vmatpush1.msra.mxu0 0.0
        %3568 = vmatprep.subr.mxu0 0.0
        %3569 = vmatpush1.msra.mxu0 0.0
        %3570 = vmatprep.subr.mxu0 0.0
        %3571 = vmatpush1.msra.mxu0 0.0
        %3572 = vmatprep.subr.mxu0 0.0
        %3573 = vmatpush1.msra.mxu0 0.0
        %3574 = vmatprep.subr.mxu0 0.0
        %3575 = vmatpush1.msra.mxu0 0.0
        %3576 = vmatprep.subr.mxu0 0.0
        %3577 = vmatpush1.msra.mxu0 0.0
        %3578 = vmatprep.subr.mxu0 0.0
        %3579 = vmatpush1.msra.mxu0 0.0
        %3580 = vmatprep.subr.mxu0 0.0
        %3581 = vmatpush1.msra.mxu0 0.0
        %3582 = vmatprep.subr.mxu0 0.0
        %3583 = vmatpush1.msra.mxu0 0.0
        %3584 = vmatprep.subr.mxu0 0.0
        %3585 = vmatpush1.msra.mxu0 0.0
        %3586 = vmatprep.subr.mxu0 0.0
        %3587 = vmatpush1.msra.mxu0 0.0
        %3588 = vmatprep.subr.mxu0 0.0
        %3589 = vmatpush1.msra.mxu0 0.0
        %3590 = vmatprep.subr.mxu0 0.0
        %3591 = vmatpush1.msra.mxu0 0.0
        %3592 = vmatprep.subr.mxu0 0.0
        %3593 = vmatpush1.msra.mxu0 0.0
        %3594 = vmatprep.subr.mxu0 0.0
        %3595 = vmatpush1.msra.mxu0 0.0
        %3596 = vmatprep.subr.mxu0 0.0
        %3597 = vmatpush1.msra.mxu0 0.0
        %3598 = vmatprep.subr.mxu0 0.0
        %3599 = vmatpush1.msra.mxu0 0.0
        %3600 = vmatprep.subr.mxu0 0.0
        %3601 = vmatpush1.msra.mxu0 0.0
        %3602 = vmatprep.subr.mxu0 0.0
        %3603 = vmatpush1.msra.mxu0 0.0
        %3604 = vmatprep.subr.mxu0 0.0
        %3605 = vmatpush1.msra.mxu0 0.0
        %3606 = vmatprep.subr.mxu0 0.0
        %3607 = vmatpush1.msra.mxu0 0.0
        %3608 = vmatprep.subr.mxu0 0.0
        %3609 = vmatpush1.msra.mxu0 0.0
        %3610 = vmatprep.subr.mxu0 0.0
        %3611 = vmatpush1.msra.mxu0 0.0
        %3612 = vmatprep.subr.mxu0 0.0
        %3613 = vmatpush1.msra.mxu0 0.0
        %3614 = vmatprep.subr.mxu0 0.0
        %3615 = vmatpush1.msra.mxu0 0.0
        %3616 = vmatprep.subr.mxu0 0.0
        %3617 = vmatpush1.msra.mxu0 0.0
        %3618 = vmatprep.subr.mxu0 0.0
        %3619 = vmatpush1.msra.mxu0 0.0
        %3620 = vmatprep.subr.mxu0 0.0
        %3621 = vmatpush1.msra.mxu0 0.0
        %3622 = vmatprep.mubr.f32.mxu0 0.0
        %3623 = vmatmul.mubr.f32.gmra.mrb[0].mxu0 %v3387
        %v3624 = vpop.f32.mrb[0].mxu0
        %v3625 = vadd.f32 %v3550, %v3624
        %v3626 = vpop.f32.mrb[0].mxu0
        %3627 = vmatprep.mubr.f32.mxu0 0.0
        %3628 = vmatmul.mubr.f32.gmra.mrb[0].mxu0 %v3390
        %v3629 = vpop.f32.mrb[0].mxu0
        %v3630 = vadd.f32 %v3555, %v3629
        %v3631 = vpop.f32.mrb[0].mxu0
        %3632 = vdwg.mxu0
        %v3633 = vadd.f32 %v3625, %v2330
        %v3634 = vadd.f32 %v3630, %v2330
        %v3635 = vsel %vm1980, %v3633, -inf
        %3636 = vmax.xlane.f32.xlu0 %v3635
        %v3637 = vpop.xlane.xlu0 %3636
        %v3638 = vsel %vm1980, %v3634, -inf
        %3639 = vmax.xlane.f32.xlu0 %v3638
        %v3640 = vpop.xlane.xlu0 %3639
        %s3641 = scalar_lea.vmem %s1126, 16
        %3642 = vst.msk [vmem:[%s3641] sm:$0xff] %vm2340, %v3296
        %3643 = vst.msk [vmem:[%s3641 + $0x8] sm:$0xff] %vm2340, %v3299
        %s3644 = scalar_lea.vmem %s1131, 16
        %3645 = vst.msk [vmem:[%s3644] sm:$0xff] %vm2340, %v3637
        %3646 = vst.msk [vmem:[%s3644 + $0x8] sm:$0xff] %vm2340, %v3640
        %v3647 = vmax.f32 %v3296, %v3299
        %v3648 = vrot.slane %v3647, 4
        %v3649 = vmax.f32 %v3647, %v3648
        %v3650 = vrot.slane %v3649, 2
        %v3651 = vmax.f32 %v3649, %v3650
        %v3652 = vrot.slane %v3651, 1
        %v3653 = vmax.f32 %v3651, %v3652
        %vm3654 = vcmp.eq.f32.partialorder %v3296, %v3653
        %vm3655 = vcmp.eq.f32.partialorder %v3299, %v3653
        %v3656 = vsel %vm3654, %v1411, 16
        %v3657 = vsel %vm3655, %v1412, 16
        %vm3658 = vcmp.lt.s32.totalorder %v3656, %v3657
        %v3659 = vsel %vm3658, %v3656, %v3657
        %v3660 = vrot.slane %v3659, 4
        %vm3661 = vcmp.lt.s32.totalorder %v3659, %v3660
        %v3662 = vsel %vm3661, %v3659, %v3660
        %v3663 = vrot.slane %v3662, 2
        %vm3664 = vcmp.lt.s32.totalorder %v3662, %v3663
        %v3665 = vsel %vm3664, %v3662, %v3663
        %v3666 = vrot.slane %v3665, 1
        %vm3667 = vcmp.lt.s32.totalorder %v3665, %v3666
        %v3668 = vsel %vm3667, %v3665, %v3666
        %vm3669 = vcmp.eq.s32.totalorder %v1411, %v3668
        %vm3670 = vcmp.eq.s32.totalorder %v1412, %v3668
        %v3671 = vsel %vm3669, 1, 0
        %v3672 = vsel %vm3670, 1, 0
        %vm3673 = vcmp.eq.s32.totalorder %v3671, 1
        %vm3674 = vcmp.eq.s32.totalorder %v3672, 1
        %v3675 = vsel %vm3673, %v1138, 0.0
        %v3676 = vsel %vm3674, %v1139, 0.0
        %v3677 = vsel %vm1247, %v3675, 0.0
        %v3678 = vsel %vm1247, %v3676, 0.0
        %v3679 = vadd.f32 %v3677, %v3678
        %v3680 = vrot.slane %v3679, 4
        %v3681 = vadd.f32 %v3679, %v3680
        %v3682 = vrot.slane %v3681, 2
        %v3683 = vadd.f32 %v3681, %v3682
        %v3684 = vrot.slane %v3683, 1
        %v3685 = vadd.f32 %v3683, %v3684
        %v3686 = vmax.f32 %v3637, %v3640
        %v3687 = vrot.slane %v3686, 4
        %v3688 = vmax.f32 %v3686, %v3687
        %v3689 = vrot.slane %v3688, 2
        %v3690 = vmax.f32 %v3688, %v3689
        %v3691 = vrot.slane %v3690, 1
        %v3692 = vmax.f32 %v3690, %v3691
        %vm3693 = vcmp.eq.f32.partialorder %v3637, %v3692
        %vm3694 = vcmp.eq.f32.partialorder %v3640, %v3692
        %v3695 = vsel %vm3693, %v1411, 16
        %v3696 = vsel %vm3694, %v1412, 16
        %vm3697 = vcmp.lt.s32.totalorder %v3695, %v3696
        %v3698 = vsel %vm3697, %v3695, %v3696
        %v3699 = vrot.slane %v3698, 4
        %vm3700 = vcmp.lt.s32.totalorder %v3698, %v3699
        %v3701 = vsel %vm3700, %v3698, %v3699
        %v3702 = vrot.slane %v3701, 2
        %vm3703 = vcmp.lt.s32.totalorder %v3701, %v3702
        %v3704 = vsel %vm3703, %v3701, %v3702
        %v3705 = vrot.slane %v3704, 1
        %vm3706 = vcmp.lt.s32.totalorder %v3704, %v3705
        %v3707 = vsel %vm3706, %v3704, %v3705
        %vm3708 = vcmp.eq.s32.totalorder %v1411, %v3707
        %vm3709 = vcmp.eq.s32.totalorder %v1412, %v3707
        %v3710 = vsel %vm3708, 1, 0
        %v3711 = vsel %vm3709, 1, 0
        %vm3712 = vcmp.eq.s32.totalorder %v3710, 1
        %vm3713 = vcmp.eq.s32.totalorder %v3711, 1
        %v3714 = vsel %vm3712, %v1138, 0.0
        %v3715 = vsel %vm3713, %v1139, 0.0
        %v3716 = vsel %vm1247, %v3714, 0.0
        %v3717 = vsel %vm1247, %v3715, 0.0
        %v3718 = vadd.f32 %v3716, %v3717
        %v3719 = vrot.slane %v3718, 4
        %v3720 = vadd.f32 %v3718, %v3719
        %v3721 = vrot.slane %v3720, 2
        %v3722 = vadd.f32 %v3720, %v3721
        %v3723 = vrot.slane %v3722, 1
        %v3724 = vadd.f32 %v3722, %v3723
        %v3726 = vsel %vm1247, %v3724, 0
        %3728 = vmatprep.subr.mxu0 0.0
        %3729 = vmatpush1.msra.mxu0 %v1223
        %3730 = vmatprep.subr.mxu0 0.0
        %3731 = vmatpush1.msra.mxu0 %v1224
        %3732 = vmatprep.subr.mxu0 0.0
        %3733 = vmatpush1.msra.mxu0 %v1225
        %3734 = vmatprep.subr.mxu0 0.0
        %3735 = vmatpush1.msra.mxu0 %v1226
        %3736 = vmatprep.subr.mxu0 0.0
        %3737 = vmatpush1.msra.mxu0 %v1227
        %3738 = vmatprep.subr.mxu0 0.0
        %3739 = vmatpush1.msra.mxu0 %v1228
        %3740 = vmatprep.subr.mxu0 0.0
        %3741 = vmatpush1.msra.mxu0 %v1229
        %3742 = vmatprep.subr.mxu0 0.0
        %3743 = vmatpush1.msra.mxu0 %v1230
        %3744 = vmatprep.subr.mxu0 0.0
        %3745 = vmatpush1.msra.mxu0 0.0
        %3746 = vmatprep.subr.mxu0 0.0
        %3747 = vmatpush1.msra.mxu0 0.0
        %3748 = vmatprep.subr.mxu0 0.0
        %3749 = vmatpush1.msra.mxu0 0.0
        %3750 = vmatprep.subr.mxu0 0.0
        %3751 = vmatpush1.msra.mxu0 0.0
        %3752 = vmatprep.subr.mxu0 0.0
        %3753 = vmatpush1.msra.mxu0 0.0
        %3754 = vmatprep.subr.mxu0 0.0
        %3755 = vmatpush1.msra.mxu0 0.0
        %3756 = vmatprep.subr.mxu0 0.0
        %3757 = vmatpush1.msra.mxu0 0.0
        %3758 = vmatprep.subr.mxu0 0.0
        %3759 = vmatpush1.msra.mxu0 0.0
        %3760 = vmatprep.subr.mxu0 0.0
        %3761 = vmatpush1.msra.mxu0 0.0
        %3762 = vmatprep.subr.mxu0 0.0
        %3763 = vmatpush1.msra.mxu0 0.0
        %3764 = vmatprep.subr.mxu0 0.0
        %3765 = vmatpush1.msra.mxu0 0.0
        %3766 = vmatprep.subr.mxu0 0.0
        %3767 = vmatpush1.msra.mxu0 0.0
        %3768 = vmatprep.subr.mxu0 0.0
        %3769 = vmatpush1.msra.mxu0 0.0
        %3770 = vmatprep.subr.mxu0 0.0
        %3771 = vmatpush1.msra.mxu0 0.0
        %3772 = vmatprep.subr.mxu0 0.0
        %3773 = vmatpush1.msra.mxu0 0.0
        %3774 = vmatprep.subr.mxu0 0.0
        %3775 = vmatpush1.msra.mxu0 0.0
        %3776 = vmatprep.subr.mxu0 0.0
        %3777 = vmatpush1.msra.mxu0 0.0
        %3778 = vmatprep.subr.mxu0 0.0
        %3779 = vmatpush1.msra.mxu0 0.0
        %3780 = vmatprep.subr.mxu0 0.0
        %3781 = vmatpush1.msra.mxu0 0.0
        %3782 = vmatprep.subr.mxu0 0.0
        %3783 = vmatpush1.msra.mxu0 0.0
        %3784 = vmatprep.subr.mxu0 0.0
        %3785 = vmatpush1.msra.mxu0 0.0
        %3786 = vmatprep.subr.mxu0 0.0
        %3787 = vmatpush1.msra.mxu0 0.0
        %3788 = vmatprep.subr.mxu0 0.0
        %3789 = vmatpush1.msra.mxu0 0.0
        %3790 = vmatprep.subr.mxu0 0.0
        %3791 = vmatpush1.msra.mxu0 0.0
        %3792 = vmatprep.mubr.f32.mxu0 0.0
        %3793 = vmatmul.mubr.f32.gmra.mrb[0].mxu0 %v3726
        %v3794 = vpop.f32.mrb[0].mxu0
        %v3795 = vadd.f32 0.0, %v3794
        %v3796 = vpop.f32.mrb[0].mxu0
        %3797 = vdwg.mxu0
        %v3799 = vsel %vm1247, %v3685, 0
        %3801 = vmatprep.subr.mxu0 0.0
        %3802 = vmatpush1.msra.mxu0 %v1215
        %3803 = vmatprep.subr.mxu0 0.0
        %3804 = vmatpush1.msra.mxu0 %v1216
        %3805 = vmatprep.subr.mxu0 0.0
        %3806 = vmatpush1.msra.mxu0 %v1217
        %3807 = vmatprep.subr.mxu0 0.0
        %3808 = vmatpush1.msra.mxu0 %v1218
        %3809 = vmatprep.subr.mxu0 0.0
        %3810 = vmatpush1.msra.mxu0 %v1219
        %3811 = vmatprep.subr.mxu0 0.0
        %3812 = vmatpush1.msra.mxu0 %v1220
        %3813 = vmatprep.subr.mxu0 0.0
        %3814 = vmatpush1.msra.mxu0 %v1221
        %3815 = vmatprep.subr.mxu0 0.0
        %3816 = vmatpush1.msra.mxu0 %v1222
        %3817 = vmatprep.subr.mxu0 0.0
        %3818 = vmatpush1.msra.mxu0 0.0
        %3819 = vmatprep.subr.mxu0 0.0
        %3820 = vmatpush1.msra.mxu0 0.0
        %3821 = vmatprep.subr.mxu0 0.0
        %3822 = vmatpush1.msra.mxu0 0.0
        %3823 = vmatprep.subr.mxu0 0.0
        %3824 = vmatpush1.msra.mxu0 0.0
        %3825 = vmatprep.subr.mxu0 0.0
        %3826 = vmatpush1.msra.mxu0 0.0
        %3827 = vmatprep.subr.mxu0 0.0
        %3828 = vmatpush1.msra.mxu0 0.0
        %3829 = vmatprep.subr.mxu0 0.0
        %3830 = vmatpush1.msra.mxu0 0.0
        %3831 = vmatprep.subr.mxu0 0.0
        %3832 = vmatpush1.msra.mxu0 0.0
        %3833 = vmatprep.subr.mxu0 0.0
        %3834 = vmatpush1.msra.mxu0 0.0
        %3835 = vmatprep.subr.mxu0 0.0
        %3836 = vmatpush1.msra.mxu0 0.0
        %3837 = vmatprep.subr.mxu0 0.0
        %3838 = vmatpush1.msra.mxu0 0.0
        %3839 = vmatprep.subr.mxu0 0.0
        %3840 = vmatpush1.msra.mxu0 0.0
        %3841 = vmatprep.subr.mxu0 0.0
        %3842 = vmatpush1.msra.mxu0 0.0
        %3843 = vmatprep.subr.mxu0 0.0
        %3844 = vmatpush1.msra.mxu0 0.0
        %3845 = vmatprep.subr.mxu0 0.0
        %3846 = vmatpush1.msra.mxu0 0.0
        %3847 = vmatprep.subr.mxu0 0.0
        %3848 = vmatpush1.msra.mxu0 0.0
        %3849 = vmatprep.subr.mxu0 0.0
        %3850 = vmatpush1.msra.mxu0 0.0
        %3851 = vmatprep.subr.mxu0 0.0
        %3852 = vmatpush1.msra.mxu0 0.0
        %3853 = vmatprep.subr.mxu0 0.0
        %3854 = vmatpush1.msra.mxu0 0.0
        %3855 = vmatprep.subr.mxu0 0.0
        %3856 = vmatpush1.msra.mxu0 0.0
        %3857 = vmatprep.subr.mxu0 0.0
        %3858 = vmatpush1.msra.mxu0 0.0
        %3859 = vmatprep.subr.mxu0 0.0
        %3860 = vmatpush1.msra.mxu0 0.0
        %3861 = vmatprep.subr.mxu0 0.0
        %3862 = vmatpush1.msra.mxu0 0.0
        %3863 = vmatprep.subr.mxu0 0.0
        %3864 = vmatpush1.msra.mxu0 0.0
        %3865 = vmatprep.mubr.f32.mxu0 0.0
        %3866 = vmatmul.mubr.f32.gmra.mrb[0].mxu0 %v3799
        %v3867 = vpop.f32.mrb[0].mxu0
        %v3868 = vadd.f32 %v3795, %v3867
        %v3869 = vpop.f32.mrb[0].mxu0
        %3870 = vdwg.mxu0
        %3871 = vmatprep.subr.mxu0 0.0
        %3872 = vmatpush1.msra.mxu0 %v1231
        %3873 = vmatprep.subr.mxu0 0.0
        %3874 = vmatpush1.msra.mxu0 %v1232
        %3875 = vmatprep.subr.mxu0 0.0
        %3876 = vmatpush1.msra.mxu0 %v1233
        %3877 = vmatprep.subr.mxu0 0.0
        %3878 = vmatpush1.msra.mxu0 %v1234
        %3879 = vmatprep.subr.mxu0 0.0
        %3880 = vmatpush1.msra.mxu0 0.0
        %3881 = vmatprep.subr.mxu0 0.0
        %3882 = vmatpush1.msra.mxu0 0.0
        %3883 = vmatprep.subr.mxu0 0.0
        %3884 = vmatpush1.msra.mxu0 0.0
        %3885 = vmatprep.subr.mxu0 0.0
        %3886 = vmatpush1.msra.mxu0 0.0
        %3887 = vmatprep.subr.mxu0 0.0
        %3888 = vmatpush1.msra.mxu0 0.0
        %3889 = vmatprep.subr.mxu0 0.0
        %3890 = vmatpush1.msra.mxu0 0.0
        %3891 = vmatprep.subr.mxu0 0.0
        %3892 = vmatpush1.msra.mxu0 0.0
        %3893 = vmatprep.subr.mxu0 0.0
        %3894 = vmatpush1.msra.mxu0 0.0
        %3895 = vmatprep.subr.mxu0 0.0
        %3896 = vmatpush1.msra.mxu0 0.0
        %3897 = vmatprep.subr.mxu0 0.0
        %3898 = vmatpush1.msra.mxu0 0.0
        %3899 = vmatprep.subr.mxu0 0.0
        %3900 = vmatpush1.msra.mxu0 0.0
        %3901 = vmatprep.subr.mxu0 0.0
        %3902 = vmatpush1.msra.mxu0 0.0
        %3903 = vmatprep.subr.mxu0 0.0
        %3904 = vmatpush1.msra.mxu0 0.0
        %3905 = vmatprep.subr.mxu0 0.0
        %3906 = vmatpush1.msra.mxu0 0.0
        %3907 = vmatprep.subr.mxu0 0.0
        %3908 = vmatpush1.msra.mxu0 0.0
        %3909 = vmatprep.subr.mxu0 0.0
        %3910 = vmatpush1.msra.mxu0 0.0
        %3911 = vmatprep.subr.mxu0 0.0
        %3912 = vmatpush1.msra.mxu0 0.0
        %3913 = vmatprep.subr.mxu0 0.0
        %3914 = vmatpush1.msra.mxu0 0.0
        %3915 = vmatprep.subr.mxu0 0.0
        %3916 = vmatpush1.msra.mxu0 0.0
        %3917 = vmatprep.subr.mxu0 0.0
        %3918 = vmatpush1.msra.mxu0 0.0
        %3919 = vmatprep.subr.mxu0 0.0
        %3920 = vmatpush1.msra.mxu0 0.0
        %3921 = vmatprep.subr.mxu0 0.0
        %3922 = vmatpush1.msra.mxu0 0.0
        %3923 = vmatprep.subr.mxu0 0.0
        %3924 = vmatpush1.msra.mxu0 0.0
        %3925 = vmatprep.subr.mxu0 0.0
        %3926 = vmatpush1.msra.mxu0 0.0
        %3927 = vmatprep.subr.mxu0 0.0
        %3928 = vmatpush1.msra.mxu0 0.0
        %3929 = vmatprep.subr.mxu0 0.0
        %3930 = vmatpush1.msra.mxu0 0.0
        %3931 = vmatprep.subr.mxu0 0.0
        %3932 = vmatpush1.msra.mxu0 0.0
        %3933 = vmatprep.subr.mxu0 0.0
        %3934 = vmatpush1.msra.mxu0 0.0
        %3935 = vmatprep.mubr.f32.mxu0 0.0
        %3936 = vmatmul.mubr.f32.gmra.mrb[0].mxu0 %v2811
        %v3937 = vpop.f32.mrb[0].mxu0
        %v3938 = vadd.f32 0.0, %v3937
        %v3939 = vpop.f32.mrb[0].mxu0
        %3940 = vdwg.mxu0
        %v3941 = vadd.f32 %v3868, %v3938
        %v3942 = vadd.f32 %v3941, %v1235
        %v3943 = vxor.u32 %v3942, 2147483648
        %v3944 = vmul.f32 %v3943, 1.442695
        %v3945 = vpow.pop %v3944
        %v3946 = vadd.f32 %v3945, 1.0
        %v3947 = vrcp.pop %v3946
        %v3948 = vmul.f32 1.0, %v3947
        %v3949 = vtanh.pop %v3942
        %v3950 = vmul.f32 %v3948, %v2658
        %3952 = vrot.lane.b32.xlu0 %v3949, 64
        %v3953 = vpop.permute.xlu0 %3952
        %v3955 = vmul.f32 %v3948, %v3953
        %3957 = vrot.lane.b32.xlu0 %v3955, 32
        %v3958 = vpop.permute.xlu0 %3957
        %v3960 = vadd.f32 %v3950, %v3958
        %v3961 = vtanh.pop %v3960
        %3963 = vrot.lane.b32.xlu0 %v3961, 64
        %v3964 = vpop.permute.xlu0 %3963
        %v3966 = vmul.f32 %v3948, %v3964
        %3968 = vrot.lane.b32.xlu0 %v3966, 32
        %v3969 = vpop.permute.xlu0 %3968
        %v3970 = vsel %vm1483, %v3969, 0
        %3972 = vmatprep.subr.mxu0 0.0
        %3973 = vmatpush1.msra.mxu0 %v1236
        %3974 = vmatprep.subr.mxu0 0.0
        %3975 = vmatpush1.msra.mxu0 %v1237
        %3976 = vmatprep.subr.mxu0 0.0
        %3977 = vmatpush1.msra.mxu0 %v1238
        %3978 = vmatprep.subr.mxu0 0.0
        %3979 = vmatpush1.msra.mxu0 %v1239
        %3980 = vmatprep.subr.mxu0 0.0
        %3981 = vmatpush1.msra.mxu0 0.0
        %3982 = vmatprep.subr.mxu0 0.0
        %3983 = vmatpush1.msra.mxu0 0.0
        %3984 = vmatprep.subr.mxu0 0.0
        %3985 = vmatpush1.msra.mxu0 0.0
        %3986 = vmatprep.subr.mxu0 0.0
        %3987 = vmatpush1.msra.mxu0 0.0
        %3988 = vmatprep.subr.mxu0 0.0
        %3989 = vmatpush1.msra.mxu0 0.0
        %3990 = vmatprep.subr.mxu0 0.0
        %3991 = vmatpush1.msra.mxu0 0.0
        %3992 = vmatprep.subr.mxu0 0.0
        %3993 = vmatpush1.msra.mxu0 0.0
        %3994 = vmatprep.subr.mxu0 0.0
        %3995 = vmatpush1.msra.mxu0 0.0
        %3996 = vmatprep.subr.mxu0 0.0
        %3997 = vmatpush1.msra.mxu0 0.0
        %3998 = vmatprep.subr.mxu0 0.0
        %3999 = vmatpush1.msra.mxu0 0.0
        %4000 = vmatprep.subr.mxu0 0.0
        %4001 = vmatpush1.msra.mxu0 0.0
        %4002 = vmatprep.subr.mxu0 0.0
        %4003 = vmatpush1.msra.mxu0 0.0
        %4004 = vmatprep.subr.mxu0 0.0
        %4005 = vmatpush1.msra.mxu0 0.0
        %4006 = vmatprep.subr.mxu0 0.0
        %4007 = vmatpush1.msra.mxu0 0.0
        %4008 = vmatprep.subr.mxu0 0.0
        %4009 = vmatpush1.msra.mxu0 0.0
        %4010 = vmatprep.subr.mxu0 0.0
        %4011 = vmatpush1.msra.mxu0 0.0
        %4012 = vmatprep.subr.mxu0 0.0
        %4013 = vmatpush1.msra.mxu0 0.0
        %4014 = vmatprep.subr.mxu0 0.0
        %4015 = vmatpush1.msra.mxu0 0.0
        %4016 = vmatprep.subr.mxu0 0.0
        %4017 = vmatpush1.msra.mxu0 0.0
        %4018 = vmatprep.subr.mxu0 0.0
        %4019 = vmatpush1.msra.mxu0 0.0
        %4020 = vmatprep.subr.mxu0 0.0
        %4021 = vmatpush1.msra.mxu0 0.0
        %4022 = vmatprep.subr.mxu0 0.0
        %4023 = vmatpush1.msra.mxu0 0.0
        %4024 = vmatprep.subr.mxu0 0.0
        %4025 = vmatpush1.msra.mxu0 0.0
        %4026 = vmatprep.subr.mxu0 0.0
        %4027 = vmatpush1.msra.mxu0 0.0
        %4028 = vmatprep.subr.mxu0 0.0
        %4029 = vmatpush1.msra.mxu0 0.0
        %4030 = vmatprep.subr.mxu0 0.0
        %4031 = vmatpush1.msra.mxu0 0.0
        %4032 = vmatprep.subr.mxu0 0.0
        %4033 = vmatpush1.msra.mxu0 0.0
        %4034 = vmatprep.subr.mxu0 0.0
        %4035 = vmatpush1.msra.mxu0 0.0
        %4036 = vmatprep.mubr.f32.mxu0 0.0
        %4037 = vmatmul.mubr.f32.gmra.mrb[0].mxu0 %v3970
        %v4038 = vpop.f32.mrb[0].mxu0
        %v4039 = vadd.f32 %v1240, %v4038
        %v4040 = vpop.f32.mrb[0].mxu0
        %4041 = vdwg.mxu0
        %4042 = vmatprep.subr.mxu0 0.0
        %4043 = vmatpush1.msra.mxu0 %v1144
        %4044 = vmatprep.subr.mxu0 0.0
        %4045 = vmatpush1.msra.mxu0 %v1145
        %4046 = vmatprep.subr.mxu0 0.0
        %4047 = vmatpush1.msra.mxu0 %v1146
        %4048 = vmatprep.subr.mxu0 0.0
        %4049 = vmatpush1.msra.mxu0 %v1147
        %4050 = vmatprep.subr.mxu0 0.0
        %4051 = vmatpush1.msra.mxu0 %v1148
        %4052 = vmatprep.subr.mxu0 0.0
        %4053 = vmatpush1.msra.mxu0 %v1149
        %4054 = vmatprep.subr.mxu0 0.0
        %4055 = vmatpush1.msra.mxu0 %v1150
        %4056 = vmatprep.subr.mxu0 0.0
        %4057 = vmatpush1.msra.mxu0 %v1151
        %4058 = vmatprep.subr.mxu0 0.0
        %4059 = vmatpush1.msra.mxu0 0.0
        %4060 = vmatprep.subr.mxu0 0.0
        %4061 = vmatpush1.msra.mxu0 0.0
        %4062 = vmatprep.subr.mxu0 0.0
        %4063 = vmatpush1.msra.mxu0 0.0
        %4064 = vmatprep.subr.mxu0 0.0
        %4065 = vmatpush1.msra.mxu0 0.0
        %4066 = vmatprep.subr.mxu0 0.0
        %4067 = vmatpush1.msra.mxu0 0.0
        %4068 = vmatprep.subr.mxu0 0.0
        %4069 = vmatpush1.msra.mxu0 0.0
        %4070 = vmatprep.subr.mxu0 0.0
        %4071 = vmatpush1.msra.mxu0 0.0
        %4072 = vmatprep.subr.mxu0 0.0
        %4073 = vmatpush1.msra.mxu0 0.0
        %4074 = vmatprep.subr.mxu0 0.0
        %4075 = vmatpush1.msra.mxu0 0.0
        %4076 = vmatprep.subr.mxu0 0.0
        %4077 = vmatpush1.msra.mxu0 0.0
        %4078 = vmatprep.subr.mxu0 0.0
        %4079 = vmatpush1.msra.mxu0 0.0
        %4080 = vmatprep.subr.mxu0 0.0
        %4081 = vmatpush1.msra.mxu0 0.0
        %4082 = vmatprep.subr.mxu0 0.0
        %4083 = vmatpush1.msra.mxu0 0.0
        %4084 = vmatprep.subr.mxu0 0.0
        %4085 = vmatpush1.msra.mxu0 0.0
        %4086 = vmatprep.subr.mxu0 0.0
        %4087 = vmatpush1.msra.mxu0 0.0
        %4088 = vmatprep.subr.mxu0 0.0
        %4089 = vmatpush1.msra.mxu0 0.0
        %4090 = vmatprep.subr.mxu0 0.0
        %4091 = vmatpush1.msra.mxu0 0.0
        %4092 = vmatprep.subr.mxu0 0.0
        %4093 = vmatpush1.msra.mxu0 0.0
        %4094 = vmatprep.subr.mxu0 0.0
        %4095 = vmatpush1.msra.mxu0 0.0
        %4096 = vmatprep.subr.mxu0 0.0
        %4097 = vmatpush1.msra.mxu0 0.0
        %4098 = vmatprep.subr.mxu0 0.0
        %4099 = vmatpush1.msra.mxu0 0.0
        %4100 = vmatprep.subr.mxu0 0.0
        %4101 = vmatpush1.msra.mxu0 0.0
        %4102 = vmatprep.subr.mxu0 0.0
        %4103 = vmatpush1.msra.mxu0 0.0
        %4104 = vmatprep.subr.mxu0 0.0
        %4105 = vmatpush1.msra.mxu0 0.0
        %4106 = vmatprep.mubr.f32.mxu0 0.0
        %4107 = vmatmul.mubr.f32.gmra.mrb[0].mxu0 %v3799
        %v4108 = vpop.f32.mrb[0].mxu0
        %v4109 = vadd.f32 0.0, %v4108
        %v4110 = vpop.f32.mrb[0].mxu0
        %4111 = vdwg.mxu0
        %v4113 = vsel %vm1483, %v4039, 0
        %4115 = vmatprep.subr.mxu0 0.0
        %4116 = vmatpush1.msra.mxu0 %v1140
        %4117 = vmatprep.subr.mxu0 0.0
        %4118 = vmatpush1.msra.mxu0 %v1141
        %4119 = vmatprep.subr.mxu0 0.0
        %4120 = vmatpush1.msra.mxu0 %v1142
        %4121 = vmatprep.subr.mxu0 0.0
        %4122 = vmatpush1.msra.mxu0 %v1143
        %4123 = vmatprep.subr.mxu0 0.0
        %4124 = vmatpush1.msra.mxu0 0.0
        %4125 = vmatprep.subr.mxu0 0.0
        %4126 = vmatpush1.msra.mxu0 0.0
        %4127 = vmatprep.subr.mxu0 0.0
        %4128 = vmatpush1.msra.mxu0 0.0
        %4129 = vmatprep.subr.mxu0 0.0
        %4130 = vmatpush1.msra.mxu0 0.0
        %4131 = vmatprep.subr.mxu0 0.0
        %4132 = vmatpush1.msra.mxu0 0.0
        %4133 = vmatprep.subr.mxu0 0.0
        %4134 = vmatpush1.msra.mxu0 0.0
        %4135 = vmatprep.subr.mxu0 0.0
        %4136 = vmatpush1.msra.mxu0 0.0
        %4137 = vmatprep.subr.mxu0 0.0
        %4138 = vmatpush1.msra.mxu0 0.0
        %4139 = vmatprep.subr.mxu0 0.0
        %4140 = vmatpush1.msra.mxu0 0.0
        %4141 = vmatprep.subr.mxu0 0.0
        %4142 = vmatpush1.msra.mxu0 0.0
        %4143 = vmatprep.subr.mxu0 0.0
        %4144 = vmatpush1.msra.mxu0 0.0
        %4145 = vmatprep.subr.mxu0 0.0
        %4146 = vmatpush1.msra.mxu0 0.0
        %4147 = vmatprep.subr.mxu0 0.0
        %4148 = vmatpush1.msra.mxu0 0.0
        %4149 = vmatprep.subr.mxu0 0.0
        %4150 = vmatpush1.msra.mxu0 0.0
        %4151 = vmatprep.subr.mxu0 0.0
        %4152 = vmatpush1.msra.mxu0 0.0
        %4153 = vmatprep.subr.mxu0 0.0
        %4154 = vmatpush1.msra.mxu0 0.0
        %4155 = vmatprep.subr.mxu0 0.0
        %4156 = vmatpush1.msra.mxu0 0.0
        %4157 = vmatprep.subr.mxu0 0.0
        %4158 = vmatpush1.msra.mxu0 0.0
        %4159 = vmatprep.subr.mxu0 0.0
        %4160 = vmatpush1.msra.mxu0 0.0
        %4161 = vmatprep.subr.mxu0 0.0
        %4162 = vmatpush1.msra.mxu0 0.0
        %4163 = vmatprep.subr.mxu0 0.0
        %4164 = vmatpush1.msra.mxu0 0.0
        %4165 = vmatprep.subr.mxu0 0.0
        %4166 = vmatpush1.msra.mxu0 0.0
        %4167 = vmatprep.subr.mxu0 0.0
        %4168 = vmatpush1.msra.mxu0 0.0
        %4169 = vmatprep.subr.mxu0 0.0
        %4170 = vmatpush1.msra.mxu0 0.0
        %4171 = vmatprep.subr.mxu0 0.0
        %4172 = vmatpush1.msra.mxu0 0.0
        %4173 = vmatprep.subr.mxu0 0.0
        %4174 = vmatpush1.msra.mxu0 0.0
        %4175 = vmatprep.subr.mxu0 0.0
        %4176 = vmatpush1.msra.mxu0 0.0
        %4177 = vmatprep.subr.mxu0 0.0
        %4178 = vmatpush1.msra.mxu0 0.0
        %4179 = vmatprep.mubr.f32.mxu0 0.0
        %4180 = vmatmul.mubr.f32.gmra.mrb[0].mxu0 %v4113
        %v4181 = vpop.f32.mrb[0].mxu0
        %v4182 = vadd.f32 %v4109, %v4181
        %v4183 = vpop.f32.mrb[0].mxu0
        %4184 = vdwg.mxu0
        %4185 = vmatprep.subr.mxu0 0.0
        %4186 = vmatpush1.msra.mxu0 %v1152
        %4187 = vmatprep.subr.mxu0 0.0
        %4188 = vmatpush1.msra.mxu0 %v1153
        %4189 = vmatprep.subr.mxu0 0.0
        %4190 = vmatpush1.msra.mxu0 %v1154
        %4191 = vmatprep.subr.mxu0 0.0
        %4192 = vmatpush1.msra.mxu0 %v1155
        %4193 = vmatprep.subr.mxu0 0.0
        %4194 = vmatpush1.msra.mxu0 %v1156
        %4195 = vmatprep.subr.mxu0 0.0
        %4196 = vmatpush1.msra.mxu0 %v1157
        %4197 = vmatprep.subr.mxu0 0.0
        %4198 = vmatpush1.msra.mxu0 %v1158
        %4199 = vmatprep.subr.mxu0 0.0
        %4200 = vmatpush1.msra.mxu0 %v1159
        %4201 = vmatprep.subr.mxu0 0.0
        %4202 = vmatpush1.msra.mxu0 0.0
        %4203 = vmatprep.subr.mxu0 0.0
        %4204 = vmatpush1.msra.mxu0 0.0
        %4205 = vmatprep.subr.mxu0 0.0
        %4206 = vmatpush1.msra.mxu0 0.0
        %4207 = vmatprep.subr.mxu0 0.0
        %4208 = vmatpush1.msra.mxu0 0.0
        %4209 = vmatprep.subr.mxu0 0.0
        %4210 = vmatpush1.msra.mxu0 0.0
        %4211 = vmatprep.subr.mxu0 0.0
        %4212 = vmatpush1.msra.mxu0 0.0
        %4213 = vmatprep.subr.mxu0 0.0
        %4214 = vmatpush1.msra.mxu0 0.0
        %4215 = vmatprep.subr.mxu0 0.0
        %4216 = vmatpush1.msra.mxu0 0.0
        %4217 = vmatprep.subr.mxu0 0.0
        %4218 = vmatpush1.msra.mxu0 0.0
        %4219 = vmatprep.subr.mxu0 0.0
        %4220 = vmatpush1.msra.mxu0 0.0
        %4221 = vmatprep.subr.mxu0 0.0
        %4222 = vmatpush1.msra.mxu0 0.0
        %4223 = vmatprep.subr.mxu0 0.0
        %4224 = vmatpush1.msra.mxu0 0.0
        %4225 = vmatprep.subr.mxu0 0.0
        %4226 = vmatpush1.msra.mxu0 0.0
        %4227 = vmatprep.subr.mxu0 0.0
        %4228 = vmatpush1.msra.mxu0 0.0
        %4229 = vmatprep.subr.mxu0 0.0
        %4230 = vmatpush1.msra.mxu0 0.0
        %4231 = vmatprep.subr.mxu0 0.0
        %4232 = vmatpush1.msra.mxu0 0.0
        %4233 = vmatprep.subr.mxu0 0.0
        %4234 = vmatpush1.msra.mxu0 0.0
        %4235 = vmatprep.subr.mxu0 0.0
        %4236 = vmatpush1.msra.mxu0 0.0
        %4237 = vmatprep.subr.mxu0 0.0
        %4238 = vmatpush1.msra.mxu0 0.0
        %4239 = vmatprep.subr.mxu0 0.0
        %4240 = vmatpush1.msra.mxu0 0.0
        %4241 = vmatprep.subr.mxu0 0.0
        %4242 = vmatpush1.msra.mxu0 0.0
        %4243 = vmatprep.subr.mxu0 0.0
        %4244 = vmatpush1.msra.mxu0 0.0
        %4245 = vmatprep.subr.mxu0 0.0
        %4246 = vmatpush1.msra.mxu0 0.0
        %4247 = vmatprep.subr.mxu0 0.0
        %4248 = vmatpush1.msra.mxu0 0.0
        %4249 = vmatprep.mubr.f32.mxu0 0.0
        %4250 = vmatmul.mubr.f32.gmra.mrb[0].mxu0 %v3726
        %v4251 = vpop.f32.mrb[0].mxu0
        %v4252 = vadd.f32 0.0, %v4251
        %v4253 = vpop.f32.mrb[0].mxu0
        %4254 = vdwg.mxu0
        %v4255 = vadd.f32 %v4182, %v4252
        %v4256 = vadd.f32 %v4255, %v1160
        %v4257 = vtanh.pop %v4256
        %v4259 = vsel %vm1483, %v4257, 0
        %4261 = vmatprep.subr.mxu0 0.0
        %4262 = vmatpush1.msra.mxu0 %v1169
        %4263 = vmatprep.subr.mxu0 0.0
        %4264 = vmatpush1.msra.mxu0 %v1170
        %4265 = vmatprep.subr.mxu0 0.0
        %4266 = vmatpush1.msra.mxu0 %v1171
        %4267 = vmatprep.subr.mxu0 0.0
        %4268 = vmatpush1.msra.mxu0 %v1172
        %4269 = vmatprep.subr.mxu0 0.0
        %4270 = vmatpush1.msra.mxu0 0.0
        %4271 = vmatprep.subr.mxu0 0.0
        %4272 = vmatpush1.msra.mxu0 0.0
        %4273 = vmatprep.subr.mxu0 0.0
        %4274 = vmatpush1.msra.mxu0 0.0
        %4275 = vmatprep.subr.mxu0 0.0
        %4276 = vmatpush1.msra.mxu0 0.0
        %4277 = vmatprep.subr.mxu0 0.0
        %4278 = vmatpush1.msra.mxu0 0.0
        %4279 = vmatprep.subr.mxu0 0.0
        %4280 = vmatpush1.msra.mxu0 0.0
        %4281 = vmatprep.subr.mxu0 0.0
        %4282 = vmatpush1.msra.mxu0 0.0
        %4283 = vmatprep.subr.mxu0 0.0
        %4284 = vmatpush1.msra.mxu0 0.0
        %4285 = vmatprep.subr.mxu0 0.0
        %4286 = vmatpush1.msra.mxu0 0.0
        %4287 = vmatprep.subr.mxu0 0.0
        %4288 = vmatpush1.msra.mxu0 0.0
        %4289 = vmatprep.subr.mxu0 0.0
        %4290 = vmatpush1.msra.mxu0 0.0
        %4291 = vmatprep.subr.mxu0 0.0
        %4292 = vmatpush1.msra.mxu0 0.0
        %4293 = vmatprep.subr.mxu0 0.0
        %4294 = vmatpush1.msra.mxu0 0.0
        %4295 = vmatprep.subr.mxu0 0.0
        %4296 = vmatpush1.msra.mxu0 0.0
        %4297 = vmatprep.subr.mxu0 0.0
        %4298 = vmatpush1.msra.mxu0 0.0
        %4299 = vmatprep.subr.mxu0 0.0
        %4300 = vmatpush1.msra.mxu0 0.0
        %4301 = vmatprep.subr.mxu0 0.0
        %4302 = vmatpush1.msra.mxu0 0.0
        %4303 = vmatprep.subr.mxu0 0.0
        %4304 = vmatpush1.msra.mxu0 0.0
        %4305 = vmatprep.subr.mxu0 0.0
        %4306 = vmatpush1.msra.mxu0 0.0
        %4307 = vmatprep.subr.mxu0 0.0
        %4308 = vmatpush1.msra.mxu0 0.0
        %4309 = vmatprep.subr.mxu0 0.0
        %4310 = vmatpush1.msra.mxu0 0.0
        %4311 = vmatprep.subr.mxu0 0.0
        %4312 = vmatpush1.msra.mxu0 0.0
        %4313 = vmatprep.subr.mxu0 0.0
        %4314 = vmatpush1.msra.mxu0 0.0
        %4315 = vmatprep.subr.mxu0 0.0
        %4316 = vmatpush1.msra.mxu0 0.0
        %4317 = vmatprep.subr.mxu0 0.0
        %4318 = vmatpush1.msra.mxu0 0.0
        %4319 = vmatprep.subr.mxu0 0.0
        %4320 = vmatpush1.msra.mxu0 0.0
        %4321 = vmatprep.subr.mxu0 0.0
        %4322 = vmatpush1.msra.mxu0 0.0
        %4323 = vmatprep.subr.mxu0 0.0
        %4324 = vmatpush1.msra.mxu0 0.0
        %4325 = vmatprep.mubr.f32.mxu0 0.0
        %4326 = vmatmul.mubr.f32.gmra.mrb[0].mxu0 %v4259
        %v4327 = vpop.f32.mrb[0].mxu0
        %v4328 = vadd.f32 0.0, %v4327
        %v4329 = vpop.f32.mrb[0].mxu0
        %4330 = vdwg.mxu0
        %v4331 = vlaneseq
        %v4332 = vshrl.u32 %v4331, 7
        %v4333 = vsub.s32 0, %v4332
        %v4334 = vrot.slane %v4328, %v4333
        %v4335 = vadd.f32 %v1321, %v4334
        %v4336 = vadd.f32 %v1326, %v4334
        %4339 = vrot.lane.b32.xlu0 %v4335, 96
        %v4340 = vpop.permute.xlu0 %4339
        %4341 = vrot.lane.b32.xlu0 %v4336, 96
        %v4342 = vpop.permute.xlu0 %4341
        %v4345 = vmax.f32 %v4335, %v4340
        %v4346 = vmax.f32 %v4336, %v4342
        %v4348 = vsel %vm1483, %v4345, 0
        %v4351 = vsel %vm1483, %v4346, 0
        %4353 = vmatprep.subr.mxu0 0.0
        %4354 = vmatpush1.msra.mxu0 %v1174
        %4355 = vmatprep.subr.mxu0 0.0
        %4356 = vmatpush1.msra.mxu0 %v1175
        %4357 = vmatprep.subr.mxu0 0.0
        %4358 = vmatpush1.msra.mxu0 %v1176
        %4359 = vmatprep.subr.mxu0 0.0
        %4360 = vmatpush1.msra.mxu0 %v1177
        %4361 = vmatprep.subr.mxu0 0.0
        %4362 = vmatpush1.msra.mxu0 0.0
        %4363 = vmatprep.subr.mxu0 0.0
        %4364 = vmatpush1.msra.mxu0 0.0
        %4365 = vmatprep.subr.mxu0 0.0
        %4366 = vmatpush1.msra.mxu0 0.0
        %4367 = vmatprep.subr.mxu0 0.0
        %4368 = vmatpush1.msra.mxu0 0.0
        %4369 = vmatprep.subr.mxu0 0.0
        %4370 = vmatpush1.msra.mxu0 0.0
        %4371 = vmatprep.subr.mxu0 0.0
        %4372 = vmatpush1.msra.mxu0 0.0
        %4373 = vmatprep.subr.mxu0 0.0
        %4374 = vmatpush1.msra.mxu0 0.0
        %4375 = vmatprep.subr.mxu0 0.0
        %4376 = vmatpush1.msra.mxu0 0.0
        %4377 = vmatprep.subr.mxu0 0.0
        %4378 = vmatpush1.msra.mxu0 0.0
        %4379 = vmatprep.subr.mxu0 0.0
        %4380 = vmatpush1.msra.mxu0 0.0
        %4381 = vmatprep.subr.mxu0 0.0
        %4382 = vmatpush1.msra.mxu0 0.0
        %4383 = vmatprep.subr.mxu0 0.0
        %4384 = vmatpush1.msra.mxu0 0.0
        %4385 = vmatprep.subr.mxu0 0.0
        %4386 = vmatpush1.msra.mxu0 0.0
        %4387 = vmatprep.subr.mxu0 0.0
        %4388 = vmatpush1.msra.mxu0 0.0
        %4389 = vmatprep.subr.mxu0 0.0
        %4390 = vmatpush1.msra.mxu0 0.0
        %4391 = vmatprep.subr.mxu0 0.0
        %4392 = vmatpush1.msra.mxu0 0.0
        %4393 = vmatprep.subr.mxu0 0.0
        %4394 = vmatpush1.msra.mxu0 0.0
        %4395 = vmatprep.subr.mxu0 0.0
        %4396 = vmatpush1.msra.mxu0 0.0
        %4397 = vmatprep.subr.mxu0 0.0
        %4398 = vmatpush1.msra.mxu0 0.0
        %4399 = vmatprep.subr.mxu0 0.0
        %4400 = vmatpush1.msra.mxu0 0.0
        %4401 = vmatprep.subr.mxu0 0.0
        %4402 = vmatpush1.msra.mxu0 0.0
        %4403 = vmatprep.subr.mxu0 0.0
        %4404 = vmatpush1.msra.mxu0 0.0
        %4405 = vmatprep.subr.mxu0 0.0
        %4406 = vmatpush1.msra.mxu0 0.0
        %4407 = vmatprep.subr.mxu0 0.0
        %4408 = vmatpush1.msra.mxu0 0.0
        %4409 = vmatprep.subr.mxu0 0.0
        %4410 = vmatpush1.msra.mxu0 0.0
        %4411 = vmatprep.subr.mxu0 0.0
        %4412 = vmatpush1.msra.mxu0 0.0
        %4413 = vmatprep.subr.mxu0 0.0
        %4414 = vmatpush1.msra.mxu0 0.0
        %4415 = vmatprep.subr.mxu0 0.0
        %4416 = vmatpush1.msra.mxu0 0.0
        %4417 = vmatprep.mubr.f32.mxu0 0.0
        %4418 = vmatmul.mubr.f32.gmra.mrb[0].mxu0 %v4348
        %v4419 = vpop.f32.mrb[0].mxu0
        %v4420 = vadd.f32 %v1723, %v4419
        %v4421 = vpop.f32.mrb[0].mxu0
        %4422 = vmatprep.mubr.f32.mxu0 0.0
        %4423 = vmatmul.mubr.f32.gmra.mrb[0].mxu0 %v4351
        %v4424 = vpop.f32.mrb[0].mxu0
        %v4425 = vadd.f32 %v1723, %v4424
        %v4426 = vpop.f32.mrb[0].mxu0
        %4427 = vdwg.mxu0
        %4430 = vrot.lane.b32.xlu0 %v4420, 96
        %v4431 = vpop.permute.xlu0 %4430
        %4432 = vrot.lane.b32.xlu0 %v4425, 96
        %v4433 = vpop.permute.xlu0 %4432
        %v4436 = vmax.f32 %v4420, %v4431
        %v4437 = vmax.f32 %v4425, %v4433
        %v4439 = vsel %vm1483, %v4436, 0
        %v4442 = vsel %vm1483, %v4437, 0
        %4444 = vmatprep.subr.mxu0 0.0
        %4445 = vmatpush1.msra.mxu0 %v1183
        %4446 = vmatprep.subr.mxu0 0.0
        %4447 = vmatpush1.msra.mxu0 %v1184
        %4448 = vmatprep.subr.mxu0 0.0
        %4449 = vmatpush1.msra.mxu0 %v1185
        %4450 = vmatprep.subr.mxu0 0.0
        %4451 = vmatpush1.msra.mxu0 %v1186
        %4452 = vmatprep.subr.mxu0 0.0
        %4453 = vmatpush1.msra.mxu0 0.0
        %4454 = vmatprep.subr.mxu0 0.0
        %4455 = vmatpush1.msra.mxu0 0.0
        %4456 = vmatprep.subr.mxu0 0.0
        %4457 = vmatpush1.msra.mxu0 0.0
        %4458 = vmatprep.subr.mxu0 0.0
        %4459 = vmatpush1.msra.mxu0 0.0
        %4460 = vmatprep.subr.mxu0 0.0
        %4461 = vmatpush1.msra.mxu0 0.0
        %4462 = vmatprep.subr.mxu0 0.0
        %4463 = vmatpush1.msra.mxu0 0.0
        %4464 = vmatprep.subr.mxu0 0.0
        %4465 = vmatpush1.msra.mxu0 0.0
        %4466 = vmatprep.subr.mxu0 0.0
        %4467 = vmatpush1.msra.mxu0 0.0
        %4468 = vmatprep.subr.mxu0 0.0
        %4469 = vmatpush1.msra.mxu0 0.0
        %4470 = vmatprep.subr.mxu0 0.0
        %4471 = vmatpush1.msra.mxu0 0.0
        %4472 = vmatprep.subr.mxu0 0.0
        %4473 = vmatpush1.msra.mxu0 0.0
        %4474 = vmatprep.subr.mxu0 0.0
        %4475 = vmatpush1.msra.mxu0 0.0
        %4476 = vmatprep.subr.mxu0 0.0
        %4477 = vmatpush1.msra.mxu0 0.0
        %4478 = vmatprep.subr.mxu0 0.0
        %4479 = vmatpush1.msra.mxu0 0.0
        %4480 = vmatprep.subr.mxu0 0.0
        %4481 = vmatpush1.msra.mxu0 0.0
        %4482 = vmatprep.subr.mxu0 0.0
        %4483 = vmatpush1.msra.mxu0 0.0
        %4484 = vmatprep.subr.mxu0 0.0
        %4485 = vmatpush1.msra.mxu0 0.0
        %4486 = vmatprep.subr.mxu0 0.0
        %4487 = vmatpush1.msra.mxu0 0.0
        %4488 = vmatprep.subr.mxu0 0.0
        %4489 = vmatpush1.msra.mxu0 0.0
        %4490 = vmatprep.subr.mxu0 0.0
        %4491 = vmatpush1.msra.mxu0 0.0
        %4492 = vmatprep.subr.mxu0 0.0
        %4493 = vmatpush1.msra.mxu0 0.0
        %4494 = vmatprep.subr.mxu0 0.0
        %4495 = vmatpush1.msra.mxu0 0.0
        %4496 = vmatprep.subr.mxu0 0.0
        %4497 = vmatpush1.msra.mxu0 0.0
        %4498 = vmatprep.subr.mxu0 0.0
        %4499 = vmatpush1.msra.mxu0 0.0
        %4500 = vmatprep.subr.mxu0 0.0
        %4501 = vmatpush1.msra.mxu0 0.0
        %4502 = vmatprep.subr.mxu0 0.0
        %4503 = vmatpush1.msra.mxu0 0.0
        %4504 = vmatprep.subr.mxu0 0.0
        %4505 = vmatpush1.msra.mxu0 0.0
        %4506 = vmatprep.subr.mxu0 0.0
        %4507 = vmatpush1.msra.mxu0 0.0
        %4508 = vmatprep.mubr.f32.mxu0 0.0
        %4509 = vmatmul.mubr.f32.gmra.mrb[0].mxu0 %v4439
        %v4510 = vpop.f32.mrb[0].mxu0
        %v4511 = vadd.f32 0.0, %v4510
        %v4512 = vpop.f32.mrb[0].mxu0
        %4513 = vmatprep.mubr.f32.mxu0 0.0
        %4514 = vmatmul.mubr.f32.gmra.mrb[0].mxu0 %v4442
        %v4515 = vpop.f32.mrb[0].mxu0
        %v4516 = vadd.f32 0.0, %v4515
        %v4517 = vpop.f32.mrb[0].mxu0
        %4518 = vdwg.mxu0
        %4519 = vmatprep.subr.mxu0 0.0
        %4520 = vmatpush1.msra.mxu0 %v1179
        %4521 = vmatprep.subr.mxu0 0.0
        %4522 = vmatpush1.msra.mxu0 %v1180
        %4523 = vmatprep.subr.mxu0 0.0
        %4524 = vmatpush1.msra.mxu0 %v1181
        %4525 = vmatprep.subr.mxu0 0.0
        %4526 = vmatpush1.msra.mxu0 %v1182
        %4527 = vmatprep.subr.mxu0 0.0
        %4528 = vmatpush1.msra.mxu0 0.0
        %4529 = vmatprep.subr.mxu0 0.0
        %4530 = vmatpush1.msra.mxu0 0.0
        %4531 = vmatprep.subr.mxu0 0.0
        %4532 = vmatpush1.msra.mxu0 0.0
        %4533 = vmatprep.subr.mxu0 0.0
        %4534 = vmatpush1.msra.mxu0 0.0
        %4535 = vmatprep.subr.mxu0 0.0
        %4536 = vmatpush1.msra.mxu0 0.0
        %4537 = vmatprep.subr.mxu0 0.0
        %4538 = vmatpush1.msra.mxu0 0.0
        %4539 = vmatprep.subr.mxu0 0.0
        %4540 = vmatpush1.msra.mxu0 0.0
        %4541 = vmatprep.subr.mxu0 0.0
        %4542 = vmatpush1.msra.mxu0 0.0
        %4543 = vmatprep.subr.mxu0 0.0
        %4544 = vmatpush1.msra.mxu0 0.0
        %4545 = vmatprep.subr.mxu0 0.0
        %4546 = vmatpush1.msra.mxu0 0.0
        %4547 = vmatprep.subr.mxu0 0.0
        %4548 = vmatpush1.msra.mxu0 0.0
        %4549 = vmatprep.subr.mxu0 0.0
        %4550 = vmatpush1.msra.mxu0 0.0
        %4551 = vmatprep.subr.mxu0 0.0
        %4552 = vmatpush1.msra.mxu0 0.0
        %4553 = vmatprep.subr.mxu0 0.0
        %4554 = vmatpush1.msra.mxu0 0.0
        %4555 = vmatprep.subr.mxu0 0.0
        %4556 = vmatpush1.msra.mxu0 0.0
        %4557 = vmatprep.subr.mxu0 0.0
        %4558 = vmatpush1.msra.mxu0 0.0
        %4559 = vmatprep.subr.mxu0 0.0
        %4560 = vmatpush1.msra.mxu0 0.0
        %4561 = vmatprep.subr.mxu0 0.0
        %4562 = vmatpush1.msra.mxu0 0.0
        %4563 = vmatprep.subr.mxu0 0.0
        %4564 = vmatpush1.msra.mxu0 0.0
        %4565 = vmatprep.subr.mxu0 0.0
        %4566 = vmatpush1.msra.mxu0 0.0
        %4567 = vmatprep.subr.mxu0 0.0
        %4568 = vmatpush1.msra.mxu0 0.0
        %4569 = vmatprep.subr.mxu0 0.0
        %4570 = vmatpush1.msra.mxu0 0.0
        %4571 = vmatprep.subr.mxu0 0.0
        %4572 = vmatpush1.msra.mxu0 0.0
        %4573 = vmatprep.subr.mxu0 0.0
        %4574 = vmatpush1.msra.mxu0 0.0
        %4575 = vmatprep.subr.mxu0 0.0
        %4576 = vmatpush1.msra.mxu0 0.0
        %4577 = vmatprep.subr.mxu0 0.0
        %4578 = vmatpush1.msra.mxu0 0.0
        %4579 = vmatprep.subr.mxu0 0.0
        %4580 = vmatpush1.msra.mxu0 0.0
        %4581 = vmatprep.subr.mxu0 0.0
        %4582 = vmatpush1.msra.mxu0 0.0
        %4583 = vmatprep.mubr.f32.mxu0 0.0
        %4584 = vmatmul.mubr.f32.gmra.mrb[0].mxu0 %v4348
        %v4585 = vpop.f32.mrb[0].mxu0
        %v4586 = vadd.f32 %v4511, %v4585
        %v4587 = vpop.f32.mrb[0].mxu0
        %4588 = vmatprep.mubr.f32.mxu0 0.0
        %4589 = vmatmul.mubr.f32.gmra.mrb[0].mxu0 %v4351
        %v4590 = vpop.f32.mrb[0].mxu0
        %v4591 = vadd.f32 %v4516, %v4590
        %v4592 = vpop.f32.mrb[0].mxu0
        %4593 = vdwg.mxu0
        %v4594 = vadd.f32 %v4586, %v1976
        %v4595 = vadd.f32 %v4591, %v1976
        %v4596 = vsel %vm1980, %v4594, -inf
        %4597 = vmax.xlane.f32.xlu0 %v4596
        %v4598 = vpop.xlane.xlu0 %4597
        %v4599 = vsel %vm1980, %v4595, -inf
        %4600 = vmax.xlane.f32.xlu0 %v4599
        %v4601 = vpop.xlane.xlu0 %4600
        %4602 = vmatprep.subr.mxu0 0.0
        %4603 = vmatpush1.msra.mxu0 %v1196
        %4604 = vmatprep.subr.mxu0 0.0
        %4605 = vmatpush1.msra.mxu0 %v1197
        %4606 = vmatprep.subr.mxu0 0.0
        %4607 = vmatpush1.msra.mxu0 %v1198
        %4608 = vmatprep.subr.mxu0 0.0
        %4609 = vmatpush1.msra.mxu0 %v1199
        %4610 = vmatprep.subr.mxu0 0.0
        %4611 = vmatpush1.msra.mxu0 0.0
        %4612 = vmatprep.subr.mxu0 0.0
        %4613 = vmatpush1.msra.mxu0 0.0
        %4614 = vmatprep.subr.mxu0 0.0
        %4615 = vmatpush1.msra.mxu0 0.0
        %4616 = vmatprep.subr.mxu0 0.0
        %4617 = vmatpush1.msra.mxu0 0.0
        %4618 = vmatprep.subr.mxu0 0.0
        %4619 = vmatpush1.msra.mxu0 0.0
        %4620 = vmatprep.subr.mxu0 0.0
        %4621 = vmatpush1.msra.mxu0 0.0
        %4622 = vmatprep.subr.mxu0 0.0
        %4623 = vmatpush1.msra.mxu0 0.0
        %4624 = vmatprep.subr.mxu0 0.0
        %4625 = vmatpush1.msra.mxu0 0.0
        %4626 = vmatprep.subr.mxu0 0.0
        %4627 = vmatpush1.msra.mxu0 0.0
        %4628 = vmatprep.subr.mxu0 0.0
        %4629 = vmatpush1.msra.mxu0 0.0
        %4630 = vmatprep.subr.mxu0 0.0
        %4631 = vmatpush1.msra.mxu0 0.0
        %4632 = vmatprep.subr.mxu0 0.0
        %4633 = vmatpush1.msra.mxu0 0.0
        %4634 = vmatprep.subr.mxu0 0.0
        %4635 = vmatpush1.msra.mxu0 0.0
        %4636 = vmatprep.subr.mxu0 0.0
        %4637 = vmatpush1.msra.mxu0 0.0
        %4638 = vmatprep.subr.mxu0 0.0
        %4639 = vmatpush1.msra.mxu0 0.0
        %4640 = vmatprep.subr.mxu0 0.0
        %4641 = vmatpush1.msra.mxu0 0.0
        %4642 = vmatprep.subr.mxu0 0.0
        %4643 = vmatpush1.msra.mxu0 0.0
        %4644 = vmatprep.subr.mxu0 0.0
        %4645 = vmatpush1.msra.mxu0 0.0
        %4646 = vmatprep.subr.mxu0 0.0
        %4647 = vmatpush1.msra.mxu0 0.0
        %4648 = vmatprep.subr.mxu0 0.0
        %4649 = vmatpush1.msra.mxu0 0.0
        %4650 = vmatprep.subr.mxu0 0.0
        %4651 = vmatpush1.msra.mxu0 0.0
        %4652 = vmatprep.subr.mxu0 0.0
        %4653 = vmatpush1.msra.mxu0 0.0
        %4654 = vmatprep.subr.mxu0 0.0
        %4655 = vmatpush1.msra.mxu0 0.0
        %4656 = vmatprep.subr.mxu0 0.0
        %4657 = vmatpush1.msra.mxu0 0.0
        %4658 = vmatprep.subr.mxu0 0.0
        %4659 = vmatpush1.msra.mxu0 0.0
        %4660 = vmatprep.subr.mxu0 0.0
        %4661 = vmatpush1.msra.mxu0 0.0
        %4662 = vmatprep.subr.mxu0 0.0
        %4663 = vmatpush1.msra.mxu0 0.0
        %4664 = vmatprep.subr.mxu0 0.0
        %4665 = vmatpush1.msra.mxu0 0.0
        %4666 = vmatprep.mubr.f32.mxu0 0.0
        %4667 = vmatmul.mubr.f32.gmra.mrb[0].mxu0 %v4259
        %v4668 = vpop.f32.mrb[0].mxu0
        %v4669 = vadd.f32 0.0, %v4668
        %v4670 = vpop.f32.mrb[0].mxu0
        %4671 = vdwg.mxu0
        %v4672 = vlaneseq
        %v4673 = vshrl.u32 %v4672, 7
        %v4674 = vsub.s32 0, %v4673
        %v4675 = vrot.slane %v4669, %v4674
        %v4676 = vadd.f32 %v1402, %v4675
        %v4677 = vadd.f32 %v1407, %v4675
        %4680 = vrot.lane.b32.xlu0 %v4676, 96
        %v4681 = vpop.permute.xlu0 %4680
        %4682 = vrot.lane.b32.xlu0 %v4677, 96
        %v4683 = vpop.permute.xlu0 %4682
        %v4686 = vmax.f32 %v4676, %v4681
        %v4687 = vmax.f32 %v4677, %v4683
        %v4689 = vsel %vm1483, %v4686, 0
        %v4692 = vsel %vm1483, %v4687, 0
        %4694 = vmatprep.subr.mxu0 0.0
        %4695 = vmatpush1.msra.mxu0 %v1201
        %4696 = vmatprep.subr.mxu0 0.0
        %4697 = vmatpush1.msra.mxu0 %v1202
        %4698 = vmatprep.subr.mxu0 0.0
        %4699 = vmatpush1.msra.mxu0 %v1203
        %4700 = vmatprep.subr.mxu0 0.0
        %4701 = vmatpush1.msra.mxu0 %v1204
        %4702 = vmatprep.subr.mxu0 0.0
        %4703 = vmatpush1.msra.mxu0 0.0
        %4704 = vmatprep.subr.mxu0 0.0
        %4705 = vmatpush1.msra.mxu0 0.0
        %4706 = vmatprep.subr.mxu0 0.0
        %4707 = vmatpush1.msra.mxu0 0.0
        %4708 = vmatprep.subr.mxu0 0.0
        %4709 = vmatpush1.msra.mxu0 0.0
        %4710 = vmatprep.subr.mxu0 0.0
        %4711 = vmatpush1.msra.mxu0 0.0
        %4712 = vmatprep.subr.mxu0 0.0
        %4713 = vmatpush1.msra.mxu0 0.0
        %4714 = vmatprep.subr.mxu0 0.0
        %4715 = vmatpush1.msra.mxu0 0.0
        %4716 = vmatprep.subr.mxu0 0.0
        %4717 = vmatpush1.msra.mxu0 0.0
        %4718 = vmatprep.subr.mxu0 0.0
        %4719 = vmatpush1.msra.mxu0 0.0
        %4720 = vmatprep.subr.mxu0 0.0
        %4721 = vmatpush1.msra.mxu0 0.0
        %4722 = vmatprep.subr.mxu0 0.0
        %4723 = vmatpush1.msra.mxu0 0.0
        %4724 = vmatprep.subr.mxu0 0.0
        %4725 = vmatpush1.msra.mxu0 0.0
        %4726 = vmatprep.subr.mxu0 0.0
        %4727 = vmatpush1.msra.mxu0 0.0
        %4728 = vmatprep.subr.mxu0 0.0
        %4729 = vmatpush1.msra.mxu0 0.0
        %4730 = vmatprep.subr.mxu0 0.0
        %4731 = vmatpush1.msra.mxu0 0.0
        %4732 = vmatprep.subr.mxu0 0.0
        %4733 = vmatpush1.msra.mxu0 0.0
        %4734 = vmatprep.subr.mxu0 0.0
        %4735 = vmatpush1.msra.mxu0 0.0
        %4736 = vmatprep.subr.mxu0 0.0
        %4737 = vmatpush1.msra.mxu0 0.0
        %4738 = vmatprep.subr.mxu0 0.0
        %4739 = vmatpush1.msra.mxu0 0.0
        %4740 = vmatprep.subr.mxu0 0.0
        %4741 = vmatpush1.msra.mxu0 0.0
        %4742 = vmatprep.subr.mxu0 0.0
        %4743 = vmatpush1.msra.mxu0 0.0
        %4744 = vmatprep.subr.mxu0 0.0
        %4745 = vmatpush1.msra.mxu0 0.0
        %4746 = vmatprep.subr.mxu0 0.0
        %4747 = vmatpush1.msra.mxu0 0.0
        %4748 = vmatprep.subr.mxu0 0.0
        %4749 = vmatpush1.msra.mxu0 0.0
        %4750 = vmatprep.subr.mxu0 0.0
        %4751 = vmatpush1.msra.mxu0 0.0
        %4752 = vmatprep.subr.mxu0 0.0
        %4753 = vmatpush1.msra.mxu0 0.0
        %4754 = vmatprep.subr.mxu0 0.0
        %4755 = vmatpush1.msra.mxu0 0.0
        %4756 = vmatprep.subr.mxu0 0.0
        %4757 = vmatpush1.msra.mxu0 0.0
        %4758 = vmatprep.mubr.f32.mxu0 0.0
        %4759 = vmatmul.mubr.f32.gmra.mrb[0].mxu0 %v4689
        %v4760 = vpop.f32.mrb[0].mxu0
        %v4761 = vadd.f32 %v2077, %v4760
        %v4762 = vpop.f32.mrb[0].mxu0
        %4763 = vmatprep.mubr.f32.mxu0 0.0
        %4764 = vmatmul.mubr.f32.gmra.mrb[0].mxu0 %v4692
        %v4765 = vpop.f32.mrb[0].mxu0
        %v4766 = vadd.f32 %v2077, %v4765
        %v4767 = vpop.f32.mrb[0].mxu0
        %4768 = vdwg.mxu0
        %4771 = vrot.lane.b32.xlu0 %v4761, 96
        %v4772 = vpop.permute.xlu0 %4771
        %4773 = vrot.lane.b32.xlu0 %v4766, 96
        %v4774 = vpop.permute.xlu0 %4773
        %v4777 = vmax.f32 %v4761, %v4772
        %v4778 = vmax.f32 %v4766, %v4774
        %v4780 = vsel %vm1483, %v4777, 0
        %v4783 = vsel %vm1483, %v4778, 0
        %4785 = vmatprep.subr.mxu0 0.0
        %4786 = vmatpush1.msra.mxu0 %v1210
        %4787 = vmatprep.subr.mxu0 0.0
        %4788 = vmatpush1.msra.mxu0 %v1211
        %4789 = vmatprep.subr.mxu0 0.0
        %4790 = vmatpush1.msra.mxu0 %v1212
        %4791 = vmatprep.subr.mxu0 0.0
        %4792 = vmatpush1.msra.mxu0 %v1213
        %4793 = vmatprep.subr.mxu0 0.0
        %4794 = vmatpush1.msra.mxu0 0.0
        %4795 = vmatprep.subr.mxu0 0.0
        %4796 = vmatpush1.msra.mxu0 0.0
        %4797 = vmatprep.subr.mxu0 0.0
        %4798 = vmatpush1.msra.mxu0 0.0
        %4799 = vmatprep.subr.mxu0 0.0
        %4800 = vmatpush1.msra.mxu0 0.0
        %4801 = vmatprep.subr.mxu0 0.0
        %4802 = vmatpush1.msra.mxu0 0.0
        %4803 = vmatprep.subr.mxu0 0.0
        %4804 = vmatpush1.msra.mxu0 0.0
        %4805 = vmatprep.subr.mxu0 0.0
        %4806 = vmatpush1.msra.mxu0 0.0
        %4807 = vmatprep.subr.mxu0 0.0
        %4808 = vmatpush1.msra.mxu0 0.0
        %4809 = vmatprep.subr.mxu0 0.0
        %4810 = vmatpush1.msra.mxu0 0.0
        %4811 = vmatprep.subr.mxu0 0.0
        %4812 = vmatpush1.msra.mxu0 0.0
        %4813 = vmatprep.subr.mxu0 0.0
        %4814 = vmatpush1.msra.mxu0 0.0
        %4815 = vmatprep.subr.mxu0 0.0
        %4816 = vmatpush1.msra.mxu0 0.0
        %4817 = vmatprep.subr.mxu0 0.0
        %4818 = vmatpush1.msra.mxu0 0.0
        %4819 = vmatprep.subr.mxu0 0.0
        %4820 = vmatpush1.msra.mxu0 0.0
        %4821 = vmatprep.subr.mxu0 0.0
        %4822 = vmatpush1.msra.mxu0 0.0
        %4823 = vmatprep.subr.mxu0 0.0
        %4824 = vmatpush1.msra.mxu0 0.0
        %4825 = vmatprep.subr.mxu0 0.0
        %4826 = vmatpush1.msra.mxu0 0.0
        %4827 = vmatprep.subr.mxu0 0.0
        %4828 = vmatpush1.msra.mxu0 0.0
        %4829 = vmatprep.subr.mxu0 0.0
        %4830 = vmatpush1.msra.mxu0 0.0
        %4831 = vmatprep.subr.mxu0 0.0
        %4832 = vmatpush1.msra.mxu0 0.0
        %4833 = vmatprep.subr.mxu0 0.0
        %4834 = vmatpush1.msra.mxu0 0.0
        %4835 = vmatprep.subr.mxu0 0.0
        %4836 = vmatpush1.msra.mxu0 0.0
        %4837 = vmatprep.subr.mxu0 0.0
        %4838 = vmatpush1.msra.mxu0 0.0
        %4839 = vmatprep.subr.mxu0 0.0
        %4840 = vmatpush1.msra.mxu0 0.0
        %4841 = vmatprep.subr.mxu0 0.0
        %4842 = vmatpush1.msra.mxu0 0.0
        %4843 = vmatprep.subr.mxu0 0.0
        %4844 = vmatpush1.msra.mxu0 0.0
        %4845 = vmatprep.subr.mxu0 0.0
        %4846 = vmatpush1.msra.mxu0 0.0
        %4847 = vmatprep.subr.mxu0 0.0
        %4848 = vmatpush1.msra.mxu0 0.0
        %4849 = vmatprep.mubr.f32.mxu0 0.0
        %4850 = vmatmul.mubr.f32.gmra.mrb[0].mxu0 %v4780
        %v4851 = vpop.f32.mrb[0].mxu0
        %v4852 = vadd.f32 0.0, %v4851
        %v4853 = vpop.f32.mrb[0].mxu0
        %4854 = vmatprep.mubr.f32.mxu0 0.0
        %4855 = vmatmul.mubr.f32.gmra.mrb[0].mxu0 %v4783
        %v4856 = vpop.f32.mrb[0].mxu0
        %v4857 = vadd.f32 0.0, %v4856
        %v4858 = vpop.f32.mrb[0].mxu0
        %4859 = vdwg.mxu0
        %4860 = vmatprep.subr.mxu0 0.0
        %4861 = vmatpush1.msra.mxu0 %v1206
        %4862 = vmatprep.subr.mxu0 0.0
        %4863 = vmatpush1.msra.mxu0 %v1207
        %4864 = vmatprep.subr.mxu0 0.0
        %4865 = vmatpush1.msra.mxu0 %v1208
        %4866 = vmatprep.subr.mxu0 0.0
        %4867 = vmatpush1.msra.mxu0 %v1209
        %4868 = vmatprep.subr.mxu0 0.0
        %4869 = vmatpush1.msra.mxu0 0.0
        %4870 = vmatprep.subr.mxu0 0.0
        %4871 = vmatpush1.msra.mxu0 0.0
        %4872 = vmatprep.subr.mxu0 0.0
        %4873 = vmatpush1.msra.mxu0 0.0
        %4874 = vmatprep.subr.mxu0 0.0
        %4875 = vmatpush1.msra.mxu0 0.0
        %4876 = vmatprep.subr.mxu0 0.0
        %4877 = vmatpush1.msra.mxu0 0.0
        %4878 = vmatprep.subr.mxu0 0.0
        %4879 = vmatpush1.msra.mxu0 0.0
        %4880 = vmatprep.subr.mxu0 0.0
        %4881 = vmatpush1.msra.mxu0 0.0
        %4882 = vmatprep.subr.mxu0 0.0
        %4883 = vmatpush1.msra.mxu0 0.0
        %4884 = vmatprep.subr.mxu0 0.0
        %4885 = vmatpush1.msra.mxu0 0.0
        %4886 = vmatprep.subr.mxu0 0.0
        %4887 = vmatpush1.msra.mxu0 0.0
        %4888 = vmatprep.subr.mxu0 0.0
        %4889 = vmatpush1.msra.mxu0 0.0
        %4890 = vmatprep.subr.mxu0 0.0
        %4891 = vmatpush1.msra.mxu0 0.0
        %4892 = vmatprep.subr.mxu0 0.0
        %4893 = vmatpush1.msra.mxu0 0.0
        %4894 = vmatprep.subr.mxu0 0.0
        %4895 = vmatpush1.msra.mxu0 0.0
        %4896 = vmatprep.subr.mxu0 0.0
        %4897 = vmatpush1.msra.mxu0 0.0
        %4898 = vmatprep.subr.mxu0 0.0
        %4899 = vmatpush1.msra.mxu0 0.0
        %4900 = vmatprep.subr.mxu0 0.0
        %4901 = vmatpush1.msra.mxu0 0.0
        %4902 = vmatprep.subr.mxu0 0.0
        %4903 = vmatpush1.msra.mxu0 0.0
        %4904 = vmatprep.subr.mxu0 0.0
        %4905 = vmatpush1.msra.mxu0 0.0
        %4906 = vmatprep.subr.mxu0 0.0
        %4907 = vmatpush1.msra.mxu0 0.0
        %4908 = vmatprep.subr.mxu0 0.0
        %4909 = vmatpush1.msra.mxu0 0.0
        %4910 = vmatprep.subr.mxu0 0.0
        %4911 = vmatpush1.msra.mxu0 0.0
        %4912 = vmatprep.subr.mxu0 0.0
        %4913 = vmatpush1.msra.mxu0 0.0
        %4914 = vmatprep.subr.mxu0 0.0
        %4915 = vmatpush1.msra.mxu0 0.0
        %4916 = vmatprep.subr.mxu0 0.0
        %4917 = vmatpush1.msra.mxu0 0.0
        %4918 = vmatprep.subr.mxu0 0.0
        %4919 = vmatpush1.msra.mxu0 0.0
        %4920 = vmatprep.subr.mxu0 0.0
        %4921 = vmatpush1.msra.mxu0 0.0
        %4922 = vmatprep.subr.mxu0 0.0
        %4923 = vmatpush1.msra.mxu0 0.0
        %4924 = vmatprep.mubr.f32.mxu0 0.0
        %4925 = vmatmul.mubr.f32.gmra.mrb[0].mxu0 %v4689
        %v4926 = vpop.f32.mrb[0].mxu0
        %v4927 = vadd.f32 %v4852, %v4926
        %v4928 = vpop.f32.mrb[0].mxu0
        %4929 = vmatprep.mubr.f32.mxu0 0.0
        %4930 = vmatmul.mubr.f32.gmra.mrb[0].mxu0 %v4692
        %v4931 = vpop.f32.mrb[0].mxu0
        %v4932 = vadd.f32 %v4857, %v4931
        %v4933 = vpop.f32.mrb[0].mxu0
        %4934 = vdwg.mxu0
        %v4935 = vadd.f32 %v4927, %v2330
        %v4936 = vadd.f32 %v4932, %v2330
        %v4937 = vsel %vm1980, %v4935, -inf
        %4938 = vmax.xlane.f32.xlu0 %v4937
        %v4939 = vpop.xlane.xlu0 %4938
        %v4940 = vsel %vm1980, %v4936, -inf
        %4941 = vmax.xlane.f32.xlu0 %v4940
        %v4942 = vpop.xlane.xlu0 %4941
        %s4943 = scalar_lea.vmem %s1126, 32
        %4944 = vst.msk [vmem:[%s4943] sm:$0xff] %vm2340, %v4598
        %4945 = vst.msk [vmem:[%s4943 + $0x8] sm:$0xff] %vm2340, %v4601
        %s4946 = scalar_lea.vmem %s1131, 32
        %4947 = vst.msk [vmem:[%s4946] sm:$0xff] %vm2340, %v4939
        %4948 = vst.msk [vmem:[%s4946 + $0x8] sm:$0xff] %vm2340, %v4942
        %v4949 = vmax.f32 %v4598, %v4601
        %v4950 = vrot.slane %v4949, 4
        %v4951 = vmax.f32 %v4949, %v4950
        %v4952 = vrot.slane %v4951, 2
        %v4953 = vmax.f32 %v4951, %v4952
        %v4954 = vrot.slane %v4953, 1
        %v4955 = vmax.f32 %v4953, %v4954
        %vm4956 = vcmp.eq.f32.partialorder %v4598, %v4955
        %vm4957 = vcmp.eq.f32.partialorder %v4601, %v4955
        %v4958 = vsel %vm4956, %v1411, 16
        %v4959 = vsel %vm4957, %v1412, 16
        %vm4960 = vcmp.lt.s32.totalorder %v4958, %v4959
        %v4961 = vsel %vm4960, %v4958, %v4959
        %v4962 = vrot.slane %v4961, 4
        %vm4963 = vcmp.lt.s32.totalorder %v4961, %v4962
        %v4964 = vsel %vm4963, %v4961, %v4962
        %v4965 = vrot.slane %v4964, 2
        %vm4966 = vcmp.lt.s32.totalorder %v4964, %v4965
        %v4967 = vsel %vm4966, %v4964, %v4965
        %v4968 = vrot.slane %v4967, 1
        %vm4969 = vcmp.lt.s32.totalorder %v4967, %v4968
        %v4970 = vsel %vm4969, %v4967, %v4968
        %vm4971 = vcmp.eq.s32.totalorder %v1411, %v4970
        %vm4972 = vcmp.eq.s32.totalorder %v1412, %v4970
        %v4973 = vsel %vm4971, 1, 0
        %v4974 = vsel %vm4972, 1, 0
        %vm4975 = vcmp.eq.s32.totalorder %v4973, 1
        %vm4976 = vcmp.eq.s32.totalorder %v4974, 1
        %v4977 = vsel %vm4975, %v1138, 0.0
        %v4978 = vsel %vm4976, %v1139, 0.0
        %v4979 = vsel %vm1247, %v4977, 0.0
        %v4980 = vsel %vm1247, %v4978, 0.0
        %v4981 = vadd.f32 %v4979, %v4980
        %v4982 = vrot.slane %v4981, 4
        %v4983 = vadd.f32 %v4981, %v4982
        %v4984 = vrot.slane %v4983, 2
        %v4985 = vadd.f32 %v4983, %v4984
        %v4986 = vrot.slane %v4985, 1
        %v4987 = vadd.f32 %v4985, %v4986
        %v4988 = vmax.f32 %v4939, %v4942
        %v4989 = vrot.slane %v4988, 4
        %v4990 = vmax.f32 %v4988, %v4989
        %v4991 = vrot.slane %v4990, 2
        %v4992 = vmax.f32 %v4990, %v4991
        %v4993 = vrot.slane %v4992, 1
        %v4994 = vmax.f32 %v4992, %v4993
        %vm4995 = vcmp.eq.f32.partialorder %v4939, %v4994
        %vm4996 = vcmp.eq.f32.partialorder %v4942, %v4994
        %v4997 = vsel %vm4995, %v1411, 16
        %v4998 = vsel %vm4996, %v1412, 16
        %vm4999 = vcmp.lt.s32.totalorder %v4997, %v4998
        %v5000 = vsel %vm4999, %v4997, %v4998
        %v5001 = vrot.slane %v5000, 4
        %vm5002 = vcmp.lt.s32.totalorder %v5000, %v5001
        %v5003 = vsel %vm5002, %v5000, %v5001
        %v5004 = vrot.slane %v5003, 2
        %vm5005 = vcmp.lt.s32.totalorder %v5003, %v5004
        %v5006 = vsel %vm5005, %v5003, %v5004
        %v5007 = vrot.slane %v5006, 1
        %vm5008 = vcmp.lt.s32.totalorder %v5006, %v5007
        %v5009 = vsel %vm5008, %v5006, %v5007
        %vm5010 = vcmp.eq.s32.totalorder %v1411, %v5009
        %vm5011 = vcmp.eq.s32.totalorder %v1412, %v5009
        %v5012 = vsel %vm5010, 1, 0
        %v5013 = vsel %vm5011, 1, 0
        %vm5014 = vcmp.eq.s32.totalorder %v5012, 1
        %vm5015 = vcmp.eq.s32.totalorder %v5013, 1
        %v5016 = vsel %vm5014, %v1138, 0.0
        %v5017 = vsel %vm5015, %v1139, 0.0
        %v5018 = vsel %vm1247, %v5016, 0.0
        %v5019 = vsel %vm1247, %v5017, 0.0
        %v5020 = vadd.f32 %v5018, %v5019
        %v5021 = vrot.slane %v5020, 4
        %v5022 = vadd.f32 %v5020, %v5021
        %v5023 = vrot.slane %v5022, 2
        %v5024 = vadd.f32 %v5022, %v5023
        %v5025 = vrot.slane %v5024, 1
        %v5026 = vadd.f32 %v5024, %v5025
        %v5028 = vsel %vm1247, %v5026, 0
        %5030 = vmatprep.subr.mxu0 0.0
        %5031 = vmatpush1.msra.mxu0 %v1223
        %5032 = vmatprep.subr.mxu0 0.0
        %5033 = vmatpush1.msra.mxu0 %v1224
        %5034 = vmatprep.subr.mxu0 0.0
        %5035 = vmatpush1.msra.mxu0 %v1225
        %5036 = vmatprep.subr.mxu0 0.0
        %5037 = vmatpush1.msra.mxu0 %v1226
        %5038 = vmatprep.subr.mxu0 0.0
        %5039 = vmatpush1.msra.mxu0 %v1227
        %5040 = vmatprep.subr.mxu0 0.0
        %5041 = vmatpush1.msra.mxu0 %v1228
        %5042 = vmatprep.subr.mxu0 0.0
        %5043 = vmatpush1.msra.mxu0 %v1229
        %5044 = vmatprep.subr.mxu0 0.0
        %5045 = vmatpush1.msra.mxu0 %v1230
        %5046 = vmatprep.subr.mxu0 0.0
        %5047 = vmatpush1.msra.mxu0 0.0
        %5048 = vmatprep.subr.mxu0 0.0
        %5049 = vmatpush1.msra.mxu0 0.0
        %5050 = vmatprep.subr.mxu0 0.0
        %5051 = vmatpush1.msra.mxu0 0.0
        %5052 = vmatprep.subr.mxu0 0.0
        %5053 = vmatpush1.msra.mxu0 0.0
        %5054 = vmatprep.subr.mxu0 0.0
        %5055 = vmatpush1.msra.mxu0 0.0
        %5056 = vmatprep.subr.mxu0 0.0
        %5057 = vmatpush1.msra.mxu0 0.0
        %5058 = vmatprep.subr.mxu0 0.0
        %5059 = vmatpush1.msra.mxu0 0.0
        %5060 = vmatprep.subr.mxu0 0.0
        %5061 = vmatpush1.msra.mxu0 0.0
        %5062 = vmatprep.subr.mxu0 0.0
        %5063 = vmatpush1.msra.mxu0 0.0
        %5064 = vmatprep.subr.mxu0 0.0
        %5065 = vmatpush1.msra.mxu0 0.0
        %5066 = vmatprep.subr.mxu0 0.0
        %5067 = vmatpush1.msra.mxu0 0.0
        %5068 = vmatprep.subr.mxu0 0.0
        %5069 = vmatpush1.msra.mxu0 0.0
        %5070 = vmatprep.subr.mxu0 0.0
        %5071 = vmatpush1.msra.mxu0 0.0
        %5072 = vmatprep.subr.mxu0 0.0
        %5073 = vmatpush1.msra.mxu0 0.0
        %5074 = vmatprep.subr.mxu0 0.0
        %5075 = vmatpush1.msra.mxu0 0.0
        %5076 = vmatprep.subr.mxu0 0.0
        %5077 = vmatpush1.msra.mxu0 0.0
        %5078 = vmatprep.subr.mxu0 0.0
        %5079 = vmatpush1.msra.mxu0 0.0
        %5080 = vmatprep.subr.mxu0 0.0
        %5081 = vmatpush1.msra.mxu0 0.0
        %5082 = vmatprep.subr.mxu0 0.0
        %5083 = vmatpush1.msra.mxu0 0.0
        %5084 = vmatprep.subr.mxu0 0.0
        %5085 = vmatpush1.msra.mxu0 0.0
        %5086 = vmatprep.subr.mxu0 0.0
        %5087 = vmatpush1.msra.mxu0 0.0
        %5088 = vmatprep.subr.mxu0 0.0
        %5089 = vmatpush1.msra.mxu0 0.0
        %5090 = vmatprep.subr.mxu0 0.0
        %5091 = vmatpush1.msra.mxu0 0.0
        %5092 = vmatprep.subr.mxu0 0.0
        %5093 = vmatpush1.msra.mxu0 0.0
        %5094 = vmatprep.mubr.f32.mxu0 0.0
        %5095 = vmatmul.mubr.f32.gmra.mrb[0].mxu0 %v5028
        %v5096 = vpop.f32.mrb[0].mxu0
        %v5097 = vadd.f32 0.0, %v5096
        %v5098 = vpop.f32.mrb[0].mxu0
        %5099 = vdwg.mxu0
        %v5101 = vsel %vm1247, %v4987, 0
        %5103 = vmatprep.subr.mxu0 0.0
        %5104 = vmatpush1.msra.mxu0 %v1215
        %5105 = vmatprep.subr.mxu0 0.0
        %5106 = vmatpush1.msra.mxu0 %v1216
        %5107 = vmatprep.subr.mxu0 0.0
        %5108 = vmatpush1.msra.mxu0 %v1217
        %5109 = vmatprep.subr.mxu0 0.0
        %5110 = vmatpush1.msra.mxu0 %v1218
        %5111 = vmatprep.subr.mxu0 0.0
        %5112 = vmatpush1.msra.mxu0 %v1219
        %5113 = vmatprep.subr.mxu0 0.0
        %5114 = vmatpush1.msra.mxu0 %v1220
        %5115 = vmatprep.subr.mxu0 0.0
        %5116 = vmatpush1.msra.mxu0 %v1221
        %5117 = vmatprep.subr.mxu0 0.0
        %5118 = vmatpush1.msra.mxu0 %v1222
        %5119 = vmatprep.subr.mxu0 0.0
        %5120 = vmatpush1.msra.mxu0 0.0
        %5121 = vmatprep.subr.mxu0 0.0
        %5122 = vmatpush1.msra.mxu0 0.0
        %5123 = vmatprep.subr.mxu0 0.0
        %5124 = vmatpush1.msra.mxu0 0.0
        %5125 = vmatprep.subr.mxu0 0.0
        %5126 = vmatpush1.msra.mxu0 0.0
        %5127 = vmatprep.subr.mxu0 0.0
        %5128 = vmatpush1.msra.mxu0 0.0
        %5129 = vmatprep.subr.mxu0 0.0
        %5130 = vmatpush1.msra.mxu0 0.0
        %5131 = vmatprep.subr.mxu0 0.0
        %5132 = vmatpush1.msra.mxu0 0.0
        %5133 = vmatprep.subr.mxu0 0.0
        %5134 = vmatpush1.msra.mxu0 0.0
        %5135 = vmatprep.subr.mxu0 0.0
        %5136 = vmatpush1.msra.mxu0 0.0
        %5137 = vmatprep.subr.mxu0 0.0
        %5138 = vmatpush1.msra.mxu0 0.0
        %5139 = vmatprep.subr.mxu0 0.0
        %5140 = vmatpush1.msra.mxu0 0.0
        %5141 = vmatprep.subr.mxu0 0.0
        %5142 = vmatpush1.msra.mxu0 0.0
        %5143 = vmatprep.subr.mxu0 0.0
        %5144 = vmatpush1.msra.mxu0 0.0
        %5145 = vmatprep.subr.mxu0 0.0
        %5146 = vmatpush1.msra.mxu0 0.0
        %5147 = vmatprep.subr.mxu0 0.0
        %5148 = vmatpush1.msra.mxu0 0.0
        %5149 = vmatprep.subr.mxu0 0.0
        %5150 = vmatpush1.msra.mxu0 0.0
        %5151 = vmatprep.subr.mxu0 0.0
        %5152 = vmatpush1.msra.mxu0 0.0
        %5153 = vmatprep.subr.mxu0 0.0
        %5154 = vmatpush1.msra.mxu0 0.0
        %5155 = vmatprep.subr.mxu0 0.0
        %5156 = vmatpush1.msra.mxu0 0.0
        %5157 = vmatprep.subr.mxu0 0.0
        %5158 = vmatpush1.msra.mxu0 0.0
        %5159 = vmatprep.subr.mxu0 0.0
        %5160 = vmatpush1.msra.mxu0 0.0
        %5161 = vmatprep.subr.mxu0 0.0
        %5162 = vmatpush1.msra.mxu0 0.0
        %5163 = vmatprep.subr.mxu0 0.0
        %5164 = vmatpush1.msra.mxu0 0.0
        %5165 = vmatprep.subr.mxu0 0.0
        %5166 = vmatpush1.msra.mxu0 0.0
        %5167 = vmatprep.mubr.f32.mxu0 0.0
        %5168 = vmatmul.mubr.f32.gmra.mrb[0].mxu0 %v5101
        %v5169 = vpop.f32.mrb[0].mxu0
        %v5170 = vadd.f32 %v5097, %v5169
        %v5171 = vpop.f32.mrb[0].mxu0
        %5172 = vdwg.mxu0
        %5173 = vmatprep.subr.mxu0 0.0
        %5174 = vmatpush1.msra.mxu0 %v1231
        %5175 = vmatprep.subr.mxu0 0.0
        %5176 = vmatpush1.msra.mxu0 %v1232
        %5177 = vmatprep.subr.mxu0 0.0
        %5178 = vmatpush1.msra.mxu0 %v1233
        %5179 = vmatprep.subr.mxu0 0.0
        %5180 = vmatpush1.msra.mxu0 %v1234
        %5181 = vmatprep.subr.mxu0 0.0
        %5182 = vmatpush1.msra.mxu0 0.0
        %5183 = vmatprep.subr.mxu0 0.0
        %5184 = vmatpush1.msra.mxu0 0.0
        %5185 = vmatprep.subr.mxu0 0.0
        %5186 = vmatpush1.msra.mxu0 0.0
        %5187 = vmatprep.subr.mxu0 0.0
        %5188 = vmatpush1.msra.mxu0 0.0
        %5189 = vmatprep.subr.mxu0 0.0
        %5190 = vmatpush1.msra.mxu0 0.0
        %5191 = vmatprep.subr.mxu0 0.0
        %5192 = vmatpush1.msra.mxu0 0.0
        %5193 = vmatprep.subr.mxu0 0.0
        %5194 = vmatpush1.msra.mxu0 0.0
        %5195 = vmatprep.subr.mxu0 0.0
        %5196 = vmatpush1.msra.mxu0 0.0
        %5197 = vmatprep.subr.mxu0 0.0
        %5198 = vmatpush1.msra.mxu0 0.0
        %5199 = vmatprep.subr.mxu0 0.0
        %5200 = vmatpush1.msra.mxu0 0.0
        %5201 = vmatprep.subr.mxu0 0.0
        %5202 = vmatpush1.msra.mxu0 0.0
        %5203 = vmatprep.subr.mxu0 0.0
        %5204 = vmatpush1.msra.mxu0 0.0
        %5205 = vmatprep.subr.mxu0 0.0
        %5206 = vmatpush1.msra.mxu0 0.0
        %5207 = vmatprep.subr.mxu0 0.0
        %5208 = vmatpush1.msra.mxu0 0.0
        %5209 = vmatprep.subr.mxu0 0.0
        %5210 = vmatpush1.msra.mxu0 0.0
        %5211 = vmatprep.subr.mxu0 0.0
        %5212 = vmatpush1.msra.mxu0 0.0
        %5213 = vmatprep.subr.mxu0 0.0
        %5214 = vmatpush1.msra.mxu0 0.0
        %5215 = vmatprep.subr.mxu0 0.0
        %5216 = vmatpush1.msra.mxu0 0.0
        %5217 = vmatprep.subr.mxu0 0.0
        %5218 = vmatpush1.msra.mxu0 0.0
        %5219 = vmatprep.subr.mxu0 0.0
        %5220 = vmatpush1.msra.mxu0 0.0
        %5221 = vmatprep.subr.mxu0 0.0
        %5222 = vmatpush1.msra.mxu0 0.0
        %5223 = vmatprep.subr.mxu0 0.0
        %5224 = vmatpush1.msra.mxu0 0.0
        %5225 = vmatprep.subr.mxu0 0.0
        %5226 = vmatpush1.msra.mxu0 0.0
        %5227 = vmatprep.subr.mxu0 0.0
        %5228 = vmatpush1.msra.mxu0 0.0
        %5229 = vmatprep.subr.mxu0 0.0
        %5230 = vmatpush1.msra.mxu0 0.0
        %5231 = vmatprep.subr.mxu0 0.0
        %5232 = vmatpush1.msra.mxu0 0.0
        %5233 = vmatprep.subr.mxu0 0.0
        %5234 = vmatpush1.msra.mxu0 0.0
        %5235 = vmatprep.subr.mxu0 0.0
        %5236 = vmatpush1.msra.mxu0 0.0
        %5237 = vmatprep.mubr.f32.mxu0 0.0
        %5238 = vmatmul.mubr.f32.gmra.mrb[0].mxu0 %v4113
        %v5239 = vpop.f32.mrb[0].mxu0
        %v5240 = vadd.f32 0.0, %v5239
        %v5241 = vpop.f32.mrb[0].mxu0
        %5242 = vdwg.mxu0
        %v5243 = vadd.f32 %v5170, %v5240
        %v5244 = vadd.f32 %v5243, %v1235
        %v5245 = vxor.u32 %v5244, 2147483648
        %v5246 = vmul.f32 %v5245, 1.442695
        %v5247 = vpow.pop %v5246
        %v5248 = vadd.f32 %v5247, 1.0
        %v5249 = vrcp.pop %v5248
        %v5250 = vmul.f32 1.0, %v5249
        %v5251 = vtanh.pop %v5244
        %v5252 = vmul.f32 %v5250, %v3960
        %5254 = vrot.lane.b32.xlu0 %v5251, 64
        %v5255 = vpop.permute.xlu0 %5254
        %v5257 = vmul.f32 %v5250, %v5255
        %5259 = vrot.lane.b32.xlu0 %v5257, 32
        %v5260 = vpop.permute.xlu0 %5259
        %v5262 = vadd.f32 %v5252, %v5260
        %v5263 = vtanh.pop %v5262
        %5265 = vrot.lane.b32.xlu0 %v5263, 64
        %v5266 = vpop.permute.xlu0 %5265
        %v5268 = vmul.f32 %v5250, %v5266
        %5270 = vrot.lane.b32.xlu0 %v5268, 32
        %v5271 = vpop.permute.xlu0 %5270
        %v5272 = vsel %vm1483, %v5271, 0
        %5274 = vmatprep.subr.mxu0 0.0
        %5275 = vmatpush1.msra.mxu0 %v1236
        %5276 = vmatprep.subr.mxu0 0.0
        %5277 = vmatpush1.msra.mxu0 %v1237
        %5278 = vmatprep.subr.mxu0 0.0
        %5279 = vmatpush1.msra.mxu0 %v1238
        %5280 = vmatprep.subr.mxu0 0.0
        %5281 = vmatpush1.msra.mxu0 %v1239
        %5282 = vmatprep.subr.mxu0 0.0
        %5283 = vmatpush1.msra.mxu0 0.0
        %5284 = vmatprep.subr.mxu0 0.0
        %5285 = vmatpush1.msra.mxu0 0.0
        %5286 = vmatprep.subr.mxu0 0.0
        %5287 = vmatpush1.msra.mxu0 0.0
        %5288 = vmatprep.subr.mxu0 0.0
        %5289 = vmatpush1.msra.mxu0 0.0
        %5290 = vmatprep.subr.mxu0 0.0
        %5291 = vmatpush1.msra.mxu0 0.0
        %5292 = vmatprep.subr.mxu0 0.0
        %5293 = vmatpush1.msra.mxu0 0.0
        %5294 = vmatprep.subr.mxu0 0.0
        %5295 = vmatpush1.msra.mxu0 0.0
        %5296 = vmatprep.subr.mxu0 0.0
        %5297 = vmatpush1.msra.mxu0 0.0
        %5298 = vmatprep.subr.mxu0 0.0
        %5299 = vmatpush1.msra.mxu0 0.0
        %5300 = vmatprep.subr.mxu0 0.0
        %5301 = vmatpush1.msra.mxu0 0.0
        %5302 = vmatprep.subr.mxu0 0.0
        %5303 = vmatpush1.msra.mxu0 0.0
        %5304 = vmatprep.subr.mxu0 0.0
        %5305 = vmatpush1.msra.mxu0 0.0
        %5306 = vmatprep.subr.mxu0 0.0
        %5307 = vmatpush1.msra.mxu0 0.0
        %5308 = vmatprep.subr.mxu0 0.0
        %5309 = vmatpush1.msra.mxu0 0.0
        %5310 = vmatprep.subr.mxu0 0.0
        %5311 = vmatpush1.msra.mxu0 0.0
        %5312 = vmatprep.subr.mxu0 0.0
        %5313 = vmatpush1.msra.mxu0 0.0
        %5314 = vmatprep.subr.mxu0 0.0
        %5315 = vmatpush1.msra.mxu0 0.0
        %5316 = vmatprep.subr.mxu0 0.0
        %5317 = vmatpush1.msra.mxu0 0.0
        %5318 = vmatprep.subr.mxu0 0.0
        %5319 = vmatpush1.msra.mxu0 0.0
        %5320 = vmatprep.subr.mxu0 0.0
        %5321 = vmatpush1.msra.mxu0 0.0
        %5322 = vmatprep.subr.mxu0 0.0
        %5323 = vmatpush1.msra.mxu0 0.0
        %5324 = vmatprep.subr.mxu0 0.0
        %5325 = vmatpush1.msra.mxu0 0.0
        %5326 = vmatprep.subr.mxu0 0.0
        %5327 = vmatpush1.msra.mxu0 0.0
        %5328 = vmatprep.subr.mxu0 0.0
        %5329 = vmatpush1.msra.mxu0 0.0
        %5330 = vmatprep.subr.mxu0 0.0
        %5331 = vmatpush1.msra.mxu0 0.0
        %5332 = vmatprep.subr.mxu0 0.0
        %5333 = vmatpush1.msra.mxu0 0.0
        %5334 = vmatprep.subr.mxu0 0.0
        %5335 = vmatpush1.msra.mxu0 0.0
        %5336 = vmatprep.subr.mxu0 0.0
        %5337 = vmatpush1.msra.mxu0 0.0
        %5338 = vmatprep.mubr.f32.mxu0 0.0
        %5339 = vmatmul.mubr.f32.gmra.mrb[0].mxu0 %v5272
        %v5340 = vpop.f32.mrb[0].mxu0
        %v5341 = vadd.f32 %v1240, %v5340
        %v5342 = vpop.f32.mrb[0].mxu0
        %5343 = vdwg.mxu0
        %5344 = vmatprep.subr.mxu0 0.0
        %5345 = vmatpush1.msra.mxu0 %v1144
        %5346 = vmatprep.subr.mxu0 0.0
        %5347 = vmatpush1.msra.mxu0 %v1145
        %5348 = vmatprep.subr.mxu0 0.0
        %5349 = vmatpush1.msra.mxu0 %v1146
        %5350 = vmatprep.subr.mxu0 0.0
        %5351 = vmatpush1.msra.mxu0 %v1147
        %5352 = vmatprep.subr.mxu0 0.0
        %5353 = vmatpush1.msra.mxu0 %v1148
        %5354 = vmatprep.subr.mxu0 0.0
        %5355 = vmatpush1.msra.mxu0 %v1149
        %5356 = vmatprep.subr.mxu0 0.0
        %5357 = vmatpush1.msra.mxu0 %v1150
        %5358 = vmatprep.subr.mxu0 0.0
        %5359 = vmatpush1.msra.mxu0 %v1151
        %5360 = vmatprep.subr.mxu0 0.0
        %5361 = vmatpush1.msra.mxu0 0.0
        %5362 = vmatprep.subr.mxu0 0.0
        %5363 = vmatpush1.msra.mxu0 0.0
        %5364 = vmatprep.subr.mxu0 0.0
        %5365 = vmatpush1.msra.mxu0 0.0
        %5366 = vmatprep.subr.mxu0 0.0
        %5367 = vmatpush1.msra.mxu0 0.0
        %5368 = vmatprep.subr.mxu0 0.0
        %5369 = vmatpush1.msra.mxu0 0.0
        %5370 = vmatprep.subr.mxu0 0.0
        %5371 = vmatpush1.msra.mxu0 0.0
        %5372 = vmatprep.subr.mxu0 0.0
        %5373 = vmatpush1.msra.mxu0 0.0
        %5374 = vmatprep.subr.mxu0 0.0
        %5375 = vmatpush1.msra.mxu0 0.0
        %5376 = vmatprep.subr.mxu0 0.0
        %5377 = vmatpush1.msra.mxu0 0.0
        %5378 = vmatprep.subr.mxu0 0.0
        %5379 = vmatpush1.msra.mxu0 0.0
        %5380 = vmatprep.subr.mxu0 0.0
        %5381 = vmatpush1.msra.mxu0 0.0
        %5382 = vmatprep.subr.mxu0 0.0
        %5383 = vmatpush1.msra.mxu0 0.0
        %5384 = vmatprep.subr.mxu0 0.0
        %5385 = vmatpush1.msra.mxu0 0.0
        %5386 = vmatprep.subr.mxu0 0.0
        %5387 = vmatpush1.msra.mxu0 0.0
        %5388 = vmatprep.subr.mxu0 0.0
        %5389 = vmatpush1.msra.mxu0 0.0
        %5390 = vmatprep.subr.mxu0 0.0
        %5391 = vmatpush1.msra.mxu0 0.0
        %5392 = vmatprep.subr.mxu0 0.0
        %5393 = vmatpush1.msra.mxu0 0.0
        %5394 = vmatprep.subr.mxu0 0.0
        %5395 = vmatpush1.msra.mxu0 0.0
        %5396 = vmatprep.subr.mxu0 0.0
        %5397 = vmatpush1.msra.mxu0 0.0
        %5398 = vmatprep.subr.mxu0 0.0
        %5399 = vmatpush1.msra.mxu0 0.0
        %5400 = vmatprep.subr.mxu0 0.0
        %5401 = vmatpush1.msra.mxu0 0.0
        %5402 = vmatprep.subr.mxu0 0.0
        %5403 = vmatpush1.msra.mxu0 0.0
        %5404 = vmatprep.subr.mxu0 0.0
        %5405 = vmatpush1.msra.mxu0 0.0
        %5406 = vmatprep.subr.mxu0 0.0
        %5407 = vmatpush1.msra.mxu0 0.0
        %5408 = vmatprep.mubr.f32.mxu0 0.0
        %5409 = vmatmul.mubr.f32.gmra.mrb[0].mxu0 %v5101
        %v5410 = vpop.f32.mrb[0].mxu0
        %v5411 = vadd.f32 0.0, %v5410
        %v5412 = vpop.f32.mrb[0].mxu0
        %5413 = vdwg.mxu0
        %v5415 = vsel %vm1483, %v5341, 0
        %5417 = vmatprep.subr.mxu0 0.0
        %5418 = vmatpush1.msra.mxu0 %v1140
        %5419 = vmatprep.subr.mxu0 0.0
        %5420 = vmatpush1.msra.mxu0 %v1141
        %5421 = vmatprep.subr.mxu0 0.0
        %5422 = vmatpush1.msra.mxu0 %v1142
        %5423 = vmatprep.subr.mxu0 0.0
        %5424 = vmatpush1.msra.mxu0 %v1143
        %5425 = vmatprep.subr.mxu0 0.0
        %5426 = vmatpush1.msra.mxu0 0.0
        %5427 = vmatprep.subr.mxu0 0.0
        %5428 = vmatpush1.msra.mxu0 0.0
        %5429 = vmatprep.subr.mxu0 0.0
        %5430 = vmatpush1.msra.mxu0 0.0
        %5431 = vmatprep.subr.mxu0 0.0
        %5432 = vmatpush1.msra.mxu0 0.0
        %5433 = vmatprep.subr.mxu0 0.0
        %5434 = vmatpush1.msra.mxu0 0.0
        %5435 = vmatprep.subr.mxu0 0.0
        %5436 = vmatpush1.msra.mxu0 0.0
        %5437 = vmatprep.subr.mxu0 0.0
        %5438 = vmatpush1.msra.mxu0 0.0
        %5439 = vmatprep.subr.mxu0 0.0
        %5440 = vmatpush1.msra.mxu0 0.0
        %5441 = vmatprep.subr.mxu0 0.0
        %5442 = vmatpush1.msra.mxu0 0.0
        %5443 = vmatprep.subr.mxu0 0.0
        %5444 = vmatpush1.msra.mxu0 0.0
        %5445 = vmatprep.subr.mxu0 0.0
        %5446 = vmatpush1.msra.mxu0 0.0
        %5447 = vmatprep.subr.mxu0 0.0
        %5448 = vmatpush1.msra.mxu0 0.0
        %5449 = vmatprep.subr.mxu0 0.0
        %5450 = vmatpush1.msra.mxu0 0.0
        %5451 = vmatprep.subr.mxu0 0.0
        %5452 = vmatpush1.msra.mxu0 0.0
        %5453 = vmatprep.subr.mxu0 0.0
        %5454 = vmatpush1.msra.mxu0 0.0
        %5455 = vmatprep.subr.mxu0 0.0
        %5456 = vmatpush1.msra.mxu0 0.0
        %5457 = vmatprep.subr.mxu0 0.0
        %5458 = vmatpush1.msra.mxu0 0.0
        %5459 = vmatprep.subr.mxu0 0.0
        %5460 = vmatpush1.msra.mxu0 0.0
        %5461 = vmatprep.subr.mxu0 0.0
        %5462 = vmatpush1.msra.mxu0 0.0
        %5463 = vmatprep.subr.mxu0 0.0
        %5464 = vmatpush1.msra.mxu0 0.0
        %5465 = vmatprep.subr.mxu0 0.0
        %5466 = vmatpush1.msra.mxu0 0.0
        %5467 = vmatprep.subr.mxu0 0.0
        %5468 = vmatpush1.msra.mxu0 0.0
        %5469 = vmatprep.subr.mxu0 0.0
        %5470 = vmatpush1.msra.mxu0 0.0
        %5471 = vmatprep.subr.mxu0 0.0
        %5472 = vmatpush1.msra.mxu0 0.0
        %5473 = vmatprep.subr.mxu0 0.0
        %5474 = vmatpush1.msra.mxu0 0.0
        %5475 = vmatprep.subr.mxu0 0.0
        %5476 = vmatpush1.msra.mxu0 0.0
        %5477 = vmatprep.subr.mxu0 0.0
        %5478 = vmatpush1.msra.mxu0 0.0
        %5479 = vmatprep.subr.mxu0 0.0
        %5480 = vmatpush1.msra.mxu0 0.0
        %5481 = vmatprep.mubr.f32.mxu0 0.0
        %5482 = vmatmul.mubr.f32.gmra.mrb[0].mxu0 %v5415
        %v5483 = vpop.f32.mrb[0].mxu0
        %v5484 = vadd.f32 %v5411, %v5483
        %v5485 = vpop.f32.mrb[0].mxu0
        %5486 = vdwg.mxu0
        %5487 = vmatprep.subr.mxu0 0.0
        %5488 = vmatpush1.msra.mxu0 %v1152
        %5489 = vmatprep.subr.mxu0 0.0
        %5490 = vmatpush1.msra.mxu0 %v1153
        %5491 = vmatprep.subr.mxu0 0.0
        %5492 = vmatpush1.msra.mxu0 %v1154
        %5493 = vmatprep.subr.mxu0 0.0
        %5494 = vmatpush1.msra.mxu0 %v1155
        %5495 = vmatprep.subr.mxu0 0.0
        %5496 = vmatpush1.msra.mxu0 %v1156
        %5497 = vmatprep.subr.mxu0 0.0
        %5498 = vmatpush1.msra.mxu0 %v1157
        %5499 = vmatprep.subr.mxu0 0.0
        %5500 = vmatpush1.msra.mxu0 %v1158
        %5501 = vmatprep.subr.mxu0 0.0
        %5502 = vmatpush1.msra.mxu0 %v1159
        %5503 = vmatprep.subr.mxu0 0.0
        %5504 = vmatpush1.msra.mxu0 0.0
        %5505 = vmatprep.subr.mxu0 0.0
        %5506 = vmatpush1.msra.mxu0 0.0
        %5507 = vmatprep.subr.mxu0 0.0
        %5508 = vmatpush1.msra.mxu0 0.0
        %5509 = vmatprep.subr.mxu0 0.0
        %5510 = vmatpush1.msra.mxu0 0.0
        %5511 = vmatprep.subr.mxu0 0.0
        %5512 = vmatpush1.msra.mxu0 0.0
        %5513 = vmatprep.subr.mxu0 0.0
        %5514 = vmatpush1.msra.mxu0 0.0
        %5515 = vmatprep.subr.mxu0 0.0
        %5516 = vmatpush1.msra.mxu0 0.0
        %5517 = vmatprep.subr.mxu0 0.0
        %5518 = vmatpush1.msra.mxu0 0.0
        %5519 = vmatprep.subr.mxu0 0.0
        %5520 = vmatpush1.msra.mxu0 0.0
        %5521 = vmatprep.subr.mxu0 0.0
        %5522 = vmatpush1.msra.mxu0 0.0
        %5523 = vmatprep.subr.mxu0 0.0
        %5524 = vmatpush1.msra.mxu0 0.0
        %5525 = vmatprep.subr.mxu0 0.0
        %5526 = vmatpush1.msra.mxu0 0.0
        %5527 = vmatprep.subr.mxu0 0.0
        %5528 = vmatpush1.msra.mxu0 0.0
        %5529 = vmatprep.subr.mxu0 0.0
        %5530 = vmatpush1.msra.mxu0 0.0
        %5531 = vmatprep.subr.mxu0 0.0
        %5532 = vmatpush1.msra.mxu0 0.0
        %5533 = vmatprep.subr.mxu0 0.0
        %5534 = vmatpush1.msra.mxu0 0.0
        %5535 = vmatprep.subr.mxu0 0.0
        %5536 = vmatpush1.msra.mxu0 0.0
        %5537 = vmatprep.subr.mxu0 0.0
        %5538 = vmatpush1.msra.mxu0 0.0
        %5539 = vmatprep.subr.mxu0 0.0
        %5540 = vmatpush1.msra.mxu0 0.0
        %5541 = vmatprep.subr.mxu0 0.0
        %5542 = vmatpush1.msra.mxu0 0.0
        %5543 = vmatprep.subr.mxu0 0.0
        %5544 = vmatpush1.msra.mxu0 0.0
        %5545 = vmatprep.subr.mxu0 0.0
        %5546 = vmatpush1.msra.mxu0 0.0
        %5547 = vmatprep.subr.mxu0 0.0
        %5548 = vmatpush1.msra.mxu0 0.0
        %5549 = vmatprep.subr.mxu0 0.0
        %5550 = vmatpush1.msra.mxu0 0.0
        %5551 = vmatprep.mubr.f32.mxu0 0.0
        %5552 = vmatmul.mubr.f32.gmra.mrb[0].mxu0 %v5028
        %v5553 = vpop.f32.mrb[0].mxu0
        %v5554 = vadd.f32 0.0, %v5553
        %v5555 = vpop.f32.mrb[0].mxu0
        %5556 = vdwg.mxu0
        %v5557 = vadd.f32 %v5484, %v5554
        %v5558 = vadd.f32 %v5557, %v1160
        %v5559 = vtanh.pop %v5558
        %v5561 = vsel %vm1483, %v5559, 0
        %5563 = vmatprep.subr.mxu0 0.0
        %5564 = vmatpush1.msra.mxu0 %v1169
        %5565 = vmatprep.subr.mxu0 0.0
        %5566 = vmatpush1.msra.mxu0 %v1170
        %5567 = vmatprep.subr.mxu0 0.0
        %5568 = vmatpush1.msra.mxu0 %v1171
        %5569 = vmatprep.subr.mxu0 0.0
        %5570 = vmatpush1.msra.mxu0 %v1172
        %5571 = vmatprep.subr.mxu0 0.0
        %5572 = vmatpush1.msra.mxu0 0.0
        %5573 = vmatprep.subr.mxu0 0.0
        %5574 = vmatpush1.msra.mxu0 0.0
        %5575 = vmatprep.subr.mxu0 0.0
        %5576 = vmatpush1.msra.mxu0 0.0
        %5577 = vmatprep.subr.mxu0 0.0
        %5578 = vmatpush1.msra.mxu0 0.0
        %5579 = vmatprep.subr.mxu0 0.0
        %5580 = vmatpush1.msra.mxu0 0.0
        %5581 = vmatprep.subr.mxu0 0.0
        %5582 = vmatpush1.msra.mxu0 0.0
        %5583 = vmatprep.subr.mxu0 0.0
        %5584 = vmatpush1.msra.mxu0 0.0
        %5585 = vmatprep.subr.mxu0 0.0
        %5586 = vmatpush1.msra.mxu0 0.0
        %5587 = vmatprep.subr.mxu0 0.0
        %5588 = vmatpush1.msra.mxu0 0.0
        %5589 = vmatprep.subr.mxu0 0.0
        %5590 = vmatpush1.msra.mxu0 0.0
        %5591 = vmatprep.subr.mxu0 0.0
        %5592 = vmatpush1.msra.mxu0 0.0
        %5593 = vmatprep.subr.mxu0 0.0
        %5594 = vmatpush1.msra.mxu0 0.0
        %5595 = vmatprep.subr.mxu0 0.0
        %5596 = vmatpush1.msra.mxu0 0.0
        %5597 = vmatprep.subr.mxu0 0.0
        %5598 = vmatpush1.msra.mxu0 0.0
        %5599 = vmatprep.subr.mxu0 0.0
        %5600 = vmatpush1.msra.mxu0 0.0
        %5601 = vmatprep.subr.mxu0 0.0
        %5602 = vmatpush1.msra.mxu0 0.0
        %5603 = vmatprep.subr.mxu0 0.0
        %5604 = vmatpush1.msra.mxu0 0.0
        %5605 = vmatprep.subr.mxu0 0.0
        %5606 = vmatpush1.msra.mxu0 0.0
        %5607 = vmatprep.subr.mxu0 0.0
        %5608 = vmatpush1.msra.mxu0 0.0
        %5609 = vmatprep.subr.mxu0 0.0
        %5610 = vmatpush1.msra.mxu0 0.0
        %5611 = vmatprep.subr.mxu0 0.0
        %5612 = vmatpush1.msra.mxu0 0.0
        %5613 = vmatprep.subr.mxu0 0.0
        %5614 = vmatpush1.msra.mxu0 0.0
        %5615 = vmatprep.subr.mxu0 0.0
        %5616 = vmatpush1.msra.mxu0 0.0
        %5617 = vmatprep.subr.mxu0 0.0
        %5618 = vmatpush1.msra.mxu0 0.0
        %5619 = vmatprep.subr.mxu0 0.0
        %5620 = vmatpush1.msra.mxu0 0.0
        %5621 = vmatprep.subr.mxu0 0.0
        %5622 = vmatpush1.msra.mxu0 0.0
        %5623 = vmatprep.subr.mxu0 0.0
        %5624 = vmatpush1.msra.mxu0 0.0
        %5625 = vmatprep.subr.mxu0 0.0
        %5626 = vmatpush1.msra.mxu0 0.0
        %5627 = vmatprep.mubr.f32.mxu0 0.0
        %5628 = vmatmul.mubr.f32.gmra.mrb[0].mxu0 %v5561
        %v5629 = vpop.f32.mrb[0].mxu0
        %v5630 = vadd.f32 0.0, %v5629
        %v5631 = vpop.f32.mrb[0].mxu0
        %5632 = vdwg.mxu0
        %v5633 = vlaneseq
        %v5634 = vshrl.u32 %v5633, 7
        %v5635 = vsub.s32 0, %v5634
        %v5636 = vrot.slane %v5630, %v5635
        %v5637 = vadd.f32 %v1321, %v5636
        %v5638 = vadd.f32 %v1326, %v5636
        %5641 = vrot.lane.b32.xlu0 %v5637, 96
        %v5642 = vpop.permute.xlu0 %5641
        %5643 = vrot.lane.b32.xlu0 %v5638, 96
        %v5644 = vpop.permute.xlu0 %5643
        %v5647 = vmax.f32 %v5637, %v5642
        %v5648 = vmax.f32 %v5638, %v5644
        %v5650 = vsel %vm1483, %v5647, 0
        %v5653 = vsel %vm1483, %v5648, 0
        %5655 = vmatprep.subr.mxu0 0.0
        %5656 = vmatpush1.msra.mxu0 %v1174
        %5657 = vmatprep.subr.mxu0 0.0
        %5658 = vmatpush1.msra.mxu0 %v1175
        %5659 = vmatprep.subr.mxu0 0.0
        %5660 = vmatpush1.msra.mxu0 %v1176
        %5661 = vmatprep.subr.mxu0 0.0
        %5662 = vmatpush1.msra.mxu0 %v1177
        %5663 = vmatprep.subr.mxu0 0.0
        %5664 = vmatpush1.msra.mxu0 0.0
        %5665 = vmatprep.subr.mxu0 0.0
        %5666 = vmatpush1.msra.mxu0 0.0
        %5667 = vmatprep.subr.mxu0 0.0
        %5668 = vmatpush1.msra.mxu0 0.0
        %5669 = vmatprep.subr.mxu0 0.0
        %5670 = vmatpush1.msra.mxu0 0.0
        %5671 = vmatprep.subr.mxu0 0.0
        %5672 = vmatpush1.msra.mxu0 0.0
        %5673 = vmatprep.subr.mxu0 0.0
        %5674 = vmatpush1.msra.mxu0 0.0
        %5675 = vmatprep.subr.mxu0 0.0
        %5676 = vmatpush1.msra.mxu0 0.0
        %5677 = vmatprep.subr.mxu0 0.0
        %5678 = vmatpush1.msra.mxu0 0.0
        %5679 = vmatprep.subr.mxu0 0.0
        %5680 = vmatpush1.msra.mxu0 0.0
        %5681 = vmatprep.subr.mxu0 0.0
        %5682 = vmatpush1.msra.mxu0 0.0
        %5683 = vmatprep.subr.mxu0 0.0
        %5684 = vmatpush1.msra.mxu0 0.0
        %5685 = vmatprep.subr.mxu0 0.0
        %5686 = vmatpush1.msra.mxu0 0.0
        %5687 = vmatprep.subr.mxu0 0.0
        %5688 = vmatpush1.msra.mxu0 0.0
        %5689 = vmatprep.subr.mxu0 0.0
        %5690 = vmatpush1.msra.mxu0 0.0
        %5691 = vmatprep.subr.mxu0 0.0
        %5692 = vmatpush1.msra.mxu0 0.0
        %5693 = vmatprep.subr.mxu0 0.0
        %5694 = vmatpush1.msra.mxu0 0.0
        %5695 = vmatprep.subr.mxu0 0.0
        %5696 = vmatpush1.msra.mxu0 0.0
        %5697 = vmatprep.subr.mxu0 0.0
        %5698 = vmatpush1.msra.mxu0 0.0
        %5699 = vmatprep.subr.mxu0 0.0
        %5700 = vmatpush1.msra.mxu0 0.0
        %5701 = vmatprep.subr.mxu0 0.0
        %5702 = vmatpush1.msra.mxu0 0.0
        %5703 = vmatprep.subr.mxu0 0.0
        %5704 = vmatpush1.msra.mxu0 0.0
        %5705 = vmatprep.subr.mxu0 0.0
        %5706 = vmatpush1.msra.mxu0 0.0
        %5707 = vmatprep.subr.mxu0 0.0
        %5708 = vmatpush1.msra.mxu0 0.0
        %5709 = vmatprep.subr.mxu0 0.0
        %5710 = vmatpush1.msra.mxu0 0.0
        %5711 = vmatprep.subr.mxu0 0.0
        %5712 = vmatpush1.msra.mxu0 0.0
        %5713 = vmatprep.subr.mxu0 0.0
        %5714 = vmatpush1.msra.mxu0 0.0
        %5715 = vmatprep.subr.mxu0 0.0
        %5716 = vmatpush1.msra.mxu0 0.0
        %5717 = vmatprep.subr.mxu0 0.0
        %5718 = vmatpush1.msra.mxu0 0.0
        %5719 = vmatprep.mubr.f32.mxu0 0.0
        %5720 = vmatmul.mubr.f32.gmra.mrb[0].mxu0 %v5650
        %v5721 = vpop.f32.mrb[0].mxu0
        %v5722 = vadd.f32 %v1723, %v5721
        %v5723 = vpop.f32.mrb[0].mxu0
        %5724 = vmatprep.mubr.f32.mxu0 0.0
        %5725 = vmatmul.mubr.f32.gmra.mrb[0].mxu0 %v5653
        %v5726 = vpop.f32.mrb[0].mxu0
        %v5727 = vadd.f32 %v1723, %v5726
        %v5728 = vpop.f32.mrb[0].mxu0
        %5729 = vdwg.mxu0
        %5732 = vrot.lane.b32.xlu0 %v5722, 96
        %v5733 = vpop.permute.xlu0 %5732
        %5734 = vrot.lane.b32.xlu0 %v5727, 96
        %v5735 = vpop.permute.xlu0 %5734
        %v5738 = vmax.f32 %v5722, %v5733
        %v5739 = vmax.f32 %v5727, %v5735
        %v5741 = vsel %vm1483, %v5738, 0
        %v5744 = vsel %vm1483, %v5739, 0
        %5746 = vmatprep.subr.mxu0 0.0
        %5747 = vmatpush1.msra.mxu0 %v1183
        %5748 = vmatprep.subr.mxu0 0.0
        %5749 = vmatpush1.msra.mxu0 %v1184
        %5750 = vmatprep.subr.mxu0 0.0
        %5751 = vmatpush1.msra.mxu0 %v1185
        %5752 = vmatprep.subr.mxu0 0.0
        %5753 = vmatpush1.msra.mxu0 %v1186
        %5754 = vmatprep.subr.mxu0 0.0
        %5755 = vmatpush1.msra.mxu0 0.0
        %5756 = vmatprep.subr.mxu0 0.0
        %5757 = vmatpush1.msra.mxu0 0.0
        %5758 = vmatprep.subr.mxu0 0.0
        %5759 = vmatpush1.msra.mxu0 0.0
        %5760 = vmatprep.subr.mxu0 0.0
        %5761 = vmatpush1.msra.mxu0 0.0
        %5762 = vmatprep.subr.mxu0 0.0
        %5763 = vmatpush1.msra.mxu0 0.0
        %5764 = vmatprep.subr.mxu0 0.0
        %5765 = vmatpush1.msra.mxu0 0.0
        %5766 = vmatprep.subr.mxu0 0.0
        %5767 = vmatpush1.msra.mxu0 0.0
        %5768 = vmatprep.subr.mxu0 0.0
        %5769 = vmatpush1.msra.mxu0 0.0
        %5770 = vmatprep.subr.mxu0 0.0
        %5771 = vmatpush1.msra.mxu0 0.0
        %5772 = vmatprep.subr.mxu0 0.0
        %5773 = vmatpush1.msra.mxu0 0.0
        %5774 = vmatprep.subr.mxu0 0.0
        %5775 = vmatpush1.msra.mxu0 0.0
        %5776 = vmatprep.subr.mxu0 0.0
        %5777 = vmatpush1.msra.mxu0 0.0
        %5778 = vmatprep.subr.mxu0 0.0
        %5779 = vmatpush1.msra.mxu0 0.0
        %5780 = vmatprep.subr.mxu0 0.0
        %5781 = vmatpush1.msra.mxu0 0.0
        %5782 = vmatprep.subr.mxu0 0.0
        %5783 = vmatpush1.msra.mxu0 0.0
        %5784 = vmatprep.subr.mxu0 0.0
        %5785 = vmatpush1.msra.mxu0 0.0
        %5786 = vmatprep.subr.mxu0 0.0
        %5787 = vmatpush1.msra.mxu0 0.0
        %5788 = vmatprep.subr.mxu0 0.0
        %5789 = vmatpush1.msra.mxu0 0.0
        %5790 = vmatprep.subr.mxu0 0.0
        %5791 = vmatpush1.msra.mxu0 0.0
        %5792 = vmatprep.subr.mxu0 0.0
        %5793 = vmatpush1.msra.mxu0 0.0
        %5794 = vmatprep.subr.mxu0 0.0
        %5795 = vmatpush1.msra.mxu0 0.0
        %5796 = vmatprep.subr.mxu0 0.0
        %5797 = vmatpush1.msra.mxu0 0.0
        %5798 = vmatprep.subr.mxu0 0.0
        %5799 = vmatpush1.msra.mxu0 0.0
        %5800 = vmatprep.subr.mxu0 0.0
        %5801 = vmatpush1.msra.mxu0 0.0
        %5802 = vmatprep.subr.mxu0 0.0
        %5803 = vmatpush1.msra.mxu0 0.0
        %5804 = vmatprep.subr.mxu0 0.0
        %5805 = vmatpush1.msra.mxu0 0.0
        %5806 = vmatprep.subr.mxu0 0.0
        %5807 = vmatpush1.msra.mxu0 0.0
        %5808 = vmatprep.subr.mxu0 0.0
        %5809 = vmatpush1.msra.mxu0 0.0
        %5810 = vmatprep.mubr.f32.mxu0 0.0
        %5811 = vmatmul.mubr.f32.gmra.mrb[0].mxu0 %v5741
        %v5812 = vpop.f32.mrb[0].mxu0
        %v5813 = vadd.f32 0.0, %v5812
        %v5814 = vpop.f32.mrb[0].mxu0
        %5815 = vmatprep.mubr.f32.mxu0 0.0
        %5816 = vmatmul.mubr.f32.gmra.mrb[0].mxu0 %v5744
        %v5817 = vpop.f32.mrb[0].mxu0
        %v5818 = vadd.f32 0.0, %v5817
        %v5819 = vpop.f32.mrb[0].mxu0
        %5820 = vdwg.mxu0
        %5821 = vmatprep.subr.mxu0 0.0
        %5822 = vmatpush1.msra.mxu0 %v1179
        %5823 = vmatprep.subr.mxu0 0.0
        %5824 = vmatpush1.msra.mxu0 %v1180
        %5825 = vmatprep.subr.mxu0 0.0
        %5826 = vmatpush1.msra.mxu0 %v1181
        %5827 = vmatprep.subr.mxu0 0.0
        %5828 = vmatpush1.msra.mxu0 %v1182
        %5829 = vmatprep.subr.mxu0 0.0
        %5830 = vmatpush1.msra.mxu0 0.0
        %5831 = vmatprep.subr.mxu0 0.0
        %5832 = vmatpush1.msra.mxu0 0.0
        %5833 = vmatprep.subr.mxu0 0.0
        %5834 = vmatpush1.msra.mxu0 0.0
        %5835 = vmatprep.subr.mxu0 0.0
        %5836 = vmatpush1.msra.mxu0 0.0
        %5837 = vmatprep.subr.mxu0 0.0
        %5838 = vmatpush1.msra.mxu0 0.0
        %5839 = vmatprep.subr.mxu0 0.0
        %5840 = vmatpush1.msra.mxu0 0.0
        %5841 = vmatprep.subr.mxu0 0.0
        %5842 = vmatpush1.msra.mxu0 0.0
        %5843 = vmatprep.subr.mxu0 0.0
        %5844 = vmatpush1.msra.mxu0 0.0
        %5845 = vmatprep.subr.mxu0 0.0
        %5846 = vmatpush1.msra.mxu0 0.0
        %5847 = vmatprep.subr.mxu0 0.0
        %5848 = vmatpush1.msra.mxu0 0.0
        %5849 = vmatprep.subr.mxu0 0.0
        %5850 = vmatpush1.msra.mxu0 0.0
        %5851 = vmatprep.subr.mxu0 0.0
        %5852 = vmatpush1.msra.mxu0 0.0
        %5853 = vmatprep.subr.mxu0 0.0
        %5854 = vmatpush1.msra.mxu0 0.0
        %5855 = vmatprep.subr.mxu0 0.0
        %5856 = vmatpush1.msra.mxu0 0.0
        %5857 = vmatprep.subr.mxu0 0.0
        %5858 = vmatpush1.msra.mxu0 0.0
        %5859 = vmatprep.subr.mxu0 0.0
        %5860 = vmatpush1.msra.mxu0 0.0
        %5861 = vmatprep.subr.mxu0 0.0
        %5862 = vmatpush1.msra.mxu0 0.0
        %5863 = vmatprep.subr.mxu0 0.0
        %5864 = vmatpush1.msra.mxu0 0.0
        %5865 = vmatprep.subr.mxu0 0.0
        %5866 = vmatpush1.msra.mxu0 0.0
        %5867 = vmatprep.subr.mxu0 0.0
        %5868 = vmatpush1.msra.mxu0 0.0
        %5869 = vmatprep.subr.mxu0 0.0
        %5870 = vmatpush1.msra.mxu0 0.0
        %5871 = vmatprep.subr.mxu0 0.0
        %5872 = vmatpush1.msra.mxu0 0.0
        %5873 = vmatprep.subr.mxu0 0.0
        %5874 = vmatpush1.msra.mxu0 0.0
        %5875 = vmatprep.subr.mxu0 0.0
        %5876 = vmatpush1.msra.mxu0 0.0
        %5877 = vmatprep.subr.mxu0 0.0
        %5878 = vmatpush1.msra.mxu0 0.0
        %5879 = vmatprep.subr.mxu0 0.0
        %5880 = vmatpush1.msra.mxu0 0.0
        %5881 = vmatprep.subr.mxu0 0.0
        %5882 = vmatpush1.msra.mxu0 0.0
        %5883 = vmatprep.subr.mxu0 0.0
        %5884 = vmatpush1.msra.mxu0 0.0
        %5885 = vmatprep.mubr.f32.mxu0 0.0
        %5886 = vmatmul.mubr.f32.gmra.mrb[0].mxu0 %v5650
        %v5887 = vpop.f32.mrb[0].mxu0
        %v5888 = vadd.f32 %v5813, %v5887
        %v5889 = vpop.f32.mrb[0].mxu0
        %5890 = vmatprep.mubr.f32.mxu0 0.0
        %5891 = vmatmul.mubr.f32.gmra.mrb[0].mxu0 %v5653
        %v5892 = vpop.f32.mrb[0].mxu0
        %v5893 = vadd.f32 %v5818, %v5892
        %v5894 = vpop.f32.mrb[0].mxu0
        %5895 = vdwg.mxu0
        %v5896 = vadd.f32 %v5888, %v1976
        %v5897 = vadd.f32 %v5893, %v1976
        %v5898 = vsel %vm1980, %v5896, -inf
        %5899 = vmax.xlane.f32.xlu0 %v5898
        %v5900 = vpop.xlane.xlu0 %5899
        %v5901 = vsel %vm1980, %v5897, -inf
        %5902 = vmax.xlane.f32.xlu0 %v5901
        %v5903 = vpop.xlane.xlu0 %5902
        %5904 = vmatprep.subr.mxu0 0.0
        %5905 = vmatpush1.msra.mxu0 %v1196
        %5906 = vmatprep.subr.mxu0 0.0
        %5907 = vmatpush1.msra.mxu0 %v1197
        %5908 = vmatprep.subr.mxu0 0.0
        %5909 = vmatpush1.msra.mxu0 %v1198
        %5910 = vmatprep.subr.mxu0 0.0
        %5911 = vmatpush1.msra.mxu0 %v1199
        %5912 = vmatprep.subr.mxu0 0.0
        %5913 = vmatpush1.msra.mxu0 0.0
        %5914 = vmatprep.subr.mxu0 0.0
        %5915 = vmatpush1.msra.mxu0 0.0
        %5916 = vmatprep.subr.mxu0 0.0
        %5917 = vmatpush1.msra.mxu0 0.0
        %5918 = vmatprep.subr.mxu0 0.0
        %5919 = vmatpush1.msra.mxu0 0.0
        %5920 = vmatprep.subr.mxu0 0.0
        %5921 = vmatpush1.msra.mxu0 0.0
        %5922 = vmatprep.subr.mxu0 0.0
        %5923 = vmatpush1.msra.mxu0 0.0
        %5924 = vmatprep.subr.mxu0 0.0
        %5925 = vmatpush1.msra.mxu0 0.0
        %5926 = vmatprep.subr.mxu0 0.0
        %5927 = vmatpush1.msra.mxu0 0.0
        %5928 = vmatprep.subr.mxu0 0.0
        %5929 = vmatpush1.msra.mxu0 0.0
        %5930 = vmatprep.subr.mxu0 0.0
        %5931 = vmatpush1.msra.mxu0 0.0
        %5932 = vmatprep.subr.mxu0 0.0
        %5933 = vmatpush1.msra.mxu0 0.0
        %5934 = vmatprep.subr.mxu0 0.0
        %5935 = vmatpush1.msra.mxu0 0.0
        %5936 = vmatprep.subr.mxu0 0.0
        %5937 = vmatpush1.msra.mxu0 0.0
        %5938 = vmatprep.subr.mxu0 0.0
        %5939 = vmatpush1.msra.mxu0 0.0
        %5940 = vmatprep.subr.mxu0 0.0
        %5941 = vmatpush1.msra.mxu0 0.0
        %5942 = vmatprep.subr.mxu0 0.0
        %5943 = vmatpush1.msra.mxu0 0.0
        %5944 = vmatprep.subr.mxu0 0.0
        %5945 = vmatpush1.msra.mxu0 0.0
        %5946 = vmatprep.subr.mxu0 0.0
        %5947 = vmatpush1.msra.mxu0 0.0
        %5948 = vmatprep.subr.mxu0 0.0
        %5949 = vmatpush1.msra.mxu0 0.0
        %5950 = vmatprep.subr.mxu0 0.0
        %5951 = vmatpush1.msra.mxu0 0.0
        %5952 = vmatprep.subr.mxu0 0.0
        %5953 = vmatpush1.msra.mxu0 0.0
        %5954 = vmatprep.subr.mxu0 0.0
        %5955 = vmatpush1.msra.mxu0 0.0
        %5956 = vmatprep.subr.mxu0 0.0
        %5957 = vmatpush1.msra.mxu0 0.0
        %5958 = vmatprep.subr.mxu0 0.0
        %5959 = vmatpush1.msra.mxu0 0.0
        %5960 = vmatprep.subr.mxu0 0.0
        %5961 = vmatpush1.msra.mxu0 0.0
        %5962 = vmatprep.subr.mxu0 0.0
        %5963 = vmatpush1.msra.mxu0 0.0
        %5964 = vmatprep.subr.mxu0 0.0
        %5965 = vmatpush1.msra.mxu0 0.0
        %5966 = vmatprep.subr.mxu0 0.0
        %5967 = vmatpush1.msra.mxu0 0.0
        %5968 = vmatprep.mubr.f32.mxu0 0.0
        %5969 = vmatmul.mubr.f32.gmra.mrb[0].mxu0 %v5561
        %v5970 = vpop.f32.mrb[0].mxu0
        %v5971 = vadd.f32 0.0, %v5970
        %v5972 = vpop.f32.mrb[0].mxu0
        %5973 = vdwg.mxu0
        %v5974 = vlaneseq
        %v5975 = vshrl.u32 %v5974, 7
        %v5976 = vsub.s32 0, %v5975
        %v5977 = vrot.slane %v5971, %v5976
        %v5978 = vadd.f32 %v1402, %v5977
        %v5979 = vadd.f32 %v1407, %v5977
        %5982 = vrot.lane.b32.xlu0 %v5978, 96
        %v5983 = vpop.permute.xlu0 %5982
        %5984 = vrot.lane.b32.xlu0 %v5979, 96
        %v5985 = vpop.permute.xlu0 %5984
        %v5988 = vmax.f32 %v5978, %v5983
        %v5989 = vmax.f32 %v5979, %v5985
        %v5991 = vsel %vm1483, %v5988, 0
        %v5994 = vsel %vm1483, %v5989, 0
        %5996 = vmatprep.subr.mxu0 0.0
        %5997 = vmatpush1.msra.mxu0 %v1201
        %5998 = vmatprep.subr.mxu0 0.0
        %5999 = vmatpush1.msra.mxu0 %v1202
        %6000 = vmatprep.subr.mxu0 0.0
        %6001 = vmatpush1.msra.mxu0 %v1203
        %6002 = vmatprep.subr.mxu0 0.0
        %6003 = vmatpush1.msra.mxu0 %v1204
        %6004 = vmatprep.subr.mxu0 0.0
        %6005 = vmatpush1.msra.mxu0 0.0
        %6006 = vmatprep.subr.mxu0 0.0
        %6007 = vmatpush1.msra.mxu0 0.0
        %6008 = vmatprep.subr.mxu0 0.0
        %6009 = vmatpush1.msra.mxu0 0.0
        %6010 = vmatprep.subr.mxu0 0.0
        %6011 = vmatpush1.msra.mxu0 0.0
        %6012 = vmatprep.subr.mxu0 0.0
        %6013 = vmatpush1.msra.mxu0 0.0
        %6014 = vmatprep.subr.mxu0 0.0
        %6015 = vmatpush1.msra.mxu0 0.0
        %6016 = vmatprep.subr.mxu0 0.0
        %6017 = vmatpush1.msra.mxu0 0.0
        %6018 = vmatprep.subr.mxu0 0.0
        %6019 = vmatpush1.msra.mxu0 0.0
        %6020 = vmatprep.subr.mxu0 0.0
        %6021 = vmatpush1.msra.mxu0 0.0
        %6022 = vmatprep.subr.mxu0 0.0
        %6023 = vmatpush1.msra.mxu0 0.0
        %6024 = vmatprep.subr.mxu0 0.0
        %6025 = vmatpush1.msra.mxu0 0.0
        %6026 = vmatprep.subr.mxu0 0.0
        %6027 = vmatpush1.msra.mxu0 0.0
        %6028 = vmatprep.subr.mxu0 0.0
        %6029 = vmatpush1.msra.mxu0 0.0
        %6030 = vmatprep.subr.mxu0 0.0
        %6031 = vmatpush1.msra.mxu0 0.0
        %6032 = vmatprep.subr.mxu0 0.0
        %6033 = vmatpush1.msra.mxu0 0.0
        %6034 = vmatprep.subr.mxu0 0.0
        %6035 = vmatpush1.msra.mxu0 0.0
        %6036 = vmatprep.subr.mxu0 0.0
        %6037 = vmatpush1.msra.mxu0 0.0
        %6038 = vmatprep.subr.mxu0 0.0
        %6039 = vmatpush1.msra.mxu0 0.0
        %6040 = vmatprep.subr.mxu0 0.0
        %6041 = vmatpush1.msra.mxu0 0.0
        %6042 = vmatprep.subr.mxu0 0.0
        %6043 = vmatpush1.msra.mxu0 0.0
        %6044 = vmatprep.subr.mxu0 0.0
        %6045 = vmatpush1.msra.mxu0 0.0
        %6046 = vmatprep.subr.mxu0 0.0
        %6047 = vmatpush1.msra.mxu0 0.0
        %6048 = vmatprep.subr.mxu0 0.0
        %6049 = vmatpush1.msra.mxu0 0.0
        %6050 = vmatprep.subr.mxu0 0.0
        %6051 = vmatpush1.msra.mxu0 0.0
        %6052 = vmatprep.subr.mxu0 0.0
        %6053 = vmatpush1.msra.mxu0 0.0
        %6054 = vmatprep.subr.mxu0 0.0
        %6055 = vmatpush1.msra.mxu0 0.0
        %6056 = vmatprep.subr.mxu0 0.0
        %6057 = vmatpush1.msra.mxu0 0.0
        %6058 = vmatprep.subr.mxu0 0.0
        %6059 = vmatpush1.msra.mxu0 0.0
        %6060 = vmatprep.mubr.f32.mxu0 0.0
        %6061 = vmatmul.mubr.f32.gmra.mrb[0].mxu0 %v5991
        %v6062 = vpop.f32.mrb[0].mxu0
        %v6063 = vadd.f32 %v2077, %v6062
        %v6064 = vpop.f32.mrb[0].mxu0
        %6065 = vmatprep.mubr.f32.mxu0 0.0
        %6066 = vmatmul.mubr.f32.gmra.mrb[0].mxu0 %v5994
        %v6067 = vpop.f32.mrb[0].mxu0
        %v6068 = vadd.f32 %v2077, %v6067
        %v6069 = vpop.f32.mrb[0].mxu0
        %6070 = vdwg.mxu0
        %6073 = vrot.lane.b32.xlu0 %v6063, 96
        %v6074 = vpop.permute.xlu0 %6073
        %6075 = vrot.lane.b32.xlu0 %v6068, 96
        %v6076 = vpop.permute.xlu0 %6075
        %v6079 = vmax.f32 %v6063, %v6074
        %v6080 = vmax.f32 %v6068, %v6076
        %v6082 = vsel %vm1483, %v6079, 0
        %v6085 = vsel %vm1483, %v6080, 0
        %6087 = vmatprep.subr.mxu0 0.0
        %6088 = vmatpush1.msra.mxu0 %v1210
        %6089 = vmatprep.subr.mxu0 0.0
        %6090 = vmatpush1.msra.mxu0 %v1211
        %6091 = vmatprep.subr.mxu0 0.0
        %6092 = vmatpush1.msra.mxu0 %v1212
        %6093 = vmatprep.subr.mxu0 0.0
        %6094 = vmatpush1.msra.mxu0 %v1213
        %6095 = vmatprep.subr.mxu0 0.0
        %6096 = vmatpush1.msra.mxu0 0.0
        %6097 = vmatprep.subr.mxu0 0.0
        %6098 = vmatpush1.msra.mxu0 0.0
        %6099 = vmatprep.subr.mxu0 0.0
        %6100 = vmatpush1.msra.mxu0 0.0
        %6101 = vmatprep.subr.mxu0 0.0
        %6102 = vmatpush1.msra.mxu0 0.0
        %6103 = vmatprep.subr.mxu0 0.0
        %6104 = vmatpush1.msra.mxu0 0.0
        %6105 = vmatprep.subr.mxu0 0.0
        %6106 = vmatpush1.msra.mxu0 0.0
        %6107 = vmatprep.subr.mxu0 0.0
        %6108 = vmatpush1.msra.mxu0 0.0
        %6109 = vmatprep.subr.mxu0 0.0
        %6110 = vmatpush1.msra.mxu0 0.0
        %6111 = vmatprep.subr.mxu0 0.0
        %6112 = vmatpush1.msra.mxu0 0.0
        %6113 = vmatprep.subr.mxu0 0.0
        %6114 = vmatpush1.msra.mxu0 0.0
        %6115 = vmatprep.subr.mxu0 0.0
        %6116 = vmatpush1.msra.mxu0 0.0
        %6117 = vmatprep.subr.mxu0 0.0
        %6118 = vmatpush1.msra.mxu0 0.0
        %6119 = vmatprep.subr.mxu0 0.0
        %6120 = vmatpush1.msra.mxu0 0.0
        %6121 = vmatprep.subr.mxu0 0.0
        %6122 = vmatpush1.msra.mxu0 0.0
        %6123 = vmatprep.subr.mxu0 0.0
        %6124 = vmatpush1.msra.mxu0 0.0
        %6125 = vmatprep.subr.mxu0 0.0
        %6126 = vmatpush1.msra.mxu0 0.0
        %6127 = vmatprep.subr.mxu0 0.0
        %6128 = vmatpush1.msra.mxu0 0.0
        %6129 = vmatprep.subr.mxu0 0.0
        %6130 = vmatpush1.msra.mxu0 0.0
        %6131 = vmatprep.subr.mxu0 0.0
        %6132 = vmatpush1.msra.mxu0 0.0
        %6133 = vmatprep.subr.mxu0 0.0
        %6134 = vmatpush1.msra.mxu0 0.0
        %6135 = vmatprep.subr.mxu0 0.0
        %6136 = vmatpush1.msra.mxu0 0.0
        %6137 = vmatprep.subr.mxu0 0.0
        %6138 = vmatpush1.msra.mxu0 0.0
        %6139 = vmatprep.subr.mxu0 0.0
        %6140 = vmatpush1.msra.mxu0 0.0
        %6141 = vmatprep.subr.mxu0 0.0
        %6142 = vmatpush1.msra.mxu0 0.0
        %6143 = vmatprep.subr.mxu0 0.0
        %6144 = vmatpush1.msra.mxu0 0.0
        %6145 = vmatprep.subr.mxu0 0.0
        %6146 = vmatpush1.msra.mxu0 0.0
        %6147 = vmatprep.subr.mxu0 0.0
        %6148 = vmatpush1.msra.mxu0 0.0
        %6149 = vmatprep.subr.mxu0 0.0
        %6150 = vmatpush1.msra.mxu0 0.0
        %6151 = vmatprep.mubr.f32.mxu0 0.0
        %6152 = vmatmul.mubr.f32.gmra.mrb[0].mxu0 %v6082
        %v6153 = vpop.f32.mrb[0].mxu0
        %v6154 = vadd.f32 0.0, %v6153
        %v6155 = vpop.f32.mrb[0].mxu0
        %6156 = vmatprep.mubr.f32.mxu0 0.0
        %6157 = vmatmul.mubr.f32.gmra.mrb[0].mxu0 %v6085
        %v6158 = vpop.f32.mrb[0].mxu0
        %v6159 = vadd.f32 0.0, %v6158
        %v6160 = vpop.f32.mrb[0].mxu0
        %6161 = vdwg.mxu0
        %6162 = vmatprep.subr.mxu0 0.0
        %6163 = vmatpush1.msra.mxu0 %v1206
        %6164 = vmatprep.subr.mxu0 0.0
        %6165 = vmatpush1.msra.mxu0 %v1207
        %6166 = vmatprep.subr.mxu0 0.0
        %6167 = vmatpush1.msra.mxu0 %v1208
        %6168 = vmatprep.subr.mxu0 0.0
        %6169 = vmatpush1.msra.mxu0 %v1209
        %6170 = vmatprep.subr.mxu0 0.0
        %6171 = vmatpush1.msra.mxu0 0.0
        %6172 = vmatprep.subr.mxu0 0.0
        %6173 = vmatpush1.msra.mxu0 0.0
        %6174 = vmatprep.subr.mxu0 0.0
        %6175 = vmatpush1.msra.mxu0 0.0
        %6176 = vmatprep.subr.mxu0 0.0
        %6177 = vmatpush1.msra.mxu0 0.0
        %6178 = vmatprep.subr.mxu0 0.0
        %6179 = vmatpush1.msra.mxu0 0.0
        %6180 = vmatprep.subr.mxu0 0.0
        %6181 = vmatpush1.msra.mxu0 0.0
        %6182 = vmatprep.subr.mxu0 0.0
        %6183 = vmatpush1.msra.mxu0 0.0
        %6184 = vmatprep.subr.mxu0 0.0
        %6185 = vmatpush1.msra.mxu0 0.0
        %6186 = vmatprep.subr.mxu0 0.0
        %6187 = vmatpush1.msra.mxu0 0.0
        %6188 = vmatprep.subr.mxu0 0.0
        %6189 = vmatpush1.msra.mxu0 0.0
        %6190 = vmatprep.subr.mxu0 0.0
        %6191 = vmatpush1.msra.mxu0 0.0
        %6192 = vmatprep.subr.mxu0 0.0
        %6193 = vmatpush1.msra.mxu0 0.0
        %6194 = vmatprep.subr.mxu0 0.0
        %6195 = vmatpush1.msra.mxu0 0.0
        %6196 = vmatprep.subr.mxu0 0.0
        %6197 = vmatpush1.msra.mxu0 0.0
        %6198 = vmatprep.subr.mxu0 0.0
        %6199 = vmatpush1.msra.mxu0 0.0
        %6200 = vmatprep.subr.mxu0 0.0
        %6201 = vmatpush1.msra.mxu0 0.0
        %6202 = vmatprep.subr.mxu0 0.0
        %6203 = vmatpush1.msra.mxu0 0.0
        %6204 = vmatprep.subr.mxu0 0.0
        %6205 = vmatpush1.msra.mxu0 0.0
        %6206 = vmatprep.subr.mxu0 0.0
        %6207 = vmatpush1.msra.mxu0 0.0
        %6208 = vmatprep.subr.mxu0 0.0
        %6209 = vmatpush1.msra.mxu0 0.0
        %6210 = vmatprep.subr.mxu0 0.0
        %6211 = vmatpush1.msra.mxu0 0.0
        %6212 = vmatprep.subr.mxu0 0.0
        %6213 = vmatpush1.msra.mxu0 0.0
        %6214 = vmatprep.subr.mxu0 0.0
        %6215 = vmatpush1.msra.mxu0 0.0
        %6216 = vmatprep.subr.mxu0 0.0
        %6217 = vmatpush1.msra.mxu0 0.0
        %6218 = vmatprep.subr.mxu0 0.0
        %6219 = vmatpush1.msra.mxu0 0.0
        %6220 = vmatprep.subr.mxu0 0.0
        %6221 = vmatpush1.msra.mxu0 0.0
        %6222 = vmatprep.subr.mxu0 0.0
        %6223 = vmatpush1.msra.mxu0 0.0
        %6224 = vmatprep.subr.mxu0 0.0
        %6225 = vmatpush1.msra.mxu0 0.0
        %6226 = vmatprep.mubr.f32.mxu0 0.0
        %6227 = vmatmul.mubr.f32.gmra.mrb[0].mxu0 %v5991
        %v6228 = vpop.f32.mrb[0].mxu0
        %v6229 = vadd.f32 %v6154, %v6228
        %v6230 = vpop.f32.mrb[0].mxu0
        %6231 = vmatprep.mubr.f32.mxu0 0.0
        %6232 = vmatmul.mubr.f32.gmra.mrb[0].mxu0 %v5994
        %v6233 = vpop.f32.mrb[0].mxu0
        %v6234 = vadd.f32 %v6159, %v6233
        %v6235 = vpop.f32.mrb[0].mxu0
        %6236 = vdwg.mxu0
        %v6237 = vadd.f32 %v6229, %v2330
        %v6238 = vadd.f32 %v6234, %v2330
        %v6239 = vsel %vm1980, %v6237, -inf
        %6240 = vmax.xlane.f32.xlu0 %v6239
        %v6241 = vpop.xlane.xlu0 %6240
        %v6242 = vsel %vm1980, %v6238, -inf
        %6243 = vmax.xlane.f32.xlu0 %v6242
        %v6244 = vpop.xlane.xlu0 %6243
        %s6245 = scalar_lea.vmem %s1126, 48
        %6246 = vst.msk [vmem:[%s6245] sm:$0xff] %vm2340, %v5900
        %6247 = vst.msk [vmem:[%s6245 + $0x8] sm:$0xff] %vm2340, %v5903
        %s6248 = scalar_lea.vmem %s1131, 48
        %6249 = vst.msk [vmem:[%s6248] sm:$0xff] %vm2340, %v6241
        %6250 = vst.msk [vmem:[%s6248 + $0x8] sm:$0xff] %vm2340, %v6244
        %v6251 = vmax.f32 %v5900, %v5903
        %v6252 = vrot.slane %v6251, 4
        %v6253 = vmax.f32 %v6251, %v6252
        %v6254 = vrot.slane %v6253, 2
        %v6255 = vmax.f32 %v6253, %v6254
        %v6256 = vrot.slane %v6255, 1
        %v6257 = vmax.f32 %v6255, %v6256
        %vm6258 = vcmp.eq.f32.partialorder %v5900, %v6257
        %vm6259 = vcmp.eq.f32.partialorder %v5903, %v6257
        %v6260 = vsel %vm6258, %v1411, 16
        %v6261 = vsel %vm6259, %v1412, 16
        %vm6262 = vcmp.lt.s32.totalorder %v6260, %v6261
        %v6263 = vsel %vm6262, %v6260, %v6261
        %v6264 = vrot.slane %v6263, 4
        %vm6265 = vcmp.lt.s32.totalorder %v6263, %v6264
        %v6266 = vsel %vm6265, %v6263, %v6264
        %v6267 = vrot.slane %v6266, 2
        %vm6268 = vcmp.lt.s32.totalorder %v6266, %v6267
        %v6269 = vsel %vm6268, %v6266, %v6267
        %v6270 = vrot.slane %v6269, 1
        %vm6271 = vcmp.lt.s32.totalorder %v6269, %v6270
        %v6272 = vsel %vm6271, %v6269, %v6270
        %v6273 = vmax.f32 %v6241, %v6244
        %v6274 = vrot.slane %v6273, 4
        %v6275 = vmax.f32 %v6273, %v6274
        %v6276 = vrot.slane %v6275, 2
        %v6277 = vmax.f32 %v6275, %v6276
        %v6278 = vrot.slane %v6277, 1
        %v6279 = vmax.f32 %v6277, %v6278
        %vm6280 = vcmp.eq.f32.partialorder %v6241, %v6279
        %vm6281 = vcmp.eq.f32.partialorder %v6244, %v6279
        %v6282 = vsel %vm6280, %v1411, 16
        %v6283 = vsel %vm6281, %v1412, 16
        %vm6284 = vcmp.lt.s32.totalorder %v6282, %v6283
        %v6285 = vsel %vm6284, %v6282, %v6283
        %v6286 = vrot.slane %v6285, 4
        %vm6287 = vcmp.lt.s32.totalorder %v6285, %v6286
        %v6288 = vsel %vm6287, %v6285, %v6286
        %v6289 = vrot.slane %v6288, 2
        %vm6290 = vcmp.lt.s32.totalorder %v6288, %v6289
        %v6291 = vsel %vm6290, %v6288, %v6289
        %v6292 = vrot.slane %v6291, 1
        %vm6293 = vcmp.lt.s32.totalorder %v6291, %v6292
        %v6294 = vsel %vm6293, %v6291, %v6292
        %vm6295 = vcmask 0
        %6296 = vst.msk [vmem:[%s1134] sm:$0x1] %vm6295, %v6272
        %6297 = vst.msk [vmem:[%s1137] sm:$0x1] %vm6295, %v6294
        %p6298 = scmp.lt.s32.totalorder %s82, 1
        %s6299 = scalar_select %p6298, %s82, 1
        %s6300 = smul.addr %s6299, 8
        %s6301 = smul.addr %s6300, 8
        %s6302 = scalar_lea.vmem %s55, %s6301
        %p6303 = scmp.lt.s32.totalorder %s82, 1
        %s6304 = scalar_select %p6303, %s82, 1
        %s6305 = smul.addr %s6304, 8
        %s6306 = smul.addr %s6305, 8
        %s6307 = scalar_lea.vmem %s57, %s6306
        %p6308 = scmp.lt.s32.totalorder %s82, 1
        %s6309 = scalar_select %p6308, %s82, 1
        %s6310 = scalar_lea.vmem %s59, %s6309
        %p6311 = scmp.lt.s32.totalorder %s82, 1
        %s6312 = scalar_select %p6311, %s82, 1
        %s6313 = scalar_lea.vmem %s61, %s6312
        // Predicated region
        $region181: #{tpu_custom_call.1} parent=127 // pred_check
          %p6314 = pneg %p672
        $region182: #{tpu_custom_call.1} parent=127 // pred_check_branch
          %6316 = sbr.rel (%p6314) target = $region184
        $region183: #{tpu_custom_call.1} parent=127 // pred_region
          _
        $region184: #{tpu_custom_call.1} parent=127 // pred_fallthru
          _
        // Predicated region
        $region185: #{tpu_custom_call.1} parent=127 // pred_check
          %p6317 = pneg %p698
        $region186: #{tpu_custom_call.1} parent=127 // pred_check_branch
          %6319 = sbr.rel (%p6317) target = $region188
        $region187: #{tpu_custom_call.1} parent=127 // pred_region
          _
        $region188: #{tpu_custom_call.1} parent=127 // pred_fallthru
          _
        // Predicated region
        $region189: #{tpu_custom_call.1} parent=127 // pred_check
          %p6320 = pneg %p724
        $region190: #{tpu_custom_call.1} parent=127 // pred_check_branch
          %6322 = sbr.rel (%p6320) target = $region192
        $region191: #{tpu_custom_call.1} parent=127 // pred_region
          _
        $region192: #{tpu_custom_call.1} parent=127 // pred_fallthru
          _
        // Predicated region
        $region193: #{tpu_custom_call.1} parent=127 // pred_check
          %p6323 = pneg %p750
        $region194: #{tpu_custom_call.1} parent=127 // pred_check_branch
          %6325 = sbr.rel (%p6323) target = $region196
        $region195: #{tpu_custom_call.1} parent=127 // pred_region
          _
        $region196: #{tpu_custom_call.1} parent=127 // pred_fallthru
          _
      $region128: #{tpu_custom_call.1} parent=5 // pred_fallthru
        _
      %p6326 = scmp.le.s32.totalorder 2, %s77
      // Predicated region
      $region197: #{tpu_custom_call.1} parent=5 // pred_check
        %p6327 = pneg %p6326
      $region198: #{tpu_custom_call.1} parent=5 // pred_check_branch
        %6329 = sbr.rel (%p6327) target = $region200
      $region199: #{tpu_custom_call.1} parent=5 // pred_region
        %s6330 = ssub.s32 %s77, 2
        // Predicated region
        $region201: #{tpu_custom_call.1} parent=199 // pred_check
          %p6331 = pneg %p678
        $region202: #{tpu_custom_call.1} parent=199 // pred_check_branch
          %6333 = sbr.rel (%p6331) target = $region204
        $region203: #{tpu_custom_call.1} parent=199 // pred_region
          %p6334 = scmp.lt.s32.totalorder %s83, 1
          %s6335 = scalar_select %p6334, %s83, 1
          %s6336 = smul.addr %s6335, 8
          %s6337 = smul.addr %s6336, 8
          %s6338 = scalar_lea.vmem %s55, %s6337
        $region204: #{tpu_custom_call.1} parent=199 // pred_fallthru
          _
        // Predicated region
        $region205: #{tpu_custom_call.1} parent=199 // pred_check
          %p6339 = pneg %p704
        $region206: #{tpu_custom_call.1} parent=199 // pred_check_branch
          %6341 = sbr.rel (%p6339) target = $region208
        $region207: #{tpu_custom_call.1} parent=199 // pred_region
          %p6342 = scmp.lt.s32.totalorder %s83, 1
          %s6343 = scalar_select %p6342, %s83, 1
          %s6344 = smul.addr %s6343, 8
          %s6345 = smul.addr %s6344, 8
          %s6346 = scalar_lea.vmem %s57, %s6345
        $region208: #{tpu_custom_call.1} parent=199 // pred_fallthru
          _
        // Predicated region
        $region209: #{tpu_custom_call.1} parent=199 // pred_check
          %p6347 = pneg %p730
        $region210: #{tpu_custom_call.1} parent=199 // pred_check_branch
          %6349 = sbr.rel (%p6347) target = $region212
        $region211: #{tpu_custom_call.1} parent=199 // pred_region
          %p6350 = scmp.lt.s32.totalorder %s83, 1
          %s6351 = scalar_select %p6350, %s83, 1
          %s6352 = scalar_lea.vmem %s59, %s6351
        $region212: #{tpu_custom_call.1} parent=199 // pred_fallthru
          _
        // Predicated region
        $region213: #{tpu_custom_call.1} parent=199 // pred_check
          %p6353 = pneg %p756
        $region214: #{tpu_custom_call.1} parent=199 // pred_check_branch
          %6355 = sbr.rel (%p6353) target = $region216
        $region215: #{tpu_custom_call.1} parent=199 // pred_region
          %p6356 = scmp.lt.s32.totalorder %s83, 1
          %s6357 = scalar_select %p6356, %s83, 1
          %s6358 = scalar_lea.vmem %s61, %s6357
        $region216: #{tpu_custom_call.1} parent=199 // pred_fallthru
          _
      $region200: #{tpu_custom_call.1} parent=5 // pred_fallthru
        _
    $region6: #{tpu_custom_call.1} parent=1 // loop_footer
      %s81 = sadd.s32 1, %s77
    $region7: #{tpu_custom_call.1} parent=1 // loop_footer_branch
      %76 = sbr.rel target = $region3
    $region8: #{tpu_custom_call.1} parent=1 // loop_exit
      _
    %6359 = vsyncpa [#allocation3], 1
    %s6360 = scalar_lea.sflag [#allocation3], 1
    %6361 = vsyncpa %s6360, 1
    %6362 = vsyncpa [#allocation5], 1
    %6363 = vsyncpa [#allocation8], 1
    %6364 = vsyncpa [#allocation11], 1
    %6365 = vsyncpa [#allocation14], 1
    %6366 = vsyncpa [#allocation17], 1
    %6367 = vsyncpa [#allocation20], 1

</llo_original>
